<compile_context>
chip_gen: v7x
topology: tpu7x:2x2x1
jax: 0.10.0
libtpu: 0.0.40
codegen_flags: <defaults>
</compile_context>

<pallas_src>
import numpy as np
import jax
import jax.numpy as jnp
from jax import lax
from jax.experimental import pallas as pl
from jax.experimental.pallas import tpu as pltpu

LPAD = 128  # lane-aligned leading halo of every staging buffer


# ----------------------------------------------------------------------------
# host-side constant builders
# ----------------------------------------------------------------------------
def bilinear_matrix(in_size, out_size):
    """out = A @ in  ==  torch bilinear upsample (align_corners=True), 1-D."""
    A = np.zeros((out_size, in_size), np.float32)
    if in_size == 1:
        A[:, 0] = 1.0
        return A
    src = np.arange(out_size) * (in_size - 1) / (out_size - 1)
    lo = np.floor(src).astype(np.int64)
    hi = np.minimum(lo + 1, in_size - 1)
    frac = (src - lo).astype(np.float32)
    A[np.arange(out_size), lo] += 1.0 - frac
    A[np.arange(out_size), hi] += frac
    return A


def upsample_kron_t(h, w):
    """(h*w, 4*h*w) matrix Ut with out_t(nh,4hw) = in_t(nh,hw) @ Ut."""
    Ah = bilinear_matrix(h, 2 * h)
    Aw = bilinear_matrix(w, 2 * w)
    return np.kron(Ah, Aw).astype(np.float32).T


def pool_select_matrix(H, W):
    """(H*W, (H//2)*(W//2)) 0/1 matrix selecting the 2x2-pool anchor lanes."""
    Hh, Wh = H // 2, W // 2
    S = np.zeros((H * W, Hh * Wh), np.float32)
    for k in range(Hh):
        for j in range(Wh):
            S[(2 * k) * W + 2 * j, k * Wh + j] = 1.0
    return S


# ----------------------------------------------------------------------------
# fused UNet kernel
# ----------------------------------------------------------------------------
def _make_unet_kernel(sizes, nh):
    (H0, W0), (H1, W1), (H2, W2), (H3, W3) = sizes
    f32 = jnp.float32

    def kernel(x_ref, wcs_ref, wcd_ref, bc_ref, wlt_ref, blt_ref,
               u3_ref, u2_ref, u1_ref, s1_ref, s2_ref, s3_ref,
               o_ref, pad_a, pad_b, pad_c, pad_d, tap_ref):

        pads = (pad_a, pad_b, pad_c, pad_d)

        # zero only the halo lanes; interiors are always fully rewritten
        for p, (H, W) in zip(pads, sizes):
            HW = H * W
            p[:, 0:LPAD] = jnp.zeros((nh, LPAD), f32)
            p[:, LPAD + HW:] = jnp.zeros((nh, W + 1), f32)

        mask_cache = {}

        def edge_masks(HW, W):
            if (HW, W) not in mask_cache:
                col = lax.broadcasted_iota(jnp.int32, (nh, HW), 1)
                col = (col & (W - 1)) if (W & (W - 1)) == 0 else (col % W)
                mask_cache[(HW, W)] = (col != 0, col != W - 1)
            return mask_cache[(HW, W)]

        def stage_taps(src, H, W, pad_ref, row0):
            """Write the 9 shifted taps of `src` ((nh,H*W) value, or None if
            already staged in pad_ref) into tap_ref rows [row0, row0+9*nh)."""
            HW = H * W
            if src is not None:
                pad_ref[:, LPAD:LPAD + HW] = src
            not_first, not_last = edge_masks(HW, W)
            k = 0
            for dy in (-1, 0, 1):
                for dx in (-1, 0, 1):
                    start = LPAD + dy * W + dx
                    patch = pad_ref[:, start:start + HW]
                    if dx == -1:
                        patch = jnp.where(not_first, patch, 0.0)
                    elif dx == 1:
                        patch = jnp.where(not_last, patch, 0.0)
                    tap_ref[row0 + k * nh:row0 + (k + 1) * nh, 0:HW] = patch
                    k += 1

        def conv3x3(srcs, w, b_idx, H, W, pad_ref, relu=True):
            """3x3 conv (padding=1) over the channel-concat of `srcs` as a
            single K = 9*nh*len(srcs) MXU matmul."""
            HW = H * W
            for s_idx, src in enumerate(srcs):
                stage_taps(src, H, W, pad_ref, s_idx * 9 * nh)
            K = 9 * nh * len(srcs)
            acc = jnp.dot(w, tap_ref[0:K, 0:HW], preferred_element_type=f32)
            acc = acc + bc_ref[:, b_idx:b_idx + 1]
            return jnp.maximum(acc, 0.0) if relu else acc

        def pool_into(c, H, W, pad_ref, sel_ref, dst_pad_ref):
            """2x2 max pool of (nh,H*W) value `c`; result goes straight into
            the interior of the next stage's staging buffer."""
            HW = H * W
            HWq = HW // 4
            pad_ref[:, LPAD:LPAD + HW] = c
            t01 = pad_ref[:, LPAD + 1:LPAD + 1 + HW]
            t10 = pad_ref[:, LPAD + W:LPAD + W + HW]
            t11 = pad_ref[:, LPAD + W + 1:LPAD + W + 1 + HW]
            h = jnp.maximum(jnp.maximum(c, t01), jnp.maximum(t10, t11))
            pooled = jnp.dot(h, sel_ref[...], preferred_element_type=f32)
            dst_pad_ref[:, LPAD:LPAD + HWq] = pooled

        x0 = x_ref[0]                                            # (nh, H0*W0)

        # ------------------------------ encoder ------------------------------
        c = conv3x3([x0], wcs_ref[0], 0, H0, W0, pad_a)
        c1 = conv3x3([c], wcs_ref[1], 1, H0, W0, pad_a)
        pool_into(c1, H0, W0, pad_a, s1_ref, pad_b)

        c = conv3x3([None], wcs_ref[2], 2, H1, W1, pad_b)
        c2 = conv3x3([c], wcs_ref[3], 3, H1, W1, pad_b)
        pool_into(c2, H1, W1, pad_b, s2_ref, pad_c)

        c = conv3x3([None], wcs_ref[4], 4, H2, W2, pad_c)
        c3 = conv3x3([c], wcs_ref[5], 5, H2, W2, pad_c)
        pool_into(c3, H2, W2, pad_c, s3_ref, pad_d)

        x = conv3x3([None], wcs_ref[6], 6, H3, W3, pad_d)
        x = conv3x3([x], wcs_ref[7], 7, H3, W3, pad_d)

        # ------------------------------ decoder ------------------------------
        x = jnp.dot(x, u3_ref[...], preferred_element_type=f32)  # (nh, H2*W2)
        x = conv3x3([x, c3], wcd_ref[0], 8, H2, W2, pad_c)
        x = conv3x3([x], wcs_ref[8], 9, H2, W2, pad_c)

        x = jnp.dot(x, u2_ref[...], preferred_element_type=f32)  # (nh, H1*W1)
        x = conv3x3([x, c2], wcd_ref[1], 10, H1, W1, pad_b)
        x = conv3x3([x], wcs_ref[9], 11, H1, W1, pad_b)

        x = jnp.dot(x, u1_ref[...], preferred_element_type=f32)  # (nh, H0*W0)
        x = conv3x3([x, c1], wcd_ref[2], 12, H0, W0, pad_a)
        x = conv3x3([x], wcs_ref[10], 13, H0, W0, pad_a)

        # final 1x1 conv (no ReLU); lane-dense (num_classes, H0*W0) output
        out = jnp.dot(wlt_ref[...], x, preferred_element_type=f32) + blt_ref[...]
        o_ref[0] = out.astype(o_ref.dtype)

    return kernel


# ----------------------------------------------------------------------------
# parameter packing + wrapper
# ----------------------------------------------------------------------------
def _pack_params(params, nh):
    def tap_mat(w, cin_pad):
        # w: (9, cin, cout) -> (cout, 9*cin_pad), row  tap*cin_pad + c_in
        cin = w.shape[1]
        if cin < cin_pad:
            w = jnp.pad(w, ((0, 0), (0, cin_pad - cin), (0, 0)))
        return jnp.reshape(w, (9 * cin_pad, w.shape[-1])).T

    singles, doubles, biases = [], [], []
    for name in ("down1", "down2", "down3", "down4"):
        (w1, b1), (w2, b2) = params[name]
        singles.append(tap_mat(w1, nh)); biases.append(b1)
        singles.append(tap_mat(w2, nh)); biases.append(b2)
    for name in ("up3", "up2", "up1"):
        (w1, b1), (w2, b2) = params[name]
        wd = jnp.concatenate([tap_mat(w1[:, :nh, :], nh),
                              tap_mat(w1[:, nh:, :], nh)], axis=1)   # (nh, 144)
        doubles.append(wd); biases.append(b1)
        singles.append(tap_mat(w2, nh)); biases.append(b2)

    wcs = jnp.stack(singles)                      # (11, nh, 72)
    wcd = jnp.stack(doubles)                      # (3, nh, 144)
    bc = jnp.concatenate(biases, axis=0).T        # (nh, 14)
    wl, bl = params["last"]
    wlt = wl.T                                    # (num_classes, nh)
    blt = bl.T                                    # (num_classes, 1)
    return wcs, wcd, bc, wlt, blt


@jax.jit
def unet_forward_pallas(params, x_nchw):
    N, cin, H0, W0 = x_nchw.shape
    nh = params["down1"][0][0].shape[-1]
    num_classes = params["last"][0].shape[-1]
    assert H0 % 8 == 0 and W0 % 8 == 0 and nh >= cin

    # channels-on-sublanes / spatial-on-lanes: NCHW -> (N, nh, H*W) (pure reshape)
    x = x_nchw.reshape(N, cin, H0 * W0)
    x = jnp.pad(x, ((0, 0), (0, nh - cin), (0, 0)))

    wcs, wcd, bc, wlt, blt = _pack_params(params, nh)

    sizes = [(H0, W0), (H0 // 2, W0 // 2), (H0 // 4, W0 // 4), (H0 // 8, W0 // 8)]
    u3 = jnp.asarray(upsample_kron_t(*sizes[3]))
    u2 = jnp.asarray(upsample_kron_t(*sizes[2]))
    u1 = jnp.asarray(upsample_kron_t(*sizes[1]))
    s1 = jnp.asarray(pool_select_matrix(*sizes[0]))
    s2 = jnp.asarray(pool_select_matrix(*sizes[1]))
    s3 = jnp.asarray(pool_select_matrix(*sizes[2]))

    def full(a):
        zeros = (0,) * a.ndim
        return pl.BlockSpec(a.shape, lambda n, _z=zeros: _z)

    # staging buffers: 128-lane aligned leading halo + interior + (W+1) tail halo
    scratch = [pltpu.VMEM((nh, LPAD + h * w + w + 1), jnp.float32)
               for (h, w) in sizes]
    scratch.append(pltpu.VMEM((2 * 9 * nh, H0 * W0), jnp.float32))   # im2col taps
    # TODO(synk): for large H0*W0 / nh this fully-resident design needs an
    # H-tiled grid (halo rows) to stay under v7x's 64 MiB/TC VMEM.

    kernel = _make_unet_kernel(sizes, nh)
    out = pl.pallas_call(
        kernel,
        out_shape=jax.ShapeDtypeStruct((N, num_classes, H0 * W0), x_nchw.dtype),
        grid=(N,),
        in_specs=[
            pl.BlockSpec((1, nh, H0 * W0), lambda n: (n, 0, 0)),
            full(wcs), full(wcd), full(bc), full(wlt), full(blt),
            full(u3), full(u2), full(u1), full(s1), full(s2), full(s3),
        ],
        out_specs=pl.BlockSpec((1, num_classes, H0 * W0), lambda n: (n, 0, 0)),
        scratch_shapes=scratch,
        compiler_params=pltpu.CompilerParams(
            dimension_semantics=("parallel",)),
    )(x, wcs, wcd, bc, wlt, blt, u3, u2, u1, s1, s2, s3)
    return out.reshape(N, num_classes, H0, W0)   # NCHW, like the PyTorch module


# ----------------------------------------------------------------------------
# pure-JAX reference (verification only, full f32 precision)
# ----------------------------------------------------------------------------
def unet_forward_ref(params, x_nhwc):
    PREC = lax.Precision.HIGHEST

    def conv3x3(x, w9, b, relu=True):
        hwio = w9.reshape(3, 3, w9.shape[1], w9.shape[2])
        y = lax.conv_general_dilated(
            x, hwio, (1, 1), ((1, 1), (1, 1)),
            dimension_numbers=("NHWC", "HWIO", "NHWC"), precision=PREC)
        y = y + b.reshape(1, 1, 1, -1)
        return jnp.maximum(y, 0.0) if relu else y

    def dconv(x, p):
        (w1, b1), (w2, b2) = p
        return conv3x3(conv3x3(x, w1, b1), w2, b2)

    def pool(x):
        return lax.reduce_window(x, -jnp.inf, lax.max,
                                 (1, 2, 2, 1), (1, 2, 2, 1), "VALID")

    def up(x):
        _, H, W, _ = x.shape
        A = jnp.asarray(bilinear_matrix(H, 2 * H))
        B = jnp.asarray(bilinear_matrix(W, 2 * W))
        return jnp.einsum("ih,jw,nhwc->nijc", A, B, x, precision=PREC)

    c1 = dconv(x_nhwc, params["down1"]); x = pool(c1)
    c2 = dconv(x, params["down2"]); x = pool(c2)
    c3 = dconv(x, params["down3"]); x = pool(c3)
    x = dconv(x, params["down4"])
    x = up(x); x = dconv(jnp.concatenate([x, c3], -1), params["up3"])
    x = up(x); x = dconv(jnp.concatenate([x, c2], -1), params["up2"])
    x = up(x); x = dconv(jnp.concatenate([x, c1], -1), params["up1"])
    wl, bl = params["last"]
    return jnp.einsum("nhwc,cd->nhwd", x, wl, precision=PREC) + bl.reshape(1, 1, 1, -1)


def init_params(key, nh, num_classes):
    def conv_p(k, cin, cout):
        k1, k2 = jax.random.split(k)
        w = jax.random.normal(k1, (9, cin, cout), jnp.float32) * np.sqrt(2.0 / (9 * cin))
        b = jax.random.normal(k2, (1, cout), jnp.float32) * 0.01
        return w, b

    ks = jax.random.split(key, 16)
    return {
        "down1": (conv_p(ks[0], 3, nh), conv_p(ks[1], nh, nh)),
        "down2": (conv_p(ks[2], nh, nh), conv_p(ks[3], nh, nh)),
        "down3": (conv_p(ks[4], nh, nh), conv_p(ks[5], nh, nh)),
        "down4": (conv_p(ks[6], nh, nh), conv_p(ks[7], nh, nh)),
        "up3": (conv_p(ks[8], 2 * nh, nh), conv_p(ks[9], nh, nh)),
        "up2": (conv_p(ks[10], 2 * nh, nh), conv_p(ks[11], nh, nh)),
        "up1": (conv_p(ks[12], 2 * nh, nh), conv_p(ks[13], nh, nh)),
        "last": (jax.random.normal(ks[14], (nh, num_classes), jnp.float32) * np.sqrt(1.0 / nh),
                 jax.random.normal(ks[15], (1, num_classes), jnp.float32) * 0.01),
    }


if __name__ == "__main__":
    nh, num_classes = 8, 4
    key = jax.random.PRNGKey(0)
    kp, kx = jax.random.split(key)
    params = init_params(kp, nh, num_classes)

    x_nchw = jax.random.normal(kx, (2, 3, 16, 16), jnp.float32)   # torch-style NCHW

    out_nchw = jax.block_until_ready(unet_forward_pallas(params, x_nchw))
    ref_nhwc = jax.block_until_ready(
        unet_forward_ref(params, jnp.transpose(x_nchw, (0, 2, 3, 1))))
    ref_nchw = jnp.transpose(ref_nhwc, (0, 3, 1, 2))

    assert out_nchw.shape == (2, num_classes, 16, 16)
    assert bool(jnp.all(jnp.isfinite(out_nchw)))
    err = float(jnp.max(jnp.abs(out_nchw - ref_nchw)))
    scale = max(1.0, float(jnp.max(jnp.abs(ref_nchw))))
    assert err <= 5e-2 * scale, f"max abs err {err} (scale {scale})"
    print("KERNEL_OK")
</pallas_src>

<mosaic_0001>
module attributes {stable_mosaic.version = 11 : i64} {
  func.func @kernel(%arg0: i32, %arg1: memref<1x8x256xf32, #tpu.memory_space<vmem>>, %arg2: memref<11x8x72xf32, #tpu.memory_space<vmem>>, %arg3: memref<3x8x144xf32, #tpu.memory_space<vmem>>, %arg4: memref<8x14xf32, #tpu.memory_space<vmem>>, %arg5: memref<4x8xf32, #tpu.memory_space<vmem>>, %arg6: memref<4x1xf32, #tpu.memory_space<vmem>>, %arg7: memref<4x16xf32, #tpu.memory_space<vmem>>, %arg8: memref<16x64xf32, #tpu.memory_space<vmem>>, %arg9: memref<64x256xf32, #tpu.memory_space<vmem>>, %arg10: memref<256x64xf32, #tpu.memory_space<vmem>>, %arg11: memref<64x16xf32, #tpu.memory_space<vmem>>, %arg12: memref<16x4xf32, #tpu.memory_space<vmem>>, %arg13: memref<1x4x256xf32, #tpu.memory_space<vmem>>, %arg14: memref<8x401xf32, #tpu.memory_space<vmem>>, %arg15: memref<8x201xf32, #tpu.memory_space<vmem>>, %arg16: memref<8x149xf32, #tpu.memory_space<vmem>>, %arg17: memref<8x135xf32, #tpu.memory_space<vmem>>, %arg18: memref<144x256xf32, #tpu.memory_space<vmem>>) attributes {dimension_semantics = [#tpu.dimension_semantics<parallel>], iteration_bounds = array<i64: 2>, scalar_prefetch = 0 : i64, scratch_operands = 5 : i64, tpu.core_type = #tpu.core_type<tc>, window_params = [{transform_indices = @transform_0, window_bounds = array<i64: 1, 8, 256>}, {pipeline_mode = #tpu.pipeline_mode<synchronous>, transform_indices = @transform_1, window_bounds = array<i64: 11, 8, 72>}, {pipeline_mode = #tpu.pipeline_mode<synchronous>, transform_indices = @transform_2, window_bounds = array<i64: 3, 8, 144>}, {pipeline_mode = #tpu.pipeline_mode<synchronous>, transform_indices = @transform_3, window_bounds = array<i64: 8, 14>}, {pipeline_mode = #tpu.pipeline_mode<synchronous>, transform_indices = @transform_4, window_bounds = array<i64: 4, 8>}, {pipeline_mode = #tpu.pipeline_mode<synchronous>, transform_indices = @transform_5, window_bounds = array<i64: 4, 1>}, {pipeline_mode = #tpu.pipeline_mode<synchronous>, transform_indices = @transform_6, window_bounds = array<i64: 4, 16>}, {pipeline_mode = #tpu.pipeline_mode<synchronous>, transform_indices = @transform_7, window_bounds = array<i64: 16, 64>}, {pipeline_mode = #tpu.pipeline_mode<synchronous>, transform_indices = @transform_8, window_bounds = array<i64: 64, 256>}, {pipeline_mode = #tpu.pipeline_mode<synchronous>, transform_indices = @transform_9, window_bounds = array<i64: 256, 64>}, {pipeline_mode = #tpu.pipeline_mode<synchronous>, transform_indices = @transform_10, window_bounds = array<i64: 64, 16>}, {pipeline_mode = #tpu.pipeline_mode<synchronous>, transform_indices = @transform_11, window_bounds = array<i64: 16, 4>}, {transform_indices = @transform_12, window_bounds = array<i64: 1, 4, 256>}]} {
    %cst = arith.constant 0.000000e+00 : f32
    %0 = vector.broadcast %cst : f32 to vector<8x128xf32>
    %c0 = arith.constant 0 : index
    %c0_0 = arith.constant 0 : index
    %1 = vector.load %arg14[%c0, %c0_0] : memref<8x401xf32, #tpu.memory_space<vmem>>, vector<8x128xf32>
    tpu.vector_store %arg14[%c0, %c0_0], %0 {strides = array<i32>} : memref<8x401xf32, #tpu.memory_space<vmem>>, vector<8x128xf32>,
    %cst_1 = arith.constant 0.000000e+00 : f32
    %2 = vector.broadcast %cst_1 : f32 to vector<8x17xf32>
    %c0_2 = arith.constant 0 : index
    %c384 = arith.constant 384 : index
    %3 = vector.load %arg14[%c0_2, %c384] : memref<8x401xf32, #tpu.memory_space<vmem>>, vector<8x17xf32>
    tpu.vector_store %arg14[%c0_2, %c384], %2 {strides = array<i32>} : memref<8x401xf32, #tpu.memory_space<vmem>>, vector<8x17xf32>,
    %cst_3 = arith.constant 0.000000e+00 : f32
    %4 = vector.broadcast %cst_3 : f32 to vector<8x128xf32>
    %c0_4 = arith.constant 0 : index
    %c0_5 = arith.constant 0 : index
    %5 = vector.load %arg15[%c0_4, %c0_5] : memref<8x201xf32, #tpu.memory_space<vmem>>, vector<8x128xf32>
    tpu.vector_store %arg15[%c0_4, %c0_5], %4 {strides = array<i32>} : memref<8x201xf32, #tpu.memory_space<vmem>>, vector<8x128xf32>,
    %cst_6 = arith.constant 0.000000e+00 : f32
    %6 = vector.broadcast %cst_6 : f32 to vector<8x9xf32>
    %c0_7 = arith.constant 0 : index
    %c192 = arith.constant 192 : index
    %7 = vector.load %arg15[%c0_7, %c192] : memref<8x201xf32, #tpu.memory_space<vmem>>, vector<8x9xf32>
    tpu.vector_store %arg15[%c0_7, %c192], %6 {strides = array<i32>} : memref<8x201xf32, #tpu.memory_space<vmem>>, vector<8x9xf32>,
    %cst_8 = arith.constant 0.000000e+00 : f32
    %8 = vector.broadcast %cst_8 : f32 to vector<8x128xf32>
    %c0_9 = arith.constant 0 : index
    %c0_10 = arith.constant 0 : index
    %9 = vector.load %arg16[%c0_9, %c0_10] : memref<8x149xf32, #tpu.memory_space<vmem>>, vector<8x128xf32>
    tpu.vector_store %arg16[%c0_9, %c0_10], %8 {strides = array<i32>} : memref<8x149xf32, #tpu.memory_space<vmem>>, vector<8x128xf32>,
    %cst_11 = arith.constant 0.000000e+00 : f32
    %10 = vector.broadcast %cst_11 : f32 to vector<8x5xf32>
    %c0_12 = arith.constant 0 : index
    %c144 = arith.constant 144 : index
    %11 = vector.load %arg16[%c0_12, %c144] : memref<8x149xf32, #tpu.memory_space<vmem>>, vector<8x5xf32>
    tpu.vector_store %arg16[%c0_12, %c144], %10 {strides = array<i32>} : memref<8x149xf32, #tpu.memory_space<vmem>>, vector<8x5xf32>,
    %cst_13 = arith.constant 0.000000e+00 : f32
    %12 = vector.broadcast %cst_13 : f32 to vector<8x128xf32>
    %c0_14 = arith.constant 0 : index
    %c0_15 = arith.constant 0 : index
    %13 = vector.load %arg17[%c0_14, %c0_15] : memref<8x135xf32, #tpu.memory_space<vmem>>, vector<8x128xf32>
    tpu.vector_store %arg17[%c0_14, %c0_15], %12 {strides = array<i32>} : memref<8x135xf32, #tpu.memory_space<vmem>>, vector<8x128xf32>,
    %cst_16 = arith.constant 0.000000e+00 : f32
    %14 = vector.broadcast %cst_16 : f32 to vector<8x3xf32>
    %c0_17 = arith.constant 0 : index
    %c132 = arith.constant 132 : index
    %15 = vector.load %arg17[%c0_17, %c132] : memref<8x135xf32, #tpu.memory_space<vmem>>, vector<8x3xf32>
    tpu.vector_store %arg17[%c0_17, %c132], %14 {strides = array<i32>} : memref<8x135xf32, #tpu.memory_space<vmem>>, vector<8x3xf32>,
    %c0_18 = arith.constant 0 : index
    %c0_19 = arith.constant 0 : index
    %c0_20 = arith.constant 0 : index
    %16 = vector.load %arg1[%c0_18, %c0_19, %c0_20] : memref<1x8x256xf32, #tpu.memory_space<vmem>>, vector<1x8x256xf32>
    %17 = vector.shape_cast %16 : vector<1x8x256xf32> to vector<8x256xf32>
    %c0_21 = arith.constant 0 : index
    %c0_22 = arith.constant 0 : index
    %c0_23 = arith.constant 0 : index
    %18 = vector.load %arg2[%c0_21, %c0_22, %c0_23] : memref<11x8x72xf32, #tpu.memory_space<vmem>>, vector<1x8x72xf32>
    %19 = vector.shape_cast %18 : vector<1x8x72xf32> to vector<8x72xf32>
    %c0_24 = arith.constant 0 : index
    %c128 = arith.constant 128 : index
    %20 = vector.load %arg14[%c0_24, %c128] : memref<8x401xf32, #tpu.memory_space<vmem>>, vector<8x256xf32>
    tpu.vector_store %arg14[%c0_24, %c128], %17 {strides = array<i32>} : memref<8x401xf32, #tpu.memory_space<vmem>>, vector<8x256xf32>,
    %21 = tpu.iota {dimensions = array<i32: 1>} : vector<8x256xi32>
    %c15_i32 = arith.constant 15 : i32
    %22 = vector.broadcast %c15_i32 : i32 to vector<8x256xi32>
    %23 = arith.andi %21, %22 : vector<8x256xi32>
    %c0_i32 = arith.constant 0 : i32
    %24 = vector.broadcast %c0_i32 : i32 to vector<8x256xi32>
    %25 = arith.cmpi ne, %23, %24 : vector<8x256xi32>
    %c15_i32_25 = arith.constant 15 : i32
    %26 = vector.broadcast %c15_i32_25 : i32 to vector<8x256xi32>
    %27 = arith.cmpi ne, %23, %26 : vector<8x256xi32>
    %c0_26 = arith.constant 0 : index
    %c111 = arith.constant 111 : index
    %28 = vector.load %arg14[%c0_26, %c111] : memref<8x401xf32, #tpu.memory_space<vmem>>, vector<8x256xf32>
    %cst_27 = arith.constant 0.000000e+00 : f32
    %29 = vector.broadcast %cst_27 : f32 to vector<8x256xf32>
    %30 = arith.select %25, %28, %29 : vector<8x256xi1>, vector<8x256xf32>
    %c0_28 = arith.constant 0 : index
    %c0_29 = arith.constant 0 : index
    %31 = vector.load %arg18[%c0_28, %c0_29] : memref<144x256xf32, #tpu.memory_space<vmem>>, vector<8x256xf32>
    tpu.vector_store %arg18[%c0_28, %c0_29], %30 {strides = array<i32>} : memref<144x256xf32, #tpu.memory_space<vmem>>, vector<8x256xf32>,
    %c0_30 = arith.constant 0 : index
    %c112 = arith.constant 112 : index
    %32 = vector.load %arg14[%c0_30, %c112] : memref<8x401xf32, #tpu.memory_space<vmem>>, vector<8x256xf32>
    %c8 = arith.constant 8 : index
    %c0_31 = arith.constant 0 : index
    %33 = vector.load %arg18[%c8, %c0_31] : memref<144x256xf32, #tpu.memory_space<vmem>>, vector<8x256xf32>
    tpu.vector_store %arg18[%c8, %c0_31], %32 {strides = array<i32>} : memref<144x256xf32, #tpu.memory_space<vmem>>, vector<8x256xf32>,
    %c0_32 = arith.constant 0 : index
    %c113 = arith.constant 113 : index
    %34 = vector.load %arg14[%c0_32, %c113] : memref<8x401xf32, #tpu.memory_space<vmem>>, vector<8x256xf32>
    %cst_33 = arith.constant 0.000000e+00 : f32
    %35 = vector.broadcast %cst_33 : f32 to vector<8x256xf32>
    %36 = arith.select %27, %34, %35 : vector<8x256xi1>, vector<8x256xf32>
    %c16 = arith.constant 16 : index
    %c0_34 = arith.constant 0 : index
    %37 = vector.load %arg18[%c16, %c0_34] : memref<144x256xf32, #tpu.memory_space<vmem>>, vector<8x256xf32>
    tpu.vector_store %arg18[%c16, %c0_34], %36 {strides = array<i32>} : memref<144x256xf32, #tpu.memory_space<vmem>>, vector<8x256xf32>,
    %c0_35 = arith.constant 0 : index
    %c127 = arith.constant 127 : index
    %38 = vector.load %arg14[%c0_35, %c127] : memref<8x401xf32, #tpu.memory_space<vmem>>, vector<8x256xf32>
    %cst_36 = arith.constant 0.000000e+00 : f32
    %39 = vector.broadcast %cst_36 : f32 to vector<8x256xf32>
    %40 = arith.select %25, %38, %39 : vector<8x256xi1>, vector<8x256xf32>
    %c24 = arith.constant 24 : index
    %c0_37 = arith.constant 0 : index
    %41 = vector.load %arg18[%c24, %c0_37] : memref<144x256xf32, #tpu.memory_space<vmem>>, vector<8x256xf32>
    tpu.vector_store %arg18[%c24, %c0_37], %40 {strides = array<i32>} : memref<144x256xf32, #tpu.memory_space<vmem>>, vector<8x256xf32>,
    %c0_38 = arith.constant 0 : index
    %c128_39 = arith.constant 128 : index
    %42 = vector.load %arg14[%c0_38, %c128_39] : memref<8x401xf32, #tpu.memory_space<vmem>>, vector<8x256xf32>
    %c32 = arith.constant 32 : index
    %c0_40 = arith.constant 0 : index
    %43 = vector.load %arg18[%c32, %c0_40] : memref<144x256xf32, #tpu.memory_space<vmem>>, vector<8x256xf32>
    tpu.vector_store %arg18[%c32, %c0_40], %42 {strides = array<i32>} : memref<144x256xf32, #tpu.memory_space<vmem>>, vector<8x256xf32>,
    %c0_41 = arith.constant 0 : index
    %c129 = arith.constant 129 : index
    %44 = vector.load %arg14[%c0_41, %c129] : memref<8x401xf32, #tpu.memory_space<vmem>>, vector<8x256xf32>
    %cst_42 = arith.constant 0.000000e+00 : f32
    %45 = vector.broadcast %cst_42 : f32 to vector<8x256xf32>
    %46 = arith.select %27, %44, %45 : vector<8x256xi1>, vector<8x256xf32>
    %c40 = arith.constant 40 : index
    %c0_43 = arith.constant 0 : index
    %47 = vector.load %arg18[%c40, %c0_43] : memref<144x256xf32, #tpu.memory_space<vmem>>, vector<8x256xf32>
    tpu.vector_store %arg18[%c40, %c0_43], %46 {strides = array<i32>} : memref<144x256xf32, #tpu.memory_space<vmem>>, vector<8x256xf32>,
    %c0_44 = arith.constant 0 : index
    %c143 = arith.constant 143 : index
    %48 = vector.load %arg14[%c0_44, %c143] : memref<8x401xf32, #tpu.memory_space<vmem>>, vector<8x256xf32>
    %cst_45 = arith.constant 0.000000e+00 : f32
    %49 = vector.broadcast %cst_45 : f32 to vector<8x256xf32>
    %50 = arith.select %25, %48, %49 : vector<8x256xi1>, vector<8x256xf32>
    %c48 = arith.constant 48 : index
    %c0_46 = arith.constant 0 : index
    %51 = vector.load %arg18[%c48, %c0_46] : memref<144x256xf32, #tpu.memory_space<vmem>>, vector<8x256xf32>
    tpu.vector_store %arg18[%c48, %c0_46], %50 {strides = array<i32>} : memref<144x256xf32, #tpu.memory_space<vmem>>, vector<8x256xf32>,
    %c0_47 = arith.constant 0 : index
    %c144_48 = arith.constant 144 : index
    %52 = vector.load %arg14[%c0_47, %c144_48] : memref<8x401xf32, #tpu.memory_space<vmem>>, vector<8x256xf32>
    %c56 = arith.constant 56 : index
    %c0_49 = arith.constant 0 : index
    %53 = vector.load %arg18[%c56, %c0_49] : memref<144x256xf32, #tpu.memory_space<vmem>>, vector<8x256xf32>
    tpu.vector_store %arg18[%c56, %c0_49], %52 {strides = array<i32>} : memref<144x256xf32, #tpu.memory_space<vmem>>, vector<8x256xf32>,
    %c0_50 = arith.constant 0 : index
    %c145 = arith.constant 145 : index
    %54 = vector.load %arg14[%c0_50, %c145] : memref<8x401xf32, #tpu.memory_space<vmem>>, vector<8x256xf32>
    %cst_51 = arith.constant 0.000000e+00 : f32
    %55 = vector.broadcast %cst_51 : f32 to vector<8x256xf32>
    %56 = arith.select %27, %54, %55 : vector<8x256xi1>, vector<8x256xf32>
    %c64 = arith.constant 64 : index
    %c0_52 = arith.constant 0 : index
    %57 = vector.load %arg18[%c64, %c0_52] : memref<144x256xf32, #tpu.memory_space<vmem>>, vector<8x256xf32>
    tpu.vector_store %arg18[%c64, %c0_52], %56 {strides = array<i32>} : memref<144x256xf32, #tpu.memory_space<vmem>>, vector<8x256xf32>,
    %c0_53 = arith.constant 0 : index
    %c0_54 = arith.constant 0 : index
    %58 = vector.load %arg18[%c0_53, %c0_54] : memref<144x256xf32, #tpu.memory_space<vmem>>, vector<72x256xf32>
    %cst_55 = arith.constant dense<0.000000e+00> : vector<8x256xf32>
    %59 = tpu.matmul %19, %58, %cst_55 {dimension_numbers = #tpu.dot_dimension_numbers<[1], [0], [0], [1], [0, 0, 1, 1], [], []>} : vector<8x72xf32>, vector<72x256xf32>, vector<8x256xf32> -> vector<8x256xf32>
    %c0_56 = arith.constant 0 : index
    %c0_57 = arith.constant 0 : index
    %60 = vector.load %arg4[%c0_56, %c0_57] : memref<8x14xf32, #tpu.memory_space<vmem>>, vector<8x1xf32>
    %61 = vector.broadcast %60 : vector<8x1xf32> to vector<8x256xf32>
    %62 = arith.addf %59, %61 : vector<8x256xf32>
    %cst_58 = arith.constant 0.000000e+00 : f32
    %63 = vector.broadcast %cst_58 : f32 to vector<8x256xf32>
    %64 = arith.maximumf %62, %63 : vector<8x256xf32>
    %c1 = arith.constant 1 : index
    %c0_59 = arith.constant 0 : index
    %c0_60 = arith.constant 0 : index
    %65 = vector.load %arg2[%c1, %c0_59, %c0_60] : memref<11x8x72xf32, #tpu.memory_space<vmem>>, vector<1x8x72xf32>
    %66 = vector.shape_cast %65 : vector<1x8x72xf32> to vector<8x72xf32>
    %c0_61 = arith.constant 0 : index
    %c128_62 = arith.constant 128 : index
    %67 = vector.load %arg14[%c0_61, %c128_62] : memref<8x401xf32, #tpu.memory_space<vmem>>, vector<8x256xf32>
    tpu.vector_store %arg14[%c0_61, %c128_62], %64 {strides = array<i32>} : memref<8x401xf32, #tpu.memory_space<vmem>>, vector<8x256xf32>,
    %c0_63 = arith.constant 0 : index
    %c111_64 = arith.constant 111 : index
    %68 = vector.load %arg14[%c0_63, %c111_64] : memref<8x401xf32, #tpu.memory_space<vmem>>, vector<8x256xf32>
    %cst_65 = arith.constant 0.000000e+00 : f32
    %69 = vector.broadcast %cst_65 : f32 to vector<8x256xf32>
    %70 = arith.select %25, %68, %69 : vector<8x256xi1>, vector<8x256xf32>
    %c0_66 = arith.constant 0 : index
    %c0_67 = arith.constant 0 : index
    %71 = vector.load %arg18[%c0_66, %c0_67] : memref<144x256xf32, #tpu.memory_space<vmem>>, vector<8x256xf32>
    tpu.vector_store %arg18[%c0_66, %c0_67], %70 {strides = array<i32>} : memref<144x256xf32, #tpu.memory_space<vmem>>, vector<8x256xf32>,
    %c0_68 = arith.constant 0 : index
    %c112_69 = arith.constant 112 : index
    %72 = vector.load %arg14[%c0_68, %c112_69] : memref<8x401xf32, #tpu.memory_space<vmem>>, vector<8x256xf32>
    %c8_70 = arith.constant 8 : index
    %c0_71 = arith.constant 0 : index
    %73 = vector.load %arg18[%c8_70, %c0_71] : memref<144x256xf32, #tpu.memory_space<vmem>>, vector<8x256xf32>
    tpu.vector_store %arg18[%c8_70, %c0_71], %72 {strides = array<i32>} : memref<144x256xf32, #tpu.memory_space<vmem>>, vector<8x256xf32>,
    %c0_72 = arith.constant 0 : index
    %c113_73 = arith.constant 113 : index
    %74 = vector.load %arg14[%c0_72, %c113_73] : memref<8x401xf32, #tpu.memory_space<vmem>>, vector<8x256xf32>
    %cst_74 = arith.constant 0.000000e+00 : f32
    %75 = vector.broadcast %cst_74 : f32 to vector<8x256xf32>
    %76 = arith.select %27, %74, %75 : vector<8x256xi1>, vector<8x256xf32>
    %c16_75 = arith.constant 16 : index
    %c0_76 = arith.constant 0 : index
    %77 = vector.load %arg18[%c16_75, %c0_76] : memref<144x256xf32, #tpu.memory_space<vmem>>, vector<8x256xf32>
    tpu.vector_store %arg18[%c16_75, %c0_76], %76 {strides = array<i32>} : memref<144x256xf32, #tpu.memory_space<vmem>>, vector<8x256xf32>,
    %c0_77 = arith.constant 0 : index
    %c127_78 = arith.constant 127 : index
    %78 = vector.load %arg14[%c0_77, %c127_78] : memref<8x401xf32, #tpu.memory_space<vmem>>, vector<8x256xf32>
    %cst_79 = arith.constant 0.000000e+00 : f32
    %79 = vector.broadcast %cst_79 : f32 to vector<8x256xf32>
    %80 = arith.select %25, %78, %79 : vector<8x256xi1>, vector<8x256xf32>
    %c24_80 = arith.constant 24 : index
    %c0_81 = arith.constant 0 : index
    %81 = vector.load %arg18[%c24_80, %c0_81] : memref<144x256xf32, #tpu.memory_space<vmem>>, vector<8x256xf32>
    tpu.vector_store %arg18[%c24_80, %c0_81], %80 {strides = array<i32>} : memref<144x256xf32, #tpu.memory_space<vmem>>, vector<8x256xf32>,
    %c0_82 = arith.constant 0 : index
    %c128_83 = arith.constant 128 : index
    %82 = vector.load %arg14[%c0_82, %c128_83] : memref<8x401xf32, #tpu.memory_space<vmem>>, vector<8x256xf32>
    %c32_84 = arith.constant 32 : index
    %c0_85 = arith.constant 0 : index
    %83 = vector.load %arg18[%c32_84, %c0_85] : memref<144x256xf32, #tpu.memory_space<vmem>>, vector<8x256xf32>
    tpu.vector_store %arg18[%c32_84, %c0_85], %82 {strides = array<i32>} : memref<144x256xf32, #tpu.memory_space<vmem>>, vector<8x256xf32>,
    %c0_86 = arith.constant 0 : index
    %c129_87 = arith.constant 129 : index
    %84 = vector.load %arg14[%c0_86, %c129_87] : memref<8x401xf32, #tpu.memory_space<vmem>>, vector<8x256xf32>
    %cst_88 = arith.constant 0.000000e+00 : f32
    %85 = vector.broadcast %cst_88 : f32 to vector<8x256xf32>
    %86 = arith.select %27, %84, %85 : vector<8x256xi1>, vector<8x256xf32>
    %c40_89 = arith.constant 40 : index
    %c0_90 = arith.constant 0 : index
    %87 = vector.load %arg18[%c40_89, %c0_90] : memref<144x256xf32, #tpu.memory_space<vmem>>, vector<8x256xf32>
    tpu.vector_store %arg18[%c40_89, %c0_90], %86 {strides = array<i32>} : memref<144x256xf32, #tpu.memory_space<vmem>>, vector<8x256xf32>,
    %c0_91 = arith.constant 0 : index
    %c143_92 = arith.constant 143 : index
    %88 = vector.load %arg14[%c0_91, %c143_92] : memref<8x401xf32, #tpu.memory_space<vmem>>, vector<8x256xf32>
    %cst_93 = arith.constant 0.000000e+00 : f32
    %89 = vector.broadcast %cst_93 : f32 to vector<8x256xf32>
    %90 = arith.select %25, %88, %89 : vector<8x256xi1>, vector<8x256xf32>
    %c48_94 = arith.constant 48 : index
    %c0_95 = arith.constant 0 : index
    %91 = vector.load %arg18[%c48_94, %c0_95] : memref<144x256xf32, #tpu.memory_space<vmem>>, vector<8x256xf32>
    tpu.vector_store %arg18[%c48_94, %c0_95], %90 {strides = array<i32>} : memref<144x256xf32, #tpu.memory_space<vmem>>, vector<8x256xf32>,
    %c0_96 = arith.constant 0 : index
    %c144_97 = arith.constant 144 : index
    %92 = vector.load %arg14[%c0_96, %c144_97] : memref<8x401xf32, #tpu.memory_space<vmem>>, vector<8x256xf32>
    %c56_98 = arith.constant 56 : index
    %c0_99 = arith.constant 0 : index
    %93 = vector.load %arg18[%c56_98, %c0_99] : memref<144x256xf32, #tpu.memory_space<vmem>>, vector<8x256xf32>
    tpu.vector_store %arg18[%c56_98, %c0_99], %92 {strides = array<i32>} : memref<144x256xf32, #tpu.memory_space<vmem>>, vector<8x256xf32>,
    %c0_100 = arith.constant 0 : index
    %c145_101 = arith.constant 145 : index
    %94 = vector.load %arg14[%c0_100, %c145_101] : memref<8x401xf32, #tpu.memory_space<vmem>>, vector<8x256xf32>
    %cst_102 = arith.constant 0.000000e+00 : f32
    %95 = vector.broadcast %cst_102 : f32 to vector<8x256xf32>
    %96 = arith.select %27, %94, %95 : vector<8x256xi1>, vector<8x256xf32>
    %c64_103 = arith.constant 64 : index
    %c0_104 = arith.constant 0 : index
    %97 = vector.load %arg18[%c64_103, %c0_104] : memref<144x256xf32, #tpu.memory_space<vmem>>, vector<8x256xf32>
    tpu.vector_store %arg18[%c64_103, %c0_104], %96 {strides = array<i32>} : memref<144x256xf32, #tpu.memory_space<vmem>>, vector<8x256xf32>,
    %c0_105 = arith.constant 0 : index
    %c0_106 = arith.constant 0 : index
    %98 = vector.load %arg18[%c0_105, %c0_106] : memref<144x256xf32, #tpu.memory_space<vmem>>, vector<72x256xf32>
    %cst_107 = arith.constant dense<0.000000e+00> : vector<8x256xf32>
    %99 = tpu.matmul %66, %98, %cst_107 {dimension_numbers = #tpu.dot_dimension_numbers<[1], [0], [0], [1], [0, 0, 1, 1], [], []>} : vector<8x72xf32>, vector<72x256xf32>, vector<8x256xf32> -> vector<8x256xf32>
    %c0_108 = arith.constant 0 : index
    %c1_109 = arith.constant 1 : index
    %100 = vector.load %arg4[%c0_108, %c1_109] : memref<8x14xf32, #tpu.memory_space<vmem>>, vector<8x1xf32>
    %101 = vector.broadcast %100 : vector<8x1xf32> to vector<8x256xf32>
    %102 = arith.addf %99, %101 : vector<8x256xf32>
    %cst_110 = arith.constant 0.000000e+00 : f32
    %103 = vector.broadcast %cst_110 : f32 to vector<8x256xf32>
    %104 = arith.maximumf %102, %103 : vector<8x256xf32>
    %c0_111 = arith.constant 0 : index
    %c128_112 = arith.constant 128 : index
    %105 = vector.load %arg14[%c0_111, %c128_112] : memref<8x401xf32, #tpu.memory_space<vmem>>, vector<8x256xf32>
    tpu.vector_store %arg14[%c0_111, %c128_112], %104 {strides = array<i32>} : memref<8x401xf32, #tpu.memory_space<vmem>>, vector<8x256xf32>,
    %c0_113 = arith.constant 0 : index
    %c129_114 = arith.constant 129 : index
    %106 = vector.load %arg14[%c0_113, %c129_114] : memref<8x401xf32, #tpu.memory_space<vmem>>, vector<8x256xf32>
    %c0_115 = arith.constant 0 : index
    %c144_116 = arith.constant 144 : index
    %107 = vector.load %arg14[%c0_115, %c144_116] : memref<8x401xf32, #tpu.memory_space<vmem>>, vector<8x256xf32>
    %c0_117 = arith.constant 0 : index
    %c145_118 = arith.constant 145 : index
    %108 = vector.load %arg14[%c0_117, %c145_118] : memref<8x401xf32, #tpu.memory_space<vmem>>, vector<8x256xf32>
    %109 = arith.maximumf %104, %106 : vector<8x256xf32>
    %110 = arith.maximumf %107, %108 : vector<8x256xf32>
    %111 = arith.maximumf %109, %110 : vector<8x256xf32>
    %c0_119 = arith.constant 0 : index
    %c0_120 = arith.constant 0 : index
    %112 = vector.load %arg10[%c0_119, %c0_120] : memref<256x64xf32, #tpu.memory_space<vmem>>, vector<256x64xf32>
    %cst_121 = arith.constant dense<0.000000e+00> : vector<8x64xf32>
    %113 = tpu.matmul %111, %112, %cst_121 {dimension_numbers = #tpu.dot_dimension_numbers<[1], [0], [0], [1], [0, 0, 1, 1], [], []>} : vector<8x256xf32>, vector<256x64xf32>, vector<8x64xf32> -> vector<8x64xf32>
    %c0_122 = arith.constant 0 : index
    %c128_123 = arith.constant 128 : index
    %114 = vector.load %arg15[%c0_122, %c128_123] : memref<8x201xf32, #tpu.memory_space<vmem>>, vector<8x64xf32>
    tpu.vector_store %arg15[%c0_122, %c128_123], %113 {strides = array<i32>} : memref<8x201xf32, #tpu.memory_space<vmem>>, vector<8x64xf32>,
    %c2 = arith.constant 2 : index
    %c0_124 = arith.constant 0 : index
    %c0_125 = arith.constant 0 : index
    %115 = vector.load %arg2[%c2, %c0_124, %c0_125] : memref<11x8x72xf32, #tpu.memory_space<vmem>>, vector<1x8x72xf32>
    %116 = vector.shape_cast %115 : vector<1x8x72xf32> to vector<8x72xf32>
    %117 = tpu.iota {dimensions = array<i32: 1>} : vector<8x64xi32>
    %c7_i32 = arith.constant 7 : i32
    %118 = vector.broadcast %c7_i32 : i32 to vector<8x64xi32>
    %119 = arith.andi %117, %118 : vector<8x64xi32>
    %c0_i32_126 = arith.constant 0 : i32
    %120 = vector.broadcast %c0_i32_126 : i32 to vector<8x64xi32>
    %121 = arith.cmpi ne, %119, %120 : vector<8x64xi32>
    %c7_i32_127 = arith.constant 7 : i32
    %122 = vector.broadcast %c7_i32_127 : i32 to vector<8x64xi32>
    %123 = arith.cmpi ne, %119, %122 : vector<8x64xi32>
    %c0_128 = arith.constant 0 : index
    %c119 = arith.constant 119 : index
    %124 = vector.load %arg15[%c0_128, %c119] : memref<8x201xf32, #tpu.memory_space<vmem>>, vector<8x64xf32>
    %cst_129 = arith.constant 0.000000e+00 : f32
    %125 = vector.broadcast %cst_129 : f32 to vector<8x64xf32>
    %126 = arith.select %121, %124, %125 : vector<8x64xi1>, vector<8x64xf32>
    %c0_130 = arith.constant 0 : index
    %c0_131 = arith.constant 0 : index
    %127 = vector.load %arg18[%c0_130, %c0_131] : memref<144x256xf32, #tpu.memory_space<vmem>>, vector<8x64xf32>
    tpu.vector_store %arg18[%c0_130, %c0_131], %126 {strides = array<i32>} : memref<144x256xf32, #tpu.memory_space<vmem>>, vector<8x64xf32>,
    %c0_132 = arith.constant 0 : index
    %c120 = arith.constant 120 : index
    %128 = vector.load %arg15[%c0_132, %c120] : memref<8x201xf32, #tpu.memory_space<vmem>>, vector<8x64xf32>
    %c8_133 = arith.constant 8 : index
    %c0_134 = arith.constant 0 : index
    %129 = vector.load %arg18[%c8_133, %c0_134] : memref<144x256xf32, #tpu.memory_space<vmem>>, vector<8x64xf32>
    tpu.vector_store %arg18[%c8_133, %c0_134], %128 {strides = array<i32>} : memref<144x256xf32, #tpu.memory_space<vmem>>, vector<8x64xf32>,
    %c0_135 = arith.constant 0 : index
    %c121 = arith.constant 121 : index
    %130 = vector.load %arg15[%c0_135, %c121] : memref<8x201xf32, #tpu.memory_space<vmem>>, vector<8x64xf32>
    %cst_136 = arith.constant 0.000000e+00 : f32
    %131 = vector.broadcast %cst_136 : f32 to vector<8x64xf32>
    %132 = arith.select %123, %130, %131 : vector<8x64xi1>, vector<8x64xf32>
    %c16_137 = arith.constant 16 : index
    %c0_138 = arith.constant 0 : index
    %133 = vector.load %arg18[%c16_137, %c0_138] : memref<144x256xf32, #tpu.memory_space<vmem>>, vector<8x64xf32>
    tpu.vector_store %arg18[%c16_137, %c0_138], %132 {strides = array<i32>} : memref<144x256xf32, #tpu.memory_space<vmem>>, vector<8x64xf32>,
    %c0_139 = arith.constant 0 : index
    %c127_140 = arith.constant 127 : index
    %134 = vector.load %arg15[%c0_139, %c127_140] : memref<8x201xf32, #tpu.memory_space<vmem>>, vector<8x64xf32>
    %cst_141 = arith.constant 0.000000e+00 : f32
    %135 = vector.broadcast %cst_141 : f32 to vector<8x64xf32>
    %136 = arith.select %121, %134, %135 : vector<8x64xi1>, vector<8x64xf32>
    %c24_142 = arith.constant 24 : index
    %c0_143 = arith.constant 0 : index
    %137 = vector.load %arg18[%c24_142, %c0_143] : memref<144x256xf32, #tpu.memory_space<vmem>>, vector<8x64xf32>
    tpu.vector_store %arg18[%c24_142, %c0_143], %136 {strides = array<i32>} : memref<144x256xf32, #tpu.memory_space<vmem>>, vector<8x64xf32>,
    %c0_144 = arith.constant 0 : index
    %c128_145 = arith.constant 128 : index
    %138 = vector.load %arg15[%c0_144, %c128_145] : memref<8x201xf32, #tpu.memory_space<vmem>>, vector<8x64xf32>
    %c32_146 = arith.constant 32 : index
    %c0_147 = arith.constant 0 : index
    %139 = vector.load %arg18[%c32_146, %c0_147] : memref<144x256xf32, #tpu.memory_space<vmem>>, vector<8x64xf32>
    tpu.vector_store %arg18[%c32_146, %c0_147], %138 {strides = array<i32>} : memref<144x256xf32, #tpu.memory_space<vmem>>, vector<8x64xf32>,
    %c0_148 = arith.constant 0 : index
    %c129_149 = arith.constant 129 : index
    %140 = vector.load %arg15[%c0_148, %c129_149] : memref<8x201xf32, #tpu.memory_space<vmem>>, vector<8x64xf32>
    %cst_150 = arith.constant 0.000000e+00 : f32
    %141 = vector.broadcast %cst_150 : f32 to vector<8x64xf32>
    %142 = arith.select %123, %140, %141 : vector<8x64xi1>, vector<8x64xf32>
    %c40_151 = arith.constant 40 : index
    %c0_152 = arith.constant 0 : index
    %143 = vector.load %arg18[%c40_151, %c0_152] : memref<144x256xf32, #tpu.memory_space<vmem>>, vector<8x64xf32>
    tpu.vector_store %arg18[%c40_151, %c0_152], %142 {strides = array<i32>} : memref<144x256xf32, #tpu.memory_space<vmem>>, vector<8x64xf32>,
    %c0_153 = arith.constant 0 : index
    %c135 = arith.constant 135 : index
    %144 = vector.load %arg15[%c0_153, %c135] : memref<8x201xf32, #tpu.memory_space<vmem>>, vector<8x64xf32>
    %cst_154 = arith.constant 0.000000e+00 : f32
    %145 = vector.broadcast %cst_154 : f32 to vector<8x64xf32>
    %146 = arith.select %121, %144, %145 : vector<8x64xi1>, vector<8x64xf32>
    %c48_155 = arith.constant 48 : index
    %c0_156 = arith.constant 0 : index
    %147 = vector.load %arg18[%c48_155, %c0_156] : memref<144x256xf32, #tpu.memory_space<vmem>>, vector<8x64xf32>
    tpu.vector_store %arg18[%c48_155, %c0_156], %146 {strides = array<i32>} : memref<144x256xf32, #tpu.memory_space<vmem>>, vector<8x64xf32>,
    %c0_157 = arith.constant 0 : index
    %c136 = arith.constant 136 : index
    %148 = vector.load %arg15[%c0_157, %c136] : memref<8x201xf32, #tpu.memory_space<vmem>>, vector<8x64xf32>
    %c56_158 = arith.constant 56 : index
    %c0_159 = arith.constant 0 : index
    %149 = vector.load %arg18[%c56_158, %c0_159] : memref<144x256xf32, #tpu.memory_space<vmem>>, vector<8x64xf32>
    tpu.vector_store %arg18[%c56_158, %c0_159], %148 {strides = array<i32>} : memref<144x256xf32, #tpu.memory_space<vmem>>, vector<8x64xf32>,
    %c0_160 = arith.constant 0 : index
    %c137 = arith.constant 137 : index
    %150 = vector.load %arg15[%c0_160, %c137] : memref<8x201xf32, #tpu.memory_space<vmem>>, vector<8x64xf32>
    %cst_161 = arith.constant 0.000000e+00 : f32
    %151 = vector.broadcast %cst_161 : f32 to vector<8x64xf32>
    %152 = arith.select %123, %150, %151 : vector<8x64xi1>, vector<8x64xf32>
    %c64_162 = arith.constant 64 : index
    %c0_163 = arith.constant 0 : index
    %153 = vector.load %arg18[%c64_162, %c0_163] : memref<144x256xf32, #tpu.memory_space<vmem>>, vector<8x64xf32>
    tpu.vector_store %arg18[%c64_162, %c0_163], %152 {strides = array<i32>} : memref<144x256xf32, #tpu.memory_space<vmem>>, vector<8x64xf32>,
    %c0_164 = arith.constant 0 : index
    %c0_165 = arith.constant 0 : index
    %154 = vector.load %arg18[%c0_164, %c0_165] : memref<144x256xf32, #tpu.memory_space<vmem>>, vector<72x64xf32>
    %cst_166 = arith.constant dense<0.000000e+00> : vector<8x64xf32>
    %155 = tpu.matmul %116, %154, %cst_166 {dimension_numbers = #tpu.dot_dimension_numbers<[1], [0], [0], [1], [0, 0, 1, 1], [], []>} : vector<8x72xf32>, vector<72x64xf32>, vector<8x64xf32> -> vector<8x64xf32>
    %c0_167 = arith.constant 0 : index
    %c2_168 = arith.constant 2 : index
    %156 = vector.load %arg4[%c0_167, %c2_168] : memref<8x14xf32, #tpu.memory_space<vmem>>, vector<8x1xf32>
    %157 = vector.broadcast %156 : vector<8x1xf32> to vector<8x64xf32>
    %158 = arith.addf %155, %157 : vector<8x64xf32>
    %cst_169 = arith.constant 0.000000e+00 : f32
    %159 = vector.broadcast %cst_169 : f32 to vector<8x64xf32>
    %160 = arith.maximumf %158, %159 : vector<8x64xf32>
    %c3 = arith.constant 3 : index
    %c0_170 = arith.constant 0 : index
    %c0_171 = arith.constant 0 : index
    %161 = vector.load %arg2[%c3, %c0_170, %c0_171] : memref<11x8x72xf32, #tpu.memory_space<vmem>>, vector<1x8x72xf32>
    %162 = vector.shape_cast %161 : vector<1x8x72xf32> to vector<8x72xf32>
    %c0_172 = arith.constant 0 : index
    %c128_173 = arith.constant 128 : index
    %163 = vector.load %arg15[%c0_172, %c128_173] : memref<8x201xf32, #tpu.memory_space<vmem>>, vector<8x64xf32>
    tpu.vector_store %arg15[%c0_172, %c128_173], %160 {strides = array<i32>} : memref<8x201xf32, #tpu.memory_space<vmem>>, vector<8x64xf32>,
    %c0_174 = arith.constant 0 : index
    %c119_175 = arith.constant 119 : index
    %164 = vector.load %arg15[%c0_174, %c119_175] : memref<8x201xf32, #tpu.memory_space<vmem>>, vector<8x64xf32>
    %cst_176 = arith.constant 0.000000e+00 : f32
    %165 = vector.broadcast %cst_176 : f32 to vector<8x64xf32>
    %166 = arith.select %121, %164, %165 : vector<8x64xi1>, vector<8x64xf32>
    %c0_177 = arith.constant 0 : index
    %c0_178 = arith.constant 0 : index
    %167 = vector.load %arg18[%c0_177, %c0_178] : memref<144x256xf32, #tpu.memory_space<vmem>>, vector<8x64xf32>
    tpu.vector_store %arg18[%c0_177, %c0_178], %166 {strides = array<i32>} : memref<144x256xf32, #tpu.memory_space<vmem>>, vector<8x64xf32>,
    %c0_179 = arith.constant 0 : index
    %c120_180 = arith.constant 120 : index
    %168 = vector.load %arg15[%c0_179, %c120_180] : memref<8x201xf32, #tpu.memory_space<vmem>>, vector<8x64xf32>
    %c8_181 = arith.constant 8 : index
    %c0_182 = arith.constant 0 : index
    %169 = vector.load %arg18[%c8_181, %c0_182] : memref<144x256xf32, #tpu.memory_space<vmem>>, vector<8x64xf32>
    tpu.vector_store %arg18[%c8_181, %c0_182], %168 {strides = array<i32>} : memref<144x256xf32, #tpu.memory_space<vmem>>, vector<8x64xf32>,
    %c0_183 = arith.constant 0 : index
    %c121_184 = arith.constant 121 : index
    %170 = vector.load %arg15[%c0_183, %c121_184] : memref<8x201xf32, #tpu.memory_space<vmem>>, vector<8x64xf32>
    %cst_185 = arith.constant 0.000000e+00 : f32
    %171 = vector.broadcast %cst_185 : f32 to vector<8x64xf32>
    %172 = arith.select %123, %170, %171 : vector<8x64xi1>, vector<8x64xf32>
    %c16_186 = arith.constant 16 : index
    %c0_187 = arith.constant 0 : index
    %173 = vector.load %arg18[%c16_186, %c0_187] : memref<144x256xf32, #tpu.memory_space<vmem>>, vector<8x64xf32>
    tpu.vector_store %arg18[%c16_186, %c0_187], %172 {strides = array<i32>} : memref<144x256xf32, #tpu.memory_space<vmem>>, vector<8x64xf32>,
    %c0_188 = arith.constant 0 : index
    %c127_189 = arith.constant 127 : index
    %174 = vector.load %arg15[%c0_188, %c127_189] : memref<8x201xf32, #tpu.memory_space<vmem>>, vector<8x64xf32>
    %cst_190 = arith.constant 0.000000e+00 : f32
    %175 = vector.broadcast %cst_190 : f32 to vector<8x64xf32>
    %176 = arith.select %121, %174, %175 : vector<8x64xi1>, vector<8x64xf32>
    %c24_191 = arith.constant 24 : index
    %c0_192 = arith.constant 0 : index
    %177 = vector.load %arg18[%c24_191, %c0_192] : memref<144x256xf32, #tpu.memory_space<vmem>>, vector<8x64xf32>
    tpu.vector_store %arg18[%c24_191, %c0_192], %176 {strides = array<i32>} : memref<144x256xf32, #tpu.memory_space<vmem>>, vector<8x64xf32>,
    %c0_193 = arith.constant 0 : index
    %c128_194 = arith.constant 128 : index
    %178 = vector.load %arg15[%c0_193, %c128_194] : memref<8x201xf32, #tpu.memory_space<vmem>>, vector<8x64xf32>
    %c32_195 = arith.constant 32 : index
    %c0_196 = arith.constant 0 : index
    %179 = vector.load %arg18[%c32_195, %c0_196] : memref<144x256xf32, #tpu.memory_space<vmem>>, vector<8x64xf32>
    tpu.vector_store %arg18[%c32_195, %c0_196], %178 {strides = array<i32>} : memref<144x256xf32, #tpu.memory_space<vmem>>, vector<8x64xf32>,
    %c0_197 = arith.constant 0 : index
    %c129_198 = arith.constant 129 : index
    %180 = vector.load %arg15[%c0_197, %c129_198] : memref<8x201xf32, #tpu.memory_space<vmem>>, vector<8x64xf32>
    %cst_199 = arith.constant 0.000000e+00 : f32
    %181 = vector.broadcast %cst_199 : f32 to vector<8x64xf32>
    %182 = arith.select %123, %180, %181 : vector<8x64xi1>, vector<8x64xf32>
    %c40_200 = arith.constant 40 : index
    %c0_201 = arith.constant 0 : index
    %183 = vector.load %arg18[%c40_200, %c0_201] : memref<144x256xf32, #tpu.memory_space<vmem>>, vector<8x64xf32>
    tpu.vector_store %arg18[%c40_200, %c0_201], %182 {strides = array<i32>} : memref<144x256xf32, #tpu.memory_space<vmem>>, vector<8x64xf32>,
    %c0_202 = arith.constant 0 : index
    %c135_203 = arith.constant 135 : index
    %184 = vector.load %arg15[%c0_202, %c135_203] : memref<8x201xf32, #tpu.memory_space<vmem>>, vector<8x64xf32>
    %cst_204 = arith.constant 0.000000e+00 : f32
    %185 = vector.broadcast %cst_204 : f32 to vector<8x64xf32>
    %186 = arith.select %121, %184, %185 : vector<8x64xi1>, vector<8x64xf32>
    %c48_205 = arith.constant 48 : index
    %c0_206 = arith.constant 0 : index
    %187 = vector.load %arg18[%c48_205, %c0_206] : memref<144x256xf32, #tpu.memory_space<vmem>>, vector<8x64xf32>
    tpu.vector_store %arg18[%c48_205, %c0_206], %186 {strides = array<i32>} : memref<144x256xf32, #tpu.memory_space<vmem>>, vector<8x64xf32>,
    %c0_207 = arith.constant 0 : index
    %c136_208 = arith.constant 136 : index
    %188 = vector.load %arg15[%c0_207, %c136_208] : memref<8x201xf32, #tpu.memory_space<vmem>>, vector<8x64xf32>
    %c56_209 = arith.constant 56 : index
    %c0_210 = arith.constant 0 : index
    %189 = vector.load %arg18[%c56_209, %c0_210] : memref<144x256xf32, #tpu.memory_space<vmem>>, vector<8x64xf32>
    tpu.vector_store %arg18[%c56_209, %c0_210], %188 {strides = array<i32>} : memref<144x256xf32, #tpu.memory_space<vmem>>, vector<8x64xf32>,
    %c0_211 = arith.constant 0 : index
    %c137_212 = arith.constant 137 : index
    %190 = vector.load %arg15[%c0_211, %c137_212] : memref<8x201xf32, #tpu.memory_space<vmem>>, vector<8x64xf32>
    %cst_213 = arith.constant 0.000000e+00 : f32
    %191 = vector.broadcast %cst_213 : f32 to vector<8x64xf32>
    %192 = arith.select %123, %190, %191 : vector<8x64xi1>, vector<8x64xf32>
    %c64_214 = arith.constant 64 : index
    %c0_215 = arith.constant 0 : index
    %193 = vector.load %arg18[%c64_214, %c0_215] : memref<144x256xf32, #tpu.memory_space<vmem>>, vector<8x64xf32>
    tpu.vector_store %arg18[%c64_214, %c0_215], %192 {strides = array<i32>} : memref<144x256xf32, #tpu.memory_space<vmem>>, vector<8x64xf32>,
    %c0_216 = arith.constant 0 : index
    %c0_217 = arith.constant 0 : index
    %194 = vector.load %arg18[%c0_216, %c0_217] : memref<144x256xf32, #tpu.memory_space<vmem>>, vector<72x64xf32>
    %cst_218 = arith.constant dense<0.000000e+00> : vector<8x64xf32>
    %195 = tpu.matmul %162, %194, %cst_218 {dimension_numbers = #tpu.dot_dimension_numbers<[1], [0], [0], [1], [0, 0, 1, 1], [], []>} : vector<8x72xf32>, vector<72x64xf32>, vector<8x64xf32> -> vector<8x64xf32>
    %c0_219 = arith.constant 0 : index
    %c3_220 = arith.constant 3 : index
    %196 = vector.load %arg4[%c0_219, %c3_220] : memref<8x14xf32, #tpu.memory_space<vmem>>, vector<8x1xf32>
    %197 = vector.broadcast %196 : vector<8x1xf32> to vector<8x64xf32>
    %198 = arith.addf %195, %197 : vector<8x64xf32>
    %cst_221 = arith.constant 0.000000e+00 : f32
    %199 = vector.broadcast %cst_221 : f32 to vector<8x64xf32>
    %200 = arith.maximumf %198, %199 : vector<8x64xf32>
    %c0_222 = arith.constant 0 : index
    %c128_223 = arith.constant 128 : index
    %201 = vector.load %arg15[%c0_222, %c128_223] : memref<8x201xf32, #tpu.memory_space<vmem>>, vector<8x64xf32>
    tpu.vector_store %arg15[%c0_222, %c128_223], %200 {strides = array<i32>} : memref<8x201xf32, #tpu.memory_space<vmem>>, vector<8x64xf32>,
    %c0_224 = arith.constant 0 : index
    %c129_225 = arith.constant 129 : index
    %202 = vector.load %arg15[%c0_224, %c129_225] : memref<8x201xf32, #tpu.memory_space<vmem>>, vector<8x64xf32>
    %c0_226 = arith.constant 0 : index
    %c136_227 = arith.constant 136 : index
    %203 = vector.load %arg15[%c0_226, %c136_227] : memref<8x201xf32, #tpu.memory_space<vmem>>, vector<8x64xf32>
    %c0_228 = arith.constant 0 : index
    %c137_229 = arith.constant 137 : index
    %204 = vector.load %arg15[%c0_228, %c137_229] : memref<8x201xf32, #tpu.memory_space<vmem>>, vector<8x64xf32>
    %205 = arith.maximumf %200, %202 : vector<8x64xf32>
    %206 = arith.maximumf %203, %204 : vector<8x64xf32>
    %207 = arith.maximumf %205, %206 : vector<8x64xf32>
    %c0_230 = arith.constant 0 : index
    %c0_231 = arith.constant 0 : index
    %208 = vector.load %arg11[%c0_230, %c0_231] : memref<64x16xf32, #tpu.memory_space<vmem>>, vector<64x16xf32>
    %cst_232 = arith.constant dense<0.000000e+00> : vector<8x16xf32>
    %209 = tpu.matmul %207, %208, %cst_232 {dimension_numbers = #tpu.dot_dimension_numbers<[1], [0], [0], [1], [0, 0, 1, 1], [], []>} : vector<8x64xf32>, vector<64x16xf32>, vector<8x16xf32> -> vector<8x16xf32>
    %c0_233 = arith.constant 0 : index
    %c128_234 = arith.constant 128 : index
    %210 = vector.load %arg16[%c0_233, %c128_234] : memref<8x149xf32, #tpu.memory_space<vmem>>, vector<8x16xf32>
    tpu.vector_store %arg16[%c0_233, %c128_234], %209 {strides = array<i32>} : memref<8x149xf32, #tpu.memory_space<vmem>>, vector<8x16xf32>,
    %c4 = arith.constant 4 : index
    %c0_235 = arith.constant 0 : index
    %c0_236 = arith.constant 0 : index
    %211 = vector.load %arg2[%c4, %c0_235, %c0_236] : memref<11x8x72xf32, #tpu.memory_space<vmem>>, vector<1x8x72xf32>
    %212 = vector.shape_cast %211 : vector<1x8x72xf32> to vector<8x72xf32>
    %213 = tpu.iota {dimensions = array<i32: 1>} : vector<8x16xi32>
    %c3_i32 = arith.constant 3 : i32
    %214 = vector.broadcast %c3_i32 : i32 to vector<8x16xi32>
    %215 = arith.andi %213, %214 : vector<8x16xi32>
    %c0_i32_237 = arith.constant 0 : i32
    %216 = vector.broadcast %c0_i32_237 : i32 to vector<8x16xi32>
    %217 = arith.cmpi ne, %215, %216 : vector<8x16xi32>
    %c3_i32_238 = arith.constant 3 : i32
    %218 = vector.broadcast %c3_i32_238 : i32 to vector<8x16xi32>
    %219 = arith.cmpi ne, %215, %218 : vector<8x16xi32>
    %c0_239 = arith.constant 0 : index
    %c123 = arith.constant 123 : index
    %220 = vector.load %arg16[%c0_239, %c123] : memref<8x149xf32, #tpu.memory_space<vmem>>, vector<8x16xf32>
    %cst_240 = arith.constant 0.000000e+00 : f32
    %221 = vector.broadcast %cst_240 : f32 to vector<8x16xf32>
    %222 = arith.select %217, %220, %221 : vector<8x16xi1>, vector<8x16xf32>
    %c0_241 = arith.constant 0 : index
    %c0_242 = arith.constant 0 : index
    %223 = vector.load %arg18[%c0_241, %c0_242] : memref<144x256xf32, #tpu.memory_space<vmem>>, vector<8x16xf32>
    tpu.vector_store %arg18[%c0_241, %c0_242], %222 {strides = array<i32>} : memref<144x256xf32, #tpu.memory_space<vmem>>, vector<8x16xf32>,
    %c0_243 = arith.constant 0 : index
    %c124 = arith.constant 124 : index
    %224 = vector.load %arg16[%c0_243, %c124] : memref<8x149xf32, #tpu.memory_space<vmem>>, vector<8x16xf32>
    %c8_244 = arith.constant 8 : index
    %c0_245 = arith.constant 0 : index
    %225 = vector.load %arg18[%c8_244, %c0_245] : memref<144x256xf32, #tpu.memory_space<vmem>>, vector<8x16xf32>
    tpu.vector_store %arg18[%c8_244, %c0_245], %224 {strides = array<i32>} : memref<144x256xf32, #tpu.memory_space<vmem>>, vector<8x16xf32>,
    %c0_246 = arith.constant 0 : index
    %c125 = arith.constant 125 : index
    %226 = vector.load %arg16[%c0_246, %c125] : memref<8x149xf32, #tpu.memory_space<vmem>>, vector<8x16xf32>
    %cst_247 = arith.constant 0.000000e+00 : f32
    %227 = vector.broadcast %cst_247 : f32 to vector<8x16xf32>
    %228 = arith.select %219, %226, %227 : vector<8x16xi1>, vector<8x16xf32>
    %c16_248 = arith.constant 16 : index
    %c0_249 = arith.constant 0 : index
    %229 = vector.load %arg18[%c16_248, %c0_249] : memref<144x256xf32, #tpu.memory_space<vmem>>, vector<8x16xf32>
    tpu.vector_store %arg18[%c16_248, %c0_249], %228 {strides = array<i32>} : memref<144x256xf32, #tpu.memory_space<vmem>>, vector<8x16xf32>,
    %c0_250 = arith.constant 0 : index
    %c127_251 = arith.constant 127 : index
    %230 = vector.load %arg16[%c0_250, %c127_251] : memref<8x149xf32, #tpu.memory_space<vmem>>, vector<8x16xf32>
    %cst_252 = arith.constant 0.000000e+00 : f32
    %231 = vector.broadcast %cst_252 : f32 to vector<8x16xf32>
    %232 = arith.select %217, %230, %231 : vector<8x16xi1>, vector<8x16xf32>
    %c24_253 = arith.constant 24 : index
    %c0_254 = arith.constant 0 : index
    %233 = vector.load %arg18[%c24_253, %c0_254] : memref<144x256xf32, #tpu.memory_space<vmem>>, vector<8x16xf32>
    tpu.vector_store %arg18[%c24_253, %c0_254], %232 {strides = array<i32>} : memref<144x256xf32, #tpu.memory_space<vmem>>, vector<8x16xf32>,
    %c0_255 = arith.constant 0 : index
    %c128_256 = arith.constant 128 : index
    %234 = vector.load %arg16[%c0_255, %c128_256] : memref<8x149xf32, #tpu.memory_space<vmem>>, vector<8x16xf32>
    %c32_257 = arith.constant 32 : index
    %c0_258 = arith.constant 0 : index
    %235 = vector.load %arg18[%c32_257, %c0_258] : memref<144x256xf32, #tpu.memory_space<vmem>>, vector<8x16xf32>
    tpu.vector_store %arg18[%c32_257, %c0_258], %234 {strides = array<i32>} : memref<144x256xf32, #tpu.memory_space<vmem>>, vector<8x16xf32>,
    %c0_259 = arith.constant 0 : index
    %c129_260 = arith.constant 129 : index
    %236 = vector.load %arg16[%c0_259, %c129_260] : memref<8x149xf32, #tpu.memory_space<vmem>>, vector<8x16xf32>
    %cst_261 = arith.constant 0.000000e+00 : f32
    %237 = vector.broadcast %cst_261 : f32 to vector<8x16xf32>
    %238 = arith.select %219, %236, %237 : vector<8x16xi1>, vector<8x16xf32>
    %c40_262 = arith.constant 40 : index
    %c0_263 = arith.constant 0 : index
    %239 = vector.load %arg18[%c40_262, %c0_263] : memref<144x256xf32, #tpu.memory_space<vmem>>, vector<8x16xf32>
    tpu.vector_store %arg18[%c40_262, %c0_263], %238 {strides = array<i32>} : memref<144x256xf32, #tpu.memory_space<vmem>>, vector<8x16xf32>,
    %c0_264 = arith.constant 0 : index
    %c131 = arith.constant 131 : index
    %240 = vector.load %arg16[%c0_264, %c131] : memref<8x149xf32, #tpu.memory_space<vmem>>, vector<8x16xf32>
    %cst_265 = arith.constant 0.000000e+00 : f32
    %241 = vector.broadcast %cst_265 : f32 to vector<8x16xf32>
    %242 = arith.select %217, %240, %241 : vector<8x16xi1>, vector<8x16xf32>
    %c48_266 = arith.constant 48 : index
    %c0_267 = arith.constant 0 : index
    %243 = vector.load %arg18[%c48_266, %c0_267] : memref<144x256xf32, #tpu.memory_space<vmem>>, vector<8x16xf32>
    tpu.vector_store %arg18[%c48_266, %c0_267], %242 {strides = array<i32>} : memref<144x256xf32, #tpu.memory_space<vmem>>, vector<8x16xf32>,
    %c0_268 = arith.constant 0 : index
    %c132_269 = arith.constant 132 : index
    %244 = vector.load %arg16[%c0_268, %c132_269] : memref<8x149xf32, #tpu.memory_space<vmem>>, vector<8x16xf32>
    %c56_270 = arith.constant 56 : index
    %c0_271 = arith.constant 0 : index
    %245 = vector.load %arg18[%c56_270, %c0_271] : memref<144x256xf32, #tpu.memory_space<vmem>>, vector<8x16xf32>
    tpu.vector_store %arg18[%c56_270, %c0_271], %244 {strides = array<i32>} : memref<144x256xf32, #tpu.memory_space<vmem>>, vector<8x16xf32>,
    %c0_272 = arith.constant 0 : index
    %c133 = arith.constant 133 : index
    %246 = vector.load %arg16[%c0_272, %c133] : memref<8x149xf32, #tpu.memory_space<vmem>>, vector<8x16xf32>
    %cst_273 = arith.constant 0.000000e+00 : f32
    %247 = vector.broadcast %cst_273 : f32 to vector<8x16xf32>
    %248 = arith.select %219, %246, %247 : vector<8x16xi1>, vector<8x16xf32>
    %c64_274 = arith.constant 64 : index
    %c0_275 = arith.constant 0 : index
    %249 = vector.load %arg18[%c64_274, %c0_275] : memref<144x256xf32, #tpu.memory_space<vmem>>, vector<8x16xf32>
    tpu.vector_store %arg18[%c64_274, %c0_275], %248 {strides = array<i32>} : memref<144x256xf32, #tpu.memory_space<vmem>>, vector<8x16xf32>,
    %c0_276 = arith.constant 0 : index
    %c0_277 = arith.constant 0 : index
    %250 = vector.load %arg18[%c0_276, %c0_277] : memref<144x256xf32, #tpu.memory_space<vmem>>, vector<72x16xf32>
    %cst_278 = arith.constant dense<0.000000e+00> : vector<8x16xf32>
    %251 = tpu.matmul %212, %250, %cst_278 {dimension_numbers = #tpu.dot_dimension_numbers<[1], [0], [0], [1], [0, 0, 1, 1], [], []>} : vector<8x72xf32>, vector<72x16xf32>, vector<8x16xf32> -> vector<8x16xf32>
    %c0_279 = arith.constant 0 : index
    %c4_280 = arith.constant 4 : index
    %252 = vector.load %arg4[%c0_279, %c4_280] : memref<8x14xf32, #tpu.memory_space<vmem>>, vector<8x1xf32>
    %253 = vector.broadcast %252 : vector<8x1xf32> to vector<8x16xf32>
    %254 = arith.addf %251, %253 : vector<8x16xf32>
    %cst_281 = arith.constant 0.000000e+00 : f32
    %255 = vector.broadcast %cst_281 : f32 to vector<8x16xf32>
    %256 = arith.maximumf %254, %255 : vector<8x16xf32>
    %c5 = arith.constant 5 : index
    %c0_282 = arith.constant 0 : index
    %c0_283 = arith.constant 0 : index
    %257 = vector.load %arg2[%c5, %c0_282, %c0_283] : memref<11x8x72xf32, #tpu.memory_space<vmem>>, vector<1x8x72xf32>
    %258 = vector.shape_cast %257 : vector<1x8x72xf32> to vector<8x72xf32>
    %c0_284 = arith.constant 0 : index
    %c128_285 = arith.constant 128 : index
    %259 = vector.load %arg16[%c0_284, %c128_285] : memref<8x149xf32, #tpu.memory_space<vmem>>, vector<8x16xf32>
    tpu.vector_store %arg16[%c0_284, %c128_285], %256 {strides = array<i32>} : memref<8x149xf32, #tpu.memory_space<vmem>>, vector<8x16xf32>,
    %c0_286 = arith.constant 0 : index
    %c123_287 = arith.constant 123 : index
    %260 = vector.load %arg16[%c0_286, %c123_287] : memref<8x149xf32, #tpu.memory_space<vmem>>, vector<8x16xf32>
    %cst_288 = arith.constant 0.000000e+00 : f32
    %261 = vector.broadcast %cst_288 : f32 to vector<8x16xf32>
    %262 = arith.select %217, %260, %261 : vector<8x16xi1>, vector<8x16xf32>
    %c0_289 = arith.constant 0 : index
    %c0_290 = arith.constant 0 : index
    %263 = vector.load %arg18[%c0_289, %c0_290] : memref<144x256xf32, #tpu.memory_space<vmem>>, vector<8x16xf32>
    tpu.vector_store %arg18[%c0_289, %c0_290], %262 {strides = array<i32>} : memref<144x256xf32, #tpu.memory_space<vmem>>, vector<8x16xf32>,
    %c0_291 = arith.constant 0 : index
    %c124_292 = arith.constant 124 : index
    %264 = vector.load %arg16[%c0_291, %c124_292] : memref<8x149xf32, #tpu.memory_space<vmem>>, vector<8x16xf32>
    %c8_293 = arith.constant 8 : index
    %c0_294 = arith.constant 0 : index
    %265 = vector.load %arg18[%c8_293, %c0_294] : memref<144x256xf32, #tpu.memory_space<vmem>>, vector<8x16xf32>
    tpu.vector_store %arg18[%c8_293, %c0_294], %264 {strides = array<i32>} : memref<144x256xf32, #tpu.memory_space<vmem>>, vector<8x16xf32>,
    %c0_295 = arith.constant 0 : index
    %c125_296 = arith.constant 125 : index
    %266 = vector.load %arg16[%c0_295, %c125_296] : memref<8x149xf32, #tpu.memory_space<vmem>>, vector<8x16xf32>
    %cst_297 = arith.constant 0.000000e+00 : f32
    %267 = vector.broadcast %cst_297 : f32 to vector<8x16xf32>
    %268 = arith.select %219, %266, %267 : vector<8x16xi1>, vector<8x16xf32>
    %c16_298 = arith.constant 16 : index
    %c0_299 = arith.constant 0 : index
    %269 = vector.load %arg18[%c16_298, %c0_299] : memref<144x256xf32, #tpu.memory_space<vmem>>, vector<8x16xf32>
    tpu.vector_store %arg18[%c16_298, %c0_299], %268 {strides = array<i32>} : memref<144x256xf32, #tpu.memory_space<vmem>>, vector<8x16xf32>,
    %c0_300 = arith.constant 0 : index
    %c127_301 = arith.constant 127 : index
    %270 = vector.load %arg16[%c0_300, %c127_301] : memref<8x149xf32, #tpu.memory_space<vmem>>, vector<8x16xf32>
    %cst_302 = arith.constant 0.000000e+00 : f32
    %271 = vector.broadcast %cst_302 : f32 to vector<8x16xf32>
    %272 = arith.select %217, %270, %271 : vector<8x16xi1>, vector<8x16xf32>
    %c24_303 = arith.constant 24 : index
    %c0_304 = arith.constant 0 : index
    %273 = vector.load %arg18[%c24_303, %c0_304] : memref<144x256xf32, #tpu.memory_space<vmem>>, vector<8x16xf32>
    tpu.vector_store %arg18[%c24_303, %c0_304], %272 {strides = array<i32>} : memref<144x256xf32, #tpu.memory_space<vmem>>, vector<8x16xf32>,
    %c0_305 = arith.constant 0 : index
    %c128_306 = arith.constant 128 : index
    %274 = vector.load %arg16[%c0_305, %c128_306] : memref<8x149xf32, #tpu.memory_space<vmem>>, vector<8x16xf32>
    %c32_307 = arith.constant 32 : index
    %c0_308 = arith.constant 0 : index
    %275 = vector.load %arg18[%c32_307, %c0_308] : memref<144x256xf32, #tpu.memory_space<vmem>>, vector<8x16xf32>
    tpu.vector_store %arg18[%c32_307, %c0_308], %274 {strides = array<i32>} : memref<144x256xf32, #tpu.memory_space<vmem>>, vector<8x16xf32>,
    %c0_309 = arith.constant 0 : index
    %c129_310 = arith.constant 129 : index
    %276 = vector.load %arg16[%c0_309, %c129_310] : memref<8x149xf32, #tpu.memory_space<vmem>>, vector<8x16xf32>
    %cst_311 = arith.constant 0.000000e+00 : f32
    %277 = vector.broadcast %cst_311 : f32 to vector<8x16xf32>
    %278 = arith.select %219, %276, %277 : vector<8x16xi1>, vector<8x16xf32>
    %c40_312 = arith.constant 40 : index
    %c0_313 = arith.constant 0 : index
    %279 = vector.load %arg18[%c40_312, %c0_313] : memref<144x256xf32, #tpu.memory_space<vmem>>, vector<8x16xf32>
    tpu.vector_store %arg18[%c40_312, %c0_313], %278 {strides = array<i32>} : memref<144x256xf32, #tpu.memory_space<vmem>>, vector<8x16xf32>,
    %c0_314 = arith.constant 0 : index
    %c131_315 = arith.constant 131 : index
    %280 = vector.load %arg16[%c0_314, %c131_315] : memref<8x149xf32, #tpu.memory_space<vmem>>, vector<8x16xf32>
    %cst_316 = arith.constant 0.000000e+00 : f32
    %281 = vector.broadcast %cst_316 : f32 to vector<8x16xf32>
    %282 = arith.select %217, %280, %281 : vector<8x16xi1>, vector<8x16xf32>
    %c48_317 = arith.constant 48 : index
    %c0_318 = arith.constant 0 : index
    %283 = vector.load %arg18[%c48_317, %c0_318] : memref<144x256xf32, #tpu.memory_space<vmem>>, vector<8x16xf32>
    tpu.vector_store %arg18[%c48_317, %c0_318], %282 {strides = array<i32>} : memref<144x256xf32, #tpu.memory_space<vmem>>, vector<8x16xf32>,
    %c0_319 = arith.constant 0 : index
    %c132_320 = arith.constant 132 : index
    %284 = vector.load %arg16[%c0_319, %c132_320] : memref<8x149xf32, #tpu.memory_space<vmem>>, vector<8x16xf32>
    %c56_321 = arith.constant 56 : index
    %c0_322 = arith.constant 0 : index
    %285 = vector.load %arg18[%c56_321, %c0_322] : memref<144x256xf32, #tpu.memory_space<vmem>>, vector<8x16xf32>
    tpu.vector_store %arg18[%c56_321, %c0_322], %284 {strides = array<i32>} : memref<144x256xf32, #tpu.memory_space<vmem>>, vector<8x16xf32>,
    %c0_323 = arith.constant 0 : index
    %c133_324 = arith.constant 133 : index
    %286 = vector.load %arg16[%c0_323, %c133_324] : memref<8x149xf32, #tpu.memory_space<vmem>>, vector<8x16xf32>
    %cst_325 = arith.constant 0.000000e+00 : f32
    %287 = vector.broadcast %cst_325 : f32 to vector<8x16xf32>
    %288 = arith.select %219, %286, %287 : vector<8x16xi1>, vector<8x16xf32>
    %c64_326 = arith.constant 64 : index
    %c0_327 = arith.constant 0 : index
    %289 = vector.load %arg18[%c64_326, %c0_327] : memref<144x256xf32, #tpu.memory_space<vmem>>, vector<8x16xf32>
    tpu.vector_store %arg18[%c64_326, %c0_327], %288 {strides = array<i32>} : memref<144x256xf32, #tpu.memory_space<vmem>>, vector<8x16xf32>,
    %c0_328 = arith.constant 0 : index
    %c0_329 = arith.constant 0 : index
    %290 = vector.load %arg18[%c0_328, %c0_329] : memref<144x256xf32, #tpu.memory_space<vmem>>, vector<72x16xf32>
    %cst_330 = arith.constant dense<0.000000e+00> : vector<8x16xf32>
    %291 = tpu.matmul %258, %290, %cst_330 {dimension_numbers = #tpu.dot_dimension_numbers<[1], [0], [0], [1], [0, 0, 1, 1], [], []>} : vector<8x72xf32>, vector<72x16xf32>, vector<8x16xf32> -> vector<8x16xf32>
    %c0_331 = arith.constant 0 : index
    %c5_332 = arith.constant 5 : index
    %292 = vector.load %arg4[%c0_331, %c5_332] : memref<8x14xf32, #tpu.memory_space<vmem>>, vector<8x1xf32>
    %293 = vector.broadcast %292 : vector<8x1xf32> to vector<8x16xf32>
    %294 = arith.addf %291, %293 : vector<8x16xf32>
    %cst_333 = arith.constant 0.000000e+00 : f32
    %295 = vector.broadcast %cst_333 : f32 to vector<8x16xf32>
    %296 = arith.maximumf %294, %295 : vector<8x16xf32>
    %c0_334 = arith.constant 0 : index
    %c128_335 = arith.constant 128 : index
    %297 = vector.load %arg16[%c0_334, %c128_335] : memref<8x149xf32, #tpu.memory_space<vmem>>, vector<8x16xf32>
    tpu.vector_store %arg16[%c0_334, %c128_335], %296 {strides = array<i32>} : memref<8x149xf32, #tpu.memory_space<vmem>>, vector<8x16xf32>,
    %c0_336 = arith.constant 0 : index
    %c129_337 = arith.constant 129 : index
    %298 = vector.load %arg16[%c0_336, %c129_337] : memref<8x149xf32, #tpu.memory_space<vmem>>, vector<8x16xf32>
    %c0_338 = arith.constant 0 : index
    %c132_339 = arith.constant 132 : index
    %299 = vector.load %arg16[%c0_338, %c132_339] : memref<8x149xf32, #tpu.memory_space<vmem>>, vector<8x16xf32>
    %c0_340 = arith.constant 0 : index
    %c133_341 = arith.constant 133 : index
    %300 = vector.load %arg16[%c0_340, %c133_341] : memref<8x149xf32, #tpu.memory_space<vmem>>, vector<8x16xf32>
    %301 = arith.maximumf %296, %298 : vector<8x16xf32>
    %302 = arith.maximumf %299, %300 : vector<8x16xf32>
    %303 = arith.maximumf %301, %302 : vector<8x16xf32>
    %c0_342 = arith.constant 0 : index
    %c0_343 = arith.constant 0 : index
    %304 = vector.load %arg12[%c0_342, %c0_343] : memref<16x4xf32, #tpu.memory_space<vmem>>, vector<16x4xf32>
    %cst_344 = arith.constant dense<0.000000e+00> : vector<8x4xf32>
    %305 = tpu.matmul %303, %304, %cst_344 {dimension_numbers = #tpu.dot_dimension_numbers<[1], [0], [0], [1], [0, 0, 1, 1], [], []>} : vector<8x16xf32>, vector<16x4xf32>, vector<8x4xf32> -> vector<8x4xf32>
    %c0_345 = arith.constant 0 : index
    %c128_346 = arith.constant 128 : index
    %306 = vector.load %arg17[%c0_345, %c128_346] : memref<8x135xf32, #tpu.memory_space<vmem>>, vector<8x4xf32>
    tpu.vector_store %arg17[%c0_345, %c128_346], %305 {strides = array<i32>} : memref<8x135xf32, #tpu.memory_space<vmem>>, vector<8x4xf32>,
    %c6 = arith.constant 6 : index
    %c0_347 = arith.constant 0 : index
    %c0_348 = arith.constant 0 : index
    %307 = vector.load %arg2[%c6, %c0_347, %c0_348] : memref<11x8x72xf32, #tpu.memory_space<vmem>>, vector<1x8x72xf32>
    %308 = vector.shape_cast %307 : vector<1x8x72xf32> to vector<8x72xf32>
    %309 = tpu.iota {dimensions = array<i32: 1>} : vector<8x4xi32>
    %c1_i32 = arith.constant 1 : i32
    %310 = vector.broadcast %c1_i32 : i32 to vector<8x4xi32>
    %311 = arith.andi %309, %310 : vector<8x4xi32>
    %c0_i32_349 = arith.constant 0 : i32
    %312 = vector.broadcast %c0_i32_349 : i32 to vector<8x4xi32>
    %313 = arith.cmpi ne, %311, %312 : vector<8x4xi32>
    %c1_i32_350 = arith.constant 1 : i32
    %314 = vector.broadcast %c1_i32_350 : i32 to vector<8x4xi32>
    %315 = arith.cmpi ne, %311, %314 : vector<8x4xi32>
    %c0_351 = arith.constant 0 : index
    %c125_352 = arith.constant 125 : index
    %316 = vector.load %arg17[%c0_351, %c125_352] : memref<8x135xf32, #tpu.memory_space<vmem>>, vector<8x4xf32>
    %cst_353 = arith.constant 0.000000e+00 : f32
    %317 = vector.broadcast %cst_353 : f32 to vector<8x4xf32>
    %318 = arith.select %313, %316, %317 : vector<8x4xi1>, vector<8x4xf32>
    %c0_354 = arith.constant 0 : index
    %c0_355 = arith.constant 0 : index
    %319 = vector.load %arg18[%c0_354, %c0_355] : memref<144x256xf32, #tpu.memory_space<vmem>>, vector<8x4xf32>
    tpu.vector_store %arg18[%c0_354, %c0_355], %318 {strides = array<i32>} : memref<144x256xf32, #tpu.memory_space<vmem>>, vector<8x4xf32>,
    %c0_356 = arith.constant 0 : index
    %c126 = arith.constant 126 : index
    %320 = vector.load %arg17[%c0_356, %c126] : memref<8x135xf32, #tpu.memory_space<vmem>>, vector<8x4xf32>
    %c8_357 = arith.constant 8 : index
    %c0_358 = arith.constant 0 : index
    %321 = vector.load %arg18[%c8_357, %c0_358] : memref<144x256xf32, #tpu.memory_space<vmem>>, vector<8x4xf32>
    tpu.vector_store %arg18[%c8_357, %c0_358], %320 {strides = array<i32>} : memref<144x256xf32, #tpu.memory_space<vmem>>, vector<8x4xf32>,
    %c0_359 = arith.constant 0 : index
    %c127_360 = arith.constant 127 : index
    %322 = vector.load %arg17[%c0_359, %c127_360] : memref<8x135xf32, #tpu.memory_space<vmem>>, vector<8x4xf32>
    %cst_361 = arith.constant 0.000000e+00 : f32
    %323 = vector.broadcast %cst_361 : f32 to vector<8x4xf32>
    %324 = arith.select %315, %322, %323 : vector<8x4xi1>, vector<8x4xf32>
    %c16_362 = arith.constant 16 : index
    %c0_363 = arith.constant 0 : index
    %325 = vector.load %arg18[%c16_362, %c0_363] : memref<144x256xf32, #tpu.memory_space<vmem>>, vector<8x4xf32>
    tpu.vector_store %arg18[%c16_362, %c0_363], %324 {strides = array<i32>} : memref<144x256xf32, #tpu.memory_space<vmem>>, vector<8x4xf32>,
    %c0_364 = arith.constant 0 : index
    %c127_365 = arith.constant 127 : index
    %326 = vector.load %arg17[%c0_364, %c127_365] : memref<8x135xf32, #tpu.memory_space<vmem>>, vector<8x4xf32>
    %cst_366 = arith.constant 0.000000e+00 : f32
    %327 = vector.broadcast %cst_366 : f32 to vector<8x4xf32>
    %328 = arith.select %313, %326, %327 : vector<8x4xi1>, vector<8x4xf32>
    %c24_367 = arith.constant 24 : index
    %c0_368 = arith.constant 0 : index
    %329 = vector.load %arg18[%c24_367, %c0_368] : memref<144x256xf32, #tpu.memory_space<vmem>>, vector<8x4xf32>
    tpu.vector_store %arg18[%c24_367, %c0_368], %328 {strides = array<i32>} : memref<144x256xf32, #tpu.memory_space<vmem>>, vector<8x4xf32>,
    %c0_369 = arith.constant 0 : index
    %c128_370 = arith.constant 128 : index
    %330 = vector.load %arg17[%c0_369, %c128_370] : memref<8x135xf32, #tpu.memory_space<vmem>>, vector<8x4xf32>
    %c32_371 = arith.constant 32 : index
    %c0_372 = arith.constant 0 : index
    %331 = vector.load %arg18[%c32_371, %c0_372] : memref<144x256xf32, #tpu.memory_space<vmem>>, vector<8x4xf32>
    tpu.vector_store %arg18[%c32_371, %c0_372], %330 {strides = array<i32>} : memref<144x256xf32, #tpu.memory_space<vmem>>, vector<8x4xf32>,
    %c0_373 = arith.constant 0 : index
    %c129_374 = arith.constant 129 : index
    %332 = vector.load %arg17[%c0_373, %c129_374] : memref<8x135xf32, #tpu.memory_space<vmem>>, vector<8x4xf32>
    %cst_375 = arith.constant 0.000000e+00 : f32
    %333 = vector.broadcast %cst_375 : f32 to vector<8x4xf32>
    %334 = arith.select %315, %332, %333 : vector<8x4xi1>, vector<8x4xf32>
    %c40_376 = arith.constant 40 : index
    %c0_377 = arith.constant 0 : index
    %335 = vector.load %arg18[%c40_376, %c0_377] : memref<144x256xf32, #tpu.memory_space<vmem>>, vector<8x4xf32>
    tpu.vector_store %arg18[%c40_376, %c0_377], %334 {strides = array<i32>} : memref<144x256xf32, #tpu.memory_space<vmem>>, vector<8x4xf32>,
    %c0_378 = arith.constant 0 : index
    %c129_379 = arith.constant 129 : index
    %336 = vector.load %arg17[%c0_378, %c129_379] : memref<8x135xf32, #tpu.memory_space<vmem>>, vector<8x4xf32>
    %cst_380 = arith.constant 0.000000e+00 : f32
    %337 = vector.broadcast %cst_380 : f32 to vector<8x4xf32>
    %338 = arith.select %313, %336, %337 : vector<8x4xi1>, vector<8x4xf32>
    %c48_381 = arith.constant 48 : index
    %c0_382 = arith.constant 0 : index
    %339 = vector.load %arg18[%c48_381, %c0_382] : memref<144x256xf32, #tpu.memory_space<vmem>>, vector<8x4xf32>
    tpu.vector_store %arg18[%c48_381, %c0_382], %338 {strides = array<i32>} : memref<144x256xf32, #tpu.memory_space<vmem>>, vector<8x4xf32>,
    %c0_383 = arith.constant 0 : index
    %c130 = arith.constant 130 : index
    %340 = vector.load %arg17[%c0_383, %c130] : memref<8x135xf32, #tpu.memory_space<vmem>>, vector<8x4xf32>
    %c56_384 = arith.constant 56 : index
    %c0_385 = arith.constant 0 : index
    %341 = vector.load %arg18[%c56_384, %c0_385] : memref<144x256xf32, #tpu.memory_space<vmem>>, vector<8x4xf32>
    tpu.vector_store %arg18[%c56_384, %c0_385], %340 {strides = array<i32>} : memref<144x256xf32, #tpu.memory_space<vmem>>, vector<8x4xf32>,
    %c0_386 = arith.constant 0 : index
    %c131_387 = arith.constant 131 : index
    %342 = vector.load %arg17[%c0_386, %c131_387] : memref<8x135xf32, #tpu.memory_space<vmem>>, vector<8x4xf32>
    %cst_388 = arith.constant 0.000000e+00 : f32
    %343 = vector.broadcast %cst_388 : f32 to vector<8x4xf32>
    %344 = arith.select %315, %342, %343 : vector<8x4xi1>, vector<8x4xf32>
    %c64_389 = arith.constant 64 : index
    %c0_390 = arith.constant 0 : index
    %345 = vector.load %arg18[%c64_389, %c0_390] : memref<144x256xf32, #tpu.memory_space<vmem>>, vector<8x4xf32>
    tpu.vector_store %arg18[%c64_389, %c0_390], %344 {strides = array<i32>} : memref<144x256xf32, #tpu.memory_space<vmem>>, vector<8x4xf32>,
    %c0_391 = arith.constant 0 : index
    %c0_392 = arith.constant 0 : index
    %346 = vector.load %arg18[%c0_391, %c0_392] : memref<144x256xf32, #tpu.memory_space<vmem>>, vector<72x4xf32>
    %cst_393 = arith.constant dense<0.000000e+00> : vector<8x4xf32>
    %347 = tpu.matmul %308, %346, %cst_393 {dimension_numbers = #tpu.dot_dimension_numbers<[1], [0], [0], [1], [0, 0, 1, 1], [], []>} : vector<8x72xf32>, vector<72x4xf32>, vector<8x4xf32> -> vector<8x4xf32>
    %c0_394 = arith.constant 0 : index
    %c6_395 = arith.constant 6 : index
    %348 = vector.load %arg4[%c0_394, %c6_395] : memref<8x14xf32, #tpu.memory_space<vmem>>, vector<8x1xf32>
    %349 = vector.broadcast %348 : vector<8x1xf32> to vector<8x4xf32>
    %350 = arith.addf %347, %349 : vector<8x4xf32>
    %cst_396 = arith.constant 0.000000e+00 : f32
    %351 = vector.broadcast %cst_396 : f32 to vector<8x4xf32>
    %352 = arith.maximumf %350, %351 : vector<8x4xf32>
    %c7 = arith.constant 7 : index
    %c0_397 = arith.constant 0 : index
    %c0_398 = arith.constant 0 : index
    %353 = vector.load %arg2[%c7, %c0_397, %c0_398] : memref<11x8x72xf32, #tpu.memory_space<vmem>>, vector<1x8x72xf32>
    %354 = vector.shape_cast %353 : vector<1x8x72xf32> to vector<8x72xf32>
    %c0_399 = arith.constant 0 : index
    %c128_400 = arith.constant 128 : index
    %355 = vector.load %arg17[%c0_399, %c128_400] : memref<8x135xf32, #tpu.memory_space<vmem>>, vector<8x4xf32>
    tpu.vector_store %arg17[%c0_399, %c128_400], %352 {strides = array<i32>} : memref<8x135xf32, #tpu.memory_space<vmem>>, vector<8x4xf32>,
    %c0_401 = arith.constant 0 : index
    %c125_402 = arith.constant 125 : index
    %356 = vector.load %arg17[%c0_401, %c125_402] : memref<8x135xf32, #tpu.memory_space<vmem>>, vector<8x4xf32>
    %cst_403 = arith.constant 0.000000e+00 : f32
    %357 = vector.broadcast %cst_403 : f32 to vector<8x4xf32>
    %358 = arith.select %313, %356, %357 : vector<8x4xi1>, vector<8x4xf32>
    %c0_404 = arith.constant 0 : index
    %c0_405 = arith.constant 0 : index
    %359 = vector.load %arg18[%c0_404, %c0_405] : memref<144x256xf32, #tpu.memory_space<vmem>>, vector<8x4xf32>
    tpu.vector_store %arg18[%c0_404, %c0_405], %358 {strides = array<i32>} : memref<144x256xf32, #tpu.memory_space<vmem>>, vector<8x4xf32>,
    %c0_406 = arith.constant 0 : index
    %c126_407 = arith.constant 126 : index
    %360 = vector.load %arg17[%c0_406, %c126_407] : memref<8x135xf32, #tpu.memory_space<vmem>>, vector<8x4xf32>
    %c8_408 = arith.constant 8 : index
    %c0_409 = arith.constant 0 : index
    %361 = vector.load %arg18[%c8_408, %c0_409] : memref<144x256xf32, #tpu.memory_space<vmem>>, vector<8x4xf32>
    tpu.vector_store %arg18[%c8_408, %c0_409], %360 {strides = array<i32>} : memref<144x256xf32, #tpu.memory_space<vmem>>, vector<8x4xf32>,
    %c0_410 = arith.constant 0 : index
    %c127_411 = arith.constant 127 : index
    %362 = vector.load %arg17[%c0_410, %c127_411] : memref<8x135xf32, #tpu.memory_space<vmem>>, vector<8x4xf32>
    %cst_412 = arith.constant 0.000000e+00 : f32
    %363 = vector.broadcast %cst_412 : f32 to vector<8x4xf32>
    %364 = arith.select %315, %362, %363 : vector<8x4xi1>, vector<8x4xf32>
    %c16_413 = arith.constant 16 : index
    %c0_414 = arith.constant 0 : index
    %365 = vector.load %arg18[%c16_413, %c0_414] : memref<144x256xf32, #tpu.memory_space<vmem>>, vector<8x4xf32>
    tpu.vector_store %arg18[%c16_413, %c0_414], %364 {strides = array<i32>} : memref<144x256xf32, #tpu.memory_space<vmem>>, vector<8x4xf32>,
    %c0_415 = arith.constant 0 : index
    %c127_416 = arith.constant 127 : index
    %366 = vector.load %arg17[%c0_415, %c127_416] : memref<8x135xf32, #tpu.memory_space<vmem>>, vector<8x4xf32>
    %cst_417 = arith.constant 0.000000e+00 : f32
    %367 = vector.broadcast %cst_417 : f32 to vector<8x4xf32>
    %368 = arith.select %313, %366, %367 : vector<8x4xi1>, vector<8x4xf32>
    %c24_418 = arith.constant 24 : index
    %c0_419 = arith.constant 0 : index
    %369 = vector.load %arg18[%c24_418, %c0_419] : memref<144x256xf32, #tpu.memory_space<vmem>>, vector<8x4xf32>
    tpu.vector_store %arg18[%c24_418, %c0_419], %368 {strides = array<i32>} : memref<144x256xf32, #tpu.memory_space<vmem>>, vector<8x4xf32>,
    %c0_420 = arith.constant 0 : index
    %c128_421 = arith.constant 128 : index
    %370 = vector.load %arg17[%c0_420, %c128_421] : memref<8x135xf32, #tpu.memory_space<vmem>>, vector<8x4xf32>
    %c32_422 = arith.constant 32 : index
    %c0_423 = arith.constant 0 : index
    %371 = vector.load %arg18[%c32_422, %c0_423] : memref<144x256xf32, #tpu.memory_space<vmem>>, vector<8x4xf32>
    tpu.vector_store %arg18[%c32_422, %c0_423], %370 {strides = array<i32>} : memref<144x256xf32, #tpu.memory_space<vmem>>, vector<8x4xf32>,
    %c0_424 = arith.constant 0 : index
    %c129_425 = arith.constant 129 : index
    %372 = vector.load %arg17[%c0_424, %c129_425] : memref<8x135xf32, #tpu.memory_space<vmem>>, vector<8x4xf32>
    %cst_426 = arith.constant 0.000000e+00 : f32
    %373 = vector.broadcast %cst_426 : f32 to vector<8x4xf32>
    %374 = arith.select %315, %372, %373 : vector<8x4xi1>, vector<8x4xf32>
    %c40_427 = arith.constant 40 : index
    %c0_428 = arith.constant 0 : index
    %375 = vector.load %arg18[%c40_427, %c0_428] : memref<144x256xf32, #tpu.memory_space<vmem>>, vector<8x4xf32>
    tpu.vector_store %arg18[%c40_427, %c0_428], %374 {strides = array<i32>} : memref<144x256xf32, #tpu.memory_space<vmem>>, vector<8x4xf32>,
    %c0_429 = arith.constant 0 : index
    %c129_430 = arith.constant 129 : index
    %376 = vector.load %arg17[%c0_429, %c129_430] : memref<8x135xf32, #tpu.memory_space<vmem>>, vector<8x4xf32>
    %cst_431 = arith.constant 0.000000e+00 : f32
    %377 = vector.broadcast %cst_431 : f32 to vector<8x4xf32>
    %378 = arith.select %313, %376, %377 : vector<8x4xi1>, vector<8x4xf32>
    %c48_432 = arith.constant 48 : index
    %c0_433 = arith.constant 0 : index
    %379 = vector.load %arg18[%c48_432, %c0_433] : memref<144x256xf32, #tpu.memory_space<vmem>>, vector<8x4xf32>
    tpu.vector_store %arg18[%c48_432, %c0_433], %378 {strides = array<i32>} : memref<144x256xf32, #tpu.memory_space<vmem>>, vector<8x4xf32>,
    %c0_434 = arith.constant 0 : index
    %c130_435 = arith.constant 130 : index
    %380 = vector.load %arg17[%c0_434, %c130_435] : memref<8x135xf32, #tpu.memory_space<vmem>>, vector<8x4xf32>
    %c56_436 = arith.constant 56 : index
    %c0_437 = arith.constant 0 : index
    %381 = vector.load %arg18[%c56_436, %c0_437] : memref<144x256xf32, #tpu.memory_space<vmem>>, vector<8x4xf32>
    tpu.vector_store %arg18[%c56_436, %c0_437], %380 {strides = array<i32>} : memref<144x256xf32, #tpu.memory_space<vmem>>, vector<8x4xf32>,
    %c0_438 = arith.constant 0 : index
    %c131_439 = arith.constant 131 : index
    %382 = vector.load %arg17[%c0_438, %c131_439] : memref<8x135xf32, #tpu.memory_space<vmem>>, vector<8x4xf32>
    %cst_440 = arith.constant 0.000000e+00 : f32
    %383 = vector.broadcast %cst_440 : f32 to vector<8x4xf32>
    %384 = arith.select %315, %382, %383 : vector<8x4xi1>, vector<8x4xf32>
    %c64_441 = arith.constant 64 : index
    %c0_442 = arith.constant 0 : index
    %385 = vector.load %arg18[%c64_441, %c0_442] : memref<144x256xf32, #tpu.memory_space<vmem>>, vector<8x4xf32>
    tpu.vector_store %arg18[%c64_441, %c0_442], %384 {strides = array<i32>} : memref<144x256xf32, #tpu.memory_space<vmem>>, vector<8x4xf32>,
    %c0_443 = arith.constant 0 : index
    %c0_444 = arith.constant 0 : index
    %386 = vector.load %arg18[%c0_443, %c0_444] : memref<144x256xf32, #tpu.memory_space<vmem>>, vector<72x4xf32>
    %cst_445 = arith.constant dense<0.000000e+00> : vector<8x4xf32>
    %387 = tpu.matmul %354, %386, %cst_445 {dimension_numbers = #tpu.dot_dimension_numbers<[1], [0], [0], [1], [0, 0, 1, 1], [], []>} : vector<8x72xf32>, vector<72x4xf32>, vector<8x4xf32> -> vector<8x4xf32>
    %c0_446 = arith.constant 0 : index
    %c7_447 = arith.constant 7 : index
    %388 = vector.load %arg4[%c0_446, %c7_447] : memref<8x14xf32, #tpu.memory_space<vmem>>, vector<8x1xf32>
    %389 = vector.broadcast %388 : vector<8x1xf32> to vector<8x4xf32>
    %390 = arith.addf %387, %389 : vector<8x4xf32>
    %cst_448 = arith.constant 0.000000e+00 : f32
    %391 = vector.broadcast %cst_448 : f32 to vector<8x4xf32>
    %392 = arith.maximumf %390, %391 : vector<8x4xf32>
    %c0_449 = arith.constant 0 : index
    %c0_450 = arith.constant 0 : index
    %393 = vector.load %arg7[%c0_449, %c0_450] : memref<4x16xf32, #tpu.memory_space<vmem>>, vector<4x16xf32>
    %cst_451 = arith.constant dense<0.000000e+00> : vector<8x16xf32>
    %394 = tpu.matmul %392, %393, %cst_451 {dimension_numbers = #tpu.dot_dimension_numbers<[1], [0], [0], [1], [0, 0, 1, 1], [], []>} : vector<8x4xf32>, vector<4x16xf32>, vector<8x16xf32> -> vector<8x16xf32>
    %c0_452 = arith.constant 0 : index
    %c0_453 = arith.constant 0 : index
    %c0_454 = arith.constant 0 : index
    %395 = vector.load %arg3[%c0_452, %c0_453, %c0_454] : memref<3x8x144xf32, #tpu.memory_space<vmem>>, vector<1x8x144xf32>
    %396 = vector.shape_cast %395 : vector<1x8x144xf32> to vector<8x144xf32>
    %c0_455 = arith.constant 0 : index
    %c128_456 = arith.constant 128 : index
    %397 = vector.load %arg16[%c0_455, %c128_456] : memref<8x149xf32, #tpu.memory_space<vmem>>, vector<8x16xf32>
    tpu.vector_store %arg16[%c0_455, %c128_456], %394 {strides = array<i32>} : memref<8x149xf32, #tpu.memory_space<vmem>>, vector<8x16xf32>,
    %c0_457 = arith.constant 0 : index
    %c123_458 = arith.constant 123 : index
    %398 = vector.load %arg16[%c0_457, %c123_458] : memref<8x149xf32, #tpu.memory_space<vmem>>, vector<8x16xf32>
    %cst_459 = arith.constant 0.000000e+00 : f32
    %399 = vector.broadcast %cst_459 : f32 to vector<8x16xf32>
    %400 = arith.select %217, %398, %399 : vector<8x16xi1>, vector<8x16xf32>
    %c0_460 = arith.constant 0 : index
    %c0_461 = arith.constant 0 : index
    %401 = vector.load %arg18[%c0_460, %c0_461] : memref<144x256xf32, #tpu.memory_space<vmem>>, vector<8x16xf32>
    tpu.vector_store %arg18[%c0_460, %c0_461], %400 {strides = array<i32>} : memref<144x256xf32, #tpu.memory_space<vmem>>, vector<8x16xf32>,
    %c0_462 = arith.constant 0 : index
    %c124_463 = arith.constant 124 : index
    %402 = vector.load %arg16[%c0_462, %c124_463] : memref<8x149xf32, #tpu.memory_space<vmem>>, vector<8x16xf32>
    %c8_464 = arith.constant 8 : index
    %c0_465 = arith.constant 0 : index
    %403 = vector.load %arg18[%c8_464, %c0_465] : memref<144x256xf32, #tpu.memory_space<vmem>>, vector<8x16xf32>
    tpu.vector_store %arg18[%c8_464, %c0_465], %402 {strides = array<i32>} : memref<144x256xf32, #tpu.memory_space<vmem>>, vector<8x16xf32>,
    %c0_466 = arith.constant 0 : index
    %c125_467 = arith.constant 125 : index
    %404 = vector.load %arg16[%c0_466, %c125_467] : memref<8x149xf32, #tpu.memory_space<vmem>>, vector<8x16xf32>
    %cst_468 = arith.constant 0.000000e+00 : f32
    %405 = vector.broadcast %cst_468 : f32 to vector<8x16xf32>
    %406 = arith.select %219, %404, %405 : vector<8x16xi1>, vector<8x16xf32>
    %c16_469 = arith.constant 16 : index
    %c0_470 = arith.constant 0 : index
    %407 = vector.load %arg18[%c16_469, %c0_470] : memref<144x256xf32, #tpu.memory_space<vmem>>, vector<8x16xf32>
    tpu.vector_store %arg18[%c16_469, %c0_470], %406 {strides = array<i32>} : memref<144x256xf32, #tpu.memory_space<vmem>>, vector<8x16xf32>,
    %c0_471 = arith.constant 0 : index
    %c127_472 = arith.constant 127 : index
    %408 = vector.load %arg16[%c0_471, %c127_472] : memref<8x149xf32, #tpu.memory_space<vmem>>, vector<8x16xf32>
    %cst_473 = arith.constant 0.000000e+00 : f32
    %409 = vector.broadcast %cst_473 : f32 to vector<8x16xf32>
    %410 = arith.select %217, %408, %409 : vector<8x16xi1>, vector<8x16xf32>
    %c24_474 = arith.constant 24 : index
    %c0_475 = arith.constant 0 : index
    %411 = vector.load %arg18[%c24_474, %c0_475] : memref<144x256xf32, #tpu.memory_space<vmem>>, vector<8x16xf32>
    tpu.vector_store %arg18[%c24_474, %c0_475], %410 {strides = array<i32>} : memref<144x256xf32, #tpu.memory_space<vmem>>, vector<8x16xf32>,
    %c0_476 = arith.constant 0 : index
    %c128_477 = arith.constant 128 : index
    %412 = vector.load %arg16[%c0_476, %c128_477] : memref<8x149xf32, #tpu.memory_space<vmem>>, vector<8x16xf32>
    %c32_478 = arith.constant 32 : index
    %c0_479 = arith.constant 0 : index
    %413 = vector.load %arg18[%c32_478, %c0_479] : memref<144x256xf32, #tpu.memory_space<vmem>>, vector<8x16xf32>
    tpu.vector_store %arg18[%c32_478, %c0_479], %412 {strides = array<i32>} : memref<144x256xf32, #tpu.memory_space<vmem>>, vector<8x16xf32>,
    %c0_480 = arith.constant 0 : index
    %c129_481 = arith.constant 129 : index
    %414 = vector.load %arg16[%c0_480, %c129_481] : memref<8x149xf32, #tpu.memory_space<vmem>>, vector<8x16xf32>
    %cst_482 = arith.constant 0.000000e+00 : f32
    %415 = vector.broadcast %cst_482 : f32 to vector<8x16xf32>
    %416 = arith.select %219, %414, %415 : vector<8x16xi1>, vector<8x16xf32>
    %c40_483 = arith.constant 40 : index
    %c0_484 = arith.constant 0 : index
    %417 = vector.load %arg18[%c40_483, %c0_484] : memref<144x256xf32, #tpu.memory_space<vmem>>, vector<8x16xf32>
    tpu.vector_store %arg18[%c40_483, %c0_484], %416 {strides = array<i32>} : memref<144x256xf32, #tpu.memory_space<vmem>>, vector<8x16xf32>,
    %c0_485 = arith.constant 0 : index
    %c131_486 = arith.constant 131 : index
    %418 = vector.load %arg16[%c0_485, %c131_486] : memref<8x149xf32, #tpu.memory_space<vmem>>, vector<8x16xf32>
    %cst_487 = arith.constant 0.000000e+00 : f32
    %419 = vector.broadcast %cst_487 : f32 to vector<8x16xf32>
    %420 = arith.select %217, %418, %419 : vector<8x16xi1>, vector<8x16xf32>
    %c48_488 = arith.constant 48 : index
    %c0_489 = arith.constant 0 : index
    %421 = vector.load %arg18[%c48_488, %c0_489] : memref<144x256xf32, #tpu.memory_space<vmem>>, vector<8x16xf32>
    tpu.vector_store %arg18[%c48_488, %c0_489], %420 {strides = array<i32>} : memref<144x256xf32, #tpu.memory_space<vmem>>, vector<8x16xf32>,
    %c0_490 = arith.constant 0 : index
    %c132_491 = arith.constant 132 : index
    %422 = vector.load %arg16[%c0_490, %c132_491] : memref<8x149xf32, #tpu.memory_space<vmem>>, vector<8x16xf32>
    %c56_492 = arith.constant 56 : index
    %c0_493 = arith.constant 0 : index
    %423 = vector.load %arg18[%c56_492, %c0_493] : memref<144x256xf32, #tpu.memory_space<vmem>>, vector<8x16xf32>
    tpu.vector_store %arg18[%c56_492, %c0_493], %422 {strides = array<i32>} : memref<144x256xf32, #tpu.memory_space<vmem>>, vector<8x16xf32>,
    %c0_494 = arith.constant 0 : index
    %c133_495 = arith.constant 133 : index
    %424 = vector.load %arg16[%c0_494, %c133_495] : memref<8x149xf32, #tpu.memory_space<vmem>>, vector<8x16xf32>
    %cst_496 = arith.constant 0.000000e+00 : f32
    %425 = vector.broadcast %cst_496 : f32 to vector<8x16xf32>
    %426 = arith.select %219, %424, %425 : vector<8x16xi1>, vector<8x16xf32>
    %c64_497 = arith.constant 64 : index
    %c0_498 = arith.constant 0 : index
    %427 = vector.load %arg18[%c64_497, %c0_498] : memref<144x256xf32, #tpu.memory_space<vmem>>, vector<8x16xf32>
    tpu.vector_store %arg18[%c64_497, %c0_498], %426 {strides = array<i32>} : memref<144x256xf32, #tpu.memory_space<vmem>>, vector<8x16xf32>,
    %c0_499 = arith.constant 0 : index
    %c128_500 = arith.constant 128 : index
    %428 = vector.load %arg16[%c0_499, %c128_500] : memref<8x149xf32, #tpu.memory_space<vmem>>, vector<8x16xf32>
    tpu.vector_store %arg16[%c0_499, %c128_500], %296 {strides = array<i32>} : memref<8x149xf32, #tpu.memory_space<vmem>>, vector<8x16xf32>,
    %c0_501 = arith.constant 0 : index
    %c123_502 = arith.constant 123 : index
    %429 = vector.load %arg16[%c0_501, %c123_502] : memref<8x149xf32, #tpu.memory_space<vmem>>, vector<8x16xf32>
    %cst_503 = arith.constant 0.000000e+00 : f32
    %430 = vector.broadcast %cst_503 : f32 to vector<8x16xf32>
    %431 = arith.select %217, %429, %430 : vector<8x16xi1>, vector<8x16xf32>
    %c72 = arith.constant 72 : index
    %c0_504 = arith.constant 0 : index
    %432 = vector.load %arg18[%c72, %c0_504] : memref<144x256xf32, #tpu.memory_space<vmem>>, vector<8x16xf32>
    tpu.vector_store %arg18[%c72, %c0_504], %431 {strides = array<i32>} : memref<144x256xf32, #tpu.memory_space<vmem>>, vector<8x16xf32>,
    %c0_505 = arith.constant 0 : index
    %c124_506 = arith.constant 124 : index
    %433 = vector.load %arg16[%c0_505, %c124_506] : memref<8x149xf32, #tpu.memory_space<vmem>>, vector<8x16xf32>
    %c80 = arith.constant 80 : index
    %c0_507 = arith.constant 0 : index
    %434 = vector.load %arg18[%c80, %c0_507] : memref<144x256xf32, #tpu.memory_space<vmem>>, vector<8x16xf32>
    tpu.vector_store %arg18[%c80, %c0_507], %433 {strides = array<i32>} : memref<144x256xf32, #tpu.memory_space<vmem>>, vector<8x16xf32>,
    %c0_508 = arith.constant 0 : index
    %c125_509 = arith.constant 125 : index
    %435 = vector.load %arg16[%c0_508, %c125_509] : memref<8x149xf32, #tpu.memory_space<vmem>>, vector<8x16xf32>
    %cst_510 = arith.constant 0.000000e+00 : f32
    %436 = vector.broadcast %cst_510 : f32 to vector<8x16xf32>
    %437 = arith.select %219, %435, %436 : vector<8x16xi1>, vector<8x16xf32>
    %c88 = arith.constant 88 : index
    %c0_511 = arith.constant 0 : index
    %438 = vector.load %arg18[%c88, %c0_511] : memref<144x256xf32, #tpu.memory_space<vmem>>, vector<8x16xf32>
    tpu.vector_store %arg18[%c88, %c0_511], %437 {strides = array<i32>} : memref<144x256xf32, #tpu.memory_space<vmem>>, vector<8x16xf32>,
    %c0_512 = arith.constant 0 : index
    %c127_513 = arith.constant 127 : index
    %439 = vector.load %arg16[%c0_512, %c127_513] : memref<8x149xf32, #tpu.memory_space<vmem>>, vector<8x16xf32>
    %cst_514 = arith.constant 0.000000e+00 : f32
    %440 = vector.broadcast %cst_514 : f32 to vector<8x16xf32>
    %441 = arith.select %217, %439, %440 : vector<8x16xi1>, vector<8x16xf32>
    %c96 = arith.constant 96 : index
    %c0_515 = arith.constant 0 : index
    %442 = vector.load %arg18[%c96, %c0_515] : memref<144x256xf32, #tpu.memory_space<vmem>>, vector<8x16xf32>
    tpu.vector_store %arg18[%c96, %c0_515], %441 {strides = array<i32>} : memref<144x256xf32, #tpu.memory_space<vmem>>, vector<8x16xf32>,
    %c0_516 = arith.constant 0 : index
    %c128_517 = arith.constant 128 : index
    %443 = vector.load %arg16[%c0_516, %c128_517] : memref<8x149xf32, #tpu.memory_space<vmem>>, vector<8x16xf32>
    %c104 = arith.constant 104 : index
    %c0_518 = arith.constant 0 : index
    %444 = vector.load %arg18[%c104, %c0_518] : memref<144x256xf32, #tpu.memory_space<vmem>>, vector<8x16xf32>
    tpu.vector_store %arg18[%c104, %c0_518], %443 {strides = array<i32>} : memref<144x256xf32, #tpu.memory_space<vmem>>, vector<8x16xf32>,
    %c0_519 = arith.constant 0 : index
    %c129_520 = arith.constant 129 : index
    %445 = vector.load %arg16[%c0_519, %c129_520] : memref<8x149xf32, #tpu.memory_space<vmem>>, vector<8x16xf32>
    %cst_521 = arith.constant 0.000000e+00 : f32
    %446 = vector.broadcast %cst_521 : f32 to vector<8x16xf32>
    %447 = arith.select %219, %445, %446 : vector<8x16xi1>, vector<8x16xf32>
    %c112_522 = arith.constant 112 : index
    %c0_523 = arith.constant 0 : index
    %448 = vector.load %arg18[%c112_522, %c0_523] : memref<144x256xf32, #tpu.memory_space<vmem>>, vector<8x16xf32>
    tpu.vector_store %arg18[%c112_522, %c0_523], %447 {strides = array<i32>} : memref<144x256xf32, #tpu.memory_space<vmem>>, vector<8x16xf32>,
    %c0_524 = arith.constant 0 : index
    %c131_525 = arith.constant 131 : index
    %449 = vector.load %arg16[%c0_524, %c131_525] : memref<8x149xf32, #tpu.memory_space<vmem>>, vector<8x16xf32>
    %cst_526 = arith.constant 0.000000e+00 : f32
    %450 = vector.broadcast %cst_526 : f32 to vector<8x16xf32>
    %451 = arith.select %217, %449, %450 : vector<8x16xi1>, vector<8x16xf32>
    %c120_527 = arith.constant 120 : index
    %c0_528 = arith.constant 0 : index
    %452 = vector.load %arg18[%c120_527, %c0_528] : memref<144x256xf32, #tpu.memory_space<vmem>>, vector<8x16xf32>
    tpu.vector_store %arg18[%c120_527, %c0_528], %451 {strides = array<i32>} : memref<144x256xf32, #tpu.memory_space<vmem>>, vector<8x16xf32>,
    %c0_529 = arith.constant 0 : index
    %c132_530 = arith.constant 132 : index
    %453 = vector.load %arg16[%c0_529, %c132_530] : memref<8x149xf32, #tpu.memory_space<vmem>>, vector<8x16xf32>
    %c128_531 = arith.constant 128 : index
    %c0_532 = arith.constant 0 : index
    %454 = vector.load %arg18[%c128_531, %c0_532] : memref<144x256xf32, #tpu.memory_space<vmem>>, vector<8x16xf32>
    tpu.vector_store %arg18[%c128_531, %c0_532], %453 {strides = array<i32>} : memref<144x256xf32, #tpu.memory_space<vmem>>, vector<8x16xf32>,
    %c0_533 = arith.constant 0 : index
    %c133_534 = arith.constant 133 : index
    %455 = vector.load %arg16[%c0_533, %c133_534] : memref<8x149xf32, #tpu.memory_space<vmem>>, vector<8x16xf32>
    %cst_535 = arith.constant 0.000000e+00 : f32
    %456 = vector.broadcast %cst_535 : f32 to vector<8x16xf32>
    %457 = arith.select %219, %455, %456 : vector<8x16xi1>, vector<8x16xf32>
    %c136_536 = arith.constant 136 : index
    %c0_537 = arith.constant 0 : index
    %458 = vector.load %arg18[%c136_536, %c0_537] : memref<144x256xf32, #tpu.memory_space<vmem>>, vector<8x16xf32>
    tpu.vector_store %arg18[%c136_536, %c0_537], %457 {strides = array<i32>} : memref<144x256xf32, #tpu.memory_space<vmem>>, vector<8x16xf32>,
    %c0_538 = arith.constant 0 : index
    %c0_539 = arith.constant 0 : index
    %459 = vector.load %arg18[%c0_538, %c0_539] : memref<144x256xf32, #tpu.memory_space<vmem>>, vector<144x16xf32>
    %cst_540 = arith.constant dense<0.000000e+00> : vector<8x16xf32>
    %460 = tpu.matmul %396, %459, %cst_540 {dimension_numbers = #tpu.dot_dimension_numbers<[1], [0], [0], [1], [0, 0, 1, 1], [], []>} : vector<8x144xf32>, vector<144x16xf32>, vector<8x16xf32> -> vector<8x16xf32>
    %c0_541 = arith.constant 0 : index
    %c8_542 = arith.constant 8 : index
    %461 = vector.load %arg4[%c0_541, %c8_542] : memref<8x14xf32, #tpu.memory_space<vmem>>, vector<8x1xf32>
    %462 = vector.broadcast %461 : vector<8x1xf32> to vector<8x16xf32>
    %463 = arith.addf %460, %462 : vector<8x16xf32>
    %cst_543 = arith.constant 0.000000e+00 : f32
    %464 = vector.broadcast %cst_543 : f32 to vector<8x16xf32>
    %465 = arith.maximumf %463, %464 : vector<8x16xf32>
    %c8_544 = arith.constant 8 : index
    %c0_545 = arith.constant 0 : index
    %c0_546 = arith.constant 0 : index
    %466 = vector.load %arg2[%c8_544, %c0_545, %c0_546] : memref<11x8x72xf32, #tpu.memory_space<vmem>>, vector<1x8x72xf32>
    %467 = vector.shape_cast %466 : vector<1x8x72xf32> to vector<8x72xf32>
    %c0_547 = arith.constant 0 : index
    %c128_548 = arith.constant 128 : index
    %468 = vector.load %arg16[%c0_547, %c128_548] : memref<8x149xf32, #tpu.memory_space<vmem>>, vector<8x16xf32>
    tpu.vector_store %arg16[%c0_547, %c128_548], %465 {strides = array<i32>} : memref<8x149xf32, #tpu.memory_space<vmem>>, vector<8x16xf32>,
    %c0_549 = arith.constant 0 : index
    %c123_550 = arith.constant 123 : index
    %469 = vector.load %arg16[%c0_549, %c123_550] : memref<8x149xf32, #tpu.memory_space<vmem>>, vector<8x16xf32>
    %cst_551 = arith.constant 0.000000e+00 : f32
    %470 = vector.broadcast %cst_551 : f32 to vector<8x16xf32>
    %471 = arith.select %217, %469, %470 : vector<8x16xi1>, vector<8x16xf32>
    %c0_552 = arith.constant 0 : index
    %c0_553 = arith.constant 0 : index
    %472 = vector.load %arg18[%c0_552, %c0_553] : memref<144x256xf32, #tpu.memory_space<vmem>>, vector<8x16xf32>
    tpu.vector_store %arg18[%c0_552, %c0_553], %471 {strides = array<i32>} : memref<144x256xf32, #tpu.memory_space<vmem>>, vector<8x16xf32>,
    %c0_554 = arith.constant 0 : index
    %c124_555 = arith.constant 124 : index
    %473 = vector.load %arg16[%c0_554, %c124_555] : memref<8x149xf32, #tpu.memory_space<vmem>>, vector<8x16xf32>
    %c8_556 = arith.constant 8 : index
    %c0_557 = arith.constant 0 : index
    %474 = vector.load %arg18[%c8_556, %c0_557] : memref<144x256xf32, #tpu.memory_space<vmem>>, vector<8x16xf32>
    tpu.vector_store %arg18[%c8_556, %c0_557], %473 {strides = array<i32>} : memref<144x256xf32, #tpu.memory_space<vmem>>, vector<8x16xf32>,
    %c0_558 = arith.constant 0 : index
    %c125_559 = arith.constant 125 : index
    %475 = vector.load %arg16[%c0_558, %c125_559] : memref<8x149xf32, #tpu.memory_space<vmem>>, vector<8x16xf32>
    %cst_560 = arith.constant 0.000000e+00 : f32
    %476 = vector.broadcast %cst_560 : f32 to vector<8x16xf32>
    %477 = arith.select %219, %475, %476 : vector<8x16xi1>, vector<8x16xf32>
    %c16_561 = arith.constant 16 : index
    %c0_562 = arith.constant 0 : index
    %478 = vector.load %arg18[%c16_561, %c0_562] : memref<144x256xf32, #tpu.memory_space<vmem>>, vector<8x16xf32>
    tpu.vector_store %arg18[%c16_561, %c0_562], %477 {strides = array<i32>} : memref<144x256xf32, #tpu.memory_space<vmem>>, vector<8x16xf32>,
    %c0_563 = arith.constant 0 : index
    %c127_564 = arith.constant 127 : index
    %479 = vector.load %arg16[%c0_563, %c127_564] : memref<8x149xf32, #tpu.memory_space<vmem>>, vector<8x16xf32>
    %cst_565 = arith.constant 0.000000e+00 : f32
    %480 = vector.broadcast %cst_565 : f32 to vector<8x16xf32>
    %481 = arith.select %217, %479, %480 : vector<8x16xi1>, vector<8x16xf32>
    %c24_566 = arith.constant 24 : index
    %c0_567 = arith.constant 0 : index
    %482 = vector.load %arg18[%c24_566, %c0_567] : memref<144x256xf32, #tpu.memory_space<vmem>>, vector<8x16xf32>
    tpu.vector_store %arg18[%c24_566, %c0_567], %481 {strides = array<i32>} : memref<144x256xf32, #tpu.memory_space<vmem>>, vector<8x16xf32>,
    %c0_568 = arith.constant 0 : index
    %c128_569 = arith.constant 128 : index
    %483 = vector.load %arg16[%c0_568, %c128_569] : memref<8x149xf32, #tpu.memory_space<vmem>>, vector<8x16xf32>
    %c32_570 = arith.constant 32 : index
    %c0_571 = arith.constant 0 : index
    %484 = vector.load %arg18[%c32_570, %c0_571] : memref<144x256xf32, #tpu.memory_space<vmem>>, vector<8x16xf32>
    tpu.vector_store %arg18[%c32_570, %c0_571], %483 {strides = array<i32>} : memref<144x256xf32, #tpu.memory_space<vmem>>, vector<8x16xf32>,
    %c0_572 = arith.constant 0 : index
    %c129_573 = arith.constant 129 : index
    %485 = vector.load %arg16[%c0_572, %c129_573] : memref<8x149xf32, #tpu.memory_space<vmem>>, vector<8x16xf32>
    %cst_574 = arith.constant 0.000000e+00 : f32
    %486 = vector.broadcast %cst_574 : f32 to vector<8x16xf32>
    %487 = arith.select %219, %485, %486 : vector<8x16xi1>, vector<8x16xf32>
    %c40_575 = arith.constant 40 : index
    %c0_576 = arith.constant 0 : index
    %488 = vector.load %arg18[%c40_575, %c0_576] : memref<144x256xf32, #tpu.memory_space<vmem>>, vector<8x16xf32>
    tpu.vector_store %arg18[%c40_575, %c0_576], %487 {strides = array<i32>} : memref<144x256xf32, #tpu.memory_space<vmem>>, vector<8x16xf32>,
    %c0_577 = arith.constant 0 : index
    %c131_578 = arith.constant 131 : index
    %489 = vector.load %arg16[%c0_577, %c131_578] : memref<8x149xf32, #tpu.memory_space<vmem>>, vector<8x16xf32>
    %cst_579 = arith.constant 0.000000e+00 : f32
    %490 = vector.broadcast %cst_579 : f32 to vector<8x16xf32>
    %491 = arith.select %217, %489, %490 : vector<8x16xi1>, vector<8x16xf32>
    %c48_580 = arith.constant 48 : index
    %c0_581 = arith.constant 0 : index
    %492 = vector.load %arg18[%c48_580, %c0_581] : memref<144x256xf32, #tpu.memory_space<vmem>>, vector<8x16xf32>
    tpu.vector_store %arg18[%c48_580, %c0_581], %491 {strides = array<i32>} : memref<144x256xf32, #tpu.memory_space<vmem>>, vector<8x16xf32>,
    %c0_582 = arith.constant 0 : index
    %c132_583 = arith.constant 132 : index
    %493 = vector.load %arg16[%c0_582, %c132_583] : memref<8x149xf32, #tpu.memory_space<vmem>>, vector<8x16xf32>
    %c56_584 = arith.constant 56 : index
    %c0_585 = arith.constant 0 : index
    %494 = vector.load %arg18[%c56_584, %c0_585] : memref<144x256xf32, #tpu.memory_space<vmem>>, vector<8x16xf32>
    tpu.vector_store %arg18[%c56_584, %c0_585], %493 {strides = array<i32>} : memref<144x256xf32, #tpu.memory_space<vmem>>, vector<8x16xf32>,
    %c0_586 = arith.constant 0 : index
    %c133_587 = arith.constant 133 : index
    %495 = vector.load %arg16[%c0_586, %c133_587] : memref<8x149xf32, #tpu.memory_space<vmem>>, vector<8x16xf32>
    %cst_588 = arith.constant 0.000000e+00 : f32
    %496 = vector.broadcast %cst_588 : f32 to vector<8x16xf32>
    %497 = arith.select %219, %495, %496 : vector<8x16xi1>, vector<8x16xf32>
    %c64_589 = arith.constant 64 : index
    %c0_590 = arith.constant 0 : index
    %498 = vector.load %arg18[%c64_589, %c0_590] : memref<144x256xf32, #tpu.memory_space<vmem>>, vector<8x16xf32>
    tpu.vector_store %arg18[%c64_589, %c0_590], %497 {strides = array<i32>} : memref<144x256xf32, #tpu.memory_space<vmem>>, vector<8x16xf32>,
    %c0_591 = arith.constant 0 : index
    %c0_592 = arith.constant 0 : index
    %499 = vector.load %arg18[%c0_591, %c0_592] : memref<144x256xf32, #tpu.memory_space<vmem>>, vector<72x16xf32>
    %cst_593 = arith.constant dense<0.000000e+00> : vector<8x16xf32>
    %500 = tpu.matmul %467, %499, %cst_593 {dimension_numbers = #tpu.dot_dimension_numbers<[1], [0], [0], [1], [0, 0, 1, 1], [], []>} : vector<8x72xf32>, vector<72x16xf32>, vector<8x16xf32> -> vector<8x16xf32>
    %c0_594 = arith.constant 0 : index
    %c9 = arith.constant 9 : index
    %501 = vector.load %arg4[%c0_594, %c9] : memref<8x14xf32, #tpu.memory_space<vmem>>, vector<8x1xf32>
    %502 = vector.broadcast %501 : vector<8x1xf32> to vector<8x16xf32>
    %503 = arith.addf %500, %502 : vector<8x16xf32>
    %cst_595 = arith.constant 0.000000e+00 : f32
    %504 = vector.broadcast %cst_595 : f32 to vector<8x16xf32>
    %505 = arith.maximumf %503, %504 : vector<8x16xf32>
    %c0_596 = arith.constant 0 : index
    %c0_597 = arith.constant 0 : index
    %506 = vector.load %arg8[%c0_596, %c0_597] : memref<16x64xf32, #tpu.memory_space<vmem>>, vector<16x64xf32>
    %cst_598 = arith.constant dense<0.000000e+00> : vector<8x64xf32>
    %507 = tpu.matmul %505, %506, %cst_598 {dimension_numbers = #tpu.dot_dimension_numbers<[1], [0], [0], [1], [0, 0, 1, 1], [], []>} : vector<8x16xf32>, vector<16x64xf32>, vector<8x64xf32> -> vector<8x64xf32>
    %c1_599 = arith.constant 1 : index
    %c0_600 = arith.constant 0 : index
    %c0_601 = arith.constant 0 : index
    %508 = vector.load %arg3[%c1_599, %c0_600, %c0_601] : memref<3x8x144xf32, #tpu.memory_space<vmem>>, vector<1x8x144xf32>
    %509 = vector.shape_cast %508 : vector<1x8x144xf32> to vector<8x144xf32>
    %c0_602 = arith.constant 0 : index
    %c128_603 = arith.constant 128 : index
    %510 = vector.load %arg15[%c0_602, %c128_603] : memref<8x201xf32, #tpu.memory_space<vmem>>, vector<8x64xf32>
    tpu.vector_store %arg15[%c0_602, %c128_603], %507 {strides = array<i32>} : memref<8x201xf32, #tpu.memory_space<vmem>>, vector<8x64xf32>,
    %c0_604 = arith.constant 0 : index
    %c119_605 = arith.constant 119 : index
    %511 = vector.load %arg15[%c0_604, %c119_605] : memref<8x201xf32, #tpu.memory_space<vmem>>, vector<8x64xf32>
    %cst_606 = arith.constant 0.000000e+00 : f32
    %512 = vector.broadcast %cst_606 : f32 to vector<8x64xf32>
    %513 = arith.select %121, %511, %512 : vector<8x64xi1>, vector<8x64xf32>
    %c0_607 = arith.constant 0 : index
    %c0_608 = arith.constant 0 : index
    %514 = vector.load %arg18[%c0_607, %c0_608] : memref<144x256xf32, #tpu.memory_space<vmem>>, vector<8x64xf32>
    tpu.vector_store %arg18[%c0_607, %c0_608], %513 {strides = array<i32>} : memref<144x256xf32, #tpu.memory_space<vmem>>, vector<8x64xf32>,
    %c0_609 = arith.constant 0 : index
    %c120_610 = arith.constant 120 : index
    %515 = vector.load %arg15[%c0_609, %c120_610] : memref<8x201xf32, #tpu.memory_space<vmem>>, vector<8x64xf32>
    %c8_611 = arith.constant 8 : index
    %c0_612 = arith.constant 0 : index
    %516 = vector.load %arg18[%c8_611, %c0_612] : memref<144x256xf32, #tpu.memory_space<vmem>>, vector<8x64xf32>
    tpu.vector_store %arg18[%c8_611, %c0_612], %515 {strides = array<i32>} : memref<144x256xf32, #tpu.memory_space<vmem>>, vector<8x64xf32>,
    %c0_613 = arith.constant 0 : index
    %c121_614 = arith.constant 121 : index
    %517 = vector.load %arg15[%c0_613, %c121_614] : memref<8x201xf32, #tpu.memory_space<vmem>>, vector<8x64xf32>
    %cst_615 = arith.constant 0.000000e+00 : f32
    %518 = vector.broadcast %cst_615 : f32 to vector<8x64xf32>
    %519 = arith.select %123, %517, %518 : vector<8x64xi1>, vector<8x64xf32>
    %c16_616 = arith.constant 16 : index
    %c0_617 = arith.constant 0 : index
    %520 = vector.load %arg18[%c16_616, %c0_617] : memref<144x256xf32, #tpu.memory_space<vmem>>, vector<8x64xf32>
    tpu.vector_store %arg18[%c16_616, %c0_617], %519 {strides = array<i32>} : memref<144x256xf32, #tpu.memory_space<vmem>>, vector<8x64xf32>,
    %c0_618 = arith.constant 0 : index
    %c127_619 = arith.constant 127 : index
    %521 = vector.load %arg15[%c0_618, %c127_619] : memref<8x201xf32, #tpu.memory_space<vmem>>, vector<8x64xf32>
    %cst_620 = arith.constant 0.000000e+00 : f32
    %522 = vector.broadcast %cst_620 : f32 to vector<8x64xf32>
    %523 = arith.select %121, %521, %522 : vector<8x64xi1>, vector<8x64xf32>
    %c24_621 = arith.constant 24 : index
    %c0_622 = arith.constant 0 : index
    %524 = vector.load %arg18[%c24_621, %c0_622] : memref<144x256xf32, #tpu.memory_space<vmem>>, vector<8x64xf32>
    tpu.vector_store %arg18[%c24_621, %c0_622], %523 {strides = array<i32>} : memref<144x256xf32, #tpu.memory_space<vmem>>, vector<8x64xf32>,
    %c0_623 = arith.constant 0 : index
    %c128_624 = arith.constant 128 : index
    %525 = vector.load %arg15[%c0_623, %c128_624] : memref<8x201xf32, #tpu.memory_space<vmem>>, vector<8x64xf32>
    %c32_625 = arith.constant 32 : index
    %c0_626 = arith.constant 0 : index
    %526 = vector.load %arg18[%c32_625, %c0_626] : memref<144x256xf32, #tpu.memory_space<vmem>>, vector<8x64xf32>
    tpu.vector_store %arg18[%c32_625, %c0_626], %525 {strides = array<i32>} : memref<144x256xf32, #tpu.memory_space<vmem>>, vector<8x64xf32>,
    %c0_627 = arith.constant 0 : index
    %c129_628 = arith.constant 129 : index
    %527 = vector.load %arg15[%c0_627, %c129_628] : memref<8x201xf32, #tpu.memory_space<vmem>>, vector<8x64xf32>
    %cst_629 = arith.constant 0.000000e+00 : f32
    %528 = vector.broadcast %cst_629 : f32 to vector<8x64xf32>
    %529 = arith.select %123, %527, %528 : vector<8x64xi1>, vector<8x64xf32>
    %c40_630 = arith.constant 40 : index
    %c0_631 = arith.constant 0 : index
    %530 = vector.load %arg18[%c40_630, %c0_631] : memref<144x256xf32, #tpu.memory_space<vmem>>, vector<8x64xf32>
    tpu.vector_store %arg18[%c40_630, %c0_631], %529 {strides = array<i32>} : memref<144x256xf32, #tpu.memory_space<vmem>>, vector<8x64xf32>,
    %c0_632 = arith.constant 0 : index
    %c135_633 = arith.constant 135 : index
    %531 = vector.load %arg15[%c0_632, %c135_633] : memref<8x201xf32, #tpu.memory_space<vmem>>, vector<8x64xf32>
    %cst_634 = arith.constant 0.000000e+00 : f32
    %532 = vector.broadcast %cst_634 : f32 to vector<8x64xf32>
    %533 = arith.select %121, %531, %532 : vector<8x64xi1>, vector<8x64xf32>
    %c48_635 = arith.constant 48 : index
    %c0_636 = arith.constant 0 : index
    %534 = vector.load %arg18[%c48_635, %c0_636] : memref<144x256xf32, #tpu.memory_space<vmem>>, vector<8x64xf32>
    tpu.vector_store %arg18[%c48_635, %c0_636], %533 {strides = array<i32>} : memref<144x256xf32, #tpu.memory_space<vmem>>, vector<8x64xf32>,
    %c0_637 = arith.constant 0 : index
    %c136_638 = arith.constant 136 : index
    %535 = vector.load %arg15[%c0_637, %c136_638] : memref<8x201xf32, #tpu.memory_space<vmem>>, vector<8x64xf32>
    %c56_639 = arith.constant 56 : index
    %c0_640 = arith.constant 0 : index
    %536 = vector.load %arg18[%c56_639, %c0_640] : memref<144x256xf32, #tpu.memory_space<vmem>>, vector<8x64xf32>
    tpu.vector_store %arg18[%c56_639, %c0_640], %535 {strides = array<i32>} : memref<144x256xf32, #tpu.memory_space<vmem>>, vector<8x64xf32>,
    %c0_641 = arith.constant 0 : index
    %c137_642 = arith.constant 137 : index
    %537 = vector.load %arg15[%c0_641, %c137_642] : memref<8x201xf32, #tpu.memory_space<vmem>>, vector<8x64xf32>
    %cst_643 = arith.constant 0.000000e+00 : f32
    %538 = vector.broadcast %cst_643 : f32 to vector<8x64xf32>
    %539 = arith.select %123, %537, %538 : vector<8x64xi1>, vector<8x64xf32>
    %c64_644 = arith.constant 64 : index
    %c0_645 = arith.constant 0 : index
    %540 = vector.load %arg18[%c64_644, %c0_645] : memref<144x256xf32, #tpu.memory_space<vmem>>, vector<8x64xf32>
    tpu.vector_store %arg18[%c64_644, %c0_645], %539 {strides = array<i32>} : memref<144x256xf32, #tpu.memory_space<vmem>>, vector<8x64xf32>,
    %c0_646 = arith.constant 0 : index
    %c128_647 = arith.constant 128 : index
    %541 = vector.load %arg15[%c0_646, %c128_647] : memref<8x201xf32, #tpu.memory_space<vmem>>, vector<8x64xf32>
    tpu.vector_store %arg15[%c0_646, %c128_647], %200 {strides = array<i32>} : memref<8x201xf32, #tpu.memory_space<vmem>>, vector<8x64xf32>,
    %c0_648 = arith.constant 0 : index
    %c119_649 = arith.constant 119 : index
    %542 = vector.load %arg15[%c0_648, %c119_649] : memref<8x201xf32, #tpu.memory_space<vmem>>, vector<8x64xf32>
    %cst_650 = arith.constant 0.000000e+00 : f32
    %543 = vector.broadcast %cst_650 : f32 to vector<8x64xf32>
    %544 = arith.select %121, %542, %543 : vector<8x64xi1>, vector<8x64xf32>
    %c72_651 = arith.constant 72 : index
    %c0_652 = arith.constant 0 : index
    %545 = vector.load %arg18[%c72_651, %c0_652] : memref<144x256xf32, #tpu.memory_space<vmem>>, vector<8x64xf32>
    tpu.vector_store %arg18[%c72_651, %c0_652], %544 {strides = array<i32>} : memref<144x256xf32, #tpu.memory_space<vmem>>, vector<8x64xf32>,
    %c0_653 = arith.constant 0 : index
    %c120_654 = arith.constant 120 : index
    %546 = vector.load %arg15[%c0_653, %c120_654] : memref<8x201xf32, #tpu.memory_space<vmem>>, vector<8x64xf32>
    %c80_655 = arith.constant 80 : index
    %c0_656 = arith.constant 0 : index
    %547 = vector.load %arg18[%c80_655, %c0_656] : memref<144x256xf32, #tpu.memory_space<vmem>>, vector<8x64xf32>
    tpu.vector_store %arg18[%c80_655, %c0_656], %546 {strides = array<i32>} : memref<144x256xf32, #tpu.memory_space<vmem>>, vector<8x64xf32>,
    %c0_657 = arith.constant 0 : index
    %c121_658 = arith.constant 121 : index
    %548 = vector.load %arg15[%c0_657, %c121_658] : memref<8x201xf32, #tpu.memory_space<vmem>>, vector<8x64xf32>
    %cst_659 = arith.constant 0.000000e+00 : f32
    %549 = vector.broadcast %cst_659 : f32 to vector<8x64xf32>
    %550 = arith.select %123, %548, %549 : vector<8x64xi1>, vector<8x64xf32>
    %c88_660 = arith.constant 88 : index
    %c0_661 = arith.constant 0 : index
    %551 = vector.load %arg18[%c88_660, %c0_661] : memref<144x256xf32, #tpu.memory_space<vmem>>, vector<8x64xf32>
    tpu.vector_store %arg18[%c88_660, %c0_661], %550 {strides = array<i32>} : memref<144x256xf32, #tpu.memory_space<vmem>>, vector<8x64xf32>,
    %c0_662 = arith.constant 0 : index
    %c127_663 = arith.constant 127 : index
    %552 = vector.load %arg15[%c0_662, %c127_663] : memref<8x201xf32, #tpu.memory_space<vmem>>, vector<8x64xf32>
    %cst_664 = arith.constant 0.000000e+00 : f32
    %553 = vector.broadcast %cst_664 : f32 to vector<8x64xf32>
    %554 = arith.select %121, %552, %553 : vector<8x64xi1>, vector<8x64xf32>
    %c96_665 = arith.constant 96 : index
    %c0_666 = arith.constant 0 : index
    %555 = vector.load %arg18[%c96_665, %c0_666] : memref<144x256xf32, #tpu.memory_space<vmem>>, vector<8x64xf32>
    tpu.vector_store %arg18[%c96_665, %c0_666], %554 {strides = array<i32>} : memref<144x256xf32, #tpu.memory_space<vmem>>, vector<8x64xf32>,
    %c0_667 = arith.constant 0 : index
    %c128_668 = arith.constant 128 : index
    %556 = vector.load %arg15[%c0_667, %c128_668] : memref<8x201xf32, #tpu.memory_space<vmem>>, vector<8x64xf32>
    %c104_669 = arith.constant 104 : index
    %c0_670 = arith.constant 0 : index
    %557 = vector.load %arg18[%c104_669, %c0_670] : memref<144x256xf32, #tpu.memory_space<vmem>>, vector<8x64xf32>
    tpu.vector_store %arg18[%c104_669, %c0_670], %556 {strides = array<i32>} : memref<144x256xf32, #tpu.memory_space<vmem>>, vector<8x64xf32>,
    %c0_671 = arith.constant 0 : index
    %c129_672 = arith.constant 129 : index
    %558 = vector.load %arg15[%c0_671, %c129_672] : memref<8x201xf32, #tpu.memory_space<vmem>>, vector<8x64xf32>
    %cst_673 = arith.constant 0.000000e+00 : f32
    %559 = vector.broadcast %cst_673 : f32 to vector<8x64xf32>
    %560 = arith.select %123, %558, %559 : vector<8x64xi1>, vector<8x64xf32>
    %c112_674 = arith.constant 112 : index
    %c0_675 = arith.constant 0 : index
    %561 = vector.load %arg18[%c112_674, %c0_675] : memref<144x256xf32, #tpu.memory_space<vmem>>, vector<8x64xf32>
    tpu.vector_store %arg18[%c112_674, %c0_675], %560 {strides = array<i32>} : memref<144x256xf32, #tpu.memory_space<vmem>>, vector<8x64xf32>,
    %c0_676 = arith.constant 0 : index
    %c135_677 = arith.constant 135 : index
    %562 = vector.load %arg15[%c0_676, %c135_677] : memref<8x201xf32, #tpu.memory_space<vmem>>, vector<8x64xf32>
    %cst_678 = arith.constant 0.000000e+00 : f32
    %563 = vector.broadcast %cst_678 : f32 to vector<8x64xf32>
    %564 = arith.select %121, %562, %563 : vector<8x64xi1>, vector<8x64xf32>
    %c120_679 = arith.constant 120 : index
    %c0_680 = arith.constant 0 : index
    %565 = vector.load %arg18[%c120_679, %c0_680] : memref<144x256xf32, #tpu.memory_space<vmem>>, vector<8x64xf32>
    tpu.vector_store %arg18[%c120_679, %c0_680], %564 {strides = array<i32>} : memref<144x256xf32, #tpu.memory_space<vmem>>, vector<8x64xf32>,
    %c0_681 = arith.constant 0 : index
    %c136_682 = arith.constant 136 : index
    %566 = vector.load %arg15[%c0_681, %c136_682] : memref<8x201xf32, #tpu.memory_space<vmem>>, vector<8x64xf32>
    %c128_683 = arith.constant 128 : index
    %c0_684 = arith.constant 0 : index
    %567 = vector.load %arg18[%c128_683, %c0_684] : memref<144x256xf32, #tpu.memory_space<vmem>>, vector<8x64xf32>
    tpu.vector_store %arg18[%c128_683, %c0_684], %566 {strides = array<i32>} : memref<144x256xf32, #tpu.memory_space<vmem>>, vector<8x64xf32>,
    %c0_685 = arith.constant 0 : index
    %c137_686 = arith.constant 137 : index
    %568 = vector.load %arg15[%c0_685, %c137_686] : memref<8x201xf32, #tpu.memory_space<vmem>>, vector<8x64xf32>
    %cst_687 = arith.constant 0.000000e+00 : f32
    %569 = vector.broadcast %cst_687 : f32 to vector<8x64xf32>
    %570 = arith.select %123, %568, %569 : vector<8x64xi1>, vector<8x64xf32>
    %c136_688 = arith.constant 136 : index
    %c0_689 = arith.constant 0 : index
    %571 = vector.load %arg18[%c136_688, %c0_689] : memref<144x256xf32, #tpu.memory_space<vmem>>, vector<8x64xf32>
    tpu.vector_store %arg18[%c136_688, %c0_689], %570 {strides = array<i32>} : memref<144x256xf32, #tpu.memory_space<vmem>>, vector<8x64xf32>,
    %c0_690 = arith.constant 0 : index
    %c0_691 = arith.constant 0 : index
    %572 = vector.load %arg18[%c0_690, %c0_691] : memref<144x256xf32, #tpu.memory_space<vmem>>, vector<144x64xf32>
    %cst_692 = arith.constant dense<0.000000e+00> : vector<8x64xf32>
    %573 = tpu.matmul %509, %572, %cst_692 {dimension_numbers = #tpu.dot_dimension_numbers<[1], [0], [0], [1], [0, 0, 1, 1], [], []>} : vector<8x144xf32>, vector<144x64xf32>, vector<8x64xf32> -> vector<8x64xf32>
    %c0_693 = arith.constant 0 : index
    %c10 = arith.constant 10 : index
    %574 = vector.load %arg4[%c0_693, %c10] : memref<8x14xf32, #tpu.memory_space<vmem>>, vector<8x1xf32>
    %575 = vector.broadcast %574 : vector<8x1xf32> to vector<8x64xf32>
    %576 = arith.addf %573, %575 : vector<8x64xf32>
    %cst_694 = arith.constant 0.000000e+00 : f32
    %577 = vector.broadcast %cst_694 : f32 to vector<8x64xf32>
    %578 = arith.maximumf %576, %577 : vector<8x64xf32>
    %c9_695 = arith.constant 9 : index
    %c0_696 = arith.constant 0 : index
    %c0_697 = arith.constant 0 : index
    %579 = vector.load %arg2[%c9_695, %c0_696, %c0_697] : memref<11x8x72xf32, #tpu.memory_space<vmem>>, vector<1x8x72xf32>
    %580 = vector.shape_cast %579 : vector<1x8x72xf32> to vector<8x72xf32>
    %c0_698 = arith.constant 0 : index
    %c128_699 = arith.constant 128 : index
    %581 = vector.load %arg15[%c0_698, %c128_699] : memref<8x201xf32, #tpu.memory_space<vmem>>, vector<8x64xf32>
    tpu.vector_store %arg15[%c0_698, %c128_699], %578 {strides = array<i32>} : memref<8x201xf32, #tpu.memory_space<vmem>>, vector<8x64xf32>,
    %c0_700 = arith.constant 0 : index
    %c119_701 = arith.constant 119 : index
    %582 = vector.load %arg15[%c0_700, %c119_701] : memref<8x201xf32, #tpu.memory_space<vmem>>, vector<8x64xf32>
    %cst_702 = arith.constant 0.000000e+00 : f32
    %583 = vector.broadcast %cst_702 : f32 to vector<8x64xf32>
    %584 = arith.select %121, %582, %583 : vector<8x64xi1>, vector<8x64xf32>
    %c0_703 = arith.constant 0 : index
    %c0_704 = arith.constant 0 : index
    %585 = vector.load %arg18[%c0_703, %c0_704] : memref<144x256xf32, #tpu.memory_space<vmem>>, vector<8x64xf32>
    tpu.vector_store %arg18[%c0_703, %c0_704], %584 {strides = array<i32>} : memref<144x256xf32, #tpu.memory_space<vmem>>, vector<8x64xf32>,
    %c0_705 = arith.constant 0 : index
    %c120_706 = arith.constant 120 : index
    %586 = vector.load %arg15[%c0_705, %c120_706] : memref<8x201xf32, #tpu.memory_space<vmem>>, vector<8x64xf32>
    %c8_707 = arith.constant 8 : index
    %c0_708 = arith.constant 0 : index
    %587 = vector.load %arg18[%c8_707, %c0_708] : memref<144x256xf32, #tpu.memory_space<vmem>>, vector<8x64xf32>
    tpu.vector_store %arg18[%c8_707, %c0_708], %586 {strides = array<i32>} : memref<144x256xf32, #tpu.memory_space<vmem>>, vector<8x64xf32>,
    %c0_709 = arith.constant 0 : index
    %c121_710 = arith.constant 121 : index
    %588 = vector.load %arg15[%c0_709, %c121_710] : memref<8x201xf32, #tpu.memory_space<vmem>>, vector<8x64xf32>
    %cst_711 = arith.constant 0.000000e+00 : f32
    %589 = vector.broadcast %cst_711 : f32 to vector<8x64xf32>
    %590 = arith.select %123, %588, %589 : vector<8x64xi1>, vector<8x64xf32>
    %c16_712 = arith.constant 16 : index
    %c0_713 = arith.constant 0 : index
    %591 = vector.load %arg18[%c16_712, %c0_713] : memref<144x256xf32, #tpu.memory_space<vmem>>, vector<8x64xf32>
    tpu.vector_store %arg18[%c16_712, %c0_713], %590 {strides = array<i32>} : memref<144x256xf32, #tpu.memory_space<vmem>>, vector<8x64xf32>,
    %c0_714 = arith.constant 0 : index
    %c127_715 = arith.constant 127 : index
    %592 = vector.load %arg15[%c0_714, %c127_715] : memref<8x201xf32, #tpu.memory_space<vmem>>, vector<8x64xf32>
    %cst_716 = arith.constant 0.000000e+00 : f32
    %593 = vector.broadcast %cst_716 : f32 to vector<8x64xf32>
    %594 = arith.select %121, %592, %593 : vector<8x64xi1>, vector<8x64xf32>
    %c24_717 = arith.constant 24 : index
    %c0_718 = arith.constant 0 : index
    %595 = vector.load %arg18[%c24_717, %c0_718] : memref<144x256xf32, #tpu.memory_space<vmem>>, vector<8x64xf32>
    tpu.vector_store %arg18[%c24_717, %c0_718], %594 {strides = array<i32>} : memref<144x256xf32, #tpu.memory_space<vmem>>, vector<8x64xf32>,
    %c0_719 = arith.constant 0 : index
    %c128_720 = arith.constant 128 : index
    %596 = vector.load %arg15[%c0_719, %c128_720] : memref<8x201xf32, #tpu.memory_space<vmem>>, vector<8x64xf32>
    %c32_721 = arith.constant 32 : index
    %c0_722 = arith.constant 0 : index
    %597 = vector.load %arg18[%c32_721, %c0_722] : memref<144x256xf32, #tpu.memory_space<vmem>>, vector<8x64xf32>
    tpu.vector_store %arg18[%c32_721, %c0_722], %596 {strides = array<i32>} : memref<144x256xf32, #tpu.memory_space<vmem>>, vector<8x64xf32>,
    %c0_723 = arith.constant 0 : index
    %c129_724 = arith.constant 129 : index
    %598 = vector.load %arg15[%c0_723, %c129_724] : memref<8x201xf32, #tpu.memory_space<vmem>>, vector<8x64xf32>
    %cst_725 = arith.constant 0.000000e+00 : f32
    %599 = vector.broadcast %cst_725 : f32 to vector<8x64xf32>
    %600 = arith.select %123, %598, %599 : vector<8x64xi1>, vector<8x64xf32>
    %c40_726 = arith.constant 40 : index
    %c0_727 = arith.constant 0 : index
    %601 = vector.load %arg18[%c40_726, %c0_727] : memref<144x256xf32, #tpu.memory_space<vmem>>, vector<8x64xf32>
    tpu.vector_store %arg18[%c40_726, %c0_727], %600 {strides = array<i32>} : memref<144x256xf32, #tpu.memory_space<vmem>>, vector<8x64xf32>,
    %c0_728 = arith.constant 0 : index
    %c135_729 = arith.constant 135 : index
    %602 = vector.load %arg15[%c0_728, %c135_729] : memref<8x201xf32, #tpu.memory_space<vmem>>, vector<8x64xf32>
    %cst_730 = arith.constant 0.000000e+00 : f32
    %603 = vector.broadcast %cst_730 : f32 to vector<8x64xf32>
    %604 = arith.select %121, %602, %603 : vector<8x64xi1>, vector<8x64xf32>
    %c48_731 = arith.constant 48 : index
    %c0_732 = arith.constant 0 : index
    %605 = vector.load %arg18[%c48_731, %c0_732] : memref<144x256xf32, #tpu.memory_space<vmem>>, vector<8x64xf32>
    tpu.vector_store %arg18[%c48_731, %c0_732], %604 {strides = array<i32>} : memref<144x256xf32, #tpu.memory_space<vmem>>, vector<8x64xf32>,
    %c0_733 = arith.constant 0 : index
    %c136_734 = arith.constant 136 : index
    %606 = vector.load %arg15[%c0_733, %c136_734] : memref<8x201xf32, #tpu.memory_space<vmem>>, vector<8x64xf32>
    %c56_735 = arith.constant 56 : index
    %c0_736 = arith.constant 0 : index
    %607 = vector.load %arg18[%c56_735, %c0_736] : memref<144x256xf32, #tpu.memory_space<vmem>>, vector<8x64xf32>
    tpu.vector_store %arg18[%c56_735, %c0_736], %606 {strides = array<i32>} : memref<144x256xf32, #tpu.memory_space<vmem>>, vector<8x64xf32>,
    %c0_737 = arith.constant 0 : index
    %c137_738 = arith.constant 137 : index
    %608 = vector.load %arg15[%c0_737, %c137_738] : memref<8x201xf32, #tpu.memory_space<vmem>>, vector<8x64xf32>
    %cst_739 = arith.constant 0.000000e+00 : f32
    %609 = vector.broadcast %cst_739 : f32 to vector<8x64xf32>
    %610 = arith.select %123, %608, %609 : vector<8x64xi1>, vector<8x64xf32>
    %c64_740 = arith.constant 64 : index
    %c0_741 = arith.constant 0 : index
    %611 = vector.load %arg18[%c64_740, %c0_741] : memref<144x256xf32, #tpu.memory_space<vmem>>, vector<8x64xf32>
    tpu.vector_store %arg18[%c64_740, %c0_741], %610 {strides = array<i32>} : memref<144x256xf32, #tpu.memory_space<vmem>>, vector<8x64xf32>,
    %c0_742 = arith.constant 0 : index
    %c0_743 = arith.constant 0 : index
    %612 = vector.load %arg18[%c0_742, %c0_743] : memref<144x256xf32, #tpu.memory_space<vmem>>, vector<72x64xf32>
    %cst_744 = arith.constant dense<0.000000e+00> : vector<8x64xf32>
    %613 = tpu.matmul %580, %612, %cst_744 {dimension_numbers = #tpu.dot_dimension_numbers<[1], [0], [0], [1], [0, 0, 1, 1], [], []>} : vector<8x72xf32>, vector<72x64xf32>, vector<8x64xf32> -> vector<8x64xf32>
    %c0_745 = arith.constant 0 : index
    %c11 = arith.constant 11 : index
    %614 = vector.load %arg4[%c0_745, %c11] : memref<8x14xf32, #tpu.memory_space<vmem>>, vector<8x1xf32>
    %615 = vector.broadcast %614 : vector<8x1xf32> to vector<8x64xf32>
    %616 = arith.addf %613, %615 : vector<8x64xf32>
    %cst_746 = arith.constant 0.000000e+00 : f32
    %617 = vector.broadcast %cst_746 : f32 to vector<8x64xf32>
    %618 = arith.maximumf %616, %617 : vector<8x64xf32>
    %c0_747 = arith.constant 0 : index
    %c0_748 = arith.constant 0 : index
    %619 = vector.load %arg9[%c0_747, %c0_748] : memref<64x256xf32, #tpu.memory_space<vmem>>, vector<64x256xf32>
    %cst_749 = arith.constant dense<0.000000e+00> : vector<8x256xf32>
    %620 = tpu.matmul %618, %619, %cst_749 {dimension_numbers = #tpu.dot_dimension_numbers<[1], [0], [0], [1], [0, 0, 1, 1], [], []>} : vector<8x64xf32>, vector<64x256xf32>, vector<8x256xf32> -> vector<8x256xf32>
    %c2_750 = arith.constant 2 : index
    %c0_751 = arith.constant 0 : index
    %c0_752 = arith.constant 0 : index
    %621 = vector.load %arg3[%c2_750, %c0_751, %c0_752] : memref<3x8x144xf32, #tpu.memory_space<vmem>>, vector<1x8x144xf32>
    %622 = vector.shape_cast %621 : vector<1x8x144xf32> to vector<8x144xf32>
    %c0_753 = arith.constant 0 : index
    %c128_754 = arith.constant 128 : index
    %623 = vector.load %arg14[%c0_753, %c128_754] : memref<8x401xf32, #tpu.memory_space<vmem>>, vector<8x256xf32>
    tpu.vector_store %arg14[%c0_753, %c128_754], %620 {strides = array<i32>} : memref<8x401xf32, #tpu.memory_space<vmem>>, vector<8x256xf32>,
    %c0_755 = arith.constant 0 : index
    %c111_756 = arith.constant 111 : index
    %624 = vector.load %arg14[%c0_755, %c111_756] : memref<8x401xf32, #tpu.memory_space<vmem>>, vector<8x256xf32>
    %cst_757 = arith.constant 0.000000e+00 : f32
    %625 = vector.broadcast %cst_757 : f32 to vector<8x256xf32>
    %626 = arith.select %25, %624, %625 : vector<8x256xi1>, vector<8x256xf32>
    %c0_758 = arith.constant 0 : index
    %c0_759 = arith.constant 0 : index
    %627 = vector.load %arg18[%c0_758, %c0_759] : memref<144x256xf32, #tpu.memory_space<vmem>>, vector<8x256xf32>
    tpu.vector_store %arg18[%c0_758, %c0_759], %626 {strides = array<i32>} : memref<144x256xf32, #tpu.memory_space<vmem>>, vector<8x256xf32>,
    %c0_760 = arith.constant 0 : index
    %c112_761 = arith.constant 112 : index
    %628 = vector.load %arg14[%c0_760, %c112_761] : memref<8x401xf32, #tpu.memory_space<vmem>>, vector<8x256xf32>
    %c8_762 = arith.constant 8 : index
    %c0_763 = arith.constant 0 : index
    %629 = vector.load %arg18[%c8_762, %c0_763] : memref<144x256xf32, #tpu.memory_space<vmem>>, vector<8x256xf32>
    tpu.vector_store %arg18[%c8_762, %c0_763], %628 {strides = array<i32>} : memref<144x256xf32, #tpu.memory_space<vmem>>, vector<8x256xf32>,
    %c0_764 = arith.constant 0 : index
    %c113_765 = arith.constant 113 : index
    %630 = vector.load %arg14[%c0_764, %c113_765] : memref<8x401xf32, #tpu.memory_space<vmem>>, vector<8x256xf32>
    %cst_766 = arith.constant 0.000000e+00 : f32
    %631 = vector.broadcast %cst_766 : f32 to vector<8x256xf32>
    %632 = arith.select %27, %630, %631 : vector<8x256xi1>, vector<8x256xf32>
    %c16_767 = arith.constant 16 : index
    %c0_768 = arith.constant 0 : index
    %633 = vector.load %arg18[%c16_767, %c0_768] : memref<144x256xf32, #tpu.memory_space<vmem>>, vector<8x256xf32>
    tpu.vector_store %arg18[%c16_767, %c0_768], %632 {strides = array<i32>} : memref<144x256xf32, #tpu.memory_space<vmem>>, vector<8x256xf32>,
    %c0_769 = arith.constant 0 : index
    %c127_770 = arith.constant 127 : index
    %634 = vector.load %arg14[%c0_769, %c127_770] : memref<8x401xf32, #tpu.memory_space<vmem>>, vector<8x256xf32>
    %cst_771 = arith.constant 0.000000e+00 : f32
    %635 = vector.broadcast %cst_771 : f32 to vector<8x256xf32>
    %636 = arith.select %25, %634, %635 : vector<8x256xi1>, vector<8x256xf32>
    %c24_772 = arith.constant 24 : index
    %c0_773 = arith.constant 0 : index
    %637 = vector.load %arg18[%c24_772, %c0_773] : memref<144x256xf32, #tpu.memory_space<vmem>>, vector<8x256xf32>
    tpu.vector_store %arg18[%c24_772, %c0_773], %636 {strides = array<i32>} : memref<144x256xf32, #tpu.memory_space<vmem>>, vector<8x256xf32>,
    %c0_774 = arith.constant 0 : index
    %c128_775 = arith.constant 128 : index
    %638 = vector.load %arg14[%c0_774, %c128_775] : memref<8x401xf32, #tpu.memory_space<vmem>>, vector<8x256xf32>
    %c32_776 = arith.constant 32 : index
    %c0_777 = arith.constant 0 : index
    %639 = vector.load %arg18[%c32_776, %c0_777] : memref<144x256xf32, #tpu.memory_space<vmem>>, vector<8x256xf32>
    tpu.vector_store %arg18[%c32_776, %c0_777], %638 {strides = array<i32>} : memref<144x256xf32, #tpu.memory_space<vmem>>, vector<8x256xf32>,
    %c0_778 = arith.constant 0 : index
    %c129_779 = arith.constant 129 : index
    %640 = vector.load %arg14[%c0_778, %c129_779] : memref<8x401xf32, #tpu.memory_space<vmem>>, vector<8x256xf32>
    %cst_780 = arith.constant 0.000000e+00 : f32
    %641 = vector.broadcast %cst_780 : f32 to vector<8x256xf32>
    %642 = arith.select %27, %640, %641 : vector<8x256xi1>, vector<8x256xf32>
    %c40_781 = arith.constant 40 : index
    %c0_782 = arith.constant 0 : index
    %643 = vector.load %arg18[%c40_781, %c0_782] : memref<144x256xf32, #tpu.memory_space<vmem>>, vector<8x256xf32>
    tpu.vector_store %arg18[%c40_781, %c0_782], %642 {strides = array<i32>} : memref<144x256xf32, #tpu.memory_space<vmem>>, vector<8x256xf32>,
    %c0_783 = arith.constant 0 : index
    %c143_784 = arith.constant 143 : index
    %644 = vector.load %arg14[%c0_783, %c143_784] : memref<8x401xf32, #tpu.memory_space<vmem>>, vector<8x256xf32>
    %cst_785 = arith.constant 0.000000e+00 : f32
    %645 = vector.broadcast %cst_785 : f32 to vector<8x256xf32>
    %646 = arith.select %25, %644, %645 : vector<8x256xi1>, vector<8x256xf32>
    %c48_786 = arith.constant 48 : index
    %c0_787 = arith.constant 0 : index
    %647 = vector.load %arg18[%c48_786, %c0_787] : memref<144x256xf32, #tpu.memory_space<vmem>>, vector<8x256xf32>
    tpu.vector_store %arg18[%c48_786, %c0_787], %646 {strides = array<i32>} : memref<144x256xf32, #tpu.memory_space<vmem>>, vector<8x256xf32>,
    %c0_788 = arith.constant 0 : index
    %c144_789 = arith.constant 144 : index
    %648 = vector.load %arg14[%c0_788, %c144_789] : memref<8x401xf32, #tpu.memory_space<vmem>>, vector<8x256xf32>
    %c56_790 = arith.constant 56 : index
    %c0_791 = arith.constant 0 : index
    %649 = vector.load %arg18[%c56_790, %c0_791] : memref<144x256xf32, #tpu.memory_space<vmem>>, vector<8x256xf32>
    tpu.vector_store %arg18[%c56_790, %c0_791], %648 {strides = array<i32>} : memref<144x256xf32, #tpu.memory_space<vmem>>, vector<8x256xf32>,
    %c0_792 = arith.constant 0 : index
    %c145_793 = arith.constant 145 : index
    %650 = vector.load %arg14[%c0_792, %c145_793] : memref<8x401xf32, #tpu.memory_space<vmem>>, vector<8x256xf32>
    %cst_794 = arith.constant 0.000000e+00 : f32
    %651 = vector.broadcast %cst_794 : f32 to vector<8x256xf32>
    %652 = arith.select %27, %650, %651 : vector<8x256xi1>, vector<8x256xf32>
    %c64_795 = arith.constant 64 : index
    %c0_796 = arith.constant 0 : index
    %653 = vector.load %arg18[%c64_795, %c0_796] : memref<144x256xf32, #tpu.memory_space<vmem>>, vector<8x256xf32>
    tpu.vector_store %arg18[%c64_795, %c0_796], %652 {strides = array<i32>} : memref<144x256xf32, #tpu.memory_space<vmem>>, vector<8x256xf32>,
    %c0_797 = arith.constant 0 : index
    %c128_798 = arith.constant 128 : index
    %654 = vector.load %arg14[%c0_797, %c128_798] : memref<8x401xf32, #tpu.memory_space<vmem>>, vector<8x256xf32>
    tpu.vector_store %arg14[%c0_797, %c128_798], %104 {strides = array<i32>} : memref<8x401xf32, #tpu.memory_space<vmem>>, vector<8x256xf32>,
    %c0_799 = arith.constant 0 : index
    %c111_800 = arith.constant 111 : index
    %655 = vector.load %arg14[%c0_799, %c111_800] : memref<8x401xf32, #tpu.memory_space<vmem>>, vector<8x256xf32>
    %cst_801 = arith.constant 0.000000e+00 : f32
    %656 = vector.broadcast %cst_801 : f32 to vector<8x256xf32>
    %657 = arith.select %25, %655, %656 : vector<8x256xi1>, vector<8x256xf32>
    %c72_802 = arith.constant 72 : index
    %c0_803 = arith.constant 0 : index
    %658 = vector.load %arg18[%c72_802, %c0_803] : memref<144x256xf32, #tpu.memory_space<vmem>>, vector<8x256xf32>
    tpu.vector_store %arg18[%c72_802, %c0_803], %657 {strides = array<i32>} : memref<144x256xf32, #tpu.memory_space<vmem>>, vector<8x256xf32>,
    %c0_804 = arith.constant 0 : index
    %c112_805 = arith.constant 112 : index
    %659 = vector.load %arg14[%c0_804, %c112_805] : memref<8x401xf32, #tpu.memory_space<vmem>>, vector<8x256xf32>
    %c80_806 = arith.constant 80 : index
    %c0_807 = arith.constant 0 : index
    %660 = vector.load %arg18[%c80_806, %c0_807] : memref<144x256xf32, #tpu.memory_space<vmem>>, vector<8x256xf32>
    tpu.vector_store %arg18[%c80_806, %c0_807], %659 {strides = array<i32>} : memref<144x256xf32, #tpu.memory_space<vmem>>, vector<8x256xf32>,
    %c0_808 = arith.constant 0 : index
    %c113_809 = arith.constant 113 : index
    %661 = vector.load %arg14[%c0_808, %c113_809] : memref<8x401xf32, #tpu.memory_space<vmem>>, vector<8x256xf32>
    %cst_810 = arith.constant 0.000000e+00 : f32
    %662 = vector.broadcast %cst_810 : f32 to vector<8x256xf32>
    %663 = arith.select %27, %661, %662 : vector<8x256xi1>, vector<8x256xf32>
    %c88_811 = arith.constant 88 : index
    %c0_812 = arith.constant 0 : index
    %664 = vector.load %arg18[%c88_811, %c0_812] : memref<144x256xf32, #tpu.memory_space<vmem>>, vector<8x256xf32>
    tpu.vector_store %arg18[%c88_811, %c0_812], %663 {strides = array<i32>} : memref<144x256xf32, #tpu.memory_space<vmem>>, vector<8x256xf32>,
    %c0_813 = arith.constant 0 : index
    %c127_814 = arith.constant 127 : index
    %665 = vector.load %arg14[%c0_813, %c127_814] : memref<8x401xf32, #tpu.memory_space<vmem>>, vector<8x256xf32>
    %cst_815 = arith.constant 0.000000e+00 : f32
    %666 = vector.broadcast %cst_815 : f32 to vector<8x256xf32>
    %667 = arith.select %25, %665, %666 : vector<8x256xi1>, vector<8x256xf32>
    %c96_816 = arith.constant 96 : index
    %c0_817 = arith.constant 0 : index
    %668 = vector.load %arg18[%c96_816, %c0_817] : memref<144x256xf32, #tpu.memory_space<vmem>>, vector<8x256xf32>
    tpu.vector_store %arg18[%c96_816, %c0_817], %667 {strides = array<i32>} : memref<144x256xf32, #tpu.memory_space<vmem>>, vector<8x256xf32>,
    %c0_818 = arith.constant 0 : index
    %c128_819 = arith.constant 128 : index
    %669 = vector.load %arg14[%c0_818, %c128_819] : memref<8x401xf32, #tpu.memory_space<vmem>>, vector<8x256xf32>
    %c104_820 = arith.constant 104 : index
    %c0_821 = arith.constant 0 : index
    %670 = vector.load %arg18[%c104_820, %c0_821] : memref<144x256xf32, #tpu.memory_space<vmem>>, vector<8x256xf32>
    tpu.vector_store %arg18[%c104_820, %c0_821], %669 {strides = array<i32>} : memref<144x256xf32, #tpu.memory_space<vmem>>, vector<8x256xf32>,
    %c0_822 = arith.constant 0 : index
    %c129_823 = arith.constant 129 : index
    %671 = vector.load %arg14[%c0_822, %c129_823] : memref<8x401xf32, #tpu.memory_space<vmem>>, vector<8x256xf32>
    %cst_824 = arith.constant 0.000000e+00 : f32
    %672 = vector.broadcast %cst_824 : f32 to vector<8x256xf32>
    %673 = arith.select %27, %671, %672 : vector<8x256xi1>, vector<8x256xf32>
    %c112_825 = arith.constant 112 : index
    %c0_826 = arith.constant 0 : index
    %674 = vector.load %arg18[%c112_825, %c0_826] : memref<144x256xf32, #tpu.memory_space<vmem>>, vector<8x256xf32>
    tpu.vector_store %arg18[%c112_825, %c0_826], %673 {strides = array<i32>} : memref<144x256xf32, #tpu.memory_space<vmem>>, vector<8x256xf32>,
    %c0_827 = arith.constant 0 : index
    %c143_828 = arith.constant 143 : index
    %675 = vector.load %arg14[%c0_827, %c143_828] : memref<8x401xf32, #tpu.memory_space<vmem>>, vector<8x256xf32>
    %cst_829 = arith.constant 0.000000e+00 : f32
    %676 = vector.broadcast %cst_829 : f32 to vector<8x256xf32>
    %677 = arith.select %25, %675, %676 : vector<8x256xi1>, vector<8x256xf32>
    %c120_830 = arith.constant 120 : index
    %c0_831 = arith.constant 0 : index
    %678 = vector.load %arg18[%c120_830, %c0_831] : memref<144x256xf32, #tpu.memory_space<vmem>>, vector<8x256xf32>
    tpu.vector_store %arg18[%c120_830, %c0_831], %677 {strides = array<i32>} : memref<144x256xf32, #tpu.memory_space<vmem>>, vector<8x256xf32>,
    %c0_832 = arith.constant 0 : index
    %c144_833 = arith.constant 144 : index
    %679 = vector.load %arg14[%c0_832, %c144_833] : memref<8x401xf32, #tpu.memory_space<vmem>>, vector<8x256xf32>
    %c128_834 = arith.constant 128 : index
    %c0_835 = arith.constant 0 : index
    %680 = vector.load %arg18[%c128_834, %c0_835] : memref<144x256xf32, #tpu.memory_space<vmem>>, vector<8x256xf32>
    tpu.vector_store %arg18[%c128_834, %c0_835], %679 {strides = array<i32>} : memref<144x256xf32, #tpu.memory_space<vmem>>, vector<8x256xf32>,
    %c0_836 = arith.constant 0 : index
    %c145_837 = arith.constant 145 : index
    %681 = vector.load %arg14[%c0_836, %c145_837] : memref<8x401xf32, #tpu.memory_space<vmem>>, vector<8x256xf32>
    %cst_838 = arith.constant 0.000000e+00 : f32
    %682 = vector.broadcast %cst_838 : f32 to vector<8x256xf32>
    %683 = arith.select %27, %681, %682 : vector<8x256xi1>, vector<8x256xf32>
    %c136_839 = arith.constant 136 : index
    %c0_840 = arith.constant 0 : index
    %684 = vector.load %arg18[%c136_839, %c0_840] : memref<144x256xf32, #tpu.memory_space<vmem>>, vector<8x256xf32>
    tpu.vector_store %arg18[%c136_839, %c0_840], %683 {strides = array<i32>} : memref<144x256xf32, #tpu.memory_space<vmem>>, vector<8x256xf32>,
    %c0_841 = arith.constant 0 : index
    %c0_842 = arith.constant 0 : index
    %685 = vector.load %arg18[%c0_841, %c0_842] : memref<144x256xf32, #tpu.memory_space<vmem>>, vector<144x256xf32>
    %cst_843 = arith.constant dense<0.000000e+00> : vector<8x256xf32>
    %686 = tpu.matmul %622, %685, %cst_843 {dimension_numbers = #tpu.dot_dimension_numbers<[1], [0], [0], [1], [0, 0, 1, 1], [], []>} : vector<8x144xf32>, vector<144x256xf32>, vector<8x256xf32> -> vector<8x256xf32>
    %c0_844 = arith.constant 0 : index
    %c12 = arith.constant 12 : index
    %687 = vector.load %arg4[%c0_844, %c12] : memref<8x14xf32, #tpu.memory_space<vmem>>, vector<8x1xf32>
    %688 = vector.broadcast %687 : vector<8x1xf32> to vector<8x256xf32>
    %689 = arith.addf %686, %688 : vector<8x256xf32>
    %cst_845 = arith.constant 0.000000e+00 : f32
    %690 = vector.broadcast %cst_845 : f32 to vector<8x256xf32>
    %691 = arith.maximumf %689, %690 : vector<8x256xf32>
    %c10_846 = arith.constant 10 : index
    %c0_847 = arith.constant 0 : index
    %c0_848 = arith.constant 0 : index
    %692 = vector.load %arg2[%c10_846, %c0_847, %c0_848] : memref<11x8x72xf32, #tpu.memory_space<vmem>>, vector<1x8x72xf32>
    %693 = vector.shape_cast %692 : vector<1x8x72xf32> to vector<8x72xf32>
    %c0_849 = arith.constant 0 : index
    %c128_850 = arith.constant 128 : index
    %694 = vector.load %arg14[%c0_849, %c128_850] : memref<8x401xf32, #tpu.memory_space<vmem>>, vector<8x256xf32>
    tpu.vector_store %arg14[%c0_849, %c128_850], %691 {strides = array<i32>} : memref<8x401xf32, #tpu.memory_space<vmem>>, vector<8x256xf32>,
    %c0_851 = arith.constant 0 : index
    %c111_852 = arith.constant 111 : index
    %695 = vector.load %arg14[%c0_851, %c111_852] : memref<8x401xf32, #tpu.memory_space<vmem>>, vector<8x256xf32>
    %cst_853 = arith.constant 0.000000e+00 : f32
    %696 = vector.broadcast %cst_853 : f32 to vector<8x256xf32>
    %697 = arith.select %25, %695, %696 : vector<8x256xi1>, vector<8x256xf32>
    %c0_854 = arith.constant 0 : index
    %c0_855 = arith.constant 0 : index
    %698 = vector.load %arg18[%c0_854, %c0_855] : memref<144x256xf32, #tpu.memory_space<vmem>>, vector<8x256xf32>
    tpu.vector_store %arg18[%c0_854, %c0_855], %697 {strides = array<i32>} : memref<144x256xf32, #tpu.memory_space<vmem>>, vector<8x256xf32>,
    %c0_856 = arith.constant 0 : index
    %c112_857 = arith.constant 112 : index
    %699 = vector.load %arg14[%c0_856, %c112_857] : memref<8x401xf32, #tpu.memory_space<vmem>>, vector<8x256xf32>
    %c8_858 = arith.constant 8 : index
    %c0_859 = arith.constant 0 : index
    %700 = vector.load %arg18[%c8_858, %c0_859] : memref<144x256xf32, #tpu.memory_space<vmem>>, vector<8x256xf32>
    tpu.vector_store %arg18[%c8_858, %c0_859], %699 {strides = array<i32>} : memref<144x256xf32, #tpu.memory_space<vmem>>, vector<8x256xf32>,
    %c0_860 = arith.constant 0 : index
    %c113_861 = arith.constant 113 : index
    %701 = vector.load %arg14[%c0_860, %c113_861] : memref<8x401xf32, #tpu.memory_space<vmem>>, vector<8x256xf32>
    %cst_862 = arith.constant 0.000000e+00 : f32
    %702 = vector.broadcast %cst_862 : f32 to vector<8x256xf32>
    %703 = arith.select %27, %701, %702 : vector<8x256xi1>, vector<8x256xf32>
    %c16_863 = arith.constant 16 : index
    %c0_864 = arith.constant 0 : index
    %704 = vector.load %arg18[%c16_863, %c0_864] : memref<144x256xf32, #tpu.memory_space<vmem>>, vector<8x256xf32>
    tpu.vector_store %arg18[%c16_863, %c0_864], %703 {strides = array<i32>} : memref<144x256xf32, #tpu.memory_space<vmem>>, vector<8x256xf32>,
    %c0_865 = arith.constant 0 : index
    %c127_866 = arith.constant 127 : index
    %705 = vector.load %arg14[%c0_865, %c127_866] : memref<8x401xf32, #tpu.memory_space<vmem>>, vector<8x256xf32>
    %cst_867 = arith.constant 0.000000e+00 : f32
    %706 = vector.broadcast %cst_867 : f32 to vector<8x256xf32>
    %707 = arith.select %25, %705, %706 : vector<8x256xi1>, vector<8x256xf32>
    %c24_868 = arith.constant 24 : index
    %c0_869 = arith.constant 0 : index
    %708 = vector.load %arg18[%c24_868, %c0_869] : memref<144x256xf32, #tpu.memory_space<vmem>>, vector<8x256xf32>
    tpu.vector_store %arg18[%c24_868, %c0_869], %707 {strides = array<i32>} : memref<144x256xf32, #tpu.memory_space<vmem>>, vector<8x256xf32>,
    %c0_870 = arith.constant 0 : index
    %c128_871 = arith.constant 128 : index
    %709 = vector.load %arg14[%c0_870, %c128_871] : memref<8x401xf32, #tpu.memory_space<vmem>>, vector<8x256xf32>
    %c32_872 = arith.constant 32 : index
    %c0_873 = arith.constant 0 : index
    %710 = vector.load %arg18[%c32_872, %c0_873] : memref<144x256xf32, #tpu.memory_space<vmem>>, vector<8x256xf32>
    tpu.vector_store %arg18[%c32_872, %c0_873], %709 {strides = array<i32>} : memref<144x256xf32, #tpu.memory_space<vmem>>, vector<8x256xf32>,
    %c0_874 = arith.constant 0 : index
    %c129_875 = arith.constant 129 : index
    %711 = vector.load %arg14[%c0_874, %c129_875] : memref<8x401xf32, #tpu.memory_space<vmem>>, vector<8x256xf32>
    %cst_876 = arith.constant 0.000000e+00 : f32
    %712 = vector.broadcast %cst_876 : f32 to vector<8x256xf32>
    %713 = arith.select %27, %711, %712 : vector<8x256xi1>, vector<8x256xf32>
    %c40_877 = arith.constant 40 : index
    %c0_878 = arith.constant 0 : index
    %714 = vector.load %arg18[%c40_877, %c0_878] : memref<144x256xf32, #tpu.memory_space<vmem>>, vector<8x256xf32>
    tpu.vector_store %arg18[%c40_877, %c0_878], %713 {strides = array<i32>} : memref<144x256xf32, #tpu.memory_space<vmem>>, vector<8x256xf32>,
    %c0_879 = arith.constant 0 : index
    %c143_880 = arith.constant 143 : index
    %715 = vector.load %arg14[%c0_879, %c143_880] : memref<8x401xf32, #tpu.memory_space<vmem>>, vector<8x256xf32>
    %cst_881 = arith.constant 0.000000e+00 : f32
    %716 = vector.broadcast %cst_881 : f32 to vector<8x256xf32>
    %717 = arith.select %25, %715, %716 : vector<8x256xi1>, vector<8x256xf32>
    %c48_882 = arith.constant 48 : index
    %c0_883 = arith.constant 0 : index
    %718 = vector.load %arg18[%c48_882, %c0_883] : memref<144x256xf32, #tpu.memory_space<vmem>>, vector<8x256xf32>
    tpu.vector_store %arg18[%c48_882, %c0_883], %717 {strides = array<i32>} : memref<144x256xf32, #tpu.memory_space<vmem>>, vector<8x256xf32>,
    %c0_884 = arith.constant 0 : index
    %c144_885 = arith.constant 144 : index
    %719 = vector.load %arg14[%c0_884, %c144_885] : memref<8x401xf32, #tpu.memory_space<vmem>>, vector<8x256xf32>
    %c56_886 = arith.constant 56 : index
    %c0_887 = arith.constant 0 : index
    %720 = vector.load %arg18[%c56_886, %c0_887] : memref<144x256xf32, #tpu.memory_space<vmem>>, vector<8x256xf32>
    tpu.vector_store %arg18[%c56_886, %c0_887], %719 {strides = array<i32>} : memref<144x256xf32, #tpu.memory_space<vmem>>, vector<8x256xf32>,
    %c0_888 = arith.constant 0 : index
    %c145_889 = arith.constant 145 : index
    %721 = vector.load %arg14[%c0_888, %c145_889] : memref<8x401xf32, #tpu.memory_space<vmem>>, vector<8x256xf32>
    %cst_890 = arith.constant 0.000000e+00 : f32
    %722 = vector.broadcast %cst_890 : f32 to vector<8x256xf32>
    %723 = arith.select %27, %721, %722 : vector<8x256xi1>, vector<8x256xf32>
    %c64_891 = arith.constant 64 : index
    %c0_892 = arith.constant 0 : index
    %724 = vector.load %arg18[%c64_891, %c0_892] : memref<144x256xf32, #tpu.memory_space<vmem>>, vector<8x256xf32>
    tpu.vector_store %arg18[%c64_891, %c0_892], %723 {strides = array<i32>} : memref<144x256xf32, #tpu.memory_space<vmem>>, vector<8x256xf32>,
    %c0_893 = arith.constant 0 : index
    %c0_894 = arith.constant 0 : index
    %725 = vector.load %arg18[%c0_893, %c0_894] : memref<144x256xf32, #tpu.memory_space<vmem>>, vector<72x256xf32>
    %cst_895 = arith.constant dense<0.000000e+00> : vector<8x256xf32>
    %726 = tpu.matmul %693, %725, %cst_895 {dimension_numbers = #tpu.dot_dimension_numbers<[1], [0], [0], [1], [0, 0, 1, 1], [], []>} : vector<8x72xf32>, vector<72x256xf32>, vector<8x256xf32> -> vector<8x256xf32>
    %c0_896 = arith.constant 0 : index
    %c13 = arith.constant 13 : index
    %727 = vector.load %arg4[%c0_896, %c13] : memref<8x14xf32, #tpu.memory_space<vmem>>, vector<8x1xf32>
    %728 = vector.broadcast %727 : vector<8x1xf32> to vector<8x256xf32>
    %729 = arith.addf %726, %728 : vector<8x256xf32>
    %cst_897 = arith.constant 0.000000e+00 : f32
    %730 = vector.broadcast %cst_897 : f32 to vector<8x256xf32>
    %731 = arith.maximumf %729, %730 : vector<8x256xf32>
    %c0_898 = arith.constant 0 : index
    %c0_899 = arith.constant 0 : index
    %732 = vector.load %arg5[%c0_898, %c0_899] : memref<4x8xf32, #tpu.memory_space<vmem>>, vector<4x8xf32>
    %cst_900 = arith.constant dense<0.000000e+00> : vector<4x256xf32>
    %733 = tpu.matmul %732, %731, %cst_900 {dimension_numbers = #tpu.dot_dimension_numbers<[1], [0], [0], [1], [0, 0, 1, 1], [], []>} : vector<4x8xf32>, vector<8x256xf32>, vector<4x256xf32> -> vector<4x256xf32>
    %c0_901 = arith.constant 0 : index
    %c0_902 = arith.constant 0 : index
    %734 = vector.load %arg6[%c0_901, %c0_902] : memref<4x1xf32, #tpu.memory_space<vmem>>, vector<4x1xf32>
    %735 = vector.broadcast %734 : vector<4x1xf32> to vector<4x256xf32>
    %736 = arith.addf %733, %735 : vector<4x256xf32>
    %c0_903 = arith.constant 0 : index
    %c0_904 = arith.constant 0 : index
    %c0_905 = arith.constant 0 : index
    %737 = vector.load %arg13[%c0_903, %c0_904, %c0_905] : memref<1x4x256xf32, #tpu.memory_space<vmem>>, vector<1x4x256xf32>
    %738 = vector.shape_cast %737 : vector<1x4x256xf32> to vector<4x256xf32>
    %739 = vector.shape_cast %736 : vector<4x256xf32> to vector<1x4x256xf32>
    tpu.vector_store %arg13[%c0_903, %c0_904, %c0_905], %739 {strides = array<i32>} : memref<1x4x256xf32, #tpu.memory_space<vmem>>, vector<1x4x256xf32>,
    return
  }
  func.func @transform_0(%arg0: i32) -> (i32, i32, i32) {
    %c0_i32 = arith.constant 0 : i32
    %c0_i32_0 = arith.constant 0 : i32
    %c0_i32_1 = arith.constant 0 : i32
    return %arg0, %c0_i32, %c0_i32_0 : i32, i32, i32
  }
  func.func @transform_1(%arg0: i32) -> (i32, i32, i32) {
    %c0_i32 = arith.constant 0 : i32
    %c0_i32_0 = arith.constant 0 : i32
    %c0_i32_1 = arith.constant 0 : i32
    %c0_i32_2 = arith.constant 0 : i32
    return %c0_i32, %c0_i32_0, %c0_i32_1 : i32, i32, i32
  }
  func.func @transform_2(%arg0: i32) -> (i32, i32, i32) {
    %c0_i32 = arith.constant 0 : i32
    %c0_i32_0 = arith.constant 0 : i32
    %c0_i32_1 = arith.constant 0 : i32
    %c0_i32_2 = arith.constant 0 : i32
    return %c0_i32, %c0_i32_0, %c0_i32_1 : i32, i32, i32
  }
  func.func @transform_3(%arg0: i32) -> (i32, i32) {
    %c0_i32 = arith.constant 0 : i32
    %c0_i32_0 = arith.constant 0 : i32
    %c0_i32_1 = arith.constant 0 : i32
    return %c0_i32, %c0_i32_0 : i32, i32
  }
  func.func @transform_4(%arg0: i32) -> (i32, i32) {
    %c0_i32 = arith.constant 0 : i32
    %c0_i32_0 = arith.constant 0 : i32
    %c0_i32_1 = arith.constant 0 : i32
    return %c0_i32, %c0_i32_0 : i32, i32
  }
  func.func @transform_5(%arg0: i32) -> (i32, i32) {
    %c0_i32 = arith.constant 0 : i32
    %c0_i32_0 = arith.constant 0 : i32
    %c0_i32_1 = arith.constant 0 : i32
    return %c0_i32, %c0_i32_0 : i32, i32
  }
  func.func @transform_6(%arg0: i32) -> (i32, i32) {
    %c0_i32 = arith.constant 0 : i32
    %c0_i32_0 = arith.constant 0 : i32
    %c0_i32_1 = arith.constant 0 : i32
    return %c0_i32, %c0_i32_0 : i32, i32
  }
  func.func @transform_7(%arg0: i32) -> (i32, i32) {
    %c0_i32 = arith.constant 0 : i32
    %c0_i32_0 = arith.constant 0 : i32
    %c0_i32_1 = arith.constant 0 : i32
    return %c0_i32, %c0_i32_0 : i32, i32
  }
  func.func @transform_8(%arg0: i32) -> (i32, i32) {
    %c0_i32 = arith.constant 0 : i32
    %c0_i32_0 = arith.constant 0 : i32
    %c0_i32_1 = arith.constant 0 : i32
    return %c0_i32, %c0_i32_0 : i32, i32
  }
  func.func @transform_9(%arg0: i32) -> (i32, i32) {
    %c0_i32 = arith.constant 0 : i32
    %c0_i32_0 = arith.constant 0 : i32
    %c0_i32_1 = arith.constant 0 : i32
    return %c0_i32, %c0_i32_0 : i32, i32
  }
  func.func @transform_10(%arg0: i32) -> (i32, i32) {
    %c0_i32 = arith.constant 0 : i32
    %c0_i32_0 = arith.constant 0 : i32
    %c0_i32_1 = arith.constant 0 : i32
    return %c0_i32, %c0_i32_0 : i32, i32
  }
  func.func @transform_11(%arg0: i32) -> (i32, i32) {
    %c0_i32 = arith.constant 0 : i32
    %c0_i32_0 = arith.constant 0 : i32
    %c0_i32_1 = arith.constant 0 : i32
    return %c0_i32, %c0_i32_0 : i32, i32
  }
  func.func @transform_12(%arg0: i32) -> (i32, i32, i32) {
    %c0_i32 = arith.constant 0 : i32
    %c0_i32_0 = arith.constant 0 : i32
    %c0_i32_1 = arith.constant 0 : i32
    return %arg0, %c0_i32, %c0_i32_0 : i32, i32, i32
  }
}

</mosaic_0001>

<llo_original>
// kernel: unet_forward_pallas.1
$region0: #{unet_forward_pallas.1}
  #allocation0 [shape = 'u32[]', space=smem, size = 0x4, offset = 0x4, fixed_abs, tag = 'smem constant byte address 0x4 - core index']
  #allocation1 [shape = 'u32[144,128]{1,0:T(1,128)}', space=vmem, size = 0x12000, scoped, tag = 'internal scratch']
  #allocation2 [shape = 'f32[8,401]{1,0:T(8,128)}', space=vmem, size = 0x4000, scoped, tag = 'scratch operand']
  #allocation3 [shape = 'f32[8,201]{1,0:T(8,128)}', space=vmem, size = 0x2000, scoped, tag = 'scratch operand']
  #allocation4 [shape = 'f32[8,149]{1,0:T(8,128)}', space=vmem, size = 0x2000, scoped, tag = 'scratch operand']
  #allocation5 [shape = 'f32[8,135]{1,0:T(8,128)}', space=vmem, size = 0x2000, scoped, tag = 'scratch operand']
  #allocation6 [shape = 'f32[144,256]{1,0:T(8,128)}', space=vmem, size = 0x24000, scoped, tag = 'scratch operand']
  %s0 = inlined_call_operand.vmem [shape: f32[2,8,256], index: 0, kind: input, shape index: {}]
  %s1 = inlined_call_operand.vmem [shape: f32[11,8,72], index: 1, kind: input, shape index: {}]
  %s2 = inlined_call_operand.vmem [shape: f32[3,8,144], index: 2, kind: input, shape index: {}]
  %s3 = inlined_call_operand.vmem [shape: f32[8,14], index: 3, kind: input, shape index: {}]
  %s4 = inlined_call_operand.vmem [shape: f32[4,8], index: 4, kind: input, shape index: {}]
  %s5 = inlined_call_operand.vmem [shape: f32[4,1], index: 5, kind: input, shape index: {}]
  %s6 = inlined_call_operand.vmem [shape: f32[4,16], index: 6, kind: input, shape index: {}]
  %s7 = inlined_call_operand.vmem [shape: f32[16,64], index: 7, kind: input, shape index: {}]
  %s8 = inlined_call_operand.vmem [shape: f32[64,256], index: 8, kind: input, shape index: {}]
  %s9 = inlined_call_operand.vmem [shape: f32[256,64], index: 9, kind: input, shape index: {}]
  %s10 = inlined_call_operand.vmem [shape: f32[64,16], index: 10, kind: input, shape index: {}]
  %s11 = inlined_call_operand.vmem [shape: f32[16,4], index: 11, kind: input, shape index: {}]
  %s12 = inlined_call_operand.vmem [shape: f32[2,4,256], index: 12, kind: output, shape index: {}]
  %s13 = sld [smem:[#allocation0]]
  $region81: #{unet_forward_pallas.1} parent=0
    _
  %s15 = ssub.s32 1, %s13
  %s16 = scalar_select 0, %s15, %s13
  loop: start=0, step=1, limit=4
  $region2: #{unet_forward_pallas.1} parent=0 // loop_pre_header
    _
  $region3: #{unet_forward_pallas.1} parent=0 // loop_header
    %s18 = sphi 0, %s22
    %p19 = scmp.ge.s32.totalorder %s18, 4
    %s28 = sphi 0, %s30
    %s31 = sphi 0, %s28
    %s32 = sphi 0, %s31
    %s48 = sphi 0, %s32
    %s52 = sphi 0, %s52
    %s54 = sphi 0, %s52
    %s55 = sphi 0, %s54
    %s69 = sphi 0, %s55
    %s73 = sphi 0, %s73
    %s75 = sphi 0, %s73
    %s76 = sphi 0, %s75
    %s90 = sphi 0, %s76
    %s94 = sphi 0, %s94
    %s96 = sphi 0, %s94
    %s97 = sphi 0, %s96
    %s111 = sphi 0, %s97
    %s115 = sphi 0, %s115
    %s117 = sphi 0, %s115
    %s118 = sphi 0, %s117
    %s132 = sphi 0, %s118
    %s136 = sphi 0, %s136
    %s138 = sphi 0, %s136
    %s139 = sphi 0, %s138
    %s153 = sphi 0, %s139
    %s157 = sphi 0, %s157
    %s159 = sphi 0, %s157
    %s160 = sphi 0, %s159
    %s174 = sphi 0, %s160
    %s178 = sphi 0, %s178
    %s180 = sphi 0, %s178
    %s181 = sphi 0, %s180
    %s195 = sphi 0, %s181
    %s199 = sphi 0, %s199
    %s201 = sphi 0, %s199
    %s202 = sphi 0, %s201
    %s216 = sphi 0, %s202
    %s220 = sphi 0, %s220
    %s222 = sphi 0, %s220
    %s223 = sphi 0, %s222
    %s237 = sphi 0, %s223
    %s241 = sphi 0, %s241
    %s243 = sphi 0, %s241
    %s244 = sphi 0, %s243
    %s258 = sphi 0, %s244
    %s262 = sphi 0, %s262
    %s264 = sphi 0, %s262
    %s265 = sphi 0, %s264
    %s279 = sphi 0, %s265
    %s285 = sphi 0, %s287
    %s288 = sphi 0, %s285
    %s289 = sphi 0, %s288
    %s305 = sphi 0, %s289
  $region4: #{unet_forward_pallas.1} parent=0 // loop_header_branch
    %21 = sbr.rel (%p19) target = $region8
  $region5: #{unet_forward_pallas.1} parent=0 // loop_body
    %s23 = ssub.s32 %s18, 1
    %s24 = ssub.s32 %s18, 2
    %s25 = sadd.s32 %s18, 1
    %s26 = ssub.s32 %s18, %s25
    %p27 = scmp.eq.s32.totalorder %s26, 0
    %s29 = sadd.s32 %s28, 1
    %s30 = scalar_select %p27, %s28, %s29
    %p33 = pneg %p27
    %p34 = scmp.eq.s32.totalorder %s18, 1
    %p35 = por %p33, %p34
    %p36 = scmp.ne.s32.totalorder %s28, %s31
    %p37 = scmp.eq.s32.totalorder %s18, 0
    %p38 = por %p36, %p37
    %p39 = scmp.ne.s32.totalorder %s28, %s31
    %p40 = scmp.eq.s32.totalorder %s23, 1
    %p41 = por %p39, %p40
    %p42 = scmp.ne.s32.totalorder %s31, %s32
    %p43 = scmp.eq.s32.totalorder %s23, 0
    %p44 = por %p42, %p43
    %p45 = scmp.ne.s32.totalorder %s31, %s32
    %p46 = scmp.eq.s32.totalorder %s24, 1
    %p47 = por %p45, %p46
    %p49 = scmp.ne.s32.totalorder %s32, %s48
    %p50 = scmp.eq.s32.totalorder %s24, 0
    %p51 = por %p49, %p50
    %s53 = sadd.s32 %s52, 1
    %p56 = scmp.eq.s32.totalorder %s18, 1
    %p57 = scmp.ne.s32.totalorder %s52, %s54
    %p58 = scmp.eq.s32.totalorder %s18, 0
    %p59 = por %p57, %p58
    %p60 = scmp.ne.s32.totalorder %s52, %s54
    %p61 = scmp.eq.s32.totalorder %s23, 1
    %p62 = por %p60, %p61
    %p63 = scmp.ne.s32.totalorder %s54, %s55
    %p64 = scmp.eq.s32.totalorder %s23, 0
    %p65 = por %p63, %p64
    %p66 = scmp.ne.s32.totalorder %s54, %s55
    %p67 = scmp.eq.s32.totalorder %s24, 1
    %p68 = por %p66, %p67
    %p70 = scmp.ne.s32.totalorder %s55, %s69
    %p71 = scmp.eq.s32.totalorder %s24, 0
    %p72 = por %p70, %p71
    %s74 = sadd.s32 %s73, 1
    %p77 = scmp.eq.s32.totalorder %s18, 1
    %p78 = scmp.ne.s32.totalorder %s73, %s75
    %p79 = scmp.eq.s32.totalorder %s18, 0
    %p80 = por %p78, %p79
    %p81 = scmp.ne.s32.totalorder %s73, %s75
    %p82 = scmp.eq.s32.totalorder %s23, 1
    %p83 = por %p81, %p82
    %p84 = scmp.ne.s32.totalorder %s75, %s76
    %p85 = scmp.eq.s32.totalorder %s23, 0
    %p86 = por %p84, %p85
    %p87 = scmp.ne.s32.totalorder %s75, %s76
    %p88 = scmp.eq.s32.totalorder %s24, 1
    %p89 = por %p87, %p88
    %p91 = scmp.ne.s32.totalorder %s76, %s90
    %p92 = scmp.eq.s32.totalorder %s24, 0
    %p93 = por %p91, %p92
    %s95 = sadd.s32 %s94, 1
    %p98 = scmp.eq.s32.totalorder %s18, 1
    %p99 = scmp.ne.s32.totalorder %s94, %s96
    %p100 = scmp.eq.s32.totalorder %s18, 0
    %p101 = por %p99, %p100
    %p102 = scmp.ne.s32.totalorder %s94, %s96
    %p103 = scmp.eq.s32.totalorder %s23, 1
    %p104 = por %p102, %p103
    %p105 = scmp.ne.s32.totalorder %s96, %s97
    %p106 = scmp.eq.s32.totalorder %s23, 0
    %p107 = por %p105, %p106
    %p108 = scmp.ne.s32.totalorder %s96, %s97
    %p109 = scmp.eq.s32.totalorder %s24, 1
    %p110 = por %p108, %p109
    %p112 = scmp.ne.s32.totalorder %s97, %s111
    %p113 = scmp.eq.s32.totalorder %s24, 0
    %p114 = por %p112, %p113
    %s116 = sadd.s32 %s115, 1
    %p119 = scmp.eq.s32.totalorder %s18, 1
    %p120 = scmp.ne.s32.totalorder %s115, %s117
    %p121 = scmp.eq.s32.totalorder %s18, 0
    %p122 = por %p120, %p121
    %p123 = scmp.ne.s32.totalorder %s115, %s117
    %p124 = scmp.eq.s32.totalorder %s23, 1
    %p125 = por %p123, %p124
    %p126 = scmp.ne.s32.totalorder %s117, %s118
    %p127 = scmp.eq.s32.totalorder %s23, 0
    %p128 = por %p126, %p127
    %p129 = scmp.ne.s32.totalorder %s117, %s118
    %p130 = scmp.eq.s32.totalorder %s24, 1
    %p131 = por %p129, %p130
    %p133 = scmp.ne.s32.totalorder %s118, %s132
    %p134 = scmp.eq.s32.totalorder %s24, 0
    %p135 = por %p133, %p134
    %s137 = sadd.s32 %s136, 1
    %p140 = scmp.eq.s32.totalorder %s18, 1
    %p141 = scmp.ne.s32.totalorder %s136, %s138
    %p142 = scmp.eq.s32.totalorder %s18, 0
    %p143 = por %p141, %p142
    %p144 = scmp.ne.s32.totalorder %s136, %s138
    %p145 = scmp.eq.s32.totalorder %s23, 1
    %p146 = por %p144, %p145
    %p147 = scmp.ne.s32.totalorder %s138, %s139
    %p148 = scmp.eq.s32.totalorder %s23, 0
    %p149 = por %p147, %p148
    %p150 = scmp.ne.s32.totalorder %s138, %s139
    %p151 = scmp.eq.s32.totalorder %s24, 1
    %p152 = por %p150, %p151
    %p154 = scmp.ne.s32.totalorder %s139, %s153
    %p155 = scmp.eq.s32.totalorder %s24, 0
    %p156 = por %p154, %p155
    %s158 = sadd.s32 %s157, 1
    %p161 = scmp.eq.s32.totalorder %s18, 1
    %p162 = scmp.ne.s32.totalorder %s157, %s159
    %p163 = scmp.eq.s32.totalorder %s18, 0
    %p164 = por %p162, %p163
    %p165 = scmp.ne.s32.totalorder %s157, %s159
    %p166 = scmp.eq.s32.totalorder %s23, 1
    %p167 = por %p165, %p166
    %p168 = scmp.ne.s32.totalorder %s159, %s160
    %p169 = scmp.eq.s32.totalorder %s23, 0
    %p170 = por %p168, %p169
    %p171 = scmp.ne.s32.totalorder %s159, %s160
    %p172 = scmp.eq.s32.totalorder %s24, 1
    %p173 = por %p171, %p172
    %p175 = scmp.ne.s32.totalorder %s160, %s174
    %p176 = scmp.eq.s32.totalorder %s24, 0
    %p177 = por %p175, %p176
    %s179 = sadd.s32 %s178, 1
    %p182 = scmp.eq.s32.totalorder %s18, 1
    %p183 = scmp.ne.s32.totalorder %s178, %s180
    %p184 = scmp.eq.s32.totalorder %s18, 0
    %p185 = por %p183, %p184
    %p186 = scmp.ne.s32.totalorder %s178, %s180
    %p187 = scmp.eq.s32.totalorder %s23, 1
    %p188 = por %p186, %p187
    %p189 = scmp.ne.s32.totalorder %s180, %s181
    %p190 = scmp.eq.s32.totalorder %s23, 0
    %p191 = por %p189, %p190
    %p192 = scmp.ne.s32.totalorder %s180, %s181
    %p193 = scmp.eq.s32.totalorder %s24, 1
    %p194 = por %p192, %p193
    %p196 = scmp.ne.s32.totalorder %s181, %s195
    %p197 = scmp.eq.s32.totalorder %s24, 0
    %p198 = por %p196, %p197
    %s200 = sadd.s32 %s199, 1
    %p203 = scmp.eq.s32.totalorder %s18, 1
    %p204 = scmp.ne.s32.totalorder %s199, %s201
    %p205 = scmp.eq.s32.totalorder %s18, 0
    %p206 = por %p204, %p205
    %p207 = scmp.ne.s32.totalorder %s199, %s201
    %p208 = scmp.eq.s32.totalorder %s23, 1
    %p209 = por %p207, %p208
    %p210 = scmp.ne.s32.totalorder %s201, %s202
    %p211 = scmp.eq.s32.totalorder %s23, 0
    %p212 = por %p210, %p211
    %p213 = scmp.ne.s32.totalorder %s201, %s202
    %p214 = scmp.eq.s32.totalorder %s24, 1
    %p215 = por %p213, %p214
    %p217 = scmp.ne.s32.totalorder %s202, %s216
    %p218 = scmp.eq.s32.totalorder %s24, 0
    %p219 = por %p217, %p218
    %s221 = sadd.s32 %s220, 1
    %p224 = scmp.eq.s32.totalorder %s18, 1
    %p225 = scmp.ne.s32.totalorder %s220, %s222
    %p226 = scmp.eq.s32.totalorder %s18, 0
    %p227 = por %p225, %p226
    %p228 = scmp.ne.s32.totalorder %s220, %s222
    %p229 = scmp.eq.s32.totalorder %s23, 1
    %p230 = por %p228, %p229
    %p231 = scmp.ne.s32.totalorder %s222, %s223
    %p232 = scmp.eq.s32.totalorder %s23, 0
    %p233 = por %p231, %p232
    %p234 = scmp.ne.s32.totalorder %s222, %s223
    %p235 = scmp.eq.s32.totalorder %s24, 1
    %p236 = por %p234, %p235
    %p238 = scmp.ne.s32.totalorder %s223, %s237
    %p239 = scmp.eq.s32.totalorder %s24, 0
    %p240 = por %p238, %p239
    %s242 = sadd.s32 %s241, 1
    %p245 = scmp.eq.s32.totalorder %s18, 1
    %p246 = scmp.ne.s32.totalorder %s241, %s243
    %p247 = scmp.eq.s32.totalorder %s18, 0
    %p248 = por %p246, %p247
    %p249 = scmp.ne.s32.totalorder %s241, %s243
    %p250 = scmp.eq.s32.totalorder %s23, 1
    %p251 = por %p249, %p250
    %p252 = scmp.ne.s32.totalorder %s243, %s244
    %p253 = scmp.eq.s32.totalorder %s23, 0
    %p254 = por %p252, %p253
    %p255 = scmp.ne.s32.totalorder %s243, %s244
    %p256 = scmp.eq.s32.totalorder %s24, 1
    %p257 = por %p255, %p256
    %p259 = scmp.ne.s32.totalorder %s244, %s258
    %p260 = scmp.eq.s32.totalorder %s24, 0
    %p261 = por %p259, %p260
    %s263 = sadd.s32 %s262, 1
    %p266 = scmp.eq.s32.totalorder %s18, 1
    %p267 = scmp.ne.s32.totalorder %s262, %s264
    %p268 = scmp.eq.s32.totalorder %s18, 0
    %p269 = por %p267, %p268
    %p270 = scmp.ne.s32.totalorder %s262, %s264
    %p271 = scmp.eq.s32.totalorder %s23, 1
    %p272 = por %p270, %p271
    %p273 = scmp.ne.s32.totalorder %s264, %s265
    %p274 = scmp.eq.s32.totalorder %s23, 0
    %p275 = por %p273, %p274
    %p276 = scmp.ne.s32.totalorder %s264, %s265
    %p277 = scmp.eq.s32.totalorder %s24, 1
    %p278 = por %p276, %p277
    %p280 = scmp.ne.s32.totalorder %s265, %s279
    %p281 = scmp.eq.s32.totalorder %s24, 0
    %p282 = por %p280, %p281
    %s283 = ssub.s32 %s18, %s25
    %p284 = scmp.eq.s32.totalorder %s283, 0
    %s286 = sadd.s32 %s285, 1
    %s287 = scalar_select %p284, %s285, %s286
    %p290 = pneg %p284
    %p291 = scmp.eq.s32.totalorder %s18, 1
    %p292 = por %p290, %p291
    %p293 = scmp.ne.s32.totalorder %s285, %s288
    %p294 = scmp.eq.s32.totalorder %s18, 0
    %p295 = por %p293, %p294
    %p296 = scmp.ne.s32.totalorder %s285, %s288
    %p297 = scmp.eq.s32.totalorder %s23, 1
    %p298 = por %p296, %p297
    %p299 = scmp.ne.s32.totalorder %s288, %s289
    %p300 = scmp.eq.s32.totalorder %s23, 0
    %p301 = por %p299, %p300
    %p302 = scmp.ne.s32.totalorder %s288, %s289
    %p303 = scmp.eq.s32.totalorder %s24, 1
    %p304 = por %p302, %p303
    %p306 = scmp.ne.s32.totalorder %s289, %s305
    %p307 = scmp.eq.s32.totalorder %s24, 0
    %p308 = por %p306, %p307
    %p309 = scmp.le.s32.totalorder 1, %s18
    %p310 = scmp.lt.s32.totalorder %s18, 3
    %p311 = pnand %p309, %p310
    %p312 = pneg %p311
    // Predicated region
    $region9: #{unet_forward_pallas.1} parent=5 // pred_check
      _
    $region10: #{unet_forward_pallas.1} parent=5 // pred_check_branch
      %314 = sbr.rel (%p311) target = $region12
    $region11: #{unet_forward_pallas.1} parent=5 // pred_region
      %s315 = ssub.s32 %s18, 1
      // Predicated region
      $region13: #{unet_forward_pallas.1} parent=11 // pred_check
        %p316 = pneg %p65
      $region14: #{unet_forward_pallas.1} parent=11 // pred_check_branch
        %318 = sbr.rel (%p316) target = $region16
      $region15: #{unet_forward_pallas.1} parent=11 // pred_region
        _
      $region16: #{unet_forward_pallas.1} parent=11 // pred_fallthru
        _
      // Predicated region
      $region17: #{unet_forward_pallas.1} parent=11 // pred_check
        %p319 = pneg %p86
      $region18: #{unet_forward_pallas.1} parent=11 // pred_check_branch
        %321 = sbr.rel (%p319) target = $region20
      $region19: #{unet_forward_pallas.1} parent=11 // pred_region
        _
      $region20: #{unet_forward_pallas.1} parent=11 // pred_fallthru
        _
      // Predicated region
      $region21: #{unet_forward_pallas.1} parent=11 // pred_check
        %p322 = pneg %p107
      $region22: #{unet_forward_pallas.1} parent=11 // pred_check_branch
        %324 = sbr.rel (%p322) target = $region24
      $region23: #{unet_forward_pallas.1} parent=11 // pred_region
        _
      $region24: #{unet_forward_pallas.1} parent=11 // pred_fallthru
        _
      // Predicated region
      $region25: #{unet_forward_pallas.1} parent=11 // pred_check
        %p325 = pneg %p128
      $region26: #{unet_forward_pallas.1} parent=11 // pred_check_branch
        %327 = sbr.rel (%p325) target = $region28
      $region27: #{unet_forward_pallas.1} parent=11 // pred_region
        _
      $region28: #{unet_forward_pallas.1} parent=11 // pred_fallthru
        _
      // Predicated region
      $region29: #{unet_forward_pallas.1} parent=11 // pred_check
        %p328 = pneg %p149
      $region30: #{unet_forward_pallas.1} parent=11 // pred_check_branch
        %330 = sbr.rel (%p328) target = $region32
      $region31: #{unet_forward_pallas.1} parent=11 // pred_region
        _
      $region32: #{unet_forward_pallas.1} parent=11 // pred_fallthru
        _
      // Predicated region
      $region33: #{unet_forward_pallas.1} parent=11 // pred_check
        %p331 = pneg %p170
      $region34: #{unet_forward_pallas.1} parent=11 // pred_check_branch
        %333 = sbr.rel (%p331) target = $region36
      $region35: #{unet_forward_pallas.1} parent=11 // pred_region
        _
      $region36: #{unet_forward_pallas.1} parent=11 // pred_fallthru
        _
      // Predicated region
      $region37: #{unet_forward_pallas.1} parent=11 // pred_check
        %p334 = pneg %p191
      $region38: #{unet_forward_pallas.1} parent=11 // pred_check_branch
        %336 = sbr.rel (%p334) target = $region40
      $region39: #{unet_forward_pallas.1} parent=11 // pred_region
        _
      $region40: #{unet_forward_pallas.1} parent=11 // pred_fallthru
        _
      // Predicated region
      $region41: #{unet_forward_pallas.1} parent=11 // pred_check
        %p337 = pneg %p212
      $region42: #{unet_forward_pallas.1} parent=11 // pred_check_branch
        %339 = sbr.rel (%p337) target = $region44
      $region43: #{unet_forward_pallas.1} parent=11 // pred_region
        _
      $region44: #{unet_forward_pallas.1} parent=11 // pred_fallthru
        _
      // Predicated region
      $region45: #{unet_forward_pallas.1} parent=11 // pred_check
        %p340 = pneg %p233
      $region46: #{unet_forward_pallas.1} parent=11 // pred_check_branch
        %342 = sbr.rel (%p340) target = $region48
      $region47: #{unet_forward_pallas.1} parent=11 // pred_region
        _
      $region48: #{unet_forward_pallas.1} parent=11 // pred_fallthru
        _
      // Predicated region
      $region49: #{unet_forward_pallas.1} parent=11 // pred_check
        %p343 = pneg %p254
      $region50: #{unet_forward_pallas.1} parent=11 // pred_check_branch
        %345 = sbr.rel (%p343) target = $region52
      $region51: #{unet_forward_pallas.1} parent=11 // pred_region
        _
      $region52: #{unet_forward_pallas.1} parent=11 // pred_fallthru
        _
      // Predicated region
      $region53: #{unet_forward_pallas.1} parent=11 // pred_check
        %p346 = pneg %p275
      $region54: #{unet_forward_pallas.1} parent=11 // pred_check_branch
        %348 = sbr.rel (%p346) target = $region56
      $region55: #{unet_forward_pallas.1} parent=11 // pred_region
        _
      $region56: #{unet_forward_pallas.1} parent=11 // pred_fallthru
        _
    $region12: #{unet_forward_pallas.1} parent=5 // pred_fallthru
      _
    %p349 = scmp.lt.s32.totalorder %s18, 2
    // Predicated region
    $region57: #{unet_forward_pallas.1} parent=5 // pred_check
      %p350 = pneg %p349
    $region58: #{unet_forward_pallas.1} parent=5 // pred_check_branch
      %352 = sbr.rel (%p350) target = $region60
    $region59: #{unet_forward_pallas.1} parent=5 // pred_region
      // Predicated region
      $region61: #{unet_forward_pallas.1} parent=59 // pred_check
        %p353 = pneg %p38
      $region62: #{unet_forward_pallas.1} parent=59 // pred_check_branch
        %355 = sbr.rel (%p353) target = $region64
      $region63: #{unet_forward_pallas.1} parent=59 // pred_region
        %p356 = scmp.lt.s32.totalorder %s18, 1
        %s357 = scalar_select %p356, %s18, 1
        %s358 = smul.addr %s357, 2
        %s359 = smul.addr %s358, 8
        %s360 = scalar_lea.vmem %s0, %s359
      $region64: #{unet_forward_pallas.1} parent=59 // pred_fallthru
        _
    $region60: #{unet_forward_pallas.1} parent=5 // pred_fallthru
      _
    %p361 = scmp.le.s32.totalorder 1, %s18
    %p362 = scmp.lt.s32.totalorder %s18, 3
    %p363 = pnand %p361, %p362
    %p364 = pneg %p363
    // Predicated region
    $region65: #{unet_forward_pallas.1} parent=5 // pred_check
      _
    $region66: #{unet_forward_pallas.1} parent=5 // pred_check_branch
      %366 = sbr.rel (%p363) target = $region68
    $region67: #{unet_forward_pallas.1} parent=5 // pred_region
      %s367 = ssub.s32 %s18, 1
      %p368 = scmp.lt.s32.totalorder %s23, 1
      %s369 = scalar_select %p368, %s23, 1
      %s370 = smul.addr %s369, 2
      %s371 = smul.addr %s370, 8
      %s372 = scalar_lea.vmem %s0, %s371
      %p373 = pneg %p44
      %p374 = pneg %p41
      %p375 = pneg %p65
      %p376 = pneg %p62
      %p377 = pneg %p86
      %p378 = pneg %p83
      %p379 = pneg %p107
      %p380 = pneg %p104
      %p381 = pneg %p128
      %p382 = pneg %p125
      %p383 = pneg %p149
      %p384 = pneg %p146
      %p385 = pneg %p170
      %p386 = pneg %p167
      %p387 = pneg %p191
      %p388 = pneg %p188
      %p389 = pneg %p212
      %p390 = pneg %p209
      %p391 = pneg %p233
      %p392 = pneg %p230
      %p393 = pneg %p254
      %p394 = pneg %p251
      %p395 = pneg %p275
      %p396 = pneg %p272
      %p397 = pneg %p301
      %p398 = pneg %p298
      %p399 = scmp.lt.s32.totalorder %s23, 1
      %s400 = scalar_select %p399, %s23, 1
      %s401 = smul.addr %s400, 2
      %s402 = smul.addr %s401, 4
      %s403 = scalar_lea.vmem %s12, %s402
      %p404 = scmp.lt.s32.totalorder %s23, 1
      %s405 = scalar_select %p404, %s23, 1
      %s406 = smul.addr %s405, 2
      %s407 = smul.addr %s406, 8
      %s408 = scalar_lea.vmem %s0, %s407
      %p409 = scmp.lt.s32.totalorder %s23, 1
      %s410 = scalar_select %p409, %s23, 1
      %s411 = smul.addr %s410, 2
      %s412 = smul.addr %s411, 4
      %s413 = scalar_lea.vmem %s12, %s412
      %414 = vst [vmem:[#allocation2] sm:$0xff] 0.0
      %vm415 = vcmask 138240
      %416 = vst.msk [vmem:[#allocation2 + $0x18] sm:$0xff] %vm415, 0.0
      %417 = vst [vmem:[#allocation3] sm:$0xff] 0.0
      %vm418 = vcmask 597504
      %419 = vst.msk [vmem:[#allocation3 + $0x8] sm:$0xff] %vm418, 0.0
      %420 = vst [vmem:[#allocation4] sm:$0xff] 0.0
      %vm421 = vcmask 171136
      %422 = vst.msk [vmem:[#allocation4 + $0x8] sm:$0xff] %vm421, 0.0
      %423 = vst [vmem:[#allocation5] sm:$0xff] 0.0
      %vm424 = vcmask 56352
      %425 = vst.msk [vmem:[#allocation5 + $0x8] sm:$0xff] %vm424, 0.0
      %v426 = vld [vmem:[%s408] sm:$0xff]
      %v427 = vld [vmem:[%s408 + $0x8] sm:$0xff]
      %v428 = vld [vmem:[%s1] sm:$0xff]
      %429 = vst [vmem:[#allocation2 + $0x8] sm:$0xff] %v426
      %430 = vst [vmem:[#allocation2 + $0x10] sm:$0xff] %v427
      %v431 = vlaneseq
      %v432 = vand.u32 %v431, 127
      %v433 = vadd.s32 %v432, 128
      %v434 = vand.u32 %v432, 15
      %v435 = vand.u32 %v433, 15
      %vm436 = vcmp.ne.s32.totalorder %v434, 0
      %vm437 = vcmp.ne.s32.totalorder %v435, 0
      %vm438 = vcmp.ne.s32.totalorder %v434, 15
      %vm439 = vcmp.ne.s32.totalorder %v435, 15
      %v440 = vld [vmem:[#allocation2] sm:$0xff]
      %v441 = vld [vmem:[#allocation2 + $0x8] sm:$0xff]
      %v442 = vld [vmem:[#allocation2 + $0x10] sm:$0xff]
      %446 = vrot.lane.b32.xlu0 %v440, 17
      %v447 = vpop.permute.xlu0 %446
      %448 = vrot.lane.b32.xlu0 %v441, 17
      %v449 = vpop.permute.xlu0 %448
      %450 = vrot.lane.b32.xlu0 %v442, 17
      %v451 = vpop.permute.xlu0 %450
      %v452 = vsel %vm415, %v447, %v449
      %v453 = vsel %vm415, %v449, %v451
      %v456 = vsel %vm436, %v452, 0.0
      %v457 = vsel %vm437, %v453, 0.0
      %458 = vst [vmem:[#allocation6] sm:$0xff] %v456
      %459 = vst [vmem:[#allocation6 + $0x8] sm:$0xff] %v457
      %v460 = vld [vmem:[#allocation2] sm:$0xff]
      %v461 = vld [vmem:[#allocation2 + $0x8] sm:$0xff]
      %v462 = vld [vmem:[#allocation2 + $0x10] sm:$0xff]
      %466 = vrot.lane.b32.xlu0 %v460, 16
      %v467 = vpop.permute.xlu0 %466
      %468 = vrot.lane.b32.xlu0 %v461, 16
      %v469 = vpop.permute.xlu0 %468
      %470 = vrot.lane.b32.xlu0 %v462, 16
      %v471 = vpop.permute.xlu0 %470
      %vm472 = vcmask 130048
      %v473 = vsel %vm472, %v467, %v469
      %v474 = vsel %vm472, %v469, %v471
      %477 = vst [vmem:[#allocation6 + $0x10] sm:$0xff] %v473
      %478 = vst [vmem:[#allocation6 + $0x18] sm:$0xff] %v474
      %v479 = vld [vmem:[#allocation2] sm:$0xff]
      %v480 = vld [vmem:[#allocation2 + $0x8] sm:$0xff]
      %v481 = vld [vmem:[#allocation2 + $0x10] sm:$0xff]
      %485 = vrot.lane.b32.xlu0 %v479, 15
      %v486 = vpop.permute.xlu0 %485
      %487 = vrot.lane.b32.xlu0 %v480, 15
      %v488 = vpop.permute.xlu0 %487
      %489 = vrot.lane.b32.xlu0 %v481, 15
      %v490 = vpop.permute.xlu0 %489
      %vm491 = vcmask 121856
      %v492 = vsel %vm491, %v486, %v488
      %v493 = vsel %vm491, %v488, %v490
      %v496 = vsel %vm438, %v492, 0.0
      %v497 = vsel %vm439, %v493, 0.0
      %498 = vst [vmem:[#allocation6 + $0x20] sm:$0xff] %v496
      %499 = vst [vmem:[#allocation6 + $0x28] sm:$0xff] %v497
      %v500 = vld [vmem:[#allocation2] sm:$0xff]
      %v501 = vld [vmem:[#allocation2 + $0x8] sm:$0xff]
      %v502 = vld [vmem:[#allocation2 + $0x10] sm:$0xff]
      %506 = vrot.lane.b32.xlu0 %v500, 1
      %v507 = vpop.permute.xlu0 %506
      %508 = vrot.lane.b32.xlu0 %v501, 1
      %v509 = vpop.permute.xlu0 %508
      %510 = vrot.lane.b32.xlu0 %v502, 1
      %v511 = vpop.permute.xlu0 %510
      %vm512 = vcmask 7168
      %v513 = vsel %vm512, %v507, %v509
      %v514 = vsel %vm512, %v509, %v511
      %v517 = vsel %vm436, %v513, 0.0
      %v518 = vsel %vm437, %v514, 0.0
      %519 = vst [vmem:[#allocation6 + $0x30] sm:$0xff] %v517
      %520 = vst [vmem:[#allocation6 + $0x38] sm:$0xff] %v518
      %v521 = vld [vmem:[#allocation2 + $0x8] sm:$0xff]
      %v522 = vld [vmem:[#allocation2 + $0x10] sm:$0xff]
      %523 = vst [vmem:[#allocation6 + $0x40] sm:$0xff] %v521
      %524 = vst [vmem:[#allocation6 + $0x48] sm:$0xff] %v522
      %v525 = vld [vmem:[#allocation2 + $0x8] sm:$0xff]
      %v526 = vld [vmem:[#allocation2 + $0x10] sm:$0xff]
      %v527 = vld [vmem:[#allocation2 + $0x18] sm:$0xff]
      %531 = vrot.lane.b32.xlu0 %v525, 127
      %v532 = vpop.permute.xlu0 %531
      %533 = vrot.lane.b32.xlu0 %v526, 127
      %v534 = vpop.permute.xlu0 %533
      %535 = vrot.lane.b32.xlu0 %v527, 127
      %v536 = vpop.permute.xlu0 %535
      %vm537 = vcmask 1039360
      %v538 = vsel %vm537, %v532, %v534
      %v539 = vsel %vm537, %v534, %v536
      %v542 = vsel %vm438, %v538, 0.0
      %v543 = vsel %vm439, %v539, 0.0
      %544 = vst [vmem:[#allocation6 + $0x50] sm:$0xff] %v542
      %545 = vst [vmem:[#allocation6 + $0x58] sm:$0xff] %v543
      %v546 = vld [vmem:[#allocation2 + $0x8] sm:$0xff]
      %v547 = vld [vmem:[#allocation2 + $0x10] sm:$0xff]
      %v548 = vld [vmem:[#allocation2 + $0x18] sm:$0xff]
      %552 = vrot.lane.b32.xlu0 %v546, 113
      %v553 = vpop.permute.xlu0 %552
      %554 = vrot.lane.b32.xlu0 %v547, 113
      %v555 = vpop.permute.xlu0 %554
      %556 = vrot.lane.b32.xlu0 %v548, 113
      %v557 = vpop.permute.xlu0 %556
      %vm558 = vcmask 924672
      %v559 = vsel %vm558, %v553, %v555
      %v560 = vsel %vm558, %v555, %v557
      %v563 = vsel %vm436, %v559, 0.0
      %v564 = vsel %vm437, %v560, 0.0
      %565 = vst [vmem:[#allocation6 + $0x60] sm:$0xff] %v563
      %566 = vst [vmem:[#allocation6 + $0x68] sm:$0xff] %v564
      %v567 = vld [vmem:[#allocation2 + $0x8] sm:$0xff]
      %v568 = vld [vmem:[#allocation2 + $0x10] sm:$0xff]
      %v569 = vld [vmem:[#allocation2 + $0x18] sm:$0xff]
      %573 = vrot.lane.b32.xlu0 %v567, 112
      %v574 = vpop.permute.xlu0 %573
      %575 = vrot.lane.b32.xlu0 %v568, 112
      %v576 = vpop.permute.xlu0 %575
      %577 = vrot.lane.b32.xlu0 %v569, 112
      %v578 = vpop.permute.xlu0 %577
      %vm579 = vcmask 916480
      %v580 = vsel %vm579, %v574, %v576
      %v581 = vsel %vm579, %v576, %v578
      %584 = vst [vmem:[#allocation6 + $0x70] sm:$0xff] %v580
      %585 = vst [vmem:[#allocation6 + $0x78] sm:$0xff] %v581
      %v586 = vld [vmem:[#allocation2 + $0x8] sm:$0xff]
      %v587 = vld [vmem:[#allocation2 + $0x10] sm:$0xff]
      %v588 = vld [vmem:[#allocation2 + $0x18] sm:$0xff]
      %592 = vrot.lane.b32.xlu0 %v586, 111
      %v593 = vpop.permute.xlu0 %592
      %594 = vrot.lane.b32.xlu0 %v587, 111
      %v595 = vpop.permute.xlu0 %594
      %596 = vrot.lane.b32.xlu0 %v588, 111
      %v597 = vpop.permute.xlu0 %596
      %vm598 = vcmask 908288
      %v599 = vsel %vm598, %v593, %v595
      %v600 = vsel %vm598, %v595, %v597
      %v603 = vsel %vm438, %v599, 0.0
      %v604 = vsel %vm439, %v600, 0.0
      %605 = vst [vmem:[#allocation6 + $0x80] sm:$0xff] %v603
      %606 = vst [vmem:[#allocation6 + $0x88] sm:$0xff] %v604
      %v607 = vld [vmem:[#allocation6] sm:$0xff]
      %v608 = vld [vmem:[#allocation6 + $0x8] sm:$0xff]
      %v609 = vld [vmem:[#allocation6 + $0x10] sm:$0xff]
      %v610 = vld [vmem:[#allocation6 + $0x18] sm:$0xff]
      %v611 = vld [vmem:[#allocation6 + $0x20] sm:$0xff]
      %v612 = vld [vmem:[#allocation6 + $0x28] sm:$0xff]
      %v613 = vld [vmem:[#allocation6 + $0x30] sm:$0xff]
      %v614 = vld [vmem:[#allocation6 + $0x38] sm:$0xff]
      %v615 = vld [vmem:[#allocation6 + $0x40] sm:$0xff]
      %v616 = vld [vmem:[#allocation6 + $0x48] sm:$0xff]
      %v617 = vld [vmem:[#allocation6 + $0x50] sm:$0xff]
      %v618 = vld [vmem:[#allocation6 + $0x58] sm:$0xff]
      %v619 = vld [vmem:[#allocation6 + $0x60] sm:$0xff]
      %v620 = vld [vmem:[#allocation6 + $0x68] sm:$0xff]
      %v621 = vld [vmem:[#allocation6 + $0x70] sm:$0xff]
      %v622 = vld [vmem:[#allocation6 + $0x78] sm:$0xff]
      %v623 = vld [vmem:[#allocation6 + $0x80] sm:$0xff]
      %v624 = vld [vmem:[#allocation6 + $0x88] sm:$0xff]
      %v625 = vld [vmem:[%s3] sm:$0xff]
      %627 = vset.pattern.permute.xlu0 0
      %628 = vperm.xlu0 %627, %v625
      %v629 = vpop.permute.xlu0 %628
      %vm631 = vcmask 588800
      %v633 = vsel %vm631, %v428, 0
      %635 = vmatprep.subr.mxu0 %v608
      %636 = vmatpush1.msra.mxu0 %v607
      %637 = vmatprep.subr.mxu0 %v610
      %638 = vmatpush1.msra.mxu0 %v609
      %639 = vmatprep.subr.mxu0 %v612
      %640 = vmatpush1.msra.mxu0 %v611
      %641 = vmatprep.subr.mxu0 %v614
      %642 = vmatpush1.msra.mxu0 %v613
      %643 = vmatprep.subr.mxu0 %v616
      %644 = vmatpush1.msra.mxu0 %v615
      %645 = vmatprep.subr.mxu0 %v618
      %646 = vmatpush1.msra.mxu0 %v617
      %647 = vmatprep.subr.mxu0 %v620
      %648 = vmatpush1.msra.mxu0 %v619
      %649 = vmatprep.subr.mxu0 %v622
      %650 = vmatpush1.msra.mxu0 %v621
      %651 = vmatprep.subr.mxu0 %v624
      %652 = vmatpush1.msra.mxu0 %v623
      %653 = vmatprep.subr.mxu0 0.0
      %654 = vmatpush1.msra.mxu0 0.0
      %655 = vmatprep.subr.mxu0 0.0
      %656 = vmatpush1.msra.mxu0 0.0
      %657 = vmatprep.subr.mxu0 0.0
      %658 = vmatpush1.msra.mxu0 0.0
      %659 = vmatprep.subr.mxu0 0.0
      %660 = vmatpush1.msra.mxu0 0.0
      %661 = vmatprep.subr.mxu0 0.0
      %662 = vmatpush1.msra.mxu0 0.0
      %663 = vmatprep.subr.mxu0 0.0
      %664 = vmatpush1.msra.mxu0 0.0
      %665 = vmatprep.subr.mxu0 0.0
      %666 = vmatpush1.msra.mxu0 0.0
      %667 = vmatprep.subr.mxu0 0.0
      %668 = vmatpush1.msra.mxu0 0.0
      %669 = vmatprep.subr.mxu0 0.0
      %670 = vmatpush1.msra.mxu0 0.0
      %671 = vmatprep.subr.mxu0 0.0
      %672 = vmatpush1.msra.mxu0 0.0
      %673 = vmatprep.subr.mxu0 0.0
      %674 = vmatpush1.msra.mxu0 0.0
      %675 = vmatprep.subr.mxu0 0.0
      %676 = vmatpush1.msra.mxu0 0.0
      %677 = vmatprep.subr.mxu0 0.0
      %678 = vmatpush1.msra.mxu0 0.0
      %679 = vmatprep.subr.mxu0 0.0
      %680 = vmatpush1.msra.mxu0 0.0
      %681 = vmatprep.subr.mxu0 0.0
      %682 = vmatpush1.msra.mxu0 0.0
      %683 = vmatprep.subr.mxu0 0.0
      %684 = vmatpush1.msra.mxu0 0.0
      %685 = vmatprep.subr.mxu0 0.0
      %686 = vmatpush1.msra.mxu0 0.0
      %687 = vmatprep.subr.mxu0 0.0
      %688 = vmatpush1.msra.mxu0 0.0
      %689 = vmatprep.subr.mxu0 0.0
      %690 = vmatpush1.msra.mxu0 0.0
      %691 = vmatprep.subr.mxu0 0.0
      %692 = vmatpush1.msra.mxu0 0.0
      %693 = vmatprep.subr.mxu0 0.0
      %694 = vmatpush1.msra.mxu0 0.0
      %695 = vmatprep.subr.mxu0 0.0
      %696 = vmatpush1.msra.mxu0 0.0
      %697 = vmatprep.subr.mxu0 0.0
      %698 = vmatpush1.msra.mxu0 0.0
      %699 = vmatprep.mubr.f32.mxu0 0.0
      %700 = vmatmul.mubr.f32.gmra.mrb[0].mxu0 %v633
      %v701 = vpop.f32.mrb[0].mxu0
      %v702 = vadd.f32 %v629, %v701
      %v703 = vpop.f32.mrb[0].mxu0
      %v704 = vadd.f32 %v629, %v703
      %705 = vdwg.mxu0
      %v706 = vmax.f32 %v702, 0.0
      %v707 = vmax.f32 %v704, 0.0
      %s708 = scalar_lea.vmem %s1, 8
      %v709 = vld [vmem:[%s708] sm:$0xff]
      %710 = vst [vmem:[#allocation2 + $0x8] sm:$0xff] %v706
      %711 = vst [vmem:[#allocation2 + $0x10] sm:$0xff] %v707
      %v712 = vld [vmem:[#allocation2] sm:$0xff]
      %v713 = vld [vmem:[#allocation2 + $0x8] sm:$0xff]
      %v714 = vld [vmem:[#allocation2 + $0x10] sm:$0xff]
      %718 = vrot.lane.b32.xlu0 %v712, 17
      %v719 = vpop.permute.xlu0 %718
      %720 = vrot.lane.b32.xlu0 %v713, 17
      %v721 = vpop.permute.xlu0 %720
      %722 = vrot.lane.b32.xlu0 %v714, 17
      %v723 = vpop.permute.xlu0 %722
      %v724 = vsel %vm415, %v719, %v721
      %v725 = vsel %vm415, %v721, %v723
      %v728 = vsel %vm436, %v724, 0.0
      %v729 = vsel %vm437, %v725, 0.0
      %730 = vst [vmem:[#allocation6] sm:$0xff] %v728
      %731 = vst [vmem:[#allocation6 + $0x8] sm:$0xff] %v729
      %v732 = vld [vmem:[#allocation2] sm:$0xff]
      %v733 = vld [vmem:[#allocation2 + $0x8] sm:$0xff]
      %v734 = vld [vmem:[#allocation2 + $0x10] sm:$0xff]
      %738 = vrot.lane.b32.xlu0 %v732, 16
      %v739 = vpop.permute.xlu0 %738
      %740 = vrot.lane.b32.xlu0 %v733, 16
      %v741 = vpop.permute.xlu0 %740
      %742 = vrot.lane.b32.xlu0 %v734, 16
      %v743 = vpop.permute.xlu0 %742
      %v744 = vsel %vm472, %v739, %v741
      %v745 = vsel %vm472, %v741, %v743
      %748 = vst [vmem:[#allocation6 + $0x10] sm:$0xff] %v744
      %749 = vst [vmem:[#allocation6 + $0x18] sm:$0xff] %v745
      %v750 = vld [vmem:[#allocation2] sm:$0xff]
      %v751 = vld [vmem:[#allocation2 + $0x8] sm:$0xff]
      %v752 = vld [vmem:[#allocation2 + $0x10] sm:$0xff]
      %756 = vrot.lane.b32.xlu0 %v750, 15
      %v757 = vpop.permute.xlu0 %756
      %758 = vrot.lane.b32.xlu0 %v751, 15
      %v759 = vpop.permute.xlu0 %758
      %760 = vrot.lane.b32.xlu0 %v752, 15
      %v761 = vpop.permute.xlu0 %760
      %v762 = vsel %vm491, %v757, %v759
      %v763 = vsel %vm491, %v759, %v761
      %v766 = vsel %vm438, %v762, 0.0
      %v767 = vsel %vm439, %v763, 0.0
      %768 = vst [vmem:[#allocation6 + $0x20] sm:$0xff] %v766
      %769 = vst [vmem:[#allocation6 + $0x28] sm:$0xff] %v767
      %v770 = vld [vmem:[#allocation2] sm:$0xff]
      %v771 = vld [vmem:[#allocation2 + $0x8] sm:$0xff]
      %v772 = vld [vmem:[#allocation2 + $0x10] sm:$0xff]
      %776 = vrot.lane.b32.xlu0 %v770, 1
      %v777 = vpop.permute.xlu0 %776
      %778 = vrot.lane.b32.xlu0 %v771, 1
      %v779 = vpop.permute.xlu0 %778
      %780 = vrot.lane.b32.xlu0 %v772, 1
      %v781 = vpop.permute.xlu0 %780
      %v782 = vsel %vm512, %v777, %v779
      %v783 = vsel %vm512, %v779, %v781
      %v786 = vsel %vm436, %v782, 0.0
      %v787 = vsel %vm437, %v783, 0.0
      %788 = vst [vmem:[#allocation6 + $0x30] sm:$0xff] %v786
      %789 = vst [vmem:[#allocation6 + $0x38] sm:$0xff] %v787
      %v790 = vld [vmem:[#allocation2 + $0x8] sm:$0xff]
      %v791 = vld [vmem:[#allocation2 + $0x10] sm:$0xff]
      %792 = vst [vmem:[#allocation6 + $0x40] sm:$0xff] %v790
      %793 = vst [vmem:[#allocation6 + $0x48] sm:$0xff] %v791
      %v794 = vld [vmem:[#allocation2 + $0x8] sm:$0xff]
      %v795 = vld [vmem:[#allocation2 + $0x10] sm:$0xff]
      %v796 = vld [vmem:[#allocation2 + $0x18] sm:$0xff]
      %800 = vrot.lane.b32.xlu0 %v794, 127
      %v801 = vpop.permute.xlu0 %800
      %802 = vrot.lane.b32.xlu0 %v795, 127
      %v803 = vpop.permute.xlu0 %802
      %804 = vrot.lane.b32.xlu0 %v796, 127
      %v805 = vpop.permute.xlu0 %804
      %v806 = vsel %vm537, %v801, %v803
      %v807 = vsel %vm537, %v803, %v805
      %v810 = vsel %vm438, %v806, 0.0
      %v811 = vsel %vm439, %v807, 0.0
      %812 = vst [vmem:[#allocation6 + $0x50] sm:$0xff] %v810
      %813 = vst [vmem:[#allocation6 + $0x58] sm:$0xff] %v811
      %v814 = vld [vmem:[#allocation2 + $0x8] sm:$0xff]
      %v815 = vld [vmem:[#allocation2 + $0x10] sm:$0xff]
      %v816 = vld [vmem:[#allocation2 + $0x18] sm:$0xff]
      %820 = vrot.lane.b32.xlu0 %v814, 113
      %v821 = vpop.permute.xlu0 %820
      %822 = vrot.lane.b32.xlu0 %v815, 113
      %v823 = vpop.permute.xlu0 %822
      %824 = vrot.lane.b32.xlu0 %v816, 113
      %v825 = vpop.permute.xlu0 %824
      %v826 = vsel %vm558, %v821, %v823
      %v827 = vsel %vm558, %v823, %v825
      %v830 = vsel %vm436, %v826, 0.0
      %v831 = vsel %vm437, %v827, 0.0
      %832 = vst [vmem:[#allocation6 + $0x60] sm:$0xff] %v830
      %833 = vst [vmem:[#allocation6 + $0x68] sm:$0xff] %v831
      %v834 = vld [vmem:[#allocation2 + $0x8] sm:$0xff]
      %v835 = vld [vmem:[#allocation2 + $0x10] sm:$0xff]
      %v836 = vld [vmem:[#allocation2 + $0x18] sm:$0xff]
      %840 = vrot.lane.b32.xlu0 %v834, 112
      %v841 = vpop.permute.xlu0 %840
      %842 = vrot.lane.b32.xlu0 %v835, 112
      %v843 = vpop.permute.xlu0 %842
      %844 = vrot.lane.b32.xlu0 %v836, 112
      %v845 = vpop.permute.xlu0 %844
      %v846 = vsel %vm579, %v841, %v843
      %v847 = vsel %vm579, %v843, %v845
      %850 = vst [vmem:[#allocation6 + $0x70] sm:$0xff] %v846
      %851 = vst [vmem:[#allocation6 + $0x78] sm:$0xff] %v847
      %v852 = vld [vmem:[#allocation2 + $0x8] sm:$0xff]
      %v853 = vld [vmem:[#allocation2 + $0x10] sm:$0xff]
      %v854 = vld [vmem:[#allocation2 + $0x18] sm:$0xff]
      %858 = vrot.lane.b32.xlu0 %v852, 111
      %v859 = vpop.permute.xlu0 %858
      %860 = vrot.lane.b32.xlu0 %v853, 111
      %v861 = vpop.permute.xlu0 %860
      %862 = vrot.lane.b32.xlu0 %v854, 111
      %v863 = vpop.permute.xlu0 %862
      %v864 = vsel %vm598, %v859, %v861
      %v865 = vsel %vm598, %v861, %v863
      %v868 = vsel %vm438, %v864, 0.0
      %v869 = vsel %vm439, %v865, 0.0
      %870 = vst [vmem:[#allocation6 + $0x80] sm:$0xff] %v868
      %871 = vst [vmem:[#allocation6 + $0x88] sm:$0xff] %v869
      %v872 = vld [vmem:[#allocation6] sm:$0xff]
      %v873 = vld [vmem:[#allocation6 + $0x8] sm:$0xff]
      %v874 = vld [vmem:[#allocation6 + $0x10] sm:$0xff]
      %v875 = vld [vmem:[#allocation6 + $0x18] sm:$0xff]
      %v876 = vld [vmem:[#allocation6 + $0x20] sm:$0xff]
      %v877 = vld [vmem:[#allocation6 + $0x28] sm:$0xff]
      %v878 = vld [vmem:[#allocation6 + $0x30] sm:$0xff]
      %v879 = vld [vmem:[#allocation6 + $0x38] sm:$0xff]
      %v880 = vld [vmem:[#allocation6 + $0x40] sm:$0xff]
      %v881 = vld [vmem:[#allocation6 + $0x48] sm:$0xff]
      %v882 = vld [vmem:[#allocation6 + $0x50] sm:$0xff]
      %v883 = vld [vmem:[#allocation6 + $0x58] sm:$0xff]
      %v884 = vld [vmem:[#allocation6 + $0x60] sm:$0xff]
      %v885 = vld [vmem:[#allocation6 + $0x68] sm:$0xff]
      %v886 = vld [vmem:[#allocation6 + $0x70] sm:$0xff]
      %v887 = vld [vmem:[#allocation6 + $0x78] sm:$0xff]
      %v888 = vld [vmem:[#allocation6 + $0x80] sm:$0xff]
      %v889 = vld [vmem:[#allocation6 + $0x88] sm:$0xff]
      %v890 = vld [vmem:[%s3] sm:$0xff]
      %892 = vset.pattern.permute.xlu0 1
      %893 = vperm.xlu0 %892, %v890
      %v894 = vpop.permute.xlu0 %893
      %v897 = vsel %vm631, %v709, 0
      %899 = vmatprep.subr.mxu0 %v873
      %900 = vmatpush1.msra.mxu0 %v872
      %901 = vmatprep.subr.mxu0 %v875
      %902 = vmatpush1.msra.mxu0 %v874
      %903 = vmatprep.subr.mxu0 %v877
      %904 = vmatpush1.msra.mxu0 %v876
      %905 = vmatprep.subr.mxu0 %v879
      %906 = vmatpush1.msra.mxu0 %v878
      %907 = vmatprep.subr.mxu0 %v881
      %908 = vmatpush1.msra.mxu0 %v880
      %909 = vmatprep.subr.mxu0 %v883
      %910 = vmatpush1.msra.mxu0 %v882
      %911 = vmatprep.subr.mxu0 %v885
      %912 = vmatpush1.msra.mxu0 %v884
      %913 = vmatprep.subr.mxu0 %v887
      %914 = vmatpush1.msra.mxu0 %v886
      %915 = vmatprep.subr.mxu0 %v889
      %916 = vmatpush1.msra.mxu0 %v888
      %917 = vmatprep.subr.mxu0 0.0
      %918 = vmatpush1.msra.mxu0 0.0
      %919 = vmatprep.subr.mxu0 0.0
      %920 = vmatpush1.msra.mxu0 0.0
      %921 = vmatprep.subr.mxu0 0.0
      %922 = vmatpush1.msra.mxu0 0.0
      %923 = vmatprep.subr.mxu0 0.0
      %924 = vmatpush1.msra.mxu0 0.0
      %925 = vmatprep.subr.mxu0 0.0
      %926 = vmatpush1.msra.mxu0 0.0
      %927 = vmatprep.subr.mxu0 0.0
      %928 = vmatpush1.msra.mxu0 0.0
      %929 = vmatprep.subr.mxu0 0.0
      %930 = vmatpush1.msra.mxu0 0.0
      %931 = vmatprep.subr.mxu0 0.0
      %932 = vmatpush1.msra.mxu0 0.0
      %933 = vmatprep.subr.mxu0 0.0
      %934 = vmatpush1.msra.mxu0 0.0
      %935 = vmatprep.subr.mxu0 0.0
      %936 = vmatpush1.msra.mxu0 0.0
      %937 = vmatprep.subr.mxu0 0.0
      %938 = vmatpush1.msra.mxu0 0.0
      %939 = vmatprep.subr.mxu0 0.0
      %940 = vmatpush1.msra.mxu0 0.0
      %941 = vmatprep.subr.mxu0 0.0
      %942 = vmatpush1.msra.mxu0 0.0
      %943 = vmatprep.subr.mxu0 0.0
      %944 = vmatpush1.msra.mxu0 0.0
      %945 = vmatprep.subr.mxu0 0.0
      %946 = vmatpush1.msra.mxu0 0.0
      %947 = vmatprep.subr.mxu0 0.0
      %948 = vmatpush1.msra.mxu0 0.0
      %949 = vmatprep.subr.mxu0 0.0
      %950 = vmatpush1.msra.mxu0 0.0
      %951 = vmatprep.subr.mxu0 0.0
      %952 = vmatpush1.msra.mxu0 0.0
      %953 = vmatprep.subr.mxu0 0.0
      %954 = vmatpush1.msra.mxu0 0.0
      %955 = vmatprep.subr.mxu0 0.0
      %956 = vmatpush1.msra.mxu0 0.0
      %957 = vmatprep.subr.mxu0 0.0
      %958 = vmatpush1.msra.mxu0 0.0
      %959 = vmatprep.subr.mxu0 0.0
      %960 = vmatpush1.msra.mxu0 0.0
      %961 = vmatprep.subr.mxu0 0.0
      %962 = vmatpush1.msra.mxu0 0.0
      %963 = vmatprep.mubr.f32.mxu0 0.0
      %964 = vmatmul.mubr.f32.gmra.mrb[0].mxu0 %v897
      %v965 = vpop.f32.mrb[0].mxu0
      %v966 = vadd.f32 %v894, %v965
      %v967 = vpop.f32.mrb[0].mxu0
      %v968 = vadd.f32 %v894, %v967
      %969 = vdwg.mxu0
      %v970 = vmax.f32 %v966, 0.0
      %v971 = vmax.f32 %v968, 0.0
      %972 = vst [vmem:[#allocation2 + $0x8] sm:$0xff] %v970
      %973 = vst [vmem:[#allocation2 + $0x10] sm:$0xff] %v971
      %v974 = vld [vmem:[#allocation2 + $0x8] sm:$0xff]
      %v975 = vld [vmem:[#allocation2 + $0x10] sm:$0xff]
      %v976 = vld [vmem:[#allocation2 + $0x18] sm:$0xff]
      %980 = vrot.lane.b32.xlu0 %v974, 127
      %v981 = vpop.permute.xlu0 %980
      %982 = vrot.lane.b32.xlu0 %v975, 127
      %v983 = vpop.permute.xlu0 %982
      %984 = vrot.lane.b32.xlu0 %v976, 127
      %v985 = vpop.permute.xlu0 %984
      %v986 = vsel %vm537, %v981, %v983
      %v987 = vsel %vm537, %v983, %v985
      %v990 = vmax.f32 %v970, %v986
      %v991 = vmax.f32 %v971, %v987
      %v993 = vmax.f32 %v974, %v986
      %v994 = vmax.f32 %v975, %v987
      %v995 = vmax.f32 %v976, %v985
      %999 = vrot.lane.b32.xlu0 %v993, 112
      %v1000 = vpop.permute.xlu0 %999
      %1001 = vrot.lane.b32.xlu0 %v994, 112
      %v1002 = vpop.permute.xlu0 %1001
      %1003 = vrot.lane.b32.xlu0 %v995, 112
      %v1004 = vpop.permute.xlu0 %1003
      %v1005 = vsel %vm579, %v1000, %v1002
      %v1006 = vsel %vm579, %v1002, %v1004
      %v1009 = vmax.f32 %v990, %v1005
      %v1010 = vmax.f32 %v991, %v1006
      %v1011 = vld [vmem:[%s9] sm:$0xff]
      %v1012 = vld [vmem:[%s9 + $0x8] sm:$0xff]
      %v1013 = vld [vmem:[%s9 + $0x10] sm:$0xff]
      %v1014 = vld [vmem:[%s9 + $0x18] sm:$0xff]
      %v1015 = vld [vmem:[%s9 + $0x20] sm:$0xff]
      %v1016 = vld [vmem:[%s9 + $0x28] sm:$0xff]
      %v1017 = vld [vmem:[%s9 + $0x30] sm:$0xff]
      %v1018 = vld [vmem:[%s9 + $0x38] sm:$0xff]
      %v1019 = vld [vmem:[%s9 + $0x40] sm:$0xff]
      %v1020 = vld [vmem:[%s9 + $0x48] sm:$0xff]
      %v1021 = vld [vmem:[%s9 + $0x50] sm:$0xff]
      %v1022 = vld [vmem:[%s9 + $0x58] sm:$0xff]
      %v1023 = vld [vmem:[%s9 + $0x60] sm:$0xff]
      %v1024 = vld [vmem:[%s9 + $0x68] sm:$0xff]
      %v1025 = vld [vmem:[%s9 + $0x70] sm:$0xff]
      %v1026 = vld [vmem:[%s9 + $0x78] sm:$0xff]
      %v1027 = vld [vmem:[%s9 + $0x80] sm:$0xff]
      %v1028 = vld [vmem:[%s9 + $0x88] sm:$0xff]
      %v1029 = vld [vmem:[%s9 + $0x90] sm:$0xff]
      %v1030 = vld [vmem:[%s9 + $0x98] sm:$0xff]
      %v1031 = vld [vmem:[%s9 + $0xa0] sm:$0xff]
      %v1032 = vld [vmem:[%s9 + $0xa8] sm:$0xff]
      %v1033 = vld [vmem:[%s9 + $0xb0] sm:$0xff]
      %v1034 = vld [vmem:[%s9 + $0xb8] sm:$0xff]
      %v1035 = vld [vmem:[%s9 + $0xc0] sm:$0xff]
      %v1036 = vld [vmem:[%s9 + $0xc8] sm:$0xff]
      %v1037 = vld [vmem:[%s9 + $0xd0] sm:$0xff]
      %v1038 = vld [vmem:[%s9 + $0xd8] sm:$0xff]
      %v1039 = vld [vmem:[%s9 + $0xe0] sm:$0xff]
      %v1040 = vld [vmem:[%s9 + $0xe8] sm:$0xff]
      %v1041 = vld [vmem:[%s9 + $0xf0] sm:$0xff]
      %v1042 = vld [vmem:[%s9 + $0xf8] sm:$0xff]
      %1043 = vmatprep.subr.mxu0 0.0
      %1044 = vmatpush1.msra.mxu0 %v1011
      %1045 = vmatprep.subr.mxu0 0.0
      %1046 = vmatpush1.msra.mxu0 %v1012
      %1047 = vmatprep.subr.mxu0 0.0
      %1048 = vmatpush1.msra.mxu0 %v1013
      %1049 = vmatprep.subr.mxu0 0.0
      %1050 = vmatpush1.msra.mxu0 %v1014
      %1051 = vmatprep.subr.mxu0 0.0
      %1052 = vmatpush1.msra.mxu0 %v1015
      %1053 = vmatprep.subr.mxu0 0.0
      %1054 = vmatpush1.msra.mxu0 %v1016
      %1055 = vmatprep.subr.mxu0 0.0
      %1056 = vmatpush1.msra.mxu0 %v1017
      %1057 = vmatprep.subr.mxu0 0.0
      %1058 = vmatpush1.msra.mxu0 %v1018
      %1059 = vmatprep.subr.mxu0 0.0
      %1060 = vmatpush1.msra.mxu0 %v1019
      %1061 = vmatprep.subr.mxu0 0.0
      %1062 = vmatpush1.msra.mxu0 %v1020
      %1063 = vmatprep.subr.mxu0 0.0
      %1064 = vmatpush1.msra.mxu0 %v1021
      %1065 = vmatprep.subr.mxu0 0.0
      %1066 = vmatpush1.msra.mxu0 %v1022
      %1067 = vmatprep.subr.mxu0 0.0
      %1068 = vmatpush1.msra.mxu0 %v1023
      %1069 = vmatprep.subr.mxu0 0.0
      %1070 = vmatpush1.msra.mxu0 %v1024
      %1071 = vmatprep.subr.mxu0 0.0
      %1072 = vmatpush1.msra.mxu0 %v1025
      %1073 = vmatprep.subr.mxu0 0.0
      %1074 = vmatpush1.msra.mxu0 %v1026
      %1075 = vmatprep.subr.mxu0 0.0
      %1076 = vmatpush1.msra.mxu0 %v1027
      %1077 = vmatprep.subr.mxu0 0.0
      %1078 = vmatpush1.msra.mxu0 %v1028
      %1079 = vmatprep.subr.mxu0 0.0
      %1080 = vmatpush1.msra.mxu0 %v1029
      %1081 = vmatprep.subr.mxu0 0.0
      %1082 = vmatpush1.msra.mxu0 %v1030
      %1083 = vmatprep.subr.mxu0 0.0
      %1084 = vmatpush1.msra.mxu0 %v1031
      %1085 = vmatprep.subr.mxu0 0.0
      %1086 = vmatpush1.msra.mxu0 %v1032
      %1087 = vmatprep.subr.mxu0 0.0
      %1088 = vmatpush1.msra.mxu0 %v1033
      %1089 = vmatprep.subr.mxu0 0.0
      %1090 = vmatpush1.msra.mxu0 %v1034
      %1091 = vmatprep.subr.mxu0 0.0
      %1092 = vmatpush1.msra.mxu0 %v1035
      %1093 = vmatprep.subr.mxu0 0.0
      %1094 = vmatpush1.msra.mxu0 %v1036
      %1095 = vmatprep.subr.mxu0 0.0
      %1096 = vmatpush1.msra.mxu0 %v1037
      %1097 = vmatprep.subr.mxu0 0.0
      %1098 = vmatpush1.msra.mxu0 %v1038
      %1099 = vmatprep.subr.mxu0 0.0
      %1100 = vmatpush1.msra.mxu0 %v1039
      %1101 = vmatprep.subr.mxu0 0.0
      %1102 = vmatpush1.msra.mxu0 %v1040
      %1103 = vmatprep.subr.mxu0 0.0
      %1104 = vmatpush1.msra.mxu0 %v1041
      %1105 = vmatprep.subr.mxu0 0.0
      %1106 = vmatpush1.msra.mxu0 %v1042
      %1107 = vmatprep.mubr.f32.mxu0 %v1010
      %1108 = vmatmul.mubr.f32.gmra.mrb[0].mxu0 %v1009
      %v1109 = vpop.f32.mrb[0].mxu0
      %v1110 = vadd.f32 0.0, %v1109
      %v1111 = vpop.f32.mrb[0].mxu0
      %1112 = vdwg.mxu0
      %vm1113 = vcmask 523264
      %1114 = vst.msk [vmem:[#allocation3 + $0x8] sm:$0xff] %vm1113, %v1110
      %s1115 = scalar_lea.vmem %s1, 16
      %v1116 = vld [vmem:[%s1115] sm:$0xff]
      %v1117 = vand.u32 %v432, 7
      %vm1118 = vcmp.ne.s32.totalorder %v1117, 0
      %vm1119 = vcmp.ne.s32.totalorder %v1117, 7
      %v1120 = vld [vmem:[#allocation3] sm:$0xff]
      %v1121 = vld [vmem:[#allocation3 + $0x8] sm:$0xff]
      %1124 = vrot.lane.b32.xlu0 %v1120, 9
      %v1125 = vpop.permute.xlu0 %1124
      %1126 = vrot.lane.b32.xlu0 %v1121, 9
      %v1127 = vpop.permute.xlu0 %1126
      %vm1128 = vcmask 72704
      %v1129 = vsel %vm1128, %v1125, %v1127
      %v1131 = vsel %vm1118, %v1129, 0.0
      %1132 = vst.msk [vmem:[#allocation6] sm:$0xff] %vm1113, %v1131
      %v1133 = vld [vmem:[#allocation3] sm:$0xff]
      %v1134 = vld [vmem:[#allocation3 + $0x8] sm:$0xff]
      %1137 = vrot.lane.b32.xlu0 %v1133, 8
      %v1138 = vpop.permute.xlu0 %1137
      %1139 = vrot.lane.b32.xlu0 %v1134, 8
      %v1140 = vpop.permute.xlu0 %1139
      %vm1141 = vcmask 64512
      %v1142 = vsel %vm1141, %v1138, %v1140
      %1144 = vst.msk [vmem:[#allocation6 + $0x10] sm:$0xff] %vm1113, %v1142
      %v1145 = vld [vmem:[#allocation3] sm:$0xff]
      %v1146 = vld [vmem:[#allocation3 + $0x8] sm:$0xff]
      %1149 = vrot.lane.b32.xlu0 %v1145, 7
      %v1150 = vpop.permute.xlu0 %1149
      %1151 = vrot.lane.b32.xlu0 %v1146, 7
      %v1152 = vpop.permute.xlu0 %1151
      %vm1153 = vcmask 56320
      %v1154 = vsel %vm1153, %v1150, %v1152
      %v1156 = vsel %vm1119, %v1154, 0.0
      %1157 = vst.msk [vmem:[#allocation6 + $0x20] sm:$0xff] %vm1113, %v1156
      %v1158 = vld [vmem:[#allocation3] sm:$0xff]
      %v1159 = vld [vmem:[#allocation3 + $0x8] sm:$0xff]
      %1162 = vrot.lane.b32.xlu0 %v1158, 1
      %v1163 = vpop.permute.xlu0 %1162
      %1164 = vrot.lane.b32.xlu0 %v1159, 1
      %v1165 = vpop.permute.xlu0 %1164
      %v1166 = vsel %vm512, %v1163, %v1165
      %v1168 = vsel %vm1118, %v1166, 0.0
      %1169 = vst.msk [vmem:[#allocation6 + $0x30] sm:$0xff] %vm1113, %v1168
      %v1170 = vld [vmem:[#allocation3 + $0x8] sm:$0xff]
      %1171 = vst.msk [vmem:[#allocation6 + $0x40] sm:$0xff] %vm1113, %v1170
      %v1172 = vld [vmem:[#allocation3 + $0x8] sm:$0xff]
      %1174 = vrot.lane.b32.xlu0 %v1172, 127
      %v1175 = vpop.permute.xlu0 %1174
      %v1177 = vsel %vm1119, %v1175, 0.0
      %1178 = vst.msk [vmem:[#allocation6 + $0x50] sm:$0xff] %vm1113, %v1177
      %v1179 = vld [vmem:[#allocation3 + $0x8] sm:$0xff]
      %1181 = vrot.lane.b32.xlu0 %v1179, 121
      %v1182 = vpop.permute.xlu0 %1181
      %v1184 = vsel %vm1118, %v1182, 0.0
      %1185 = vst.msk [vmem:[#allocation6 + $0x60] sm:$0xff] %vm1113, %v1184
      %v1186 = vld [vmem:[#allocation3 + $0x8] sm:$0xff]
      %1188 = vrot.lane.b32.xlu0 %v1186, 120
      %v1189 = vpop.permute.xlu0 %1188
      %1191 = vst.msk [vmem:[#allocation6 + $0x70] sm:$0xff] %vm1113, %v1189
      %v1192 = vld [vmem:[#allocation3 + $0x8] sm:$0xff]
      %1194 = vrot.lane.b32.xlu0 %v1192, 119
      %v1195 = vpop.permute.xlu0 %1194
      %v1197 = vsel %vm1119, %v1195, 0.0
      %1198 = vst.msk [vmem:[#allocation6 + $0x80] sm:$0xff] %vm1113, %v1197
      %v1199 = vld [vmem:[#allocation6] sm:$0xff]
      %v1200 = vld [vmem:[#allocation6 + $0x10] sm:$0xff]
      %v1201 = vld [vmem:[#allocation6 + $0x20] sm:$0xff]
      %v1202 = vld [vmem:[#allocation6 + $0x30] sm:$0xff]
      %v1203 = vld [vmem:[#allocation6 + $0x40] sm:$0xff]
      %v1204 = vld [vmem:[#allocation6 + $0x50] sm:$0xff]
      %v1205 = vld [vmem:[#allocation6 + $0x60] sm:$0xff]
      %v1206 = vld [vmem:[#allocation6 + $0x70] sm:$0xff]
      %v1207 = vld [vmem:[#allocation6 + $0x80] sm:$0xff]
      %v1208 = vld [vmem:[%s3] sm:$0xff]
      %1210 = vset.pattern.permute.xlu0 2
      %1211 = vperm.xlu0 %1210, %v1208
      %v1212 = vpop.permute.xlu0 %1211
      %v1215 = vsel %vm631, %v1116, 0
      %1217 = vmatprep.subr.mxu0 0.0
      %1218 = vmatpush1.msra.mxu0 %v1199
      %1219 = vmatprep.subr.mxu0 0.0
      %1220 = vmatpush1.msra.mxu0 %v1200
      %1221 = vmatprep.subr.mxu0 0.0
      %1222 = vmatpush1.msra.mxu0 %v1201
      %1223 = vmatprep.subr.mxu0 0.0
      %1224 = vmatpush1.msra.mxu0 %v1202
      %1225 = vmatprep.subr.mxu0 0.0
      %1226 = vmatpush1.msra.mxu0 %v1203
      %1227 = vmatprep.subr.mxu0 0.0
      %1228 = vmatpush1.msra.mxu0 %v1204
      %1229 = vmatprep.subr.mxu0 0.0
      %1230 = vmatpush1.msra.mxu0 %v1205
      %1231 = vmatprep.subr.mxu0 0.0
      %1232 = vmatpush1.msra.mxu0 %v1206
      %1233 = vmatprep.subr.mxu0 0.0
      %1234 = vmatpush1.msra.mxu0 %v1207
      %1235 = vmatprep.subr.mxu0 0.0
      %1236 = vmatpush1.msra.mxu0 0.0
      %1237 = vmatprep.subr.mxu0 0.0
      %1238 = vmatpush1.msra.mxu0 0.0
      %1239 = vmatprep.subr.mxu0 0.0
      %1240 = vmatpush1.msra.mxu0 0.0
      %1241 = vmatprep.subr.mxu0 0.0
      %1242 = vmatpush1.msra.mxu0 0.0
      %1243 = vmatprep.subr.mxu0 0.0
      %1244 = vmatpush1.msra.mxu0 0.0
      %1245 = vmatprep.subr.mxu0 0.0
      %1246 = vmatpush1.msra.mxu0 0.0
      %1247 = vmatprep.subr.mxu0 0.0
      %1248 = vmatpush1.msra.mxu0 0.0
      %1249 = vmatprep.subr.mxu0 0.0
      %1250 = vmatpush1.msra.mxu0 0.0
      %1251 = vmatprep.subr.mxu0 0.0
      %1252 = vmatpush1.msra.mxu0 0.0
      %1253 = vmatprep.subr.mxu0 0.0
      %1254 = vmatpush1.msra.mxu0 0.0
      %1255 = vmatprep.subr.mxu0 0.0
      %1256 = vmatpush1.msra.mxu0 0.0
      %1257 = vmatprep.subr.mxu0 0.0
      %1258 = vmatpush1.msra.mxu0 0.0
      %1259 = vmatprep.subr.mxu0 0.0
      %1260 = vmatpush1.msra.mxu0 0.0
      %1261 = vmatprep.subr.mxu0 0.0
      %1262 = vmatpush1.msra.mxu0 0.0
      %1263 = vmatprep.subr.mxu0 0.0
      %1264 = vmatpush1.msra.mxu0 0.0
      %1265 = vmatprep.subr.mxu0 0.0
      %1266 = vmatpush1.msra.mxu0 0.0
      %1267 = vmatprep.subr.mxu0 0.0
      %1268 = vmatpush1.msra.mxu0 0.0
      %1269 = vmatprep.subr.mxu0 0.0
      %1270 = vmatpush1.msra.mxu0 0.0
      %1271 = vmatprep.subr.mxu0 0.0
      %1272 = vmatpush1.msra.mxu0 0.0
      %1273 = vmatprep.subr.mxu0 0.0
      %1274 = vmatpush1.msra.mxu0 0.0
      %1275 = vmatprep.subr.mxu0 0.0
      %1276 = vmatpush1.msra.mxu0 0.0
      %1277 = vmatprep.subr.mxu0 0.0
      %1278 = vmatpush1.msra.mxu0 0.0
      %1279 = vmatprep.subr.mxu0 0.0
      %1280 = vmatpush1.msra.mxu0 0.0
      %1281 = vmatprep.mubr.f32.mxu0 0.0
      %1282 = vmatmul.mubr.f32.gmra.mrb[0].mxu0 %v1215
      %v1283 = vpop.f32.mrb[0].mxu0
      %v1284 = vadd.f32 %v1212, %v1283
      %v1285 = vpop.f32.mrb[0].mxu0
      %1286 = vdwg.mxu0
      %v1287 = vmax.f32 %v1284, 0.0
      %s1288 = scalar_lea.vmem %s1, 24
      %v1289 = vld [vmem:[%s1288] sm:$0xff]
      %1290 = vst.msk [vmem:[#allocation3 + $0x8] sm:$0xff] %vm1113, %v1287
      %v1291 = vld [vmem:[#allocation3] sm:$0xff]
      %v1292 = vld [vmem:[#allocation3 + $0x8] sm:$0xff]
      %1295 = vrot.lane.b32.xlu0 %v1291, 9
      %v1296 = vpop.permute.xlu0 %1295
      %1297 = vrot.lane.b32.xlu0 %v1292, 9
      %v1298 = vpop.permute.xlu0 %1297
      %v1299 = vsel %vm1128, %v1296, %v1298
      %v1301 = vsel %vm1118, %v1299, 0.0
      %1302 = vst.msk [vmem:[#allocation6] sm:$0xff] %vm1113, %v1301
      %v1303 = vld [vmem:[#allocation3] sm:$0xff]
      %v1304 = vld [vmem:[#allocation3 + $0x8] sm:$0xff]
      %1307 = vrot.lane.b32.xlu0 %v1303, 8
      %v1308 = vpop.permute.xlu0 %1307
      %1309 = vrot.lane.b32.xlu0 %v1304, 8
      %v1310 = vpop.permute.xlu0 %1309
      %v1311 = vsel %vm1141, %v1308, %v1310
      %1313 = vst.msk [vmem:[#allocation6 + $0x10] sm:$0xff] %vm1113, %v1311
      %v1314 = vld [vmem:[#allocation3] sm:$0xff]
      %v1315 = vld [vmem:[#allocation3 + $0x8] sm:$0xff]
      %1318 = vrot.lane.b32.xlu0 %v1314, 7
      %v1319 = vpop.permute.xlu0 %1318
      %1320 = vrot.lane.b32.xlu0 %v1315, 7
      %v1321 = vpop.permute.xlu0 %1320
      %v1322 = vsel %vm1153, %v1319, %v1321
      %v1324 = vsel %vm1119, %v1322, 0.0
      %1325 = vst.msk [vmem:[#allocation6 + $0x20] sm:$0xff] %vm1113, %v1324
      %v1326 = vld [vmem:[#allocation3] sm:$0xff]
      %v1327 = vld [vmem:[#allocation3 + $0x8] sm:$0xff]
      %1330 = vrot.lane.b32.xlu0 %v1326, 1
      %v1331 = vpop.permute.xlu0 %1330
      %1332 = vrot.lane.b32.xlu0 %v1327, 1
      %v1333 = vpop.permute.xlu0 %1332
      %v1334 = vsel %vm512, %v1331, %v1333
      %v1336 = vsel %vm1118, %v1334, 0.0
      %1337 = vst.msk [vmem:[#allocation6 + $0x30] sm:$0xff] %vm1113, %v1336
      %v1338 = vld [vmem:[#allocation3 + $0x8] sm:$0xff]
      %1339 = vst.msk [vmem:[#allocation6 + $0x40] sm:$0xff] %vm1113, %v1338
      %v1340 = vld [vmem:[#allocation3 + $0x8] sm:$0xff]
      %1342 = vrot.lane.b32.xlu0 %v1340, 127
      %v1343 = vpop.permute.xlu0 %1342
      %v1345 = vsel %vm1119, %v1343, 0.0
      %1346 = vst.msk [vmem:[#allocation6 + $0x50] sm:$0xff] %vm1113, %v1345
      %v1347 = vld [vmem:[#allocation3 + $0x8] sm:$0xff]
      %1349 = vrot.lane.b32.xlu0 %v1347, 121
      %v1350 = vpop.permute.xlu0 %1349
      %v1352 = vsel %vm1118, %v1350, 0.0
      %1353 = vst.msk [vmem:[#allocation6 + $0x60] sm:$0xff] %vm1113, %v1352
      %v1354 = vld [vmem:[#allocation3 + $0x8] sm:$0xff]
      %1356 = vrot.lane.b32.xlu0 %v1354, 120
      %v1357 = vpop.permute.xlu0 %1356
      %1359 = vst.msk [vmem:[#allocation6 + $0x70] sm:$0xff] %vm1113, %v1357
      %v1360 = vld [vmem:[#allocation3 + $0x8] sm:$0xff]
      %1362 = vrot.lane.b32.xlu0 %v1360, 119
      %v1363 = vpop.permute.xlu0 %1362
      %v1365 = vsel %vm1119, %v1363, 0.0
      %1366 = vst.msk [vmem:[#allocation6 + $0x80] sm:$0xff] %vm1113, %v1365
      %v1367 = vld [vmem:[#allocation6] sm:$0xff]
      %v1368 = vld [vmem:[#allocation6 + $0x10] sm:$0xff]
      %v1369 = vld [vmem:[#allocation6 + $0x20] sm:$0xff]
      %v1370 = vld [vmem:[#allocation6 + $0x30] sm:$0xff]
      %v1371 = vld [vmem:[#allocation6 + $0x40] sm:$0xff]
      %v1372 = vld [vmem:[#allocation6 + $0x50] sm:$0xff]
      %v1373 = vld [vmem:[#allocation6 + $0x60] sm:$0xff]
      %v1374 = vld [vmem:[#allocation6 + $0x70] sm:$0xff]
      %v1375 = vld [vmem:[#allocation6 + $0x80] sm:$0xff]
      %v1376 = vld [vmem:[%s3] sm:$0xff]
      %1378 = vset.pattern.permute.xlu0 3
      %1379 = vperm.xlu0 %1378, %v1376
      %v1380 = vpop.permute.xlu0 %1379
      %v1383 = vsel %vm631, %v1289, 0
      %1385 = vmatprep.subr.mxu0 0.0
      %1386 = vmatpush1.msra.mxu0 %v1367
      %1387 = vmatprep.subr.mxu0 0.0
      %1388 = vmatpush1.msra.mxu0 %v1368
      %1389 = vmatprep.subr.mxu0 0.0
      %1390 = vmatpush1.msra.mxu0 %v1369
      %1391 = vmatprep.subr.mxu0 0.0
      %1392 = vmatpush1.msra.mxu0 %v1370
      %1393 = vmatprep.subr.mxu0 0.0
      %1394 = vmatpush1.msra.mxu0 %v1371
      %1395 = vmatprep.subr.mxu0 0.0
      %1396 = vmatpush1.msra.mxu0 %v1372
      %1397 = vmatprep.subr.mxu0 0.0
      %1398 = vmatpush1.msra.mxu0 %v1373
      %1399 = vmatprep.subr.mxu0 0.0
      %1400 = vmatpush1.msra.mxu0 %v1374
      %1401 = vmatprep.subr.mxu0 0.0
      %1402 = vmatpush1.msra.mxu0 %v1375
      %1403 = vmatprep.subr.mxu0 0.0
      %1404 = vmatpush1.msra.mxu0 0.0
      %1405 = vmatprep.subr.mxu0 0.0
      %1406 = vmatpush1.msra.mxu0 0.0
      %1407 = vmatprep.subr.mxu0 0.0
      %1408 = vmatpush1.msra.mxu0 0.0
      %1409 = vmatprep.subr.mxu0 0.0
      %1410 = vmatpush1.msra.mxu0 0.0
      %1411 = vmatprep.subr.mxu0 0.0
      %1412 = vmatpush1.msra.mxu0 0.0
      %1413 = vmatprep.subr.mxu0 0.0
      %1414 = vmatpush1.msra.mxu0 0.0
      %1415 = vmatprep.subr.mxu0 0.0
      %1416 = vmatpush1.msra.mxu0 0.0
      %1417 = vmatprep.subr.mxu0 0.0
      %1418 = vmatpush1.msra.mxu0 0.0
      %1419 = vmatprep.subr.mxu0 0.0
      %1420 = vmatpush1.msra.mxu0 0.0
      %1421 = vmatprep.subr.mxu0 0.0
      %1422 = vmatpush1.msra.mxu0 0.0
      %1423 = vmatprep.subr.mxu0 0.0
      %1424 = vmatpush1.msra.mxu0 0.0
      %1425 = vmatprep.subr.mxu0 0.0
      %1426 = vmatpush1.msra.mxu0 0.0
      %1427 = vmatprep.subr.mxu0 0.0
      %1428 = vmatpush1.msra.mxu0 0.0
      %1429 = vmatprep.subr.mxu0 0.0
      %1430 = vmatpush1.msra.mxu0 0.0
      %1431 = vmatprep.subr.mxu0 0.0
      %1432 = vmatpush1.msra.mxu0 0.0
      %1433 = vmatprep.subr.mxu0 0.0
      %1434 = vmatpush1.msra.mxu0 0.0
      %1435 = vmatprep.subr.mxu0 0.0
      %1436 = vmatpush1.msra.mxu0 0.0
      %1437 = vmatprep.subr.mxu0 0.0
      %1438 = vmatpush1.msra.mxu0 0.0
      %1439 = vmatprep.subr.mxu0 0.0
      %1440 = vmatpush1.msra.mxu0 0.0
      %1441 = vmatprep.subr.mxu0 0.0
      %1442 = vmatpush1.msra.mxu0 0.0
      %1443 = vmatprep.subr.mxu0 0.0
      %1444 = vmatpush1.msra.mxu0 0.0
      %1445 = vmatprep.subr.mxu0 0.0
      %1446 = vmatpush1.msra.mxu0 0.0
      %1447 = vmatprep.subr.mxu0 0.0
      %1448 = vmatpush1.msra.mxu0 0.0
      %1449 = vmatprep.mubr.f32.mxu0 0.0
      %1450 = vmatmul.mubr.f32.gmra.mrb[0].mxu0 %v1383
      %v1451 = vpop.f32.mrb[0].mxu0
      %v1452 = vadd.f32 %v1380, %v1451
      %v1453 = vpop.f32.mrb[0].mxu0
      %1454 = vdwg.mxu0
      %v1455 = vmax.f32 %v1452, 0.0
      %1456 = vst.msk [vmem:[#allocation3 + $0x8] sm:$0xff] %vm1113, %v1455
      %v1457 = vld [vmem:[#allocation3 + $0x8] sm:$0xff]
      %1459 = vrot.lane.b32.xlu0 %v1457, 127
      %v1460 = vpop.permute.xlu0 %1459
      %v1462 = vmax.f32 %v1455, %v1460
      %v1463 = vmax.f32 %v1457, %v1460
      %1465 = vrot.lane.b32.xlu0 %v1463, 120
      %v1466 = vpop.permute.xlu0 %1465
      %v1468 = vmax.f32 %v1462, %v1466
      %v1469 = vld [vmem:[%s10] sm:$0xff]
      %v1470 = vld [vmem:[%s10 + $0x8] sm:$0xff]
      %v1471 = vld [vmem:[%s10 + $0x10] sm:$0xff]
      %v1472 = vld [vmem:[%s10 + $0x18] sm:$0xff]
      %v1473 = vld [vmem:[%s10 + $0x20] sm:$0xff]
      %v1474 = vld [vmem:[%s10 + $0x28] sm:$0xff]
      %v1475 = vld [vmem:[%s10 + $0x30] sm:$0xff]
      %v1476 = vld [vmem:[%s10 + $0x38] sm:$0xff]
      %v1478 = vsel %vm1113, %v1468, 0
      %1480 = vmatprep.subr.mxu0 0.0
      %1481 = vmatpush1.msra.mxu0 %v1469
      %1482 = vmatprep.subr.mxu0 0.0
      %1483 = vmatpush1.msra.mxu0 %v1470
      %1484 = vmatprep.subr.mxu0 0.0
      %1485 = vmatpush1.msra.mxu0 %v1471
      %1486 = vmatprep.subr.mxu0 0.0
      %1487 = vmatpush1.msra.mxu0 %v1472
      %1488 = vmatprep.subr.mxu0 0.0
      %1489 = vmatpush1.msra.mxu0 %v1473
      %1490 = vmatprep.subr.mxu0 0.0
      %1491 = vmatpush1.msra.mxu0 %v1474
      %1492 = vmatprep.subr.mxu0 0.0
      %1493 = vmatpush1.msra.mxu0 %v1475
      %1494 = vmatprep.subr.mxu0 0.0
      %1495 = vmatpush1.msra.mxu0 %v1476
      %1496 = vmatprep.subr.mxu0 0.0
      %1497 = vmatpush1.msra.mxu0 0.0
      %1498 = vmatprep.subr.mxu0 0.0
      %1499 = vmatpush1.msra.mxu0 0.0
      %1500 = vmatprep.subr.mxu0 0.0
      %1501 = vmatpush1.msra.mxu0 0.0
      %1502 = vmatprep.subr.mxu0 0.0
      %1503 = vmatpush1.msra.mxu0 0.0
      %1504 = vmatprep.subr.mxu0 0.0
      %1505 = vmatpush1.msra.mxu0 0.0
      %1506 = vmatprep.subr.mxu0 0.0
      %1507 = vmatpush1.msra.mxu0 0.0
      %1508 = vmatprep.subr.mxu0 0.0
      %1509 = vmatpush1.msra.mxu0 0.0
      %1510 = vmatprep.subr.mxu0 0.0
      %1511 = vmatpush1.msra.mxu0 0.0
      %1512 = vmatprep.subr.mxu0 0.0
      %1513 = vmatpush1.msra.mxu0 0.0
      %1514 = vmatprep.subr.mxu0 0.0
      %1515 = vmatpush1.msra.mxu0 0.0
      %1516 = vmatprep.subr.mxu0 0.0
      %1517 = vmatpush1.msra.mxu0 0.0
      %1518 = vmatprep.subr.mxu0 0.0
      %1519 = vmatpush1.msra.mxu0 0.0
      %1520 = vmatprep.subr.mxu0 0.0
      %1521 = vmatpush1.msra.mxu0 0.0
      %1522 = vmatprep.subr.mxu0 0.0
      %1523 = vmatpush1.msra.mxu0 0.0
      %1524 = vmatprep.subr.mxu0 0.0
      %1525 = vmatpush1.msra.mxu0 0.0
      %1526 = vmatprep.subr.mxu0 0.0
      %1527 = vmatpush1.msra.mxu0 0.0
      %1528 = vmatprep.subr.mxu0 0.0
      %1529 = vmatpush1.msra.mxu0 0.0
      %1530 = vmatprep.subr.mxu0 0.0
      %1531 = vmatpush1.msra.mxu0 0.0
      %1532 = vmatprep.subr.mxu0 0.0
      %1533 = vmatpush1.msra.mxu0 0.0
      %1534 = vmatprep.subr.mxu0 0.0
      %1535 = vmatpush1.msra.mxu0 0.0
      %1536 = vmatprep.subr.mxu0 0.0
      %1537 = vmatpush1.msra.mxu0 0.0
      %1538 = vmatprep.subr.mxu0 0.0
      %1539 = vmatpush1.msra.mxu0 0.0
      %1540 = vmatprep.subr.mxu0 0.0
      %1541 = vmatpush1.msra.mxu0 0.0
      %1542 = vmatprep.subr.mxu0 0.0
      %1543 = vmatpush1.msra.mxu0 0.0
      %1544 = vmatprep.mubr.f32.mxu0 0.0
      %1545 = vmatmul.mubr.f32.gmra.mrb[0].mxu0 %v1478
      %v1546 = vpop.f32.mrb[0].mxu0
      %v1547 = vadd.f32 0.0, %v1546
      %v1548 = vpop.f32.mrb[0].mxu0
      %1549 = vdwg.mxu0
      %1550 = vst.msk [vmem:[#allocation4 + $0x8] sm:$0xff] %vm472, %v1547
      %s1551 = scalar_lea.vmem %s1, 32
      %v1552 = vld [vmem:[%s1551] sm:$0xff]
      %v1553 = vand.u32 %v432, 3
      %vm1554 = vcmp.ne.s32.totalorder %v1553, 0
      %vm1555 = vcmp.ne.s32.totalorder %v1553, 3
      %v1556 = vld [vmem:[#allocation4] sm:$0xff]
      %v1557 = vld [vmem:[#allocation4 + $0x8] sm:$0xff]
      %1560 = vrot.lane.b32.xlu0 %v1556, 5
      %v1561 = vpop.permute.xlu0 %1560
      %1562 = vrot.lane.b32.xlu0 %v1557, 5
      %v1563 = vpop.permute.xlu0 %1562
      %vm1564 = vcmask 39936
      %v1565 = vsel %vm1564, %v1561, %v1563
      %v1567 = vsel %vm1554, %v1565, 0.0
      %1568 = vst.msk [vmem:[#allocation6] sm:$0xff] %vm472, %v1567
      %v1569 = vld [vmem:[#allocation4] sm:$0xff]
      %v1570 = vld [vmem:[#allocation4 + $0x8] sm:$0xff]
      %1573 = vrot.lane.b32.xlu0 %v1569, 4
      %v1574 = vpop.permute.xlu0 %1573
      %1575 = vrot.lane.b32.xlu0 %v1570, 4
      %v1576 = vpop.permute.xlu0 %1575
      %vm1577 = vcmask 31744
      %v1578 = vsel %vm1577, %v1574, %v1576
      %1580 = vst.msk [vmem:[#allocation6 + $0x10] sm:$0xff] %vm472, %v1578
      %v1581 = vld [vmem:[#allocation4] sm:$0xff]
      %v1582 = vld [vmem:[#allocation4 + $0x8] sm:$0xff]
      %1585 = vrot.lane.b32.xlu0 %v1581, 3
      %v1586 = vpop.permute.xlu0 %1585
      %1587 = vrot.lane.b32.xlu0 %v1582, 3
      %v1588 = vpop.permute.xlu0 %1587
      %vm1589 = vcmask 23552
      %v1590 = vsel %vm1589, %v1586, %v1588
      %v1592 = vsel %vm1555, %v1590, 0.0
      %1593 = vst.msk [vmem:[#allocation6 + $0x20] sm:$0xff] %vm472, %v1592
      %v1594 = vld [vmem:[#allocation4] sm:$0xff]
      %v1595 = vld [vmem:[#allocation4 + $0x8] sm:$0xff]
      %1598 = vrot.lane.b32.xlu0 %v1594, 1
      %v1599 = vpop.permute.xlu0 %1598
      %1600 = vrot.lane.b32.xlu0 %v1595, 1
      %v1601 = vpop.permute.xlu0 %1600
      %v1602 = vsel %vm512, %v1599, %v1601
      %v1604 = vsel %vm1554, %v1602, 0.0
      %1605 = vst.msk [vmem:[#allocation6 + $0x30] sm:$0xff] %vm472, %v1604
      %v1606 = vld [vmem:[#allocation4 + $0x8] sm:$0xff]
      %1607 = vst.msk [vmem:[#allocation6 + $0x40] sm:$0xff] %vm472, %v1606
      %v1608 = vld [vmem:[#allocation4 + $0x8] sm:$0xff]
      %1610 = vrot.lane.b32.xlu0 %v1608, 127
      %v1611 = vpop.permute.xlu0 %1610
      %v1613 = vsel %vm1555, %v1611, 0.0
      %1614 = vst.msk [vmem:[#allocation6 + $0x50] sm:$0xff] %vm472, %v1613
      %v1615 = vld [vmem:[#allocation4 + $0x8] sm:$0xff]
      %1617 = vrot.lane.b32.xlu0 %v1615, 125
      %v1618 = vpop.permute.xlu0 %1617
      %v1620 = vsel %vm1554, %v1618, 0.0
      %1621 = vst.msk [vmem:[#allocation6 + $0x60] sm:$0xff] %vm472, %v1620
      %v1622 = vld [vmem:[#allocation4 + $0x8] sm:$0xff]
      %1624 = vrot.lane.b32.xlu0 %v1622, 124
      %v1625 = vpop.permute.xlu0 %1624
      %1627 = vst.msk [vmem:[#allocation6 + $0x70] sm:$0xff] %vm472, %v1625
      %v1628 = vld [vmem:[#allocation4 + $0x8] sm:$0xff]
      %1630 = vrot.lane.b32.xlu0 %v1628, 123
      %v1631 = vpop.permute.xlu0 %1630
      %v1633 = vsel %vm1555, %v1631, 0.0
      %1634 = vst.msk [vmem:[#allocation6 + $0x80] sm:$0xff] %vm472, %v1633
      %v1635 = vld [vmem:[#allocation6] sm:$0xff]
      %v1636 = vld [vmem:[#allocation6 + $0x10] sm:$0xff]
      %v1637 = vld [vmem:[#allocation6 + $0x20] sm:$0xff]
      %v1638 = vld [vmem:[#allocation6 + $0x30] sm:$0xff]
      %v1639 = vld [vmem:[#allocation6 + $0x40] sm:$0xff]
      %v1640 = vld [vmem:[#allocation6 + $0x50] sm:$0xff]
      %v1641 = vld [vmem:[#allocation6 + $0x60] sm:$0xff]
      %v1642 = vld [vmem:[#allocation6 + $0x70] sm:$0xff]
      %v1643 = vld [vmem:[#allocation6 + $0x80] sm:$0xff]
      %v1644 = vld [vmem:[%s3] sm:$0xff]
      %1646 = vset.pattern.permute.xlu0 4
      %1647 = vperm.xlu0 %1646, %v1644
      %v1648 = vpop.permute.xlu0 %1647
      %v1651 = vsel %vm631, %v1552, 0
      %1653 = vmatprep.subr.mxu0 0.0
      %1654 = vmatpush1.msra.mxu0 %v1635
      %1655 = vmatprep.subr.mxu0 0.0
      %1656 = vmatpush1.msra.mxu0 %v1636
      %1657 = vmatprep.subr.mxu0 0.0
      %1658 = vmatpush1.msra.mxu0 %v1637
      %1659 = vmatprep.subr.mxu0 0.0
      %1660 = vmatpush1.msra.mxu0 %v1638
      %1661 = vmatprep.subr.mxu0 0.0
      %1662 = vmatpush1.msra.mxu0 %v1639
      %1663 = vmatprep.subr.mxu0 0.0
      %1664 = vmatpush1.msra.mxu0 %v1640
      %1665 = vmatprep.subr.mxu0 0.0
      %1666 = vmatpush1.msra.mxu0 %v1641
      %1667 = vmatprep.subr.mxu0 0.0
      %1668 = vmatpush1.msra.mxu0 %v1642
      %1669 = vmatprep.subr.mxu0 0.0
      %1670 = vmatpush1.msra.mxu0 %v1643
      %1671 = vmatprep.subr.mxu0 0.0
      %1672 = vmatpush1.msra.mxu0 0.0
      %1673 = vmatprep.subr.mxu0 0.0
      %1674 = vmatpush1.msra.mxu0 0.0
      %1675 = vmatprep.subr.mxu0 0.0
      %1676 = vmatpush1.msra.mxu0 0.0
      %1677 = vmatprep.subr.mxu0 0.0
      %1678 = vmatpush1.msra.mxu0 0.0
      %1679 = vmatprep.subr.mxu0 0.0
      %1680 = vmatpush1.msra.mxu0 0.0
      %1681 = vmatprep.subr.mxu0 0.0
      %1682 = vmatpush1.msra.mxu0 0.0
      %1683 = vmatprep.subr.mxu0 0.0
      %1684 = vmatpush1.msra.mxu0 0.0
      %1685 = vmatprep.subr.mxu0 0.0
      %1686 = vmatpush1.msra.mxu0 0.0
      %1687 = vmatprep.subr.mxu0 0.0
      %1688 = vmatpush1.msra.mxu0 0.0
      %1689 = vmatprep.subr.mxu0 0.0
      %1690 = vmatpush1.msra.mxu0 0.0
      %1691 = vmatprep.subr.mxu0 0.0
      %1692 = vmatpush1.msra.mxu0 0.0
      %1693 = vmatprep.subr.mxu0 0.0
      %1694 = vmatpush1.msra.mxu0 0.0
      %1695 = vmatprep.subr.mxu0 0.0
      %1696 = vmatpush1.msra.mxu0 0.0
      %1697 = vmatprep.subr.mxu0 0.0
      %1698 = vmatpush1.msra.mxu0 0.0
      %1699 = vmatprep.subr.mxu0 0.0
      %1700 = vmatpush1.msra.mxu0 0.0
      %1701 = vmatprep.subr.mxu0 0.0
      %1702 = vmatpush1.msra.mxu0 0.0
      %1703 = vmatprep.subr.mxu0 0.0
      %1704 = vmatpush1.msra.mxu0 0.0
      %1705 = vmatprep.subr.mxu0 0.0
      %1706 = vmatpush1.msra.mxu0 0.0
      %1707 = vmatprep.subr.mxu0 0.0
      %1708 = vmatpush1.msra.mxu0 0.0
      %1709 = vmatprep.subr.mxu0 0.0
      %1710 = vmatpush1.msra.mxu0 0.0
      %1711 = vmatprep.subr.mxu0 0.0
      %1712 = vmatpush1.msra.mxu0 0.0
      %1713 = vmatprep.subr.mxu0 0.0
      %1714 = vmatpush1.msra.mxu0 0.0
      %1715 = vmatprep.subr.mxu0 0.0
      %1716 = vmatpush1.msra.mxu0 0.0
      %1717 = vmatprep.mubr.f32.mxu0 0.0
      %1718 = vmatmul.mubr.f32.gmra.mrb[0].mxu0 %v1651
      %v1719 = vpop.f32.mrb[0].mxu0
      %v1720 = vadd.f32 %v1648, %v1719
      %v1721 = vpop.f32.mrb[0].mxu0
      %1722 = vdwg.mxu0
      %v1723 = vmax.f32 %v1720, 0.0
      %s1724 = scalar_lea.vmem %s1, 40
      %v1725 = vld [vmem:[%s1724] sm:$0xff]
      %1726 = vst.msk [vmem:[#allocation4 + $0x8] sm:$0xff] %vm472, %v1723
      %v1727 = vld [vmem:[#allocation4] sm:$0xff]
      %v1728 = vld [vmem:[#allocation4 + $0x8] sm:$0xff]
      %1731 = vrot.lane.b32.xlu0 %v1727, 5
      %v1732 = vpop.permute.xlu0 %1731
      %1733 = vrot.lane.b32.xlu0 %v1728, 5
      %v1734 = vpop.permute.xlu0 %1733
      %v1735 = vsel %vm1564, %v1732, %v1734
      %v1737 = vsel %vm1554, %v1735, 0.0
      %1738 = vst.msk [vmem:[#allocation6] sm:$0xff] %vm472, %v1737
      %v1739 = vld [vmem:[#allocation4] sm:$0xff]
      %v1740 = vld [vmem:[#allocation4 + $0x8] sm:$0xff]
      %1743 = vrot.lane.b32.xlu0 %v1739, 4
      %v1744 = vpop.permute.xlu0 %1743
      %1745 = vrot.lane.b32.xlu0 %v1740, 4
      %v1746 = vpop.permute.xlu0 %1745
      %v1747 = vsel %vm1577, %v1744, %v1746
      %1749 = vst.msk [vmem:[#allocation6 + $0x10] sm:$0xff] %vm472, %v1747
      %v1750 = vld [vmem:[#allocation4] sm:$0xff]
      %v1751 = vld [vmem:[#allocation4 + $0x8] sm:$0xff]
      %1754 = vrot.lane.b32.xlu0 %v1750, 3
      %v1755 = vpop.permute.xlu0 %1754
      %1756 = vrot.lane.b32.xlu0 %v1751, 3
      %v1757 = vpop.permute.xlu0 %1756
      %v1758 = vsel %vm1589, %v1755, %v1757
      %v1760 = vsel %vm1555, %v1758, 0.0
      %1761 = vst.msk [vmem:[#allocation6 + $0x20] sm:$0xff] %vm472, %v1760
      %v1762 = vld [vmem:[#allocation4] sm:$0xff]
      %v1763 = vld [vmem:[#allocation4 + $0x8] sm:$0xff]
      %1766 = vrot.lane.b32.xlu0 %v1762, 1
      %v1767 = vpop.permute.xlu0 %1766
      %1768 = vrot.lane.b32.xlu0 %v1763, 1
      %v1769 = vpop.permute.xlu0 %1768
      %v1770 = vsel %vm512, %v1767, %v1769
      %v1772 = vsel %vm1554, %v1770, 0.0
      %1773 = vst.msk [vmem:[#allocation6 + $0x30] sm:$0xff] %vm472, %v1772
      %v1774 = vld [vmem:[#allocation4 + $0x8] sm:$0xff]
      %1775 = vst.msk [vmem:[#allocation6 + $0x40] sm:$0xff] %vm472, %v1774
      %v1776 = vld [vmem:[#allocation4 + $0x8] sm:$0xff]
      %1778 = vrot.lane.b32.xlu0 %v1776, 127
      %v1779 = vpop.permute.xlu0 %1778
      %v1781 = vsel %vm1555, %v1779, 0.0
      %1782 = vst.msk [vmem:[#allocation6 + $0x50] sm:$0xff] %vm472, %v1781
      %v1783 = vld [vmem:[#allocation4 + $0x8] sm:$0xff]
      %1785 = vrot.lane.b32.xlu0 %v1783, 125
      %v1786 = vpop.permute.xlu0 %1785
      %v1788 = vsel %vm1554, %v1786, 0.0
      %1789 = vst.msk [vmem:[#allocation6 + $0x60] sm:$0xff] %vm472, %v1788
      %v1790 = vld [vmem:[#allocation4 + $0x8] sm:$0xff]
      %1792 = vrot.lane.b32.xlu0 %v1790, 124
      %v1793 = vpop.permute.xlu0 %1792
      %1795 = vst.msk [vmem:[#allocation6 + $0x70] sm:$0xff] %vm472, %v1793
      %v1796 = vld [vmem:[#allocation4 + $0x8] sm:$0xff]
      %1798 = vrot.lane.b32.xlu0 %v1796, 123
      %v1799 = vpop.permute.xlu0 %1798
      %v1801 = vsel %vm1555, %v1799, 0.0
      %1802 = vst.msk [vmem:[#allocation6 + $0x80] sm:$0xff] %vm472, %v1801
      %v1803 = vld [vmem:[#allocation6] sm:$0xff]
      %v1804 = vld [vmem:[#allocation6 + $0x10] sm:$0xff]
      %v1805 = vld [vmem:[#allocation6 + $0x20] sm:$0xff]
      %v1806 = vld [vmem:[#allocation6 + $0x30] sm:$0xff]
      %v1807 = vld [vmem:[#allocation6 + $0x40] sm:$0xff]
      %v1808 = vld [vmem:[#allocation6 + $0x50] sm:$0xff]
      %v1809 = vld [vmem:[#allocation6 + $0x60] sm:$0xff]
      %v1810 = vld [vmem:[#allocation6 + $0x70] sm:$0xff]
      %v1811 = vld [vmem:[#allocation6 + $0x80] sm:$0xff]
      %v1812 = vld [vmem:[%s3] sm:$0xff]
      %1814 = vset.pattern.permute.xlu0 5
      %1815 = vperm.xlu0 %1814, %v1812
      %v1816 = vpop.permute.xlu0 %1815
      %v1819 = vsel %vm631, %v1725, 0
      %1821 = vmatprep.subr.mxu0 0.0
      %1822 = vmatpush1.msra.mxu0 %v1803
      %1823 = vmatprep.subr.mxu0 0.0
      %1824 = vmatpush1.msra.mxu0 %v1804
      %1825 = vmatprep.subr.mxu0 0.0
      %1826 = vmatpush1.msra.mxu0 %v1805
      %1827 = vmatprep.subr.mxu0 0.0
      %1828 = vmatpush1.msra.mxu0 %v1806
      %1829 = vmatprep.subr.mxu0 0.0
      %1830 = vmatpush1.msra.mxu0 %v1807
      %1831 = vmatprep.subr.mxu0 0.0
      %1832 = vmatpush1.msra.mxu0 %v1808
      %1833 = vmatprep.subr.mxu0 0.0
      %1834 = vmatpush1.msra.mxu0 %v1809
      %1835 = vmatprep.subr.mxu0 0.0
      %1836 = vmatpush1.msra.mxu0 %v1810
      %1837 = vmatprep.subr.mxu0 0.0
      %1838 = vmatpush1.msra.mxu0 %v1811
      %1839 = vmatprep.subr.mxu0 0.0
      %1840 = vmatpush1.msra.mxu0 0.0
      %1841 = vmatprep.subr.mxu0 0.0
      %1842 = vmatpush1.msra.mxu0 0.0
      %1843 = vmatprep.subr.mxu0 0.0
      %1844 = vmatpush1.msra.mxu0 0.0
      %1845 = vmatprep.subr.mxu0 0.0
      %1846 = vmatpush1.msra.mxu0 0.0
      %1847 = vmatprep.subr.mxu0 0.0
      %1848 = vmatpush1.msra.mxu0 0.0
      %1849 = vmatprep.subr.mxu0 0.0
      %1850 = vmatpush1.msra.mxu0 0.0
      %1851 = vmatprep.subr.mxu0 0.0
      %1852 = vmatpush1.msra.mxu0 0.0
      %1853 = vmatprep.subr.mxu0 0.0
      %1854 = vmatpush1.msra.mxu0 0.0
      %1855 = vmatprep.subr.mxu0 0.0
      %1856 = vmatpush1.msra.mxu0 0.0
      %1857 = vmatprep.subr.mxu0 0.0
      %1858 = vmatpush1.msra.mxu0 0.0
      %1859 = vmatprep.subr.mxu0 0.0
      %1860 = vmatpush1.msra.mxu0 0.0
      %1861 = vmatprep.subr.mxu0 0.0
      %1862 = vmatpush1.msra.mxu0 0.0
      %1863 = vmatprep.subr.mxu0 0.0
      %1864 = vmatpush1.msra.mxu0 0.0
      %1865 = vmatprep.subr.mxu0 0.0
      %1866 = vmatpush1.msra.mxu0 0.0
      %1867 = vmatprep.subr.mxu0 0.0
      %1868 = vmatpush1.msra.mxu0 0.0
      %1869 = vmatprep.subr.mxu0 0.0
      %1870 = vmatpush1.msra.mxu0 0.0
      %1871 = vmatprep.subr.mxu0 0.0
      %1872 = vmatpush1.msra.mxu0 0.0
      %1873 = vmatprep.subr.mxu0 0.0
      %1874 = vmatpush1.msra.mxu0 0.0
      %1875 = vmatprep.subr.mxu0 0.0
      %1876 = vmatpush1.msra.mxu0 0.0
      %1877 = vmatprep.subr.mxu0 0.0
      %1878 = vmatpush1.msra.mxu0 0.0
      %1879 = vmatprep.subr.mxu0 0.0
      %1880 = vmatpush1.msra.mxu0 0.0
      %1881 = vmatprep.subr.mxu0 0.0
      %1882 = vmatpush1.msra.mxu0 0.0
      %1883 = vmatprep.subr.mxu0 0.0
      %1884 = vmatpush1.msra.mxu0 0.0
      %1885 = vmatprep.mubr.f32.mxu0 0.0
      %1886 = vmatmul.mubr.f32.gmra.mrb[0].mxu0 %v1819
      %v1887 = vpop.f32.mrb[0].mxu0
      %v1888 = vadd.f32 %v1816, %v1887
      %v1889 = vpop.f32.mrb[0].mxu0
      %1890 = vdwg.mxu0
      %v1891 = vmax.f32 %v1888, 0.0
      %1892 = vst.msk [vmem:[#allocation4 + $0x8] sm:$0xff] %vm472, %v1891
      %v1893 = vld [vmem:[#allocation4 + $0x8] sm:$0xff]
      %1895 = vrot.lane.b32.xlu0 %v1893, 127
      %v1896 = vpop.permute.xlu0 %1895
      %v1898 = vmax.f32 %v1891, %v1896
      %v1899 = vmax.f32 %v1893, %v1896
      %1901 = vrot.lane.b32.xlu0 %v1899, 124
      %v1902 = vpop.permute.xlu0 %1901
      %v1904 = vmax.f32 %v1898, %v1902
      %v1905 = vld [vmem:[%s11] sm:$0xff]
      %v1906 = vld [vmem:[%s11 + $0x8] sm:$0xff]
      %v1908 = vsel %vm472, %v1904, 0
      %1910 = vmatprep.subr.mxu0 0.0
      %1911 = vmatpush1.msra.mxu0 %v1905
      %1912 = vmatprep.subr.mxu0 0.0
      %1913 = vmatpush1.msra.mxu0 %v1906
      %1914 = vmatprep.subr.mxu0 0.0
      %1915 = vmatpush1.msra.mxu0 0.0
      %1916 = vmatprep.subr.mxu0 0.0
      %1917 = vmatpush1.msra.mxu0 0.0
      %1918 = vmatprep.subr.mxu0 0.0
      %1919 = vmatpush1.msra.mxu0 0.0
      %1920 = vmatprep.subr.mxu0 0.0
      %1921 = vmatpush1.msra.mxu0 0.0
      %1922 = vmatprep.subr.mxu0 0.0
      %1923 = vmatpush1.msra.mxu0 0.0
      %1924 = vmatprep.subr.mxu0 0.0
      %1925 = vmatpush1.msra.mxu0 0.0
      %1926 = vmatprep.subr.mxu0 0.0
      %1927 = vmatpush1.msra.mxu0 0.0
      %1928 = vmatprep.subr.mxu0 0.0
      %1929 = vmatpush1.msra.mxu0 0.0
      %1930 = vmatprep.subr.mxu0 0.0
      %1931 = vmatpush1.msra.mxu0 0.0
      %1932 = vmatprep.subr.mxu0 0.0
      %1933 = vmatpush1.msra.mxu0 0.0
      %1934 = vmatprep.subr.mxu0 0.0
      %1935 = vmatpush1.msra.mxu0 0.0
      %1936 = vmatprep.subr.mxu0 0.0
      %1937 = vmatpush1.msra.mxu0 0.0
      %1938 = vmatprep.subr.mxu0 0.0
      %1939 = vmatpush1.msra.mxu0 0.0
      %1940 = vmatprep.subr.mxu0 0.0
      %1941 = vmatpush1.msra.mxu0 0.0
      %1942 = vmatprep.subr.mxu0 0.0
      %1943 = vmatpush1.msra.mxu0 0.0
      %1944 = vmatprep.subr.mxu0 0.0
      %1945 = vmatpush1.msra.mxu0 0.0
      %1946 = vmatprep.subr.mxu0 0.0
      %1947 = vmatpush1.msra.mxu0 0.0
      %1948 = vmatprep.subr.mxu0 0.0
      %1949 = vmatpush1.msra.mxu0 0.0
      %1950 = vmatprep.subr.mxu0 0.0
      %1951 = vmatpush1.msra.mxu0 0.0
      %1952 = vmatprep.subr.mxu0 0.0
      %1953 = vmatpush1.msra.mxu0 0.0
      %1954 = vmatprep.subr.mxu0 0.0
      %1955 = vmatpush1.msra.mxu0 0.0
      %1956 = vmatprep.subr.mxu0 0.0
      %1957 = vmatpush1.msra.mxu0 0.0
      %1958 = vmatprep.subr.mxu0 0.0
      %1959 = vmatpush1.msra.mxu0 0.0
      %1960 = vmatprep.subr.mxu0 0.0
      %1961 = vmatpush1.msra.mxu0 0.0
      %1962 = vmatprep.subr.mxu0 0.0
      %1963 = vmatpush1.msra.mxu0 0.0
      %1964 = vmatprep.subr.mxu0 0.0
      %1965 = vmatpush1.msra.mxu0 0.0
      %1966 = vmatprep.subr.mxu0 0.0
      %1967 = vmatpush1.msra.mxu0 0.0
      %1968 = vmatprep.subr.mxu0 0.0
      %1969 = vmatpush1.msra.mxu0 0.0
      %1970 = vmatprep.subr.mxu0 0.0
      %1971 = vmatpush1.msra.mxu0 0.0
      %1972 = vmatprep.subr.mxu0 0.0
      %1973 = vmatpush1.msra.mxu0 0.0
      %1974 = vmatprep.mubr.f32.mxu0 0.0
      %1975 = vmatmul.mubr.f32.gmra.mrb[0].mxu0 %v1908
      %v1976 = vpop.f32.mrb[0].mxu0
      %v1977 = vadd.f32 0.0, %v1976
      %v1978 = vpop.f32.mrb[0].mxu0
      %1979 = vdwg.mxu0
      %1980 = vst.msk [vmem:[#allocation5 + $0x8] sm:$0xff] %vm1577, %v1977
      %s1981 = scalar_lea.vmem %s1, 48
      %v1982 = vld [vmem:[%s1981] sm:$0xff]
      %v1983 = vand.u32 %v432, 1
      %vm1984 = vcmp.ne.s32.totalorder %v1983, 0
      %vm1985 = vcmp.ne.s32.totalorder %v1983, 1
      %v1986 = vld [vmem:[#allocation5] sm:$0xff]
      %v1987 = vld [vmem:[#allocation5 + $0x8] sm:$0xff]
      %1990 = vrot.lane.b32.xlu0 %v1986, 3
      %v1991 = vpop.permute.xlu0 %1990
      %1992 = vrot.lane.b32.xlu0 %v1987, 3
      %v1993 = vpop.permute.xlu0 %1992
      %v1994 = vsel %vm1589, %v1991, %v1993
      %v1996 = vsel %vm1984, %v1994, 0.0
      %1997 = vst.msk [vmem:[#allocation6] sm:$0xff] %vm1577, %v1996
      %v1998 = vld [vmem:[#allocation5] sm:$0xff]
      %v1999 = vld [vmem:[#allocation5 + $0x8] sm:$0xff]
      %2002 = vrot.lane.b32.xlu0 %v1998, 2
      %v2003 = vpop.permute.xlu0 %2002
      %2004 = vrot.lane.b32.xlu0 %v1999, 2
      %v2005 = vpop.permute.xlu0 %2004
      %vm2006 = vcmask 15360
      %v2007 = vsel %vm2006, %v2003, %v2005
      %2009 = vst.msk [vmem:[#allocation6 + $0x10] sm:$0xff] %vm1577, %v2007
      %v2010 = vld [vmem:[#allocation5] sm:$0xff]
      %v2011 = vld [vmem:[#allocation5 + $0x8] sm:$0xff]
      %2014 = vrot.lane.b32.xlu0 %v2010, 1
      %v2015 = vpop.permute.xlu0 %2014
      %2016 = vrot.lane.b32.xlu0 %v2011, 1
      %v2017 = vpop.permute.xlu0 %2016
      %v2018 = vsel %vm512, %v2015, %v2017
      %v2020 = vsel %vm1985, %v2018, 0.0
      %2021 = vst.msk [vmem:[#allocation6 + $0x20] sm:$0xff] %vm1577, %v2020
      %v2022 = vld [vmem:[#allocation5] sm:$0xff]
      %v2023 = vld [vmem:[#allocation5 + $0x8] sm:$0xff]
      %2026 = vrot.lane.b32.xlu0 %v2022, 1
      %v2027 = vpop.permute.xlu0 %2026
      %2028 = vrot.lane.b32.xlu0 %v2023, 1
      %v2029 = vpop.permute.xlu0 %2028
      %v2030 = vsel %vm512, %v2027, %v2029
      %v2032 = vsel %vm1984, %v2030, 0.0
      %2033 = vst.msk [vmem:[#allocation6 + $0x30] sm:$0xff] %vm1577, %v2032
      %v2034 = vld [vmem:[#allocation5 + $0x8] sm:$0xff]
      %2035 = vst.msk [vmem:[#allocation6 + $0x40] sm:$0xff] %vm1577, %v2034
      %v2036 = vld [vmem:[#allocation5 + $0x8] sm:$0xff]
      %2038 = vrot.lane.b32.xlu0 %v2036, 127
      %v2039 = vpop.permute.xlu0 %2038
      %v2041 = vsel %vm1985, %v2039, 0.0
      %2042 = vst.msk [vmem:[#allocation6 + $0x50] sm:$0xff] %vm1577, %v2041
      %v2043 = vld [vmem:[#allocation5 + $0x8] sm:$0xff]
      %2045 = vrot.lane.b32.xlu0 %v2043, 127
      %v2046 = vpop.permute.xlu0 %2045
      %v2048 = vsel %vm1984, %v2046, 0.0
      %2049 = vst.msk [vmem:[#allocation6 + $0x60] sm:$0xff] %vm1577, %v2048
      %v2050 = vld [vmem:[#allocation5 + $0x8] sm:$0xff]
      %2052 = vrot.lane.b32.xlu0 %v2050, 126
      %v2053 = vpop.permute.xlu0 %2052
      %2055 = vst.msk [vmem:[#allocation6 + $0x70] sm:$0xff] %vm1577, %v2053
      %v2056 = vld [vmem:[#allocation5 + $0x8] sm:$0xff]
      %2058 = vrot.lane.b32.xlu0 %v2056, 125
      %v2059 = vpop.permute.xlu0 %2058
      %v2061 = vsel %vm1985, %v2059, 0.0
      %2062 = vst.msk [vmem:[#allocation6 + $0x80] sm:$0xff] %vm1577, %v2061
      %v2063 = vld [vmem:[#allocation6] sm:$0xff]
      %v2064 = vld [vmem:[#allocation6 + $0x10] sm:$0xff]
      %v2065 = vld [vmem:[#allocation6 + $0x20] sm:$0xff]
      %v2066 = vld [vmem:[#allocation6 + $0x30] sm:$0xff]
      %v2067 = vld [vmem:[#allocation6 + $0x40] sm:$0xff]
      %v2068 = vld [vmem:[#allocation6 + $0x50] sm:$0xff]
      %v2069 = vld [vmem:[#allocation6 + $0x60] sm:$0xff]
      %v2070 = vld [vmem:[#allocation6 + $0x70] sm:$0xff]
      %v2071 = vld [vmem:[#allocation6 + $0x80] sm:$0xff]
      %v2072 = vld [vmem:[%s3] sm:$0xff]
      %2074 = vset.pattern.permute.xlu0 6
      %2075 = vperm.xlu0 %2074, %v2072
      %v2076 = vpop.permute.xlu0 %2075
      %v2079 = vsel %vm631, %v1982, 0
      %2081 = vmatprep.subr.mxu0 0.0
      %2082 = vmatpush1.msra.mxu0 %v2063
      %2083 = vmatprep.subr.mxu0 0.0
      %2084 = vmatpush1.msra.mxu0 %v2064
      %2085 = vmatprep.subr.mxu0 0.0
      %2086 = vmatpush1.msra.mxu0 %v2065
      %2087 = vmatprep.subr.mxu0 0.0
      %2088 = vmatpush1.msra.mxu0 %v2066
      %2089 = vmatprep.subr.mxu0 0.0
      %2090 = vmatpush1.msra.mxu0 %v2067
      %2091 = vmatprep.subr.mxu0 0.0
      %2092 = vmatpush1.msra.mxu0 %v2068
      %2093 = vmatprep.subr.mxu0 0.0
      %2094 = vmatpush1.msra.mxu0 %v2069
      %2095 = vmatprep.subr.mxu0 0.0
      %2096 = vmatpush1.msra.mxu0 %v2070
      %2097 = vmatprep.subr.mxu0 0.0
      %2098 = vmatpush1.msra.mxu0 %v2071
      %2099 = vmatprep.subr.mxu0 0.0
      %2100 = vmatpush1.msra.mxu0 0.0
      %2101 = vmatprep.subr.mxu0 0.0
      %2102 = vmatpush1.msra.mxu0 0.0
      %2103 = vmatprep.subr.mxu0 0.0
      %2104 = vmatpush1.msra.mxu0 0.0
      %2105 = vmatprep.subr.mxu0 0.0
      %2106 = vmatpush1.msra.mxu0 0.0
      %2107 = vmatprep.subr.mxu0 0.0
      %2108 = vmatpush1.msra.mxu0 0.0
      %2109 = vmatprep.subr.mxu0 0.0
      %2110 = vmatpush1.msra.mxu0 0.0
      %2111 = vmatprep.subr.mxu0 0.0
      %2112 = vmatpush1.msra.mxu0 0.0
      %2113 = vmatprep.subr.mxu0 0.0
      %2114 = vmatpush1.msra.mxu0 0.0
      %2115 = vmatprep.subr.mxu0 0.0
      %2116 = vmatpush1.msra.mxu0 0.0
      %2117 = vmatprep.subr.mxu0 0.0
      %2118 = vmatpush1.msra.mxu0 0.0
      %2119 = vmatprep.subr.mxu0 0.0
      %2120 = vmatpush1.msra.mxu0 0.0
      %2121 = vmatprep.subr.mxu0 0.0
      %2122 = vmatpush1.msra.mxu0 0.0
      %2123 = vmatprep.subr.mxu0 0.0
      %2124 = vmatpush1.msra.mxu0 0.0
      %2125 = vmatprep.subr.mxu0 0.0
      %2126 = vmatpush1.msra.mxu0 0.0
      %2127 = vmatprep.subr.mxu0 0.0
      %2128 = vmatpush1.msra.mxu0 0.0
      %2129 = vmatprep.subr.mxu0 0.0
      %2130 = vmatpush1.msra.mxu0 0.0
      %2131 = vmatprep.subr.mxu0 0.0
      %2132 = vmatpush1.msra.mxu0 0.0
      %2133 = vmatprep.subr.mxu0 0.0
      %2134 = vmatpush1.msra.mxu0 0.0
      %2135 = vmatprep.subr.mxu0 0.0
      %2136 = vmatpush1.msra.mxu0 0.0
      %2137 = vmatprep.subr.mxu0 0.0
      %2138 = vmatpush1.msra.mxu0 0.0
      %2139 = vmatprep.subr.mxu0 0.0
      %2140 = vmatpush1.msra.mxu0 0.0
      %2141 = vmatprep.subr.mxu0 0.0
      %2142 = vmatpush1.msra.mxu0 0.0
      %2143 = vmatprep.subr.mxu0 0.0
      %2144 = vmatpush1.msra.mxu0 0.0
      %2145 = vmatprep.mubr.f32.mxu0 0.0
      %2146 = vmatmul.mubr.f32.gmra.mrb[0].mxu0 %v2079
      %v2147 = vpop.f32.mrb[0].mxu0
      %v2148 = vadd.f32 %v2076, %v2147
      %v2149 = vpop.f32.mrb[0].mxu0
      %2150 = vdwg.mxu0
      %v2151 = vmax.f32 %v2148, 0.0
      %s2152 = scalar_lea.vmem %s1, 56
      %v2153 = vld [vmem:[%s2152] sm:$0xff]
      %2154 = vst.msk [vmem:[#allocation5 + $0x8] sm:$0xff] %vm1577, %v2151
      %v2155 = vld [vmem:[#allocation5] sm:$0xff]
      %v2156 = vld [vmem:[#allocation5 + $0x8] sm:$0xff]
      %2159 = vrot.lane.b32.xlu0 %v2155, 3
      %v2160 = vpop.permute.xlu0 %2159
      %2161 = vrot.lane.b32.xlu0 %v2156, 3
      %v2162 = vpop.permute.xlu0 %2161
      %v2163 = vsel %vm1589, %v2160, %v2162
      %v2165 = vsel %vm1984, %v2163, 0.0
      %2166 = vst.msk [vmem:[#allocation6] sm:$0xff] %vm1577, %v2165
      %v2167 = vld [vmem:[#allocation5] sm:$0xff]
      %v2168 = vld [vmem:[#allocation5 + $0x8] sm:$0xff]
      %2171 = vrot.lane.b32.xlu0 %v2167, 2
      %v2172 = vpop.permute.xlu0 %2171
      %2173 = vrot.lane.b32.xlu0 %v2168, 2
      %v2174 = vpop.permute.xlu0 %2173
      %v2175 = vsel %vm2006, %v2172, %v2174
      %2177 = vst.msk [vmem:[#allocation6 + $0x10] sm:$0xff] %vm1577, %v2175
      %v2178 = vld [vmem:[#allocation5] sm:$0xff]
      %v2179 = vld [vmem:[#allocation5 + $0x8] sm:$0xff]
      %2182 = vrot.lane.b32.xlu0 %v2178, 1
      %v2183 = vpop.permute.xlu0 %2182
      %2184 = vrot.lane.b32.xlu0 %v2179, 1
      %v2185 = vpop.permute.xlu0 %2184
      %v2186 = vsel %vm512, %v2183, %v2185
      %v2188 = vsel %vm1985, %v2186, 0.0
      %2189 = vst.msk [vmem:[#allocation6 + $0x20] sm:$0xff] %vm1577, %v2188
      %v2190 = vld [vmem:[#allocation5] sm:$0xff]
      %v2191 = vld [vmem:[#allocation5 + $0x8] sm:$0xff]
      %2194 = vrot.lane.b32.xlu0 %v2190, 1
      %v2195 = vpop.permute.xlu0 %2194
      %2196 = vrot.lane.b32.xlu0 %v2191, 1
      %v2197 = vpop.permute.xlu0 %2196
      %v2198 = vsel %vm512, %v2195, %v2197
      %v2200 = vsel %vm1984, %v2198, 0.0
      %2201 = vst.msk [vmem:[#allocation6 + $0x30] sm:$0xff] %vm1577, %v2200
      %v2202 = vld [vmem:[#allocation5 + $0x8] sm:$0xff]
      %2203 = vst.msk [vmem:[#allocation6 + $0x40] sm:$0xff] %vm1577, %v2202
      %v2204 = vld [vmem:[#allocation5 + $0x8] sm:$0xff]
      %2206 = vrot.lane.b32.xlu0 %v2204, 127
      %v2207 = vpop.permute.xlu0 %2206
      %v2209 = vsel %vm1985, %v2207, 0.0
      %2210 = vst.msk [vmem:[#allocation6 + $0x50] sm:$0xff] %vm1577, %v2209
      %v2211 = vld [vmem:[#allocation5 + $0x8] sm:$0xff]
      %2213 = vrot.lane.b32.xlu0 %v2211, 127
      %v2214 = vpop.permute.xlu0 %2213
      %v2216 = vsel %vm1984, %v2214, 0.0
      %2217 = vst.msk [vmem:[#allocation6 + $0x60] sm:$0xff] %vm1577, %v2216
      %v2218 = vld [vmem:[#allocation5 + $0x8] sm:$0xff]
      %2220 = vrot.lane.b32.xlu0 %v2218, 126
      %v2221 = vpop.permute.xlu0 %2220
      %2223 = vst.msk [vmem:[#allocation6 + $0x70] sm:$0xff] %vm1577, %v2221
      %v2224 = vld [vmem:[#allocation5 + $0x8] sm:$0xff]
      %2226 = vrot.lane.b32.xlu0 %v2224, 125
      %v2227 = vpop.permute.xlu0 %2226
      %v2229 = vsel %vm1985, %v2227, 0.0
      %2230 = vst.msk [vmem:[#allocation6 + $0x80] sm:$0xff] %vm1577, %v2229
      %v2231 = vld [vmem:[#allocation6] sm:$0xff]
      %v2232 = vld [vmem:[#allocation6 + $0x10] sm:$0xff]
      %v2233 = vld [vmem:[#allocation6 + $0x20] sm:$0xff]
      %v2234 = vld [vmem:[#allocation6 + $0x30] sm:$0xff]
      %v2235 = vld [vmem:[#allocation6 + $0x40] sm:$0xff]
      %v2236 = vld [vmem:[#allocation6 + $0x50] sm:$0xff]
      %v2237 = vld [vmem:[#allocation6 + $0x60] sm:$0xff]
      %v2238 = vld [vmem:[#allocation6 + $0x70] sm:$0xff]
      %v2239 = vld [vmem:[#allocation6 + $0x80] sm:$0xff]
      %v2240 = vld [vmem:[%s3] sm:$0xff]
      %2242 = vset.pattern.permute.xlu0 7
      %2243 = vperm.xlu0 %2242, %v2240
      %v2244 = vpop.permute.xlu0 %2243
      %v2247 = vsel %vm631, %v2153, 0
      %2249 = vmatprep.subr.mxu0 0.0
      %2250 = vmatpush1.msra.mxu0 %v2231
      %2251 = vmatprep.subr.mxu0 0.0
      %2252 = vmatpush1.msra.mxu0 %v2232
      %2253 = vmatprep.subr.mxu0 0.0
      %2254 = vmatpush1.msra.mxu0 %v2233
      %2255 = vmatprep.subr.mxu0 0.0
      %2256 = vmatpush1.msra.mxu0 %v2234
      %2257 = vmatprep.subr.mxu0 0.0
      %2258 = vmatpush1.msra.mxu0 %v2235
      %2259 = vmatprep.subr.mxu0 0.0
      %2260 = vmatpush1.msra.mxu0 %v2236
      %2261 = vmatprep.subr.mxu0 0.0
      %2262 = vmatpush1.msra.mxu0 %v2237
      %2263 = vmatprep.subr.mxu0 0.0
      %2264 = vmatpush1.msra.mxu0 %v2238
      %2265 = vmatprep.subr.mxu0 0.0
      %2266 = vmatpush1.msra.mxu0 %v2239
      %2267 = vmatprep.subr.mxu0 0.0
      %2268 = vmatpush1.msra.mxu0 0.0
      %2269 = vmatprep.subr.mxu0 0.0
      %2270 = vmatpush1.msra.mxu0 0.0
      %2271 = vmatprep.subr.mxu0 0.0
      %2272 = vmatpush1.msra.mxu0 0.0
      %2273 = vmatprep.subr.mxu0 0.0
      %2274 = vmatpush1.msra.mxu0 0.0
      %2275 = vmatprep.subr.mxu0 0.0
      %2276 = vmatpush1.msra.mxu0 0.0
      %2277 = vmatprep.subr.mxu0 0.0
      %2278 = vmatpush1.msra.mxu0 0.0
      %2279 = vmatprep.subr.mxu0 0.0
      %2280 = vmatpush1.msra.mxu0 0.0
      %2281 = vmatprep.subr.mxu0 0.0
      %2282 = vmatpush1.msra.mxu0 0.0
      %2283 = vmatprep.subr.mxu0 0.0
      %2284 = vmatpush1.msra.mxu0 0.0
      %2285 = vmatprep.subr.mxu0 0.0
      %2286 = vmatpush1.msra.mxu0 0.0
      %2287 = vmatprep.subr.mxu0 0.0
      %2288 = vmatpush1.msra.mxu0 0.0
      %2289 = vmatprep.subr.mxu0 0.0
      %2290 = vmatpush1.msra.mxu0 0.0
      %2291 = vmatprep.subr.mxu0 0.0
      %2292 = vmatpush1.msra.mxu0 0.0
      %2293 = vmatprep.subr.mxu0 0.0
      %2294 = vmatpush1.msra.mxu0 0.0
      %2295 = vmatprep.subr.mxu0 0.0
      %2296 = vmatpush1.msra.mxu0 0.0
      %2297 = vmatprep.subr.mxu0 0.0
      %2298 = vmatpush1.msra.mxu0 0.0
      %2299 = vmatprep.subr.mxu0 0.0
      %2300 = vmatpush1.msra.mxu0 0.0
      %2301 = vmatprep.subr.mxu0 0.0
      %2302 = vmatpush1.msra.mxu0 0.0
      %2303 = vmatprep.subr.mxu0 0.0
      %2304 = vmatpush1.msra.mxu0 0.0
      %2305 = vmatprep.subr.mxu0 0.0
      %2306 = vmatpush1.msra.mxu0 0.0
      %2307 = vmatprep.subr.mxu0 0.0
      %2308 = vmatpush1.msra.mxu0 0.0
      %2309 = vmatprep.subr.mxu0 0.0
      %2310 = vmatpush1.msra.mxu0 0.0
      %2311 = vmatprep.subr.mxu0 0.0
      %2312 = vmatpush1.msra.mxu0 0.0
      %2313 = vmatprep.mubr.f32.mxu0 0.0
      %2314 = vmatmul.mubr.f32.gmra.mrb[0].mxu0 %v2247
      %v2315 = vpop.f32.mrb[0].mxu0
      %v2316 = vadd.f32 %v2244, %v2315
      %v2317 = vpop.f32.mrb[0].mxu0
      %2318 = vdwg.mxu0
      %v2319 = vmax.f32 %v2316, 0.0
      %v2320 = vld [vmem:[%s6] sm:$0xf]
      %v2322 = vsel %vm1577, %v2319, 0
      %vm2324 = vcmask 1043456
      %v2326 = vsel %vm2324, %v2320, 0
      %2328 = vmatprep.subr.mxu0 0.0
      %2329 = vmatpush1.msra.mxu0 %v2326
      %2330 = vmatprep.subr.mxu0 0.0
      %2331 = vmatpush1.msra.mxu0 0.0
      %2332 = vmatprep.subr.mxu0 0.0
      %2333 = vmatpush1.msra.mxu0 0.0
      %2334 = vmatprep.subr.mxu0 0.0
      %2335 = vmatpush1.msra.mxu0 0.0
      %2336 = vmatprep.subr.mxu0 0.0
      %2337 = vmatpush1.msra.mxu0 0.0
      %2338 = vmatprep.subr.mxu0 0.0
      %2339 = vmatpush1.msra.mxu0 0.0
      %2340 = vmatprep.subr.mxu0 0.0
      %2341 = vmatpush1.msra.mxu0 0.0
      %2342 = vmatprep.subr.mxu0 0.0
      %2343 = vmatpush1.msra.mxu0 0.0
      %2344 = vmatprep.subr.mxu0 0.0
      %2345 = vmatpush1.msra.mxu0 0.0
      %2346 = vmatprep.subr.mxu0 0.0
      %2347 = vmatpush1.msra.mxu0 0.0
      %2348 = vmatprep.subr.mxu0 0.0
      %2349 = vmatpush1.msra.mxu0 0.0
      %2350 = vmatprep.subr.mxu0 0.0
      %2351 = vmatpush1.msra.mxu0 0.0
      %2352 = vmatprep.subr.mxu0 0.0
      %2353 = vmatpush1.msra.mxu0 0.0
      %2354 = vmatprep.subr.mxu0 0.0
      %2355 = vmatpush1.msra.mxu0 0.0
      %2356 = vmatprep.subr.mxu0 0.0
      %2357 = vmatpush1.msra.mxu0 0.0
      %2358 = vmatprep.subr.mxu0 0.0
      %2359 = vmatpush1.msra.mxu0 0.0
      %2360 = vmatprep.subr.mxu0 0.0
      %2361 = vmatpush1.msra.mxu0 0.0
      %2362 = vmatprep.subr.mxu0 0.0
      %2363 = vmatpush1.msra.mxu0 0.0
      %2364 = vmatprep.subr.mxu0 0.0
      %2365 = vmatpush1.msra.mxu0 0.0
      %2366 = vmatprep.subr.mxu0 0.0
      %2367 = vmatpush1.msra.mxu0 0.0
      %2368 = vmatprep.subr.mxu0 0.0
      %2369 = vmatpush1.msra.mxu0 0.0
      %2370 = vmatprep.subr.mxu0 0.0
      %2371 = vmatpush1.msra.mxu0 0.0
      %2372 = vmatprep.subr.mxu0 0.0
      %2373 = vmatpush1.msra.mxu0 0.0
      %2374 = vmatprep.subr.mxu0 0.0
      %2375 = vmatpush1.msra.mxu0 0.0
      %2376 = vmatprep.subr.mxu0 0.0
      %2377 = vmatpush1.msra.mxu0 0.0
      %2378 = vmatprep.subr.mxu0 0.0
      %2379 = vmatpush1.msra.mxu0 0.0
      %2380 = vmatprep.subr.mxu0 0.0
      %2381 = vmatpush1.msra.mxu0 0.0
      %2382 = vmatprep.subr.mxu0 0.0
      %2383 = vmatpush1.msra.mxu0 0.0
      %2384 = vmatprep.subr.mxu0 0.0
      %2385 = vmatpush1.msra.mxu0 0.0
      %2386 = vmatprep.subr.mxu0 0.0
      %2387 = vmatpush1.msra.mxu0 0.0
      %2388 = vmatprep.subr.mxu0 0.0
      %2389 = vmatpush1.msra.mxu0 0.0
      %2390 = vmatprep.subr.mxu0 0.0
      %2391 = vmatpush1.msra.mxu0 0.0
      %2392 = vmatprep.mubr.f32.mxu0 0.0
      %2393 = vmatmul.mubr.f32.gmra.mrb[0].mxu0 %v2322
      %v2394 = vpop.f32.mrb[0].mxu0
      %v2395 = vadd.f32 0.0, %v2394
      %v2396 = vpop.f32.mrb[0].mxu0
      %2397 = vdwg.mxu0
      %v2398 = vld [vmem:[%s2] sm:$0xff]
      %v2399 = vld [vmem:[%s2 + $0x8] sm:$0xff]
      %2400 = vst.msk [vmem:[#allocation4 + $0x8] sm:$0xff] %vm472, %v2395
      %v2401 = vld [vmem:[#allocation4] sm:$0xff]
      %v2402 = vld [vmem:[#allocation4 + $0x8] sm:$0xff]
      %2405 = vrot.lane.b32.xlu0 %v2401, 5
      %v2406 = vpop.permute.xlu0 %2405
      %2407 = vrot.lane.b32.xlu0 %v2402, 5
      %v2408 = vpop.permute.xlu0 %2407
      %v2409 = vsel %vm1564, %v2406, %v2408
      %v2411 = vsel %vm1554, %v2409, 0.0
      %2412 = vst.msk [vmem:[#allocation6] sm:$0xff] %vm472, %v2411
      %v2413 = vld [vmem:[#allocation4] sm:$0xff]
      %v2414 = vld [vmem:[#allocation4 + $0x8] sm:$0xff]
      %2417 = vrot.lane.b32.xlu0 %v2413, 4
      %v2418 = vpop.permute.xlu0 %2417
      %2419 = vrot.lane.b32.xlu0 %v2414, 4
      %v2420 = vpop.permute.xlu0 %2419
      %v2421 = vsel %vm1577, %v2418, %v2420
      %2423 = vst.msk [vmem:[#allocation6 + $0x10] sm:$0xff] %vm472, %v2421
      %v2424 = vld [vmem:[#allocation4] sm:$0xff]
      %v2425 = vld [vmem:[#allocation4 + $0x8] sm:$0xff]
      %2428 = vrot.lane.b32.xlu0 %v2424, 3
      %v2429 = vpop.permute.xlu0 %2428
      %2430 = vrot.lane.b32.xlu0 %v2425, 3
      %v2431 = vpop.permute.xlu0 %2430
      %v2432 = vsel %vm1589, %v2429, %v2431
      %v2434 = vsel %vm1555, %v2432, 0.0
      %2435 = vst.msk [vmem:[#allocation6 + $0x20] sm:$0xff] %vm472, %v2434
      %v2436 = vld [vmem:[#allocation4] sm:$0xff]
      %v2437 = vld [vmem:[#allocation4 + $0x8] sm:$0xff]
      %2440 = vrot.lane.b32.xlu0 %v2436, 1
      %v2441 = vpop.permute.xlu0 %2440
      %2442 = vrot.lane.b32.xlu0 %v2437, 1
      %v2443 = vpop.permute.xlu0 %2442
      %v2444 = vsel %vm512, %v2441, %v2443
      %v2446 = vsel %vm1554, %v2444, 0.0
      %2447 = vst.msk [vmem:[#allocation6 + $0x30] sm:$0xff] %vm472, %v2446
      %v2448 = vld [vmem:[#allocation4 + $0x8] sm:$0xff]
      %2449 = vst.msk [vmem:[#allocation6 + $0x40] sm:$0xff] %vm472, %v2448
      %v2450 = vld [vmem:[#allocation4 + $0x8] sm:$0xff]
      %2452 = vrot.lane.b32.xlu0 %v2450, 127
      %v2453 = vpop.permute.xlu0 %2452
      %v2455 = vsel %vm1555, %v2453, 0.0
      %2456 = vst.msk [vmem:[#allocation6 + $0x50] sm:$0xff] %vm472, %v2455
      %v2457 = vld [vmem:[#allocation4 + $0x8] sm:$0xff]
      %2459 = vrot.lane.b32.xlu0 %v2457, 125
      %v2460 = vpop.permute.xlu0 %2459
      %v2462 = vsel %vm1554, %v2460, 0.0
      %2463 = vst.msk [vmem:[#allocation6 + $0x60] sm:$0xff] %vm472, %v2462
      %v2464 = vld [vmem:[#allocation4 + $0x8] sm:$0xff]
      %2466 = vrot.lane.b32.xlu0 %v2464, 124
      %v2467 = vpop.permute.xlu0 %2466
      %2469 = vst.msk [vmem:[#allocation6 + $0x70] sm:$0xff] %vm472, %v2467
      %v2470 = vld [vmem:[#allocation4 + $0x8] sm:$0xff]
      %2472 = vrot.lane.b32.xlu0 %v2470, 123
      %v2473 = vpop.permute.xlu0 %2472
      %v2475 = vsel %vm1555, %v2473, 0.0
      %2476 = vst.msk [vmem:[#allocation6 + $0x80] sm:$0xff] %vm472, %v2475
      %2477 = vst.msk [vmem:[#allocation4 + $0x8] sm:$0xff] %vm472, %v1891
      %v2478 = vld [vmem:[#allocation4] sm:$0xff]
      %v2479 = vld [vmem:[#allocation4 + $0x8] sm:$0xff]
      %2482 = vrot.lane.b32.xlu0 %v2478, 5
      %v2483 = vpop.permute.xlu0 %2482
      %2484 = vrot.lane.b32.xlu0 %v2479, 5
      %v2485 = vpop.permute.xlu0 %2484
      %v2486 = vsel %vm1564, %v2483, %v2485
      %v2488 = vsel %vm1554, %v2486, 0.0
      %2489 = vst.msk [vmem:[#allocation6 + $0x90] sm:$0xff] %vm472, %v2488
      %v2490 = vld [vmem:[#allocation4] sm:$0xff]
      %v2491 = vld [vmem:[#allocation4 + $0x8] sm:$0xff]
      %2494 = vrot.lane.b32.xlu0 %v2490, 4
      %v2495 = vpop.permute.xlu0 %2494
      %2496 = vrot.lane.b32.xlu0 %v2491, 4
      %v2497 = vpop.permute.xlu0 %2496
      %v2498 = vsel %vm1577, %v2495, %v2497
      %2500 = vst.msk [vmem:[#allocation6 + $0xa0] sm:$0xff] %vm472, %v2498
      %v2501 = vld [vmem:[#allocation4] sm:$0xff]
      %v2502 = vld [vmem:[#allocation4 + $0x8] sm:$0xff]
      %2505 = vrot.lane.b32.xlu0 %v2501, 3
      %v2506 = vpop.permute.xlu0 %2505
      %2507 = vrot.lane.b32.xlu0 %v2502, 3
      %v2508 = vpop.permute.xlu0 %2507
      %v2509 = vsel %vm1589, %v2506, %v2508
      %v2511 = vsel %vm1555, %v2509, 0.0
      %2512 = vst.msk [vmem:[#allocation6 + $0xb0] sm:$0xff] %vm472, %v2511
      %v2513 = vld [vmem:[#allocation4] sm:$0xff]
      %v2514 = vld [vmem:[#allocation4 + $0x8] sm:$0xff]
      %2517 = vrot.lane.b32.xlu0 %v2513, 1
      %v2518 = vpop.permute.xlu0 %2517
      %2519 = vrot.lane.b32.xlu0 %v2514, 1
      %v2520 = vpop.permute.xlu0 %2519
      %v2521 = vsel %vm512, %v2518, %v2520
      %v2523 = vsel %vm1554, %v2521, 0.0
      %2524 = vst.msk [vmem:[#allocation6 + $0xc0] sm:$0xff] %vm472, %v2523
      %v2525 = vld [vmem:[#allocation4 + $0x8] sm:$0xff]
      %2526 = vst.msk [vmem:[#allocation6 + $0xd0] sm:$0xff] %vm472, %v2525
      %v2527 = vld [vmem:[#allocation4 + $0x8] sm:$0xff]
      %2529 = vrot.lane.b32.xlu0 %v2527, 127
      %v2530 = vpop.permute.xlu0 %2529
      %v2532 = vsel %vm1555, %v2530, 0.0
      %2533 = vst.msk [vmem:[#allocation6 + $0xe0] sm:$0xff] %vm472, %v2532
      %v2534 = vld [vmem:[#allocation4 + $0x8] sm:$0xff]
      %2536 = vrot.lane.b32.xlu0 %v2534, 125
      %v2537 = vpop.permute.xlu0 %2536
      %v2539 = vsel %vm1554, %v2537, 0.0
      %2540 = vst.msk [vmem:[#allocation6 + $0xf0] sm:$0xff] %vm472, %v2539
      %v2541 = vld [vmem:[#allocation4 + $0x8] sm:$0xff]
      %2543 = vrot.lane.b32.xlu0 %v2541, 124
      %v2544 = vpop.permute.xlu0 %2543
      %2546 = vst.msk [vmem:[#allocation6 + $0x100] sm:$0xff] %vm472, %v2544
      %v2547 = vld [vmem:[#allocation4 + $0x8] sm:$0xff]
      %2549 = vrot.lane.b32.xlu0 %v2547, 123
      %v2550 = vpop.permute.xlu0 %2549
      %v2552 = vsel %vm1555, %v2550, 0.0
      %2553 = vst.msk [vmem:[#allocation6 + $0x110] sm:$0xff] %vm472, %v2552
      %v2554 = vld [vmem:[#allocation6] sm:$0xff]
      %v2555 = vld [vmem:[#allocation6 + $0x10] sm:$0xff]
      %v2556 = vld [vmem:[#allocation6 + $0x20] sm:$0xff]
      %v2557 = vld [vmem:[#allocation6 + $0x30] sm:$0xff]
      %v2558 = vld [vmem:[#allocation6 + $0x40] sm:$0xff]
      %v2559 = vld [vmem:[#allocation6 + $0x50] sm:$0xff]
      %v2560 = vld [vmem:[#allocation6 + $0x60] sm:$0xff]
      %v2561 = vld [vmem:[#allocation6 + $0x70] sm:$0xff]
      %v2562 = vld [vmem:[#allocation6 + $0x80] sm:$0xff]
      %v2563 = vld [vmem:[#allocation6 + $0x90] sm:$0xff]
      %v2564 = vld [vmem:[#allocation6 + $0xa0] sm:$0xff]
      %v2565 = vld [vmem:[#allocation6 + $0xb0] sm:$0xff]
      %v2566 = vld [vmem:[#allocation6 + $0xc0] sm:$0xff]
      %v2567 = vld [vmem:[#allocation6 + $0xd0] sm:$0xff]
      %v2568 = vld [vmem:[#allocation6 + $0xe0] sm:$0xff]
      %v2569 = vld [vmem:[#allocation6 + $0xf0] sm:$0xff]
      %v2570 = vld [vmem:[#allocation6 + $0x100] sm:$0xff]
      %v2571 = vld [vmem:[#allocation6 + $0x110] sm:$0xff]
      %v2572 = vld [vmem:[%s3] sm:$0xff]
      %2574 = vset.pattern.permute.xlu0 8
      %2575 = vperm.xlu0 %2574, %v2572
      %v2576 = vpop.permute.xlu0 %2575
      %v2579 = vsel %vm472, %v2399, 0
      %2581 = vmatprep.subr.mxu0 0.0
      %2582 = vmatpush1.msra.mxu0 %v2554
      %2583 = vmatprep.subr.mxu0 0.0
      %2584 = vmatpush1.msra.mxu0 %v2555
      %2585 = vmatprep.subr.mxu0 0.0
      %2586 = vmatpush1.msra.mxu0 %v2556
      %2587 = vmatprep.subr.mxu0 0.0
      %2588 = vmatpush1.msra.mxu0 %v2557
      %2589 = vmatprep.subr.mxu0 0.0
      %2590 = vmatpush1.msra.mxu0 %v2558
      %2591 = vmatprep.subr.mxu0 0.0
      %2592 = vmatpush1.msra.mxu0 %v2559
      %2593 = vmatprep.subr.mxu0 0.0
      %2594 = vmatpush1.msra.mxu0 %v2560
      %2595 = vmatprep.subr.mxu0 0.0
      %2596 = vmatpush1.msra.mxu0 %v2561
      %2597 = vmatprep.subr.mxu0 0.0
      %2598 = vmatpush1.msra.mxu0 %v2562
      %2599 = vmatprep.subr.mxu0 0.0
      %2600 = vmatpush1.msra.mxu0 %v2563
      %2601 = vmatprep.subr.mxu0 0.0
      %2602 = vmatpush1.msra.mxu0 %v2564
      %2603 = vmatprep.subr.mxu0 0.0
      %2604 = vmatpush1.msra.mxu0 %v2565
      %2605 = vmatprep.subr.mxu0 0.0
      %2606 = vmatpush1.msra.mxu0 %v2566
      %2607 = vmatprep.subr.mxu0 0.0
      %2608 = vmatpush1.msra.mxu0 %v2567
      %2609 = vmatprep.subr.mxu0 0.0
      %2610 = vmatpush1.msra.mxu0 %v2568
      %2611 = vmatprep.subr.mxu0 0.0
      %2612 = vmatpush1.msra.mxu0 %v2569
      %2613 = vmatprep.subr.mxu0 0.0
      %2614 = vmatpush1.msra.mxu0 %v2570
      %2615 = vmatprep.subr.mxu0 0.0
      %2616 = vmatpush1.msra.mxu0 %v2571
      %2617 = vmatprep.subr.mxu0 0.0
      %2618 = vmatpush1.msra.mxu0 0.0
      %2619 = vmatprep.subr.mxu0 0.0
      %2620 = vmatpush1.msra.mxu0 0.0
      %2621 = vmatprep.subr.mxu0 0.0
      %2622 = vmatpush1.msra.mxu0 0.0
      %2623 = vmatprep.subr.mxu0 0.0
      %2624 = vmatpush1.msra.mxu0 0.0
      %2625 = vmatprep.subr.mxu0 0.0
      %2626 = vmatpush1.msra.mxu0 0.0
      %2627 = vmatprep.subr.mxu0 0.0
      %2628 = vmatpush1.msra.mxu0 0.0
      %2629 = vmatprep.subr.mxu0 0.0
      %2630 = vmatpush1.msra.mxu0 0.0
      %2631 = vmatprep.subr.mxu0 0.0
      %2632 = vmatpush1.msra.mxu0 0.0
      %2633 = vmatprep.subr.mxu0 0.0
      %2634 = vmatpush1.msra.mxu0 0.0
      %2635 = vmatprep.subr.mxu0 0.0
      %2636 = vmatpush1.msra.mxu0 0.0
      %2637 = vmatprep.subr.mxu0 0.0
      %2638 = vmatpush1.msra.mxu0 0.0
      %2639 = vmatprep.subr.mxu0 0.0
      %2640 = vmatpush1.msra.mxu0 0.0
      %2641 = vmatprep.subr.mxu0 0.0
      %2642 = vmatpush1.msra.mxu0 0.0
      %2643 = vmatprep.subr.mxu0 0.0
      %2644 = vmatpush1.msra.mxu0 0.0
      %2645 = vmatprep.mubr.f32.mxu0 %v2579
      %2646 = vmatmul.mubr.f32.gmra.mrb[0].mxu0 %v2398
      %v2647 = vpop.f32.mrb[0].mxu0
      %v2648 = vadd.f32 %v2576, %v2647
      %v2649 = vpop.f32.mrb[0].mxu0
      %2650 = vdwg.mxu0
      %v2651 = vmax.f32 %v2648, 0.0
      %s2652 = scalar_lea.vmem %s1, 64
      %v2653 = vld [vmem:[%s2652] sm:$0xff]
      %2654 = vst.msk [vmem:[#allocation4 + $0x8] sm:$0xff] %vm472, %v2651
      %v2655 = vld [vmem:[#allocation4] sm:$0xff]
      %v2656 = vld [vmem:[#allocation4 + $0x8] sm:$0xff]
      %2659 = vrot.lane.b32.xlu0 %v2655, 5
      %v2660 = vpop.permute.xlu0 %2659
      %2661 = vrot.lane.b32.xlu0 %v2656, 5
      %v2662 = vpop.permute.xlu0 %2661
      %v2663 = vsel %vm1564, %v2660, %v2662
      %v2665 = vsel %vm1554, %v2663, 0.0
      %2666 = vst.msk [vmem:[#allocation6] sm:$0xff] %vm472, %v2665
      %v2667 = vld [vmem:[#allocation4] sm:$0xff]
      %v2668 = vld [vmem:[#allocation4 + $0x8] sm:$0xff]
      %2671 = vrot.lane.b32.xlu0 %v2667, 4
      %v2672 = vpop.permute.xlu0 %2671
      %2673 = vrot.lane.b32.xlu0 %v2668, 4
      %v2674 = vpop.permute.xlu0 %2673
      %v2675 = vsel %vm1577, %v2672, %v2674
      %2677 = vst.msk [vmem:[#allocation6 + $0x10] sm:$0xff] %vm472, %v2675
      %v2678 = vld [vmem:[#allocation4] sm:$0xff]
      %v2679 = vld [vmem:[#allocation4 + $0x8] sm:$0xff]
      %2682 = vrot.lane.b32.xlu0 %v2678, 3
      %v2683 = vpop.permute.xlu0 %2682
      %2684 = vrot.lane.b32.xlu0 %v2679, 3
      %v2685 = vpop.permute.xlu0 %2684
      %v2686 = vsel %vm1589, %v2683, %v2685
      %v2688 = vsel %vm1555, %v2686, 0.0
      %2689 = vst.msk [vmem:[#allocation6 + $0x20] sm:$0xff] %vm472, %v2688
      %v2690 = vld [vmem:[#allocation4] sm:$0xff]
      %v2691 = vld [vmem:[#allocation4 + $0x8] sm:$0xff]
      %2694 = vrot.lane.b32.xlu0 %v2690, 1
      %v2695 = vpop.permute.xlu0 %2694
      %2696 = vrot.lane.b32.xlu0 %v2691, 1
      %v2697 = vpop.permute.xlu0 %2696
      %v2698 = vsel %vm512, %v2695, %v2697
      %v2700 = vsel %vm1554, %v2698, 0.0
      %2701 = vst.msk [vmem:[#allocation6 + $0x30] sm:$0xff] %vm472, %v2700
      %v2702 = vld [vmem:[#allocation4 + $0x8] sm:$0xff]
      %2703 = vst.msk [vmem:[#allocation6 + $0x40] sm:$0xff] %vm472, %v2702
      %v2704 = vld [vmem:[#allocation4 + $0x8] sm:$0xff]
      %2706 = vrot.lane.b32.xlu0 %v2704, 127
      %v2707 = vpop.permute.xlu0 %2706
      %v2709 = vsel %vm1555, %v2707, 0.0
      %2710 = vst.msk [vmem:[#allocation6 + $0x50] sm:$0xff] %vm472, %v2709
      %v2711 = vld [vmem:[#allocation4 + $0x8] sm:$0xff]
      %2713 = vrot.lane.b32.xlu0 %v2711, 125
      %v2714 = vpop.permute.xlu0 %2713
      %v2716 = vsel %vm1554, %v2714, 0.0
      %2717 = vst.msk [vmem:[#allocation6 + $0x60] sm:$0xff] %vm472, %v2716
      %v2718 = vld [vmem:[#allocation4 + $0x8] sm:$0xff]
      %2720 = vrot.lane.b32.xlu0 %v2718, 124
      %v2721 = vpop.permute.xlu0 %2720
      %2723 = vst.msk [vmem:[#allocation6 + $0x70] sm:$0xff] %vm472, %v2721
      %v2724 = vld [vmem:[#allocation4 + $0x8] sm:$0xff]
      %2726 = vrot.lane.b32.xlu0 %v2724, 123
      %v2727 = vpop.permute.xlu0 %2726
      %v2729 = vsel %vm1555, %v2727, 0.0
      %2730 = vst.msk [vmem:[#allocation6 + $0x80] sm:$0xff] %vm472, %v2729
      %v2731 = vld [vmem:[#allocation6] sm:$0xff]
      %v2732 = vld [vmem:[#allocation6 + $0x10] sm:$0xff]
      %v2733 = vld [vmem:[#allocation6 + $0x20] sm:$0xff]
      %v2734 = vld [vmem:[#allocation6 + $0x30] sm:$0xff]
      %v2735 = vld [vmem:[#allocation6 + $0x40] sm:$0xff]
      %v2736 = vld [vmem:[#allocation6 + $0x50] sm:$0xff]
      %v2737 = vld [vmem:[#allocation6 + $0x60] sm:$0xff]
      %v2738 = vld [vmem:[#allocation6 + $0x70] sm:$0xff]
      %v2739 = vld [vmem:[#allocation6 + $0x80] sm:$0xff]
      %v2740 = vld [vmem:[%s3] sm:$0xff]
      %2742 = vset.pattern.permute.xlu0 9
      %2743 = vperm.xlu0 %2742, %v2740
      %v2744 = vpop.permute.xlu0 %2743
      %v2747 = vsel %vm631, %v2653, 0
      %2749 = vmatprep.subr.mxu0 0.0
      %2750 = vmatpush1.msra.mxu0 %v2731
      %2751 = vmatprep.subr.mxu0 0.0
      %2752 = vmatpush1.msra.mxu0 %v2732
      %2753 = vmatprep.subr.mxu0 0.0
      %2754 = vmatpush1.msra.mxu0 %v2733
      %2755 = vmatprep.subr.mxu0 0.0
      %2756 = vmatpush1.msra.mxu0 %v2734
      %2757 = vmatprep.subr.mxu0 0.0
      %2758 = vmatpush1.msra.mxu0 %v2735
      %2759 = vmatprep.subr.mxu0 0.0
      %2760 = vmatpush1.msra.mxu0 %v2736
      %2761 = vmatprep.subr.mxu0 0.0
      %2762 = vmatpush1.msra.mxu0 %v2737
      %2763 = vmatprep.subr.mxu0 0.0
      %2764 = vmatpush1.msra.mxu0 %v2738
      %2765 = vmatprep.subr.mxu0 0.0
      %2766 = vmatpush1.msra.mxu0 %v2739
      %2767 = vmatprep.subr.mxu0 0.0
      %2768 = vmatpush1.msra.mxu0 0.0
      %2769 = vmatprep.subr.mxu0 0.0
      %2770 = vmatpush1.msra.mxu0 0.0
      %2771 = vmatprep.subr.mxu0 0.0
      %2772 = vmatpush1.msra.mxu0 0.0
      %2773 = vmatprep.subr.mxu0 0.0
      %2774 = vmatpush1.msra.mxu0 0.0
      %2775 = vmatprep.subr.mxu0 0.0
      %2776 = vmatpush1.msra.mxu0 0.0
      %2777 = vmatprep.subr.mxu0 0.0
      %2778 = vmatpush1.msra.mxu0 0.0
      %2779 = vmatprep.subr.mxu0 0.0
      %2780 = vmatpush1.msra.mxu0 0.0
      %2781 = vmatprep.subr.mxu0 0.0
      %2782 = vmatpush1.msra.mxu0 0.0
      %2783 = vmatprep.subr.mxu0 0.0
      %2784 = vmatpush1.msra.mxu0 0.0
      %2785 = vmatprep.subr.mxu0 0.0
      %2786 = vmatpush1.msra.mxu0 0.0
      %2787 = vmatprep.subr.mxu0 0.0
      %2788 = vmatpush1.msra.mxu0 0.0
      %2789 = vmatprep.subr.mxu0 0.0
      %2790 = vmatpush1.msra.mxu0 0.0
      %2791 = vmatprep.subr.mxu0 0.0
      %2792 = vmatpush1.msra.mxu0 0.0
      %2793 = vmatprep.subr.mxu0 0.0
      %2794 = vmatpush1.msra.mxu0 0.0
      %2795 = vmatprep.subr.mxu0 0.0
      %2796 = vmatpush1.msra.mxu0 0.0
      %2797 = vmatprep.subr.mxu0 0.0
      %2798 = vmatpush1.msra.mxu0 0.0
      %2799 = vmatprep.subr.mxu0 0.0
      %2800 = vmatpush1.msra.mxu0 0.0
      %2801 = vmatprep.subr.mxu0 0.0
      %2802 = vmatpush1.msra.mxu0 0.0
      %2803 = vmatprep.subr.mxu0 0.0
      %2804 = vmatpush1.msra.mxu0 0.0
      %2805 = vmatprep.subr.mxu0 0.0
      %2806 = vmatpush1.msra.mxu0 0.0
      %2807 = vmatprep.subr.mxu0 0.0
      %2808 = vmatpush1.msra.mxu0 0.0
      %2809 = vmatprep.subr.mxu0 0.0
      %2810 = vmatpush1.msra.mxu0 0.0
      %2811 = vmatprep.subr.mxu0 0.0
      %2812 = vmatpush1.msra.mxu0 0.0
      %2813 = vmatprep.mubr.f32.mxu0 0.0
      %2814 = vmatmul.mubr.f32.gmra.mrb[0].mxu0 %v2747
      %v2815 = vpop.f32.mrb[0].mxu0
      %v2816 = vadd.f32 %v2744, %v2815
      %v2817 = vpop.f32.mrb[0].mxu0
      %2818 = vdwg.mxu0
      %v2819 = vmax.f32 %v2816, 0.0
      %v2820 = vld [vmem:[%s7] sm:$0xff]
      %v2821 = vld [vmem:[%s7 + $0x8] sm:$0xff]
      %v2823 = vsel %vm472, %v2819, 0
      %2825 = vmatprep.subr.mxu0 0.0
      %2826 = vmatpush1.msra.mxu0 %v2820
      %2827 = vmatprep.subr.mxu0 0.0
      %2828 = vmatpush1.msra.mxu0 %v2821
      %2829 = vmatprep.subr.mxu0 0.0
      %2830 = vmatpush1.msra.mxu0 0.0
      %2831 = vmatprep.subr.mxu0 0.0
      %2832 = vmatpush1.msra.mxu0 0.0
      %2833 = vmatprep.subr.mxu0 0.0
      %2834 = vmatpush1.msra.mxu0 0.0
      %2835 = vmatprep.subr.mxu0 0.0
      %2836 = vmatpush1.msra.mxu0 0.0
      %2837 = vmatprep.subr.mxu0 0.0
      %2838 = vmatpush1.msra.mxu0 0.0
      %2839 = vmatprep.subr.mxu0 0.0
      %2840 = vmatpush1.msra.mxu0 0.0
      %2841 = vmatprep.subr.mxu0 0.0
      %2842 = vmatpush1.msra.mxu0 0.0
      %2843 = vmatprep.subr.mxu0 0.0
      %2844 = vmatpush1.msra.mxu0 0.0
      %2845 = vmatprep.subr.mxu0 0.0
      %2846 = vmatpush1.msra.mxu0 0.0
      %2847 = vmatprep.subr.mxu0 0.0
      %2848 = vmatpush1.msra.mxu0 0.0
      %2849 = vmatprep.subr.mxu0 0.0
      %2850 = vmatpush1.msra.mxu0 0.0
      %2851 = vmatprep.subr.mxu0 0.0
      %2852 = vmatpush1.msra.mxu0 0.0
      %2853 = vmatprep.subr.mxu0 0.0
      %2854 = vmatpush1.msra.mxu0 0.0
      %2855 = vmatprep.subr.mxu0 0.0
      %2856 = vmatpush1.msra.mxu0 0.0
      %2857 = vmatprep.subr.mxu0 0.0
      %2858 = vmatpush1.msra.mxu0 0.0
      %2859 = vmatprep.subr.mxu0 0.0
      %2860 = vmatpush1.msra.mxu0 0.0
      %2861 = vmatprep.subr.mxu0 0.0
      %2862 = vmatpush1.msra.mxu0 0.0
      %2863 = vmatprep.subr.mxu0 0.0
      %2864 = vmatpush1.msra.mxu0 0.0
      %2865 = vmatprep.subr.mxu0 0.0
      %2866 = vmatpush1.msra.mxu0 0.0
      %2867 = vmatprep.subr.mxu0 0.0
      %2868 = vmatpush1.msra.mxu0 0.0
      %2869 = vmatprep.subr.mxu0 0.0
      %2870 = vmatpush1.msra.mxu0 0.0
      %2871 = vmatprep.subr.mxu0 0.0
      %2872 = vmatpush1.msra.mxu0 0.0
      %2873 = vmatprep.subr.mxu0 0.0
      %2874 = vmatpush1.msra.mxu0 0.0
      %2875 = vmatprep.subr.mxu0 0.0
      %2876 = vmatpush1.msra.mxu0 0.0
      %2877 = vmatprep.subr.mxu0 0.0
      %2878 = vmatpush1.msra.mxu0 0.0
      %2879 = vmatprep.subr.mxu0 0.0
      %2880 = vmatpush1.msra.mxu0 0.0
      %2881 = vmatprep.subr.mxu0 0.0
      %2882 = vmatpush1.msra.mxu0 0.0
      %2883 = vmatprep.subr.mxu0 0.0
      %2884 = vmatpush1.msra.mxu0 0.0
      %2885 = vmatprep.subr.mxu0 0.0
      %2886 = vmatpush1.msra.mxu0 0.0
      %2887 = vmatprep.subr.mxu0 0.0
      %2888 = vmatpush1.msra.mxu0 0.0
      %2889 = vmatprep.mubr.f32.mxu0 0.0
      %2890 = vmatmul.mubr.f32.gmra.mrb[0].mxu0 %v2823
      %v2891 = vpop.f32.mrb[0].mxu0
      %v2892 = vadd.f32 0.0, %v2891
      %v2893 = vpop.f32.mrb[0].mxu0
      %2894 = vdwg.mxu0
      %s2895 = scalar_lea.vmem %s2, 16
      %v2896 = vld [vmem:[%s2895] sm:$0xff]
      %v2897 = vld [vmem:[%s2895 + $0x8] sm:$0xff]
      %2898 = vst.msk [vmem:[#allocation3 + $0x8] sm:$0xff] %vm1113, %v2892
      %v2899 = vld [vmem:[#allocation3] sm:$0xff]
      %v2900 = vld [vmem:[#allocation3 + $0x8] sm:$0xff]
      %2903 = vrot.lane.b32.xlu0 %v2899, 9
      %v2904 = vpop.permute.xlu0 %2903
      %2905 = vrot.lane.b32.xlu0 %v2900, 9
      %v2906 = vpop.permute.xlu0 %2905
      %v2907 = vsel %vm1128, %v2904, %v2906
      %v2909 = vsel %vm1118, %v2907, 0.0
      %2910 = vst.msk [vmem:[#allocation6] sm:$0xff] %vm1113, %v2909
      %v2911 = vld [vmem:[#allocation3] sm:$0xff]
      %v2912 = vld [vmem:[#allocation3 + $0x8] sm:$0xff]
      %2915 = vrot.lane.b32.xlu0 %v2911, 8
      %v2916 = vpop.permute.xlu0 %2915
      %2917 = vrot.lane.b32.xlu0 %v2912, 8
      %v2918 = vpop.permute.xlu0 %2917
      %v2919 = vsel %vm1141, %v2916, %v2918
      %2921 = vst.msk [vmem:[#allocation6 + $0x10] sm:$0xff] %vm1113, %v2919
      %v2922 = vld [vmem:[#allocation3] sm:$0xff]
      %v2923 = vld [vmem:[#allocation3 + $0x8] sm:$0xff]
      %2926 = vrot.lane.b32.xlu0 %v2922, 7
      %v2927 = vpop.permute.xlu0 %2926
      %2928 = vrot.lane.b32.xlu0 %v2923, 7
      %v2929 = vpop.permute.xlu0 %2928
      %v2930 = vsel %vm1153, %v2927, %v2929
      %v2932 = vsel %vm1119, %v2930, 0.0
      %2933 = vst.msk [vmem:[#allocation6 + $0x20] sm:$0xff] %vm1113, %v2932
      %v2934 = vld [vmem:[#allocation3] sm:$0xff]
      %v2935 = vld [vmem:[#allocation3 + $0x8] sm:$0xff]
      %2938 = vrot.lane.b32.xlu0 %v2934, 1
      %v2939 = vpop.permute.xlu0 %2938
      %2940 = vrot.lane.b32.xlu0 %v2935, 1
      %v2941 = vpop.permute.xlu0 %2940
      %v2942 = vsel %vm512, %v2939, %v2941
      %v2944 = vsel %vm1118, %v2942, 0.0
      %2945 = vst.msk [vmem:[#allocation6 + $0x30] sm:$0xff] %vm1113, %v2944
      %v2946 = vld [vmem:[#allocation3 + $0x8] sm:$0xff]
      %2947 = vst.msk [vmem:[#allocation6 + $0x40] sm:$0xff] %vm1113, %v2946
      %v2948 = vld [vmem:[#allocation3 + $0x8] sm:$0xff]
      %2950 = vrot.lane.b32.xlu0 %v2948, 127
      %v2951 = vpop.permute.xlu0 %2950
      %v2953 = vsel %vm1119, %v2951, 0.0
      %2954 = vst.msk [vmem:[#allocation6 + $0x50] sm:$0xff] %vm1113, %v2953
      %v2955 = vld [vmem:[#allocation3 + $0x8] sm:$0xff]
      %2957 = vrot.lane.b32.xlu0 %v2955, 121
      %v2958 = vpop.permute.xlu0 %2957
      %v2960 = vsel %vm1118, %v2958, 0.0
      %2961 = vst.msk [vmem:[#allocation6 + $0x60] sm:$0xff] %vm1113, %v2960
      %v2962 = vld [vmem:[#allocation3 + $0x8] sm:$0xff]
      %2964 = vrot.lane.b32.xlu0 %v2962, 120
      %v2965 = vpop.permute.xlu0 %2964
      %2967 = vst.msk [vmem:[#allocation6 + $0x70] sm:$0xff] %vm1113, %v2965
      %v2968 = vld [vmem:[#allocation3 + $0x8] sm:$0xff]
      %2970 = vrot.lane.b32.xlu0 %v2968, 119
      %v2971 = vpop.permute.xlu0 %2970
      %v2973 = vsel %vm1119, %v2971, 0.0
      %2974 = vst.msk [vmem:[#allocation6 + $0x80] sm:$0xff] %vm1113, %v2973
      %2975 = vst.msk [vmem:[#allocation3 + $0x8] sm:$0xff] %vm1113, %v1455
      %v2976 = vld [vmem:[#allocation3] sm:$0xff]
      %v2977 = vld [vmem:[#allocation3 + $0x8] sm:$0xff]
      %2980 = vrot.lane.b32.xlu0 %v2976, 9
      %v2981 = vpop.permute.xlu0 %2980
      %2982 = vrot.lane.b32.xlu0 %v2977, 9
      %v2983 = vpop.permute.xlu0 %2982
      %v2984 = vsel %vm1128, %v2981, %v2983
      %v2986 = vsel %vm1118, %v2984, 0.0
      %2987 = vst.msk [vmem:[#allocation6 + $0x90] sm:$0xff] %vm1113, %v2986
      %v2988 = vld [vmem:[#allocation3] sm:$0xff]
      %v2989 = vld [vmem:[#allocation3 + $0x8] sm:$0xff]
      %2992 = vrot.lane.b32.xlu0 %v2988, 8
      %v2993 = vpop.permute.xlu0 %2992
      %2994 = vrot.lane.b32.xlu0 %v2989, 8
      %v2995 = vpop.permute.xlu0 %2994
      %v2996 = vsel %vm1141, %v2993, %v2995
      %2998 = vst.msk [vmem:[#allocation6 + $0xa0] sm:$0xff] %vm1113, %v2996
      %v2999 = vld [vmem:[#allocation3] sm:$0xff]
      %v3000 = vld [vmem:[#allocation3 + $0x8] sm:$0xff]
      %3003 = vrot.lane.b32.xlu0 %v2999, 7
      %v3004 = vpop.permute.xlu0 %3003
      %3005 = vrot.lane.b32.xlu0 %v3000, 7
      %v3006 = vpop.permute.xlu0 %3005
      %v3007 = vsel %vm1153, %v3004, %v3006
      %v3009 = vsel %vm1119, %v3007, 0.0
      %3010 = vst.msk [vmem:[#allocation6 + $0xb0] sm:$0xff] %vm1113, %v3009
      %v3011 = vld [vmem:[#allocation3] sm:$0xff]
      %v3012 = vld [vmem:[#allocation3 + $0x8] sm:$0xff]
      %3015 = vrot.lane.b32.xlu0 %v3011, 1
      %v3016 = vpop.permute.xlu0 %3015
      %3017 = vrot.lane.b32.xlu0 %v3012, 1
      %v3018 = vpop.permute.xlu0 %3017
      %v3019 = vsel %vm512, %v3016, %v3018
      %v3021 = vsel %vm1118, %v3019, 0.0
      %3022 = vst.msk [vmem:[#allocation6 + $0xc0] sm:$0xff] %vm1113, %v3021
      %v3023 = vld [vmem:[#allocation3 + $0x8] sm:$0xff]
      %3024 = vst.msk [vmem:[#allocation6 + $0xd0] sm:$0xff] %vm1113, %v3023
      %v3025 = vld [vmem:[#allocation3 + $0x8] sm:$0xff]
      %3027 = vrot.lane.b32.xlu0 %v3025, 127
      %v3028 = vpop.permute.xlu0 %3027
      %v3030 = vsel %vm1119, %v3028, 0.0
      %3031 = vst.msk [vmem:[#allocation6 + $0xe0] sm:$0xff] %vm1113, %v3030
      %v3032 = vld [vmem:[#allocation3 + $0x8] sm:$0xff]
      %3034 = vrot.lane.b32.xlu0 %v3032, 121
      %v3035 = vpop.permute.xlu0 %3034
      %v3037 = vsel %vm1118, %v3035, 0.0
      %3038 = vst.msk [vmem:[#allocation6 + $0xf0] sm:$0xff] %vm1113, %v3037
      %v3039 = vld [vmem:[#allocation3 + $0x8] sm:$0xff]
      %3041 = vrot.lane.b32.xlu0 %v3039, 120
      %v3042 = vpop.permute.xlu0 %3041
      %3044 = vst.msk [vmem:[#allocation6 + $0x100] sm:$0xff] %vm1113, %v3042
      %v3045 = vld [vmem:[#allocation3 + $0x8] sm:$0xff]
      %3047 = vrot.lane.b32.xlu0 %v3045, 119
      %v3048 = vpop.permute.xlu0 %3047
      %v3050 = vsel %vm1119, %v3048, 0.0
      %3051 = vst.msk [vmem:[#allocation6 + $0x110] sm:$0xff] %vm1113, %v3050
      %v3052 = vld [vmem:[#allocation6] sm:$0xff]
      %v3053 = vld [vmem:[#allocation6 + $0x10] sm:$0xff]
      %v3054 = vld [vmem:[#allocation6 + $0x20] sm:$0xff]
      %v3055 = vld [vmem:[#allocation6 + $0x30] sm:$0xff]
      %v3056 = vld [vmem:[#allocation6 + $0x40] sm:$0xff]
      %v3057 = vld [vmem:[#allocation6 + $0x50] sm:$0xff]
      %v3058 = vld [vmem:[#allocation6 + $0x60] sm:$0xff]
      %v3059 = vld [vmem:[#allocation6 + $0x70] sm:$0xff]
      %v3060 = vld [vmem:[#allocation6 + $0x80] sm:$0xff]
      %v3061 = vld [vmem:[#allocation6 + $0x90] sm:$0xff]
      %v3062 = vld [vmem:[#allocation6 + $0xa0] sm:$0xff]
      %v3063 = vld [vmem:[#allocation6 + $0xb0] sm:$0xff]
      %v3064 = vld [vmem:[#allocation6 + $0xc0] sm:$0xff]
      %v3065 = vld [vmem:[#allocation6 + $0xd0] sm:$0xff]
      %v3066 = vld [vmem:[#allocation6 + $0xe0] sm:$0xff]
      %v3067 = vld [vmem:[#allocation6 + $0xf0] sm:$0xff]
      %v3068 = vld [vmem:[#allocation6 + $0x100] sm:$0xff]
      %v3069 = vld [vmem:[#allocation6 + $0x110] sm:$0xff]
      %v3070 = vld [vmem:[%s3] sm:$0xff]
      %3072 = vset.pattern.permute.xlu0 10
      %3073 = vperm.xlu0 %3072, %v3070
      %v3074 = vpop.permute.xlu0 %3073
      %v3077 = vsel %vm472, %v2897, 0
      %3079 = vmatprep.subr.mxu0 0.0
      %3080 = vmatpush1.msra.mxu0 %v3052
      %3081 = vmatprep.subr.mxu0 0.0
      %3082 = vmatpush1.msra.mxu0 %v3053
      %3083 = vmatprep.subr.mxu0 0.0
      %3084 = vmatpush1.msra.mxu0 %v3054
      %3085 = vmatprep.subr.mxu0 0.0
      %3086 = vmatpush1.msra.mxu0 %v3055
      %3087 = vmatprep.subr.mxu0 0.0
      %3088 = vmatpush1.msra.mxu0 %v3056
      %3089 = vmatprep.subr.mxu0 0.0
      %3090 = vmatpush1.msra.mxu0 %v3057
      %3091 = vmatprep.subr.mxu0 0.0
      %3092 = vmatpush1.msra.mxu0 %v3058
      %3093 = vmatprep.subr.mxu0 0.0
      %3094 = vmatpush1.msra.mxu0 %v3059
      %3095 = vmatprep.subr.mxu0 0.0
      %3096 = vmatpush1.msra.mxu0 %v3060
      %3097 = vmatprep.subr.mxu0 0.0
      %3098 = vmatpush1.msra.mxu0 %v3061
      %3099 = vmatprep.subr.mxu0 0.0
      %3100 = vmatpush1.msra.mxu0 %v3062
      %3101 = vmatprep.subr.mxu0 0.0
      %3102 = vmatpush1.msra.mxu0 %v3063
      %3103 = vmatprep.subr.mxu0 0.0
      %3104 = vmatpush1.msra.mxu0 %v3064
      %3105 = vmatprep.subr.mxu0 0.0
      %3106 = vmatpush1.msra.mxu0 %v3065
      %3107 = vmatprep.subr.mxu0 0.0
      %3108 = vmatpush1.msra.mxu0 %v3066
      %3109 = vmatprep.subr.mxu0 0.0
      %3110 = vmatpush1.msra.mxu0 %v3067
      %3111 = vmatprep.subr.mxu0 0.0
      %3112 = vmatpush1.msra.mxu0 %v3068
      %3113 = vmatprep.subr.mxu0 0.0
      %3114 = vmatpush1.msra.mxu0 %v3069
      %3115 = vmatprep.subr.mxu0 0.0
      %3116 = vmatpush1.msra.mxu0 0.0
      %3117 = vmatprep.subr.mxu0 0.0
      %3118 = vmatpush1.msra.mxu0 0.0
      %3119 = vmatprep.subr.mxu0 0.0
      %3120 = vmatpush1.msra.mxu0 0.0
      %3121 = vmatprep.subr.mxu0 0.0
      %3122 = vmatpush1.msra.mxu0 0.0
      %3123 = vmatprep.subr.mxu0 0.0
      %3124 = vmatpush1.msra.mxu0 0.0
      %3125 = vmatprep.subr.mxu0 0.0
      %3126 = vmatpush1.msra.mxu0 0.0
      %3127 = vmatprep.subr.mxu0 0.0
      %3128 = vmatpush1.msra.mxu0 0.0
      %3129 = vmatprep.subr.mxu0 0.0
      %3130 = vmatpush1.msra.mxu0 0.0
      %3131 = vmatprep.subr.mxu0 0.0
      %3132 = vmatpush1.msra.mxu0 0.0
      %3133 = vmatprep.subr.mxu0 0.0
      %3134 = vmatpush1.msra.mxu0 0.0
      %3135 = vmatprep.subr.mxu0 0.0
      %3136 = vmatpush1.msra.mxu0 0.0
      %3137 = vmatprep.subr.mxu0 0.0
      %3138 = vmatpush1.msra.mxu0 0.0
      %3139 = vmatprep.subr.mxu0 0.0
      %3140 = vmatpush1.msra.mxu0 0.0
      %3141 = vmatprep.subr.mxu0 0.0
      %3142 = vmatpush1.msra.mxu0 0.0
      %3143 = vmatprep.mubr.f32.mxu0 %v3077
      %3144 = vmatmul.mubr.f32.gmra.mrb[0].mxu0 %v2896
      %v3145 = vpop.f32.mrb[0].mxu0
      %v3146 = vadd.f32 %v3074, %v3145
      %v3147 = vpop.f32.mrb[0].mxu0
      %3148 = vdwg.mxu0
      %v3149 = vmax.f32 %v3146, 0.0
      %s3150 = scalar_lea.vmem %s1, 72
      %v3151 = vld [vmem:[%s3150] sm:$0xff]
      %3152 = vst.msk [vmem:[#allocation3 + $0x8] sm:$0xff] %vm1113, %v3149
      %v3153 = vld [vmem:[#allocation3] sm:$0xff]
      %v3154 = vld [vmem:[#allocation3 + $0x8] sm:$0xff]
      %3157 = vrot.lane.b32.xlu0 %v3153, 9
      %v3158 = vpop.permute.xlu0 %3157
      %3159 = vrot.lane.b32.xlu0 %v3154, 9
      %v3160 = vpop.permute.xlu0 %3159
      %v3161 = vsel %vm1128, %v3158, %v3160
      %v3163 = vsel %vm1118, %v3161, 0.0
      %3164 = vst.msk [vmem:[#allocation6] sm:$0xff] %vm1113, %v3163
      %v3165 = vld [vmem:[#allocation3] sm:$0xff]
      %v3166 = vld [vmem:[#allocation3 + $0x8] sm:$0xff]
      %3169 = vrot.lane.b32.xlu0 %v3165, 8
      %v3170 = vpop.permute.xlu0 %3169
      %3171 = vrot.lane.b32.xlu0 %v3166, 8
      %v3172 = vpop.permute.xlu0 %3171
      %v3173 = vsel %vm1141, %v3170, %v3172
      %3175 = vst.msk [vmem:[#allocation6 + $0x10] sm:$0xff] %vm1113, %v3173
      %v3176 = vld [vmem:[#allocation3] sm:$0xff]
      %v3177 = vld [vmem:[#allocation3 + $0x8] sm:$0xff]
      %3180 = vrot.lane.b32.xlu0 %v3176, 7
      %v3181 = vpop.permute.xlu0 %3180
      %3182 = vrot.lane.b32.xlu0 %v3177, 7
      %v3183 = vpop.permute.xlu0 %3182
      %v3184 = vsel %vm1153, %v3181, %v3183
      %v3186 = vsel %vm1119, %v3184, 0.0
      %3187 = vst.msk [vmem:[#allocation6 + $0x20] sm:$0xff] %vm1113, %v3186
      %v3188 = vld [vmem:[#allocation3] sm:$0xff]
      %v3189 = vld [vmem:[#allocation3 + $0x8] sm:$0xff]
      %3192 = vrot.lane.b32.xlu0 %v3188, 1
      %v3193 = vpop.permute.xlu0 %3192
      %3194 = vrot.lane.b32.xlu0 %v3189, 1
      %v3195 = vpop.permute.xlu0 %3194
      %v3196 = vsel %vm512, %v3193, %v3195
      %v3198 = vsel %vm1118, %v3196, 0.0
      %3199 = vst.msk [vmem:[#allocation6 + $0x30] sm:$0xff] %vm1113, %v3198
      %v3200 = vld [vmem:[#allocation3 + $0x8] sm:$0xff]
      %3201 = vst.msk [vmem:[#allocation6 + $0x40] sm:$0xff] %vm1113, %v3200
      %v3202 = vld [vmem:[#allocation3 + $0x8] sm:$0xff]
      %3204 = vrot.lane.b32.xlu0 %v3202, 127
      %v3205 = vpop.permute.xlu0 %3204
      %v3207 = vsel %vm1119, %v3205, 0.0
      %3208 = vst.msk [vmem:[#allocation6 + $0x50] sm:$0xff] %vm1113, %v3207
      %v3209 = vld [vmem:[#allocation3 + $0x8] sm:$0xff]
      %3211 = vrot.lane.b32.xlu0 %v3209, 121
      %v3212 = vpop.permute.xlu0 %3211
      %v3214 = vsel %vm1118, %v3212, 0.0
      %3215 = vst.msk [vmem:[#allocation6 + $0x60] sm:$0xff] %vm1113, %v3214
      %v3216 = vld [vmem:[#allocation3 + $0x8] sm:$0xff]
      %3218 = vrot.lane.b32.xlu0 %v3216, 120
      %v3219 = vpop.permute.xlu0 %3218
      %3221 = vst.msk [vmem:[#allocation6 + $0x70] sm:$0xff] %vm1113, %v3219
      %v3222 = vld [vmem:[#allocation3 + $0x8] sm:$0xff]
      %3224 = vrot.lane.b32.xlu0 %v3222, 119
      %v3225 = vpop.permute.xlu0 %3224
      %v3227 = vsel %vm1119, %v3225, 0.0
      %3228 = vst.msk [vmem:[#allocation6 + $0x80] sm:$0xff] %vm1113, %v3227
      %v3229 = vld [vmem:[#allocation6] sm:$0xff]
      %v3230 = vld [vmem:[#allocation6 + $0x10] sm:$0xff]
      %v3231 = vld [vmem:[#allocation6 + $0x20] sm:$0xff]
      %v3232 = vld [vmem:[#allocation6 + $0x30] sm:$0xff]
      %v3233 = vld [vmem:[#allocation6 + $0x40] sm:$0xff]
      %v3234 = vld [vmem:[#allocation6 + $0x50] sm:$0xff]
      %v3235 = vld [vmem:[#allocation6 + $0x60] sm:$0xff]
      %v3236 = vld [vmem:[#allocation6 + $0x70] sm:$0xff]
      %v3237 = vld [vmem:[#allocation6 + $0x80] sm:$0xff]
      %v3238 = vld [vmem:[%s3] sm:$0xff]
      %3240 = vset.pattern.permute.xlu0 11
      %3241 = vperm.xlu0 %3240, %v3238
      %v3242 = vpop.permute.xlu0 %3241
      %v3245 = vsel %vm631, %v3151, 0
      %3247 = vmatprep.subr.mxu0 0.0
      %3248 = vmatpush1.msra.mxu0 %v3229
      %3249 = vmatprep.subr.mxu0 0.0
      %3250 = vmatpush1.msra.mxu0 %v3230
      %3251 = vmatprep.subr.mxu0 0.0
      %3252 = vmatpush1.msra.mxu0 %v3231
      %3253 = vmatprep.subr.mxu0 0.0
      %3254 = vmatpush1.msra.mxu0 %v3232
      %3255 = vmatprep.subr.mxu0 0.0
      %3256 = vmatpush1.msra.mxu0 %v3233
      %3257 = vmatprep.subr.mxu0 0.0
      %3258 = vmatpush1.msra.mxu0 %v3234
      %3259 = vmatprep.subr.mxu0 0.0
      %3260 = vmatpush1.msra.mxu0 %v3235
      %3261 = vmatprep.subr.mxu0 0.0
      %3262 = vmatpush1.msra.mxu0 %v3236
      %3263 = vmatprep.subr.mxu0 0.0
      %3264 = vmatpush1.msra.mxu0 %v3237
      %3265 = vmatprep.subr.mxu0 0.0
      %3266 = vmatpush1.msra.mxu0 0.0
      %3267 = vmatprep.subr.mxu0 0.0
      %3268 = vmatpush1.msra.mxu0 0.0
      %3269 = vmatprep.subr.mxu0 0.0
      %3270 = vmatpush1.msra.mxu0 0.0
      %3271 = vmatprep.subr.mxu0 0.0
      %3272 = vmatpush1.msra.mxu0 0.0
      %3273 = vmatprep.subr.mxu0 0.0
      %3274 = vmatpush1.msra.mxu0 0.0
      %3275 = vmatprep.subr.mxu0 0.0
      %3276 = vmatpush1.msra.mxu0 0.0
      %3277 = vmatprep.subr.mxu0 0.0
      %3278 = vmatpush1.msra.mxu0 0.0
      %3279 = vmatprep.subr.mxu0 0.0
      %3280 = vmatpush1.msra.mxu0 0.0
      %3281 = vmatprep.subr.mxu0 0.0
      %3282 = vmatpush1.msra.mxu0 0.0
      %3283 = vmatprep.subr.mxu0 0.0
      %3284 = vmatpush1.msra.mxu0 0.0
      %3285 = vmatprep.subr.mxu0 0.0
      %3286 = vmatpush1.msra.mxu0 0.0
      %3287 = vmatprep.subr.mxu0 0.0
      %3288 = vmatpush1.msra.mxu0 0.0
      %3289 = vmatprep.subr.mxu0 0.0
      %3290 = vmatpush1.msra.mxu0 0.0
      %3291 = vmatprep.subr.mxu0 0.0
      %3292 = vmatpush1.msra.mxu0 0.0
      %3293 = vmatprep.subr.mxu0 0.0
      %3294 = vmatpush1.msra.mxu0 0.0
      %3295 = vmatprep.subr.mxu0 0.0
      %3296 = vmatpush1.msra.mxu0 0.0
      %3297 = vmatprep.subr.mxu0 0.0
      %3298 = vmatpush1.msra.mxu0 0.0
      %3299 = vmatprep.subr.mxu0 0.0
      %3300 = vmatpush1.msra.mxu0 0.0
      %3301 = vmatprep.subr.mxu0 0.0
      %3302 = vmatpush1.msra.mxu0 0.0
      %3303 = vmatprep.subr.mxu0 0.0
      %3304 = vmatpush1.msra.mxu0 0.0
      %3305 = vmatprep.subr.mxu0 0.0
      %3306 = vmatpush1.msra.mxu0 0.0
      %3307 = vmatprep.subr.mxu0 0.0
      %3308 = vmatpush1.msra.mxu0 0.0
      %3309 = vmatprep.subr.mxu0 0.0
      %3310 = vmatpush1.msra.mxu0 0.0
      %3311 = vmatprep.mubr.f32.mxu0 0.0
      %3312 = vmatmul.mubr.f32.gmra.mrb[0].mxu0 %v3245
      %v3313 = vpop.f32.mrb[0].mxu0
      %v3314 = vadd.f32 %v3242, %v3313
      %v3315 = vpop.f32.mrb[0].mxu0
      %3316 = vdwg.mxu0
      %v3317 = vmax.f32 %v3314, 0.0
      %v3318 = vld [vmem:[%s8] sm:$0xff]
      %v3319 = vld [vmem:[%s8 + $0x8] sm:$0xff]
      %v3320 = vld [vmem:[%s8 + $0x10] sm:$0xff]
      %v3321 = vld [vmem:[%s8 + $0x18] sm:$0xff]
      %v3322 = vld [vmem:[%s8 + $0x20] sm:$0xff]
      %v3323 = vld [vmem:[%s8 + $0x28] sm:$0xff]
      %v3324 = vld [vmem:[%s8 + $0x30] sm:$0xff]
      %v3325 = vld [vmem:[%s8 + $0x38] sm:$0xff]
      %v3326 = vld [vmem:[%s8 + $0x40] sm:$0xff]
      %v3327 = vld [vmem:[%s8 + $0x48] sm:$0xff]
      %v3328 = vld [vmem:[%s8 + $0x50] sm:$0xff]
      %v3329 = vld [vmem:[%s8 + $0x58] sm:$0xff]
      %v3330 = vld [vmem:[%s8 + $0x60] sm:$0xff]
      %v3331 = vld [vmem:[%s8 + $0x68] sm:$0xff]
      %v3332 = vld [vmem:[%s8 + $0x70] sm:$0xff]
      %v3333 = vld [vmem:[%s8 + $0x78] sm:$0xff]
      %v3335 = vsel %vm1113, %v3317, 0
      %3337 = vmatprep.subr.mxu0 %v3319
      %3338 = vmatpush1.msra.mxu0 %v3318
      %3339 = vmatprep.subr.mxu0 %v3321
      %3340 = vmatpush1.msra.mxu0 %v3320
      %3341 = vmatprep.subr.mxu0 %v3323
      %3342 = vmatpush1.msra.mxu0 %v3322
      %3343 = vmatprep.subr.mxu0 %v3325
      %3344 = vmatpush1.msra.mxu0 %v3324
      %3345 = vmatprep.subr.mxu0 %v3327
      %3346 = vmatpush1.msra.mxu0 %v3326
      %3347 = vmatprep.subr.mxu0 %v3329
      %3348 = vmatpush1.msra.mxu0 %v3328
      %3349 = vmatprep.subr.mxu0 %v3331
      %3350 = vmatpush1.msra.mxu0 %v3330
      %3351 = vmatprep.subr.mxu0 %v3333
      %3352 = vmatpush1.msra.mxu0 %v3332
      %3353 = vmatprep.subr.mxu0 0.0
      %3354 = vmatpush1.msra.mxu0 0.0
      %3355 = vmatprep.subr.mxu0 0.0
      %3356 = vmatpush1.msra.mxu0 0.0
      %3357 = vmatprep.subr.mxu0 0.0
      %3358 = vmatpush1.msra.mxu0 0.0
      %3359 = vmatprep.subr.mxu0 0.0
      %3360 = vmatpush1.msra.mxu0 0.0
      %3361 = vmatprep.subr.mxu0 0.0
      %3362 = vmatpush1.msra.mxu0 0.0
      %3363 = vmatprep.subr.mxu0 0.0
      %3364 = vmatpush1.msra.mxu0 0.0
      %3365 = vmatprep.subr.mxu0 0.0
      %3366 = vmatpush1.msra.mxu0 0.0
      %3367 = vmatprep.subr.mxu0 0.0
      %3368 = vmatpush1.msra.mxu0 0.0
      %3369 = vmatprep.subr.mxu0 0.0
      %3370 = vmatpush1.msra.mxu0 0.0
      %3371 = vmatprep.subr.mxu0 0.0
      %3372 = vmatpush1.msra.mxu0 0.0
      %3373 = vmatprep.subr.mxu0 0.0
      %3374 = vmatpush1.msra.mxu0 0.0
      %3375 = vmatprep.subr.mxu0 0.0
      %3376 = vmatpush1.msra.mxu0 0.0
      %3377 = vmatprep.subr.mxu0 0.0
      %3378 = vmatpush1.msra.mxu0 0.0
      %3379 = vmatprep.subr.mxu0 0.0
      %3380 = vmatpush1.msra.mxu0 0.0
      %3381 = vmatprep.subr.mxu0 0.0
      %3382 = vmatpush1.msra.mxu0 0.0
      %3383 = vmatprep.subr.mxu0 0.0
      %3384 = vmatpush1.msra.mxu0 0.0
      %3385 = vmatprep.subr.mxu0 0.0
      %3386 = vmatpush1.msra.mxu0 0.0
      %3387 = vmatprep.subr.mxu0 0.0
      %3388 = vmatpush1.msra.mxu0 0.0
      %3389 = vmatprep.subr.mxu0 0.0
      %3390 = vmatpush1.msra.mxu0 0.0
      %3391 = vmatprep.subr.mxu0 0.0
      %3392 = vmatpush1.msra.mxu0 0.0
      %3393 = vmatprep.subr.mxu0 0.0
      %3394 = vmatpush1.msra.mxu0 0.0
      %3395 = vmatprep.subr.mxu0 0.0
      %3396 = vmatpush1.msra.mxu0 0.0
      %3397 = vmatprep.subr.mxu0 0.0
      %3398 = vmatpush1.msra.mxu0 0.0
      %3399 = vmatprep.subr.mxu0 0.0
      %3400 = vmatpush1.msra.mxu0 0.0
      %3401 = vmatprep.mubr.f32.mxu0 0.0
      %3402 = vmatmul.mubr.f32.gmra.mrb[0].mxu0 %v3335
      %v3403 = vpop.f32.mrb[0].mxu0
      %v3404 = vadd.f32 0.0, %v3403
      %v3405 = vpop.f32.mrb[0].mxu0
      %v3406 = vadd.f32 0.0, %v3405
      %3407 = vdwg.mxu0
      %s3408 = scalar_lea.vmem %s2, 32
      %v3409 = vld [vmem:[%s3408] sm:$0xff]
      %v3410 = vld [vmem:[%s3408 + $0x8] sm:$0xff]
      %3411 = vst [vmem:[#allocation2 + $0x8] sm:$0xff] %v3404
      %3412 = vst [vmem:[#allocation2 + $0x10] sm:$0xff] %v3406
      %v3413 = vld [vmem:[#allocation2] sm:$0xff]
      %v3414 = vld [vmem:[#allocation2 + $0x8] sm:$0xff]
      %v3415 = vld [vmem:[#allocation2 + $0x10] sm:$0xff]
      %3419 = vrot.lane.b32.xlu0 %v3413, 17
      %v3420 = vpop.permute.xlu0 %3419
      %3421 = vrot.lane.b32.xlu0 %v3414, 17
      %v3422 = vpop.permute.xlu0 %3421
      %3423 = vrot.lane.b32.xlu0 %v3415, 17
      %v3424 = vpop.permute.xlu0 %3423
      %v3425 = vsel %vm415, %v3420, %v3422
      %v3426 = vsel %vm415, %v3422, %v3424
      %v3429 = vsel %vm436, %v3425, 0.0
      %v3430 = vsel %vm437, %v3426, 0.0
      %3431 = vst [vmem:[#allocation6] sm:$0xff] %v3429
      %3432 = vst [vmem:[#allocation6 + $0x8] sm:$0xff] %v3430
      %v3433 = vld [vmem:[#allocation2] sm:$0xff]
      %v3434 = vld [vmem:[#allocation2 + $0x8] sm:$0xff]
      %v3435 = vld [vmem:[#allocation2 + $0x10] sm:$0xff]
      %3439 = vrot.lane.b32.xlu0 %v3433, 16
      %v3440 = vpop.permute.xlu0 %3439
      %3441 = vrot.lane.b32.xlu0 %v3434, 16
      %v3442 = vpop.permute.xlu0 %3441
      %3443 = vrot.lane.b32.xlu0 %v3435, 16
      %v3444 = vpop.permute.xlu0 %3443
      %v3445 = vsel %vm472, %v3440, %v3442
      %v3446 = vsel %vm472, %v3442, %v3444
      %3449 = vst [vmem:[#allocation6 + $0x10] sm:$0xff] %v3445
      %3450 = vst [vmem:[#allocation6 + $0x18] sm:$0xff] %v3446
      %v3451 = vld [vmem:[#allocation2] sm:$0xff]
      %v3452 = vld [vmem:[#allocation2 + $0x8] sm:$0xff]
      %v3453 = vld [vmem:[#allocation2 + $0x10] sm:$0xff]
      %3457 = vrot.lane.b32.xlu0 %v3451, 15
      %v3458 = vpop.permute.xlu0 %3457
      %3459 = vrot.lane.b32.xlu0 %v3452, 15
      %v3460 = vpop.permute.xlu0 %3459
      %3461 = vrot.lane.b32.xlu0 %v3453, 15
      %v3462 = vpop.permute.xlu0 %3461
      %v3463 = vsel %vm491, %v3458, %v3460
      %v3464 = vsel %vm491, %v3460, %v3462
      %v3467 = vsel %vm438, %v3463, 0.0
      %v3468 = vsel %vm439, %v3464, 0.0
      %3469 = vst [vmem:[#allocation6 + $0x20] sm:$0xff] %v3467
      %3470 = vst [vmem:[#allocation6 + $0x28] sm:$0xff] %v3468
      %v3471 = vld [vmem:[#allocation2] sm:$0xff]
      %v3472 = vld [vmem:[#allocation2 + $0x8] sm:$0xff]
      %v3473 = vld [vmem:[#allocation2 + $0x10] sm:$0xff]
      %3477 = vrot.lane.b32.xlu0 %v3471, 1
      %v3478 = vpop.permute.xlu0 %3477
      %3479 = vrot.lane.b32.xlu0 %v3472, 1
      %v3480 = vpop.permute.xlu0 %3479
      %3481 = vrot.lane.b32.xlu0 %v3473, 1
      %v3482 = vpop.permute.xlu0 %3481
      %v3483 = vsel %vm512, %v3478, %v3480
      %v3484 = vsel %vm512, %v3480, %v3482
      %v3487 = vsel %vm436, %v3483, 0.0
      %v3488 = vsel %vm437, %v3484, 0.0
      %3489 = vst [vmem:[#allocation6 + $0x30] sm:$0xff] %v3487
      %3490 = vst [vmem:[#allocation6 + $0x38] sm:$0xff] %v3488
      %v3491 = vld [vmem:[#allocation2 + $0x8] sm:$0xff]
      %v3492 = vld [vmem:[#allocation2 + $0x10] sm:$0xff]
      %3493 = vst [vmem:[#allocation6 + $0x40] sm:$0xff] %v3491
      %3494 = vst [vmem:[#allocation6 + $0x48] sm:$0xff] %v3492
      %v3495 = vld [vmem:[#allocation2 + $0x8] sm:$0xff]
      %v3496 = vld [vmem:[#allocation2 + $0x10] sm:$0xff]
      %v3497 = vld [vmem:[#allocation2 + $0x18] sm:$0xff]
      %3501 = vrot.lane.b32.xlu0 %v3495, 127
      %v3502 = vpop.permute.xlu0 %3501
      %3503 = vrot.lane.b32.xlu0 %v3496, 127
      %v3504 = vpop.permute.xlu0 %3503
      %3505 = vrot.lane.b32.xlu0 %v3497, 127
      %v3506 = vpop.permute.xlu0 %3505
      %v3507 = vsel %vm537, %v3502, %v3504
      %v3508 = vsel %vm537, %v3504, %v3506
      %v3511 = vsel %vm438, %v3507, 0.0
      %v3512 = vsel %vm439, %v3508, 0.0
      %3513 = vst [vmem:[#allocation6 + $0x50] sm:$0xff] %v3511
      %3514 = vst [vmem:[#allocation6 + $0x58] sm:$0xff] %v3512
      %v3515 = vld [vmem:[#allocation2 + $0x8] sm:$0xff]
      %v3516 = vld [vmem:[#allocation2 + $0x10] sm:$0xff]
      %v3517 = vld [vmem:[#allocation2 + $0x18] sm:$0xff]
      %3521 = vrot.lane.b32.xlu0 %v3515, 113
      %v3522 = vpop.permute.xlu0 %3521
      %3523 = vrot.lane.b32.xlu0 %v3516, 113
      %v3524 = vpop.permute.xlu0 %3523
      %3525 = vrot.lane.b32.xlu0 %v3517, 113
      %v3526 = vpop.permute.xlu0 %3525
      %v3527 = vsel %vm558, %v3522, %v3524
      %v3528 = vsel %vm558, %v3524, %v3526
      %v3531 = vsel %vm436, %v3527, 0.0
      %v3532 = vsel %vm437, %v3528, 0.0
      %3533 = vst [vmem:[#allocation6 + $0x60] sm:$0xff] %v3531
      %3534 = vst [vmem:[#allocation6 + $0x68] sm:$0xff] %v3532
      %v3535 = vld [vmem:[#allocation2 + $0x8] sm:$0xff]
      %v3536 = vld [vmem:[#allocation2 + $0x10] sm:$0xff]
      %v3537 = vld [vmem:[#allocation2 + $0x18] sm:$0xff]
      %3541 = vrot.lane.b32.xlu0 %v3535, 112
      %v3542 = vpop.permute.xlu0 %3541
      %3543 = vrot.lane.b32.xlu0 %v3536, 112
      %v3544 = vpop.permute.xlu0 %3543
      %3545 = vrot.lane.b32.xlu0 %v3537, 112
      %v3546 = vpop.permute.xlu0 %3545
      %v3547 = vsel %vm579, %v3542, %v3544
      %v3548 = vsel %vm579, %v3544, %v3546
      %3551 = vst [vmem:[#allocation6 + $0x70] sm:$0xff] %v3547
      %3552 = vst [vmem:[#allocation6 + $0x78] sm:$0xff] %v3548
      %v3553 = vld [vmem:[#allocation2 + $0x8] sm:$0xff]
      %v3554 = vld [vmem:[#allocation2 + $0x10] sm:$0xff]
      %v3555 = vld [vmem:[#allocation2 + $0x18] sm:$0xff]
      %3559 = vrot.lane.b32.xlu0 %v3553, 111
      %v3560 = vpop.permute.xlu0 %3559
      %3561 = vrot.lane.b32.xlu0 %v3554, 111
      %v3562 = vpop.permute.xlu0 %3561
      %3563 = vrot.lane.b32.xlu0 %v3555, 111
      %v3564 = vpop.permute.xlu0 %3563
      %v3565 = vsel %vm598, %v3560, %v3562
      %v3566 = vsel %vm598, %v3562, %v3564
      %v3569 = vsel %vm438, %v3565, 0.0
      %v3570 = vsel %vm439, %v3566, 0.0
      %3571 = vst [vmem:[#allocation6 + $0x80] sm:$0xff] %v3569
      %3572 = vst [vmem:[#allocation6 + $0x88] sm:$0xff] %v3570
      %3573 = vst [vmem:[#allocation2 + $0x8] sm:$0xff] %v970
      %3574 = vst [vmem:[#allocation2 + $0x10] sm:$0xff] %v971
      %v3575 = vld [vmem:[#allocation2] sm:$0xff]
      %v3576 = vld [vmem:[#allocation2 + $0x8] sm:$0xff]
      %v3577 = vld [vmem:[#allocation2 + $0x10] sm:$0xff]
      %3581 = vrot.lane.b32.xlu0 %v3575, 17
      %v3582 = vpop.permute.xlu0 %3581
      %3583 = vrot.lane.b32.xlu0 %v3576, 17
      %v3584 = vpop.permute.xlu0 %3583
      %3585 = vrot.lane.b32.xlu0 %v3577, 17
      %v3586 = vpop.permute.xlu0 %3585
      %v3587 = vsel %vm415, %v3582, %v3584
      %v3588 = vsel %vm415, %v3584, %v3586
      %v3591 = vsel %vm436, %v3587, 0.0
      %v3592 = vsel %vm437, %v3588, 0.0
      %3593 = vst [vmem:[#allocation6 + $0x90] sm:$0xff] %v3591
      %3594 = vst [vmem:[#allocation6 + $0x98] sm:$0xff] %v3592
      %v3595 = vld [vmem:[#allocation2] sm:$0xff]
      %v3596 = vld [vmem:[#allocation2 + $0x8] sm:$0xff]
      %v3597 = vld [vmem:[#allocation2 + $0x10] sm:$0xff]
      %3601 = vrot.lane.b32.xlu0 %v3595, 16
      %v3602 = vpop.permute.xlu0 %3601
      %3603 = vrot.lane.b32.xlu0 %v3596, 16
      %v3604 = vpop.permute.xlu0 %3603
      %3605 = vrot.lane.b32.xlu0 %v3597, 16
      %v3606 = vpop.permute.xlu0 %3605
      %v3607 = vsel %vm472, %v3602, %v3604
      %v3608 = vsel %vm472, %v3604, %v3606
      %3611 = vst [vmem:[#allocation6 + $0xa0] sm:$0xff] %v3607
      %3612 = vst [vmem:[#allocation6 + $0xa8] sm:$0xff] %v3608
      %v3613 = vld [vmem:[#allocation2] sm:$0xff]
      %v3614 = vld [vmem:[#allocation2 + $0x8] sm:$0xff]
      %v3615 = vld [vmem:[#allocation2 + $0x10] sm:$0xff]
      %3619 = vrot.lane.b32.xlu0 %v3613, 15
      %v3620 = vpop.permute.xlu0 %3619
      %3621 = vrot.lane.b32.xlu0 %v3614, 15
      %v3622 = vpop.permute.xlu0 %3621
      %3623 = vrot.lane.b32.xlu0 %v3615, 15
      %v3624 = vpop.permute.xlu0 %3623
      %v3625 = vsel %vm491, %v3620, %v3622
      %v3626 = vsel %vm491, %v3622, %v3624
      %v3629 = vsel %vm438, %v3625, 0.0
      %v3630 = vsel %vm439, %v3626, 0.0
      %3631 = vst [vmem:[#allocation6 + $0xb0] sm:$0xff] %v3629
      %3632 = vst [vmem:[#allocation6 + $0xb8] sm:$0xff] %v3630
      %v3633 = vld [vmem:[#allocation2] sm:$0xff]
      %v3634 = vld [vmem:[#allocation2 + $0x8] sm:$0xff]
      %v3635 = vld [vmem:[#allocation2 + $0x10] sm:$0xff]
      %3639 = vrot.lane.b32.xlu0 %v3633, 1
      %v3640 = vpop.permute.xlu0 %3639
      %3641 = vrot.lane.b32.xlu0 %v3634, 1
      %v3642 = vpop.permute.xlu0 %3641
      %3643 = vrot.lane.b32.xlu0 %v3635, 1
      %v3644 = vpop.permute.xlu0 %3643
      %v3645 = vsel %vm512, %v3640, %v3642
      %v3646 = vsel %vm512, %v3642, %v3644
      %v3649 = vsel %vm436, %v3645, 0.0
      %v3650 = vsel %vm437, %v3646, 0.0
      %3651 = vst [vmem:[#allocation6 + $0xc0] sm:$0xff] %v3649
      %3652 = vst [vmem:[#allocation6 + $0xc8] sm:$0xff] %v3650
      %v3653 = vld [vmem:[#allocation2 + $0x8] sm:$0xff]
      %v3654 = vld [vmem:[#allocation2 + $0x10] sm:$0xff]
      %3655 = vst [vmem:[#allocation6 + $0xd0] sm:$0xff] %v3653
      %3656 = vst [vmem:[#allocation6 + $0xd8] sm:$0xff] %v3654
      %v3657 = vld [vmem:[#allocation2 + $0x8] sm:$0xff]
      %v3658 = vld [vmem:[#allocation2 + $0x10] sm:$0xff]
      %v3659 = vld [vmem:[#allocation2 + $0x18] sm:$0xff]
      %3663 = vrot.lane.b32.xlu0 %v3657, 127
      %v3664 = vpop.permute.xlu0 %3663
      %3665 = vrot.lane.b32.xlu0 %v3658, 127
      %v3666 = vpop.permute.xlu0 %3665
      %3667 = vrot.lane.b32.xlu0 %v3659, 127
      %v3668 = vpop.permute.xlu0 %3667
      %v3669 = vsel %vm537, %v3664, %v3666
      %v3670 = vsel %vm537, %v3666, %v3668
      %v3673 = vsel %vm438, %v3669, 0.0
      %v3674 = vsel %vm439, %v3670, 0.0
      %3675 = vst [vmem:[#allocation6 + $0xe0] sm:$0xff] %v3673
      %3676 = vst [vmem:[#allocation6 + $0xe8] sm:$0xff] %v3674
      %v3677 = vld [vmem:[#allocation2 + $0x8] sm:$0xff]
      %v3678 = vld [vmem:[#allocation2 + $0x10] sm:$0xff]
      %v3679 = vld [vmem:[#allocation2 + $0x18] sm:$0xff]
      %3683 = vrot.lane.b32.xlu0 %v3677, 113
      %v3684 = vpop.permute.xlu0 %3683
      %3685 = vrot.lane.b32.xlu0 %v3678, 113
      %v3686 = vpop.permute.xlu0 %3685
      %3687 = vrot.lane.b32.xlu0 %v3679, 113
      %v3688 = vpop.permute.xlu0 %3687
      %v3689 = vsel %vm558, %v3684, %v3686
      %v3690 = vsel %vm558, %v3686, %v3688
      %v3693 = vsel %vm436, %v3689, 0.0
      %v3694 = vsel %vm437, %v3690, 0.0
      %3695 = vst [vmem:[#allocation6 + $0xf0] sm:$0xff] %v3693
      %3696 = vst [vmem:[#allocation6 + $0xf8] sm:$0xff] %v3694
      %v3697 = vld [vmem:[#allocation2 + $0x8] sm:$0xff]
      %v3698 = vld [vmem:[#allocation2 + $0x10] sm:$0xff]
      %v3699 = vld [vmem:[#allocation2 + $0x18] sm:$0xff]
      %3703 = vrot.lane.b32.xlu0 %v3697, 112
      %v3704 = vpop.permute.xlu0 %3703
      %3705 = vrot.lane.b32.xlu0 %v3698, 112
      %v3706 = vpop.permute.xlu0 %3705
      %3707 = vrot.lane.b32.xlu0 %v3699, 112
      %v3708 = vpop.permute.xlu0 %3707
      %v3709 = vsel %vm579, %v3704, %v3706
      %v3710 = vsel %vm579, %v3706, %v3708
      %3713 = vst [vmem:[#allocation6 + $0x100] sm:$0xff] %v3709
      %3714 = vst [vmem:[#allocation6 + $0x108] sm:$0xff] %v3710
      %v3715 = vld [vmem:[#allocation2 + $0x8] sm:$0xff]
      %v3716 = vld [vmem:[#allocation2 + $0x10] sm:$0xff]
      %v3717 = vld [vmem:[#allocation2 + $0x18] sm:$0xff]
      %3721 = vrot.lane.b32.xlu0 %v3715, 111
      %v3722 = vpop.permute.xlu0 %3721
      %3723 = vrot.lane.b32.xlu0 %v3716, 111
      %v3724 = vpop.permute.xlu0 %3723
      %3725 = vrot.lane.b32.xlu0 %v3717, 111
      %v3726 = vpop.permute.xlu0 %3725
      %v3727 = vsel %vm598, %v3722, %v3724
      %v3728 = vsel %vm598, %v3724, %v3726
      %v3731 = vsel %vm438, %v3727, 0.0
      %v3732 = vsel %vm439, %v3728, 0.0
      %3733 = vst [vmem:[#allocation6 + $0x110] sm:$0xff] %v3731
      %3734 = vst [vmem:[#allocation6 + $0x118] sm:$0xff] %v3732
      %v3735 = vld [vmem:[#allocation6] sm:$0xff]
      %v3736 = vld [vmem:[#allocation6 + $0x8] sm:$0xff]
      %v3737 = vld [vmem:[#allocation6 + $0x10] sm:$0xff]
      %v3738 = vld [vmem:[#allocation6 + $0x18] sm:$0xff]
      %v3739 = vld [vmem:[#allocation6 + $0x20] sm:$0xff]
      %v3740 = vld [vmem:[#allocation6 + $0x28] sm:$0xff]
      %v3741 = vld [vmem:[#allocation6 + $0x30] sm:$0xff]
      %v3742 = vld [vmem:[#allocation6 + $0x38] sm:$0xff]
      %v3743 = vld [vmem:[#allocation6 + $0x40] sm:$0xff]
      %v3744 = vld [vmem:[#allocation6 + $0x48] sm:$0xff]
      %v3745 = vld [vmem:[#allocation6 + $0x50] sm:$0xff]
      %v3746 = vld [vmem:[#allocation6 + $0x58] sm:$0xff]
      %v3747 = vld [vmem:[#allocation6 + $0x60] sm:$0xff]
      %v3748 = vld [vmem:[#allocation6 + $0x68] sm:$0xff]
      %v3749 = vld [vmem:[#allocation6 + $0x70] sm:$0xff]
      %v3750 = vld [vmem:[#allocation6 + $0x78] sm:$0xff]
      %v3751 = vld [vmem:[#allocation6 + $0x80] sm:$0xff]
      %v3752 = vld [vmem:[#allocation6 + $0x88] sm:$0xff]
      %v3753 = vld [vmem:[#allocation6 + $0x90] sm:$0xff]
      %v3754 = vld [vmem:[#allocation6 + $0x98] sm:$0xff]
      %v3755 = vld [vmem:[#allocation6 + $0xa0] sm:$0xff]
      %v3756 = vld [vmem:[#allocation6 + $0xa8] sm:$0xff]
      %v3757 = vld [vmem:[#allocation6 + $0xb0] sm:$0xff]
      %v3758 = vld [vmem:[#allocation6 + $0xb8] sm:$0xff]
      %v3759 = vld [vmem:[#allocation6 + $0xc0] sm:$0xff]
      %v3760 = vld [vmem:[#allocation6 + $0xc8] sm:$0xff]
      %v3761 = vld [vmem:[#allocation6 + $0xd0] sm:$0xff]
      %v3762 = vld [vmem:[#allocation6 + $0xd8] sm:$0xff]
      %v3763 = vld [vmem:[#allocation6 + $0xe0] sm:$0xff]
      %v3764 = vld [vmem:[#allocation6 + $0xe8] sm:$0xff]
      %v3765 = vld [vmem:[#allocation6 + $0xf0] sm:$0xff]
      %v3766 = vld [vmem:[#allocation6 + $0xf8] sm:$0xff]
      %v3767 = vld [vmem:[#allocation6 + $0x100] sm:$0xff]
      %v3768 = vld [vmem:[#allocation6 + $0x108] sm:$0xff]
      %v3769 = vld [vmem:[#allocation6 + $0x110] sm:$0xff]
      %v3770 = vld [vmem:[#allocation6 + $0x118] sm:$0xff]
      %v3771 = vld [vmem:[%s3] sm:$0xff]
      %3773 = vset.pattern.permute.xlu0 12
      %3774 = vperm.xlu0 %3773, %v3771
      %v3775 = vpop.permute.xlu0 %3774
      %v3778 = vsel %vm472, %v3410, 0
      %3780 = vmatprep.subr.mxu0 %v3736
      %3781 = vmatpush1.msra.mxu0 %v3735
      %3782 = vmatprep.subr.mxu0 %v3738
      %3783 = vmatpush1.msra.mxu0 %v3737
      %3784 = vmatprep.subr.mxu0 %v3740
      %3785 = vmatpush1.msra.mxu0 %v3739
      %3786 = vmatprep.subr.mxu0 %v3742
      %3787 = vmatpush1.msra.mxu0 %v3741
      %3788 = vmatprep.subr.mxu0 %v3744
      %3789 = vmatpush1.msra.mxu0 %v3743
      %3790 = vmatprep.subr.mxu0 %v3746
      %3791 = vmatpush1.msra.mxu0 %v3745
      %3792 = vmatprep.subr.mxu0 %v3748
      %3793 = vmatpush1.msra.mxu0 %v3747
      %3794 = vmatprep.subr.mxu0 %v3750
      %3795 = vmatpush1.msra.mxu0 %v3749
      %3796 = vmatprep.subr.mxu0 %v3752
      %3797 = vmatpush1.msra.mxu0 %v3751
      %3798 = vmatprep.subr.mxu0 %v3754
      %3799 = vmatpush1.msra.mxu0 %v3753
      %3800 = vmatprep.subr.mxu0 %v3756
      %3801 = vmatpush1.msra.mxu0 %v3755
      %3802 = vmatprep.subr.mxu0 %v3758
      %3803 = vmatpush1.msra.mxu0 %v3757
      %3804 = vmatprep.subr.mxu0 %v3760
      %3805 = vmatpush1.msra.mxu0 %v3759
      %3806 = vmatprep.subr.mxu0 %v3762
      %3807 = vmatpush1.msra.mxu0 %v3761
      %3808 = vmatprep.subr.mxu0 %v3764
      %3809 = vmatpush1.msra.mxu0 %v3763
      %3810 = vmatprep.subr.mxu0 %v3766
      %3811 = vmatpush1.msra.mxu0 %v3765
      %3812 = vmatprep.subr.mxu0 %v3768
      %3813 = vmatpush1.msra.mxu0 %v3767
      %3814 = vmatprep.subr.mxu0 %v3770
      %3815 = vmatpush1.msra.mxu0 %v3769
      %3816 = vmatprep.subr.mxu0 0.0
      %3817 = vmatpush1.msra.mxu0 0.0
      %3818 = vmatprep.subr.mxu0 0.0
      %3819 = vmatpush1.msra.mxu0 0.0
      %3820 = vmatprep.subr.mxu0 0.0
      %3821 = vmatpush1.msra.mxu0 0.0
      %3822 = vmatprep.subr.mxu0 0.0
      %3823 = vmatpush1.msra.mxu0 0.0
      %3824 = vmatprep.subr.mxu0 0.0
      %3825 = vmatpush1.msra.mxu0 0.0
      %3826 = vmatprep.subr.mxu0 0.0
      %3827 = vmatpush1.msra.mxu0 0.0
      %3828 = vmatprep.subr.mxu0 0.0
      %3829 = vmatpush1.msra.mxu0 0.0
      %3830 = vmatprep.subr.mxu0 0.0
      %3831 = vmatpush1.msra.mxu0 0.0
      %3832 = vmatprep.subr.mxu0 0.0
      %3833 = vmatpush1.msra.mxu0 0.0
      %3834 = vmatprep.subr.mxu0 0.0
      %3835 = vmatpush1.msra.mxu0 0.0
      %3836 = vmatprep.subr.mxu0 0.0
      %3837 = vmatpush1.msra.mxu0 0.0
      %3838 = vmatprep.subr.mxu0 0.0
      %3839 = vmatpush1.msra.mxu0 0.0
      %3840 = vmatprep.subr.mxu0 0.0
      %3841 = vmatpush1.msra.mxu0 0.0
      %3842 = vmatprep.subr.mxu0 0.0
      %3843 = vmatpush1.msra.mxu0 0.0
      %3844 = vmatprep.mubr.f32.mxu0 %v3778
      %3845 = vmatmul.mubr.f32.gmra.mrb[0].mxu0 %v3409
      %v3846 = vpop.f32.mrb[0].mxu0
      %v3847 = vadd.f32 %v3775, %v3846
      %v3848 = vpop.f32.mrb[0].mxu0
      %v3849 = vadd.f32 %v3775, %v3848
      %3850 = vdwg.mxu0
      %v3851 = vmax.f32 %v3847, 0.0
      %v3852 = vmax.f32 %v3849, 0.0
      %s3853 = scalar_lea.vmem %s1, 80
      %v3854 = vld [vmem:[%s3853] sm:$0xff]
      %3855 = vst [vmem:[#allocation2 + $0x8] sm:$0xff] %v3851
      %3856 = vst [vmem:[#allocation2 + $0x10] sm:$0xff] %v3852
      %v3857 = vld [vmem:[#allocation2] sm:$0xff]
      %v3858 = vld [vmem:[#allocation2 + $0x8] sm:$0xff]
      %v3859 = vld [vmem:[#allocation2 + $0x10] sm:$0xff]
      %3863 = vrot.lane.b32.xlu0 %v3857, 17
      %v3864 = vpop.permute.xlu0 %3863
      %3865 = vrot.lane.b32.xlu0 %v3858, 17
      %v3866 = vpop.permute.xlu0 %3865
      %3867 = vrot.lane.b32.xlu0 %v3859, 17
      %v3868 = vpop.permute.xlu0 %3867
      %v3869 = vsel %vm415, %v3864, %v3866
      %v3870 = vsel %vm415, %v3866, %v3868
      %v3873 = vsel %vm436, %v3869, 0.0
      %v3874 = vsel %vm437, %v3870, 0.0
      %3875 = vst [vmem:[#allocation6] sm:$0xff] %v3873
      %3876 = vst [vmem:[#allocation6 + $0x8] sm:$0xff] %v3874
      %v3877 = vld [vmem:[#allocation2] sm:$0xff]
      %v3878 = vld [vmem:[#allocation2 + $0x8] sm:$0xff]
      %v3879 = vld [vmem:[#allocation2 + $0x10] sm:$0xff]
      %3883 = vrot.lane.b32.xlu0 %v3877, 16
      %v3884 = vpop.permute.xlu0 %3883
      %3885 = vrot.lane.b32.xlu0 %v3878, 16
      %v3886 = vpop.permute.xlu0 %3885
      %3887 = vrot.lane.b32.xlu0 %v3879, 16
      %v3888 = vpop.permute.xlu0 %3887
      %v3889 = vsel %vm472, %v3884, %v3886
      %v3890 = vsel %vm472, %v3886, %v3888
      %3893 = vst [vmem:[#allocation6 + $0x10] sm:$0xff] %v3889
      %3894 = vst [vmem:[#allocation6 + $0x18] sm:$0xff] %v3890
      %v3895 = vld [vmem:[#allocation2] sm:$0xff]
      %v3896 = vld [vmem:[#allocation2 + $0x8] sm:$0xff]
      %v3897 = vld [vmem:[#allocation2 + $0x10] sm:$0xff]
      %3901 = vrot.lane.b32.xlu0 %v3895, 15
      %v3902 = vpop.permute.xlu0 %3901
      %3903 = vrot.lane.b32.xlu0 %v3896, 15
      %v3904 = vpop.permute.xlu0 %3903
      %3905 = vrot.lane.b32.xlu0 %v3897, 15
      %v3906 = vpop.permute.xlu0 %3905
      %v3907 = vsel %vm491, %v3902, %v3904
      %v3908 = vsel %vm491, %v3904, %v3906
      %v3911 = vsel %vm438, %v3907, 0.0
      %v3912 = vsel %vm439, %v3908, 0.0
      %3913 = vst [vmem:[#allocation6 + $0x20] sm:$0xff] %v3911
      %3914 = vst [vmem:[#allocation6 + $0x28] sm:$0xff] %v3912
      %v3915 = vld [vmem:[#allocation2] sm:$0xff]
      %v3916 = vld [vmem:[#allocation2 + $0x8] sm:$0xff]
      %v3917 = vld [vmem:[#allocation2 + $0x10] sm:$0xff]
      %3921 = vrot.lane.b32.xlu0 %v3915, 1
      %v3922 = vpop.permute.xlu0 %3921
      %3923 = vrot.lane.b32.xlu0 %v3916, 1
      %v3924 = vpop.permute.xlu0 %3923
      %3925 = vrot.lane.b32.xlu0 %v3917, 1
      %v3926 = vpop.permute.xlu0 %3925
      %v3927 = vsel %vm512, %v3922, %v3924
      %v3928 = vsel %vm512, %v3924, %v3926
      %v3931 = vsel %vm436, %v3927, 0.0
      %v3932 = vsel %vm437, %v3928, 0.0
      %3933 = vst [vmem:[#allocation6 + $0x30] sm:$0xff] %v3931
      %3934 = vst [vmem:[#allocation6 + $0x38] sm:$0xff] %v3932
      %v3935 = vld [vmem:[#allocation2 + $0x8] sm:$0xff]
      %v3936 = vld [vmem:[#allocation2 + $0x10] sm:$0xff]
      %3937 = vst [vmem:[#allocation6 + $0x40] sm:$0xff] %v3935
      %3938 = vst [vmem:[#allocation6 + $0x48] sm:$0xff] %v3936
      %v3939 = vld [vmem:[#allocation2 + $0x8] sm:$0xff]
      %v3940 = vld [vmem:[#allocation2 + $0x10] sm:$0xff]
      %v3941 = vld [vmem:[#allocation2 + $0x18] sm:$0xff]
      %3945 = vrot.lane.b32.xlu0 %v3939, 127
      %v3946 = vpop.permute.xlu0 %3945
      %3947 = vrot.lane.b32.xlu0 %v3940, 127
      %v3948 = vpop.permute.xlu0 %3947
      %3949 = vrot.lane.b32.xlu0 %v3941, 127
      %v3950 = vpop.permute.xlu0 %3949
      %v3951 = vsel %vm537, %v3946, %v3948
      %v3952 = vsel %vm537, %v3948, %v3950
      %v3955 = vsel %vm438, %v3951, 0.0
      %v3956 = vsel %vm439, %v3952, 0.0
      %3957 = vst [vmem:[#allocation6 + $0x50] sm:$0xff] %v3955
      %3958 = vst [vmem:[#allocation6 + $0x58] sm:$0xff] %v3956
      %v3959 = vld [vmem:[#allocation2 + $0x8] sm:$0xff]
      %v3960 = vld [vmem:[#allocation2 + $0x10] sm:$0xff]
      %v3961 = vld [vmem:[#allocation2 + $0x18] sm:$0xff]
      %3965 = vrot.lane.b32.xlu0 %v3959, 113
      %v3966 = vpop.permute.xlu0 %3965
      %3967 = vrot.lane.b32.xlu0 %v3960, 113
      %v3968 = vpop.permute.xlu0 %3967
      %3969 = vrot.lane.b32.xlu0 %v3961, 113
      %v3970 = vpop.permute.xlu0 %3969
      %v3971 = vsel %vm558, %v3966, %v3968
      %v3972 = vsel %vm558, %v3968, %v3970
      %v3975 = vsel %vm436, %v3971, 0.0
      %v3976 = vsel %vm437, %v3972, 0.0
      %3977 = vst [vmem:[#allocation6 + $0x60] sm:$0xff] %v3975
      %3978 = vst [vmem:[#allocation6 + $0x68] sm:$0xff] %v3976
      %v3979 = vld [vmem:[#allocation2 + $0x8] sm:$0xff]
      %v3980 = vld [vmem:[#allocation2 + $0x10] sm:$0xff]
      %v3981 = vld [vmem:[#allocation2 + $0x18] sm:$0xff]
      %3985 = vrot.lane.b32.xlu0 %v3979, 112
      %v3986 = vpop.permute.xlu0 %3985
      %3987 = vrot.lane.b32.xlu0 %v3980, 112
      %v3988 = vpop.permute.xlu0 %3987
      %3989 = vrot.lane.b32.xlu0 %v3981, 112
      %v3990 = vpop.permute.xlu0 %3989
      %v3991 = vsel %vm579, %v3986, %v3988
      %v3992 = vsel %vm579, %v3988, %v3990
      %3995 = vst [vmem:[#allocation6 + $0x70] sm:$0xff] %v3991
      %3996 = vst [vmem:[#allocation6 + $0x78] sm:$0xff] %v3992
      %v3997 = vld [vmem:[#allocation2 + $0x8] sm:$0xff]
      %v3998 = vld [vmem:[#allocation2 + $0x10] sm:$0xff]
      %v3999 = vld [vmem:[#allocation2 + $0x18] sm:$0xff]
      %4003 = vrot.lane.b32.xlu0 %v3997, 111
      %v4004 = vpop.permute.xlu0 %4003
      %4005 = vrot.lane.b32.xlu0 %v3998, 111
      %v4006 = vpop.permute.xlu0 %4005
      %4007 = vrot.lane.b32.xlu0 %v3999, 111
      %v4008 = vpop.permute.xlu0 %4007
      %v4009 = vsel %vm598, %v4004, %v4006
      %v4010 = vsel %vm598, %v4006, %v4008
      %v4013 = vsel %vm438, %v4009, 0.0
      %v4014 = vsel %vm439, %v4010, 0.0
      %4015 = vst [vmem:[#allocation6 + $0x80] sm:$0xff] %v4013
      %4016 = vst [vmem:[#allocation6 + $0x88] sm:$0xff] %v4014
      %v4017 = vld [vmem:[#allocation6] sm:$0xff]
      %v4018 = vld [vmem:[#allocation6 + $0x8] sm:$0xff]
      %v4019 = vld [vmem:[#allocation6 + $0x10] sm:$0xff]
      %v4020 = vld [vmem:[#allocation6 + $0x18] sm:$0xff]
      %v4021 = vld [vmem:[#allocation6 + $0x20] sm:$0xff]
      %v4022 = vld [vmem:[#allocation6 + $0x28] sm:$0xff]
      %v4023 = vld [vmem:[#allocation6 + $0x30] sm:$0xff]
      %v4024 = vld [vmem:[#allocation6 + $0x38] sm:$0xff]
      %v4025 = vld [vmem:[#allocation6 + $0x40] sm:$0xff]
      %v4026 = vld [vmem:[#allocation6 + $0x48] sm:$0xff]
      %v4027 = vld [vmem:[#allocation6 + $0x50] sm:$0xff]
      %v4028 = vld [vmem:[#allocation6 + $0x58] sm:$0xff]
      %v4029 = vld [vmem:[#allocation6 + $0x60] sm:$0xff]
      %v4030 = vld [vmem:[#allocation6 + $0x68] sm:$0xff]
      %v4031 = vld [vmem:[#allocation6 + $0x70] sm:$0xff]
      %v4032 = vld [vmem:[#allocation6 + $0x78] sm:$0xff]
      %v4033 = vld [vmem:[#allocation6 + $0x80] sm:$0xff]
      %v4034 = vld [vmem:[#allocation6 + $0x88] sm:$0xff]
      %v4035 = vld [vmem:[%s3] sm:$0xff]
      %4037 = vset.pattern.permute.xlu0 13
      %4038 = vperm.xlu0 %4037, %v4035
      %v4039 = vpop.permute.xlu0 %4038
      %v4042 = vsel %vm631, %v3854, 0
      %4044 = vmatprep.subr.mxu0 %v4018
      %4045 = vmatpush1.msra.mxu0 %v4017
      %4046 = vmatprep.subr.mxu0 %v4020
      %4047 = vmatpush1.msra.mxu0 %v4019
      %4048 = vmatprep.subr.mxu0 %v4022
      %4049 = vmatpush1.msra.mxu0 %v4021
      %4050 = vmatprep.subr.mxu0 %v4024
      %4051 = vmatpush1.msra.mxu0 %v4023
      %4052 = vmatprep.subr.mxu0 %v4026
      %4053 = vmatpush1.msra.mxu0 %v4025
      %4054 = vmatprep.subr.mxu0 %v4028
      %4055 = vmatpush1.msra.mxu0 %v4027
      %4056 = vmatprep.subr.mxu0 %v4030
      %4057 = vmatpush1.msra.mxu0 %v4029
      %4058 = vmatprep.subr.mxu0 %v4032
      %4059 = vmatpush1.msra.mxu0 %v4031
      %4060 = vmatprep.subr.mxu0 %v4034
      %4061 = vmatpush1.msra.mxu0 %v4033
      %4062 = vmatprep.subr.mxu0 0.0
      %4063 = vmatpush1.msra.mxu0 0.0
      %4064 = vmatprep.subr.mxu0 0.0
      %4065 = vmatpush1.msra.mxu0 0.0
      %4066 = vmatprep.subr.mxu0 0.0
      %4067 = vmatpush1.msra.mxu0 0.0
      %4068 = vmatprep.subr.mxu0 0.0
      %4069 = vmatpush1.msra.mxu0 0.0
      %4070 = vmatprep.subr.mxu0 0.0
      %4071 = vmatpush1.msra.mxu0 0.0
      %4072 = vmatprep.subr.mxu0 0.0
      %4073 = vmatpush1.msra.mxu0 0.0
      %4074 = vmatprep.subr.mxu0 0.0
      %4075 = vmatpush1.msra.mxu0 0.0
      %4076 = vmatprep.subr.mxu0 0.0
      %4077 = vmatpush1.msra.mxu0 0.0
      %4078 = vmatprep.subr.mxu0 0.0
      %4079 = vmatpush1.msra.mxu0 0.0
      %4080 = vmatprep.subr.mxu0 0.0
      %4081 = vmatpush1.msra.mxu0 0.0
      %4082 = vmatprep.subr.mxu0 0.0
      %4083 = vmatpush1.msra.mxu0 0.0
      %4084 = vmatprep.subr.mxu0 0.0
      %4085 = vmatpush1.msra.mxu0 0.0
      %4086 = vmatprep.subr.mxu0 0.0
      %4087 = vmatpush1.msra.mxu0 0.0
      %4088 = vmatprep.subr.mxu0 0.0
      %4089 = vmatpush1.msra.mxu0 0.0
      %4090 = vmatprep.subr.mxu0 0.0
      %4091 = vmatpush1.msra.mxu0 0.0
      %4092 = vmatprep.subr.mxu0 0.0
      %4093 = vmatpush1.msra.mxu0 0.0
      %4094 = vmatprep.subr.mxu0 0.0
      %4095 = vmatpush1.msra.mxu0 0.0
      %4096 = vmatprep.subr.mxu0 0.0
      %4097 = vmatpush1.msra.mxu0 0.0
      %4098 = vmatprep.subr.mxu0 0.0
      %4099 = vmatpush1.msra.mxu0 0.0
      %4100 = vmatprep.subr.mxu0 0.0
      %4101 = vmatpush1.msra.mxu0 0.0
      %4102 = vmatprep.subr.mxu0 0.0
      %4103 = vmatpush1.msra.mxu0 0.0
      %4104 = vmatprep.subr.mxu0 0.0
      %4105 = vmatpush1.msra.mxu0 0.0
      %4106 = vmatprep.subr.mxu0 0.0
      %4107 = vmatpush1.msra.mxu0 0.0
      %4108 = vmatprep.mubr.f32.mxu0 0.0
      %4109 = vmatmul.mubr.f32.gmra.mrb[0].mxu0 %v4042
      %v4110 = vpop.f32.mrb[0].mxu0
      %v4111 = vadd.f32 %v4039, %v4110
      %v4112 = vpop.f32.mrb[0].mxu0
      %v4113 = vadd.f32 %v4039, %v4112
      %4114 = vdwg.mxu0
      %v4115 = vmax.f32 %v4111, 0.0
      %v4116 = vmax.f32 %v4113, 0.0
      %v4117 = vld [vmem:[%s4] sm:$0xf]
      %v4118 = vld [vmem:[%s5] sm:$0xf]
      %4120 = vset.pattern.permute.xlu0 0
      %4121 = vperm.xlu0 %4120, %v4118
      %v4122 = vpop.permute.xlu0 %4121
      %v4125 = vsel %vm1141, %v4117, 0
      %4127 = vmatprep.subr.mxu0 %v4116
      %4128 = vmatpush1.msra.mxu0 %v4115
      %4129 = vmatprep.subr.mxu0 0.0
      %4130 = vmatpush1.msra.mxu0 0.0
      %4131 = vmatprep.subr.mxu0 0.0
      %4132 = vmatpush1.msra.mxu0 0.0
      %4133 = vmatprep.subr.mxu0 0.0
      %4134 = vmatpush1.msra.mxu0 0.0
      %4135 = vmatprep.subr.mxu0 0.0
      %4136 = vmatpush1.msra.mxu0 0.0
      %4137 = vmatprep.subr.mxu0 0.0
      %4138 = vmatpush1.msra.mxu0 0.0
      %4139 = vmatprep.subr.mxu0 0.0
      %4140 = vmatpush1.msra.mxu0 0.0
      %4141 = vmatprep.subr.mxu0 0.0
      %4142 = vmatpush1.msra.mxu0 0.0
      %4143 = vmatprep.subr.mxu0 0.0
      %4144 = vmatpush1.msra.mxu0 0.0
      %4145 = vmatprep.subr.mxu0 0.0
      %4146 = vmatpush1.msra.mxu0 0.0
      %4147 = vmatprep.subr.mxu0 0.0
      %4148 = vmatpush1.msra.mxu0 0.0
      %4149 = vmatprep.subr.mxu0 0.0
      %4150 = vmatpush1.msra.mxu0 0.0
      %4151 = vmatprep.subr.mxu0 0.0
      %4152 = vmatpush1.msra.mxu0 0.0
      %4153 = vmatprep.subr.mxu0 0.0
      %4154 = vmatpush1.msra.mxu0 0.0
      %4155 = vmatprep.subr.mxu0 0.0
      %4156 = vmatpush1.msra.mxu0 0.0
      %4157 = vmatprep.subr.mxu0 0.0
      %4158 = vmatpush1.msra.mxu0 0.0
      %4159 = vmatprep.subr.mxu0 0.0
      %4160 = vmatpush1.msra.mxu0 0.0
      %4161 = vmatprep.subr.mxu0 0.0
      %4162 = vmatpush1.msra.mxu0 0.0
      %4163 = vmatprep.subr.mxu0 0.0
      %4164 = vmatpush1.msra.mxu0 0.0
      %4165 = vmatprep.subr.mxu0 0.0
      %4166 = vmatpush1.msra.mxu0 0.0
      %4167 = vmatprep.subr.mxu0 0.0
      %4168 = vmatpush1.msra.mxu0 0.0
      %4169 = vmatprep.subr.mxu0 0.0
      %4170 = vmatpush1.msra.mxu0 0.0
      %4171 = vmatprep.subr.mxu0 0.0
      %4172 = vmatpush1.msra.mxu0 0.0
      %4173 = vmatprep.subr.mxu0 0.0
      %4174 = vmatpush1.msra.mxu0 0.0
      %4175 = vmatprep.subr.mxu0 0.0
      %4176 = vmatpush1.msra.mxu0 0.0
      %4177 = vmatprep.subr.mxu0 0.0
      %4178 = vmatpush1.msra.mxu0 0.0
      %4179 = vmatprep.subr.mxu0 0.0
      %4180 = vmatpush1.msra.mxu0 0.0
      %4181 = vmatprep.subr.mxu0 0.0
      %4182 = vmatpush1.msra.mxu0 0.0
      %4183 = vmatprep.subr.mxu0 0.0
      %4184 = vmatpush1.msra.mxu0 0.0
      %4185 = vmatprep.subr.mxu0 0.0
      %4186 = vmatpush1.msra.mxu0 0.0
      %4187 = vmatprep.subr.mxu0 0.0
      %4188 = vmatpush1.msra.mxu0 0.0
      %4189 = vmatprep.subr.mxu0 0.0
      %4190 = vmatpush1.msra.mxu0 0.0
      %4191 = vmatprep.mubr.f32.mxu0 0.0
      %4192 = vmatmul.mubr.f32.gmra.mrb[0].mxu0 %v4125
      %v4193 = vpop.f32.mrb[0].mxu0
      %v4194 = vadd.f32 %v4122, %v4193
      %v4195 = vpop.f32.mrb[0].mxu0
      %v4196 = vadd.f32 %v4122, %v4195
      %4197 = vdwg.mxu0
      %v4200 = vcombine.low %v4194, %v4196
      %4202 = vst [vmem:[%s413] sm:$0xff] %v4200
      %p4203 = scmp.lt.s32.totalorder %s23, 1
      %s4204 = scalar_select %p4203, %s23, 1
      %s4205 = smul.addr %s4204, 2
      %s4206 = smul.addr %s4205, 4
      %s4207 = scalar_lea.vmem %s12, %s4206
      // Predicated region
      $region69: #{unet_forward_pallas.1} parent=67 // pred_check
        %p4208 = pneg %p298
      $region70: #{unet_forward_pallas.1} parent=67 // pred_check_branch
        %4210 = sbr.rel (%p4208) target = $region72
      $region71: #{unet_forward_pallas.1} parent=67 // pred_region
        _
      $region72: #{unet_forward_pallas.1} parent=67 // pred_fallthru
        _
    $region68: #{unet_forward_pallas.1} parent=5 // pred_fallthru
      _
    %p4211 = scmp.le.s32.totalorder 2, %s18
    // Predicated region
    $region73: #{unet_forward_pallas.1} parent=5 // pred_check
      %p4212 = pneg %p4211
    $region74: #{unet_forward_pallas.1} parent=5 // pred_check_branch
      %4214 = sbr.rel (%p4212) target = $region76
    $region75: #{unet_forward_pallas.1} parent=5 // pred_region
      %s4215 = ssub.s32 %s18, 2
      // Predicated region
      $region77: #{unet_forward_pallas.1} parent=75 // pred_check
        %p4216 = pneg %p304
      $region78: #{unet_forward_pallas.1} parent=75 // pred_check_branch
        %4218 = sbr.rel (%p4216) target = $region80
      $region79: #{unet_forward_pallas.1} parent=75 // pred_region
        %p4219 = scmp.lt.s32.totalorder %s24, 1
        %s4220 = scalar_select %p4219, %s24, 1
        %s4221 = smul.addr %s4220, 2
        %s4222 = smul.addr %s4221, 4
        %s4223 = scalar_lea.vmem %s12, %s4222
      $region80: #{unet_forward_pallas.1} parent=75 // pred_fallthru
        _
    $region76: #{unet_forward_pallas.1} parent=5 // pred_fallthru
      _
  $region6: #{unet_forward_pallas.1} parent=0 // loop_footer
    %s22 = sadd.s32 1, %s18
  $region7: #{unet_forward_pallas.1} parent=0 // loop_footer_branch
    %17 = sbr.rel target = $region3
  $region8: #{unet_forward_pallas.1} parent=0 // loop_exit
    _

</llo_original>
